<compile_context>
chip_gen: v7x
topology: tpu7x:2x2x1
jax: 0.10.0
libtpu: 0.0.40
codegen_flags: <defaults>
</compile_context>

<pallas_src>
import functools

import jax
import jax.numpy as jnp
from jax.experimental import pallas as pl
from jax.experimental.pallas import tpu as pltpu


def _rdb_kernel(x_ref, wd_ref, bd_ref, w1_ref, b1_ref, out_ref, feat_ref,
                *, H, W, C0, G, L, Kmax, Cpad, compute_dtype):
    """Fused ResDenseBlock for one image.

    x_ref:    (1, H, W, C0)            input image (NHWC block)
    wd_ref:   (L*9, Kmax, Cpad)        conv3x3 weights, tap-major, N padded
    bd_ref:   (L, 1, Cpad)             conv3x3 biases, padded to Cpad lanes
    w1_ref:   (Cpad, C0)               conv1x1 weights (rows >= Cf are zero)
    b1_ref:   (1, C0)                  conv1x1 bias
    out_ref:  (1, H, W, C0)            output block
    feat_ref: (H+2, W+16, Cpad) f32    padded, growing feature scratch
    """
    WP = W + 16
    f32 = jnp.float32

    # ---- per-step init: zero halo / unused columns (all aligned stores) ----
    feat_ref[:, 0:8, :] = jnp.zeros((H + 2, 8, Cpad), f32)            # left  (col 7 = halo)
    feat_ref[:, W + 8:WP, :] = jnp.zeros((H + 2, 8, Cpad), f32)       # right (col W+8 = halo)
    feat_ref[0:1, 8:W + 8, :] = jnp.zeros((1, W, Cpad), f32)          # top halo row
    feat_ref[H + 1:H + 2, 8:W + 8, :] = jnp.zeros((1, W, Cpad), f32)  # bottom halo row

    # Interior: channels [0:C0] = image, [C0:Cpad] = 0, one full-lane,
    # sublane-aligned store (required so later accumulates are exact).
    feat_ref[1:H + 1, 8:W + 8, :] = jnp.concatenate(
        [x_ref[0].astype(f32), jnp.zeros((H, W, Cpad - C0), f32)], axis=-1)

    # ---- dense layers: conv3x3 -> ReLU, full-lane accumulate writeback -----
    for li in range(L):
        acc = None
        for ky in range(3):
            for kx in range(3):
                # Tap (ky, kx): direct VMEM window read (no value concat).
                lhs = feat_ref[ky:ky + H, 7 + kx:7 + kx + W, 0:Kmax]
                lhs = lhs.reshape(H * W, Kmax).astype(compute_dtype)
                d = jnp.dot(lhs, wd_ref[li * 9 + ky * 3 + kx],
                            preferred_element_type=jnp.float32)
                acc = d if acc is None else acc + d
        y = jnp.maximum(acc + bd_ref[li], 0.0)             # bias + ReLU, (H*W, Cpad)
        # y is nonzero only in lanes [cin, cin+G); those interior lanes are
        # still zero, so load-add-store == placement, and other lanes get +0.
        cur = feat_ref[1:H + 1, 8:W + 8, :]
        feat_ref[1:H + 1, 8:W + 8, :] = cur + y.reshape(H, W, Cpad)

    # ---- conv1x1 over the concatenated features + residual -----------------
    feat = feat_ref[1:H + 1, 8:W + 8, :].reshape(H * W, Cpad).astype(compute_dtype)
    out = jnp.dot(feat, w1_ref[...], preferred_element_type=jnp.float32)
    out = out + b1_ref[...]
    out_ref[0] = (out.reshape(H, W, C0) + x_ref[0].astype(f32)).astype(out_ref.dtype)


def res_dense_block_nhwc(x_nhwc, dense_weights, dense_biases, w1x1, b1x1,
                         *, compute_dtype=jnp.float32):
    """NHWC-native core (preferred: avoids NCHW<->NHWC HBM passes).

    x_nhwc:        (N, H, W, C0)
    dense_weights: list of L conv3x3 weights (PyTorch OIHW), layer i: (G, C0+i*G, 3, 3)
    dense_biases:  list of L biases, each (G,)
    w1x1:          (C0, C0 + L*G, 1, 1);  b1x1: (C0,)
    compute_dtype: jnp.float32 (exact parity) or jnp.bfloat16 (v6e/v7x MXU rate)
    """
    N, H, W, C0 = x_nhwc.shape
    L = len(dense_weights)
    G = int(dense_weights[0].shape[0])
    Cf = C0 + L * G
    Kmax = C0 + (L - 1) * G                      # uniform contraction depth
    Cpad = ((Cf + 127) // 128) * 128             # pad features to full lane tiles

    # ---- pack dense-layer weights: one tap-major, N-padded tensor ----------
    w_dense = jnp.zeros((L * 9, Kmax, Cpad), jnp.float32)
    b_dense = jnp.zeros((L, 1, Cpad), jnp.float32)
    cin = C0
    for i in range(L):
        w = jnp.asarray(dense_weights[i], jnp.float32)          # (G, cin, 3, 3)
        wt = jnp.transpose(w, (2, 3, 1, 0)).reshape(9, cin, G)  # (ky*3+kx, c, g)
        w_dense = w_dense.at[i * 9:(i + 1) * 9, :cin, cin:cin + G].set(wt)
        b_dense = b_dense.at[i, 0, cin:cin + G].set(
            jnp.asarray(dense_biases[i], jnp.float32))
        cin += G

    w1 = jnp.transpose(jnp.asarray(w1x1, jnp.float32).reshape(C0, Cf), (1, 0))
    w1_pad = jnp.zeros((Cpad, C0), jnp.float32).at[:Cf, :].set(w1)
    b1 = jnp.asarray(b1x1, jnp.float32).reshape(1, C0)

    w_dense = w_dense.astype(compute_dtype)
    w1_pad = w1_pad.astype(compute_dtype)
    x_f = x_nhwc.astype(jnp.float32)

    kernel = functools.partial(_rdb_kernel, H=H, W=W, C0=C0, G=G, L=L,
                               Kmax=Kmax, Cpad=Cpad, compute_dtype=compute_dtype)

    # Explicit VMEM budget: scratch + double-buffered blocks/weights + margin.
    itm = jnp.dtype(compute_dtype).itemsize
    scratch_bytes = (H + 2) * (W + 16) * Cpad * 4
    blk_bytes = H * W * C0 * 4
    w_bytes = (w_dense.size * itm + b_dense.size * 4 + w1_pad.size * itm + b1.size * 4)
    vmem_limit = int(scratch_bytes + 4 * blk_bytes + 2 * w_bytes + (8 << 20))

    out = pl.pallas_call(
        kernel,
        out_shape=jax.ShapeDtypeStruct((N, H, W, C0), jnp.float32),
        grid_spec=pltpu.PrefetchScalarGridSpec(
            num_scalar_prefetch=0,
            grid=(N,),
            in_specs=[
                pl.BlockSpec((1, H, W, C0), lambda n: (n, 0, 0, 0)),
                pl.BlockSpec((L * 9, Kmax, Cpad), lambda n: (0, 0, 0)),
                pl.BlockSpec((L, 1, Cpad), lambda n: (0, 0, 0)),
                pl.BlockSpec((Cpad, C0), lambda n: (0, 0)),
                pl.BlockSpec((1, C0), lambda n: (0, 0)),
            ],
            out_specs=pl.BlockSpec((1, H, W, C0), lambda n: (n, 0, 0, 0)),
            scratch_shapes=[pltpu.VMEM((H + 2, W + 16, Cpad), jnp.float32)],
        ),
        compiler_params=pltpu.CompilerParams(
            dimension_semantics=("parallel",),
            vmem_limit_bytes=vmem_limit),
    )(x_f, w_dense, b_dense, w1_pad, b1)
    return out


def res_dense_block(x_nchw, dense_weights, dense_biases, w1x1, b1x1,
                    *, compute_dtype=jnp.float32):
    """PyTorch-parity (NCHW) entry point.

    NOTE: the two jnp.transpose calls are extra HBM passes kept only for
    interface parity; prefer res_dense_block_nhwc end-to-end.
    """
    x_nhwc = jnp.transpose(x_nchw, (0, 2, 3, 1))
    out = res_dense_block_nhwc(x_nhwc, dense_weights, dense_biases, w1x1, b1x1,
                               compute_dtype=compute_dtype)
    return jnp.transpose(out, (0, 3, 1, 2))


def _reference(x, dense_ws, dense_bs, w1x1, b1x1):
    """Pure-JAX reference matching the PyTorch forward (NCHW / OIHW, ReLU)."""
    dn = ('NCHW', 'OIHW', 'NCHW')
    feat = x
    for w, b in zip(dense_ws, dense_bs):
        y = jax.lax.conv_general_dilated(feat, w, (1, 1), ((1, 1), (1, 1)),
                                         dimension_numbers=dn)
        y = jnp.maximum(y + b[None, :, None, None], 0.0)
        feat = jnp.concatenate([feat, y], axis=1)
    out = jax.lax.conv_general_dilated(feat, w1x1, (1, 1), ((0, 0), (0, 0)),
                                       dimension_numbers=dn)
    out = out + b1x1[None, :, None, None]
    return out + x


if __name__ == "__main__":
    # Small deterministic config: in_chs=16, growth_rate=8, num_layer=3.
    N, C0, H, W = 2, 16, 16, 16
    G, L = 8, 3

    key = jax.random.PRNGKey(0)
    keys = jax.random.split(key, 2 + 2 * L + 2)

    x = jax.random.normal(keys[0], (N, C0, H, W), jnp.float32)

    dense_ws, dense_bs = [], []
    cin = C0
    ki = 1
    for i in range(L):
        std = (2.0 / (cin * 9)) ** 0.5
        dense_ws.append(
            jax.random.normal(keys[ki], (G, cin, 3, 3), jnp.float32) * std)
        dense_bs.append(
            jax.random.normal(keys[ki + 1], (G,), jnp.float32) * 0.01)
        ki += 2
        cin += G
    Cf = cin
    w1x1 = jax.random.normal(keys[ki], (C0, Cf, 1, 1), jnp.float32) * (1.0 / Cf) ** 0.5
    b1x1 = jax.random.normal(keys[ki + 1], (C0,), jnp.float32) * 0.01

    out = res_dense_block(x, dense_ws, dense_bs, w1x1, b1x1)
    out = jax.block_until_ready(out)

    ref = _reference(x, dense_ws, dense_bs, w1x1, b1x1)
    assert out.shape == (N, C0, H, W)
    err = jnp.max(jnp.abs(out - ref))
    assert jnp.allclose(out, ref, atol=1e-3, rtol=1e-3), f"max abs err {err}"

    print("KERNEL_OK")
</pallas_src>

<mosaic_0001>
module attributes {stable_mosaic.version = 11 : i64} {
  func.func @_rdb_kernel(%arg0: i32, %arg1: memref<1x16x16x16xf32, #tpu.memory_space<vmem>>, %arg2: memref<27x32x128xf32, #tpu.memory_space<vmem>>, %arg3: memref<3x1x128xf32, #tpu.memory_space<vmem>>, %arg4: memref<128x16xf32, #tpu.memory_space<vmem>>, %arg5: memref<1x16xf32, #tpu.memory_space<vmem>>, %arg6: memref<1x16x16x16xf32, #tpu.memory_space<vmem>>, %arg7: memref<18x32x128xf32, #tpu.memory_space<vmem>>) attributes {dimension_semantics = [#tpu.dimension_semantics<parallel>], iteration_bounds = array<i64: 2>, scalar_prefetch = 0 : i64, scratch_operands = 1 : i64, tpu.core_type = #tpu.core_type<tc>, window_params = [{transform_indices = @transform_0, window_bounds = array<i64: 1, 16, 16, 16>}, {pipeline_mode = #tpu.pipeline_mode<synchronous>, transform_indices = @transform_1, window_bounds = array<i64: 27, 32, 128>}, {pipeline_mode = #tpu.pipeline_mode<synchronous>, transform_indices = @transform_2, window_bounds = array<i64: 3, 1, 128>}, {pipeline_mode = #tpu.pipeline_mode<synchronous>, transform_indices = @transform_3, window_bounds = array<i64: 128, 16>}, {pipeline_mode = #tpu.pipeline_mode<synchronous>, transform_indices = @transform_4, window_bounds = array<i64: 1, 16>}, {transform_indices = @transform_5, window_bounds = array<i64: 1, 16, 16, 16>}]} {
    %cst = arith.constant 0.000000e+00 : f32
    %0 = vector.broadcast %cst : f32 to vector<18x8x128xf32>
    %c0 = arith.constant 0 : index
    %c0_0 = arith.constant 0 : index
    %c0_1 = arith.constant 0 : index
    %1 = vector.load %arg7[%c0, %c0_0, %c0_1] : memref<18x32x128xf32, #tpu.memory_space<vmem>>, vector<18x8x128xf32>
    tpu.vector_store %arg7[%c0, %c0_0, %c0_1], %0 {strides = array<i32>} : memref<18x32x128xf32, #tpu.memory_space<vmem>>, vector<18x8x128xf32>,
    %cst_2 = arith.constant 0.000000e+00 : f32
    %2 = vector.broadcast %cst_2 : f32 to vector<18x8x128xf32>
    %c0_3 = arith.constant 0 : index
    %c24 = arith.constant 24 : index
    %c0_4 = arith.constant 0 : index
    %3 = vector.load %arg7[%c0_3, %c24, %c0_4] : memref<18x32x128xf32, #tpu.memory_space<vmem>>, vector<18x8x128xf32>
    tpu.vector_store %arg7[%c0_3, %c24, %c0_4], %2 {strides = array<i32>} : memref<18x32x128xf32, #tpu.memory_space<vmem>>, vector<18x8x128xf32>,
    %cst_5 = arith.constant 0.000000e+00 : f32
    %4 = vector.broadcast %cst_5 : f32 to vector<1x16x128xf32>
    %c0_6 = arith.constant 0 : index
    %c8 = arith.constant 8 : index
    %c0_7 = arith.constant 0 : index
    %5 = vector.load %arg7[%c0_6, %c8, %c0_7] : memref<18x32x128xf32, #tpu.memory_space<vmem>>, vector<1x16x128xf32>
    tpu.vector_store %arg7[%c0_6, %c8, %c0_7], %4 {strides = array<i32>} : memref<18x32x128xf32, #tpu.memory_space<vmem>>, vector<1x16x128xf32>,
    %cst_8 = arith.constant 0.000000e+00 : f32
    %6 = vector.broadcast %cst_8 : f32 to vector<1x16x128xf32>
    %c17 = arith.constant 17 : index
    %c8_9 = arith.constant 8 : index
    %c0_10 = arith.constant 0 : index
    %7 = vector.load %arg7[%c17, %c8_9, %c0_10] : memref<18x32x128xf32, #tpu.memory_space<vmem>>, vector<1x16x128xf32>
    tpu.vector_store %arg7[%c17, %c8_9, %c0_10], %6 {strides = array<i32>} : memref<18x32x128xf32, #tpu.memory_space<vmem>>, vector<1x16x128xf32>,
    %c0_11 = arith.constant 0 : index
    %c0_12 = arith.constant 0 : index
    %c0_13 = arith.constant 0 : index
    %c0_14 = arith.constant 0 : index
    %8 = vector.load %arg1[%c0_11, %c0_12, %c0_13, %c0_14] : memref<1x16x16x16xf32, #tpu.memory_space<vmem>>, vector<1x16x16x16xf32>
    %9 = vector.shape_cast %8 : vector<1x16x16x16xf32> to vector<16x16x16xf32>
    %cst_15 = arith.constant 0.000000e+00 : f32
    %10 = vector.broadcast %cst_15 : f32 to vector<16x16x112xf32>
    %11 = tpu.concatenate %9, %10 in 2 : vector<16x16x16xf32>, vector<16x16x112xf32> -> vector<16x16x128xf32>
    %c1 = arith.constant 1 : index
    %c8_16 = arith.constant 8 : index
    %c0_17 = arith.constant 0 : index
    %12 = vector.load %arg7[%c1, %c8_16, %c0_17] : memref<18x32x128xf32, #tpu.memory_space<vmem>>, vector<16x16x128xf32>
    tpu.vector_store %arg7[%c1, %c8_16, %c0_17], %11 {strides = array<i32>} : memref<18x32x128xf32, #tpu.memory_space<vmem>>, vector<16x16x128xf32>,
    %c0_18 = arith.constant 0 : index
    %c7 = arith.constant 7 : index
    %c0_19 = arith.constant 0 : index
    %13 = vector.load %arg7[%c0_18, %c7, %c0_19] : memref<18x32x128xf32, #tpu.memory_space<vmem>>, vector<16x16x32xf32>
    %14 = vector.shape_cast %13 : vector<16x16x32xf32> to vector<256x32xf32>
    %c0_20 = arith.constant 0 : index
    %c0_21 = arith.constant 0 : index
    %c0_22 = arith.constant 0 : index
    %15 = vector.load %arg2[%c0_20, %c0_21, %c0_22] : memref<27x32x128xf32, #tpu.memory_space<vmem>>, vector<1x32x128xf32>
    %16 = vector.shape_cast %15 : vector<1x32x128xf32> to vector<32x128xf32>
    %cst_23 = arith.constant dense<0.000000e+00> : vector<256x128xf32>
    %17 = tpu.matmul %14, %16, %cst_23 {dimension_numbers = #tpu.dot_dimension_numbers<[1], [0], [0], [1], [0, 0, 1, 1], [], []>} : vector<256x32xf32>, vector<32x128xf32>, vector<256x128xf32> -> vector<256x128xf32>
    %c0_24 = arith.constant 0 : index
    %c8_25 = arith.constant 8 : index
    %c0_26 = arith.constant 0 : index
    %18 = vector.load %arg7[%c0_24, %c8_25, %c0_26] : memref<18x32x128xf32, #tpu.memory_space<vmem>>, vector<16x16x32xf32>
    %19 = vector.shape_cast %18 : vector<16x16x32xf32> to vector<256x32xf32>
    %c1_27 = arith.constant 1 : index
    %c0_28 = arith.constant 0 : index
    %c0_29 = arith.constant 0 : index
    %20 = vector.load %arg2[%c1_27, %c0_28, %c0_29] : memref<27x32x128xf32, #tpu.memory_space<vmem>>, vector<1x32x128xf32>
    %21 = vector.shape_cast %20 : vector<1x32x128xf32> to vector<32x128xf32>
    %cst_30 = arith.constant dense<0.000000e+00> : vector<256x128xf32>
    %22 = tpu.matmul %19, %21, %cst_30 {dimension_numbers = #tpu.dot_dimension_numbers<[1], [0], [0], [1], [0, 0, 1, 1], [], []>} : vector<256x32xf32>, vector<32x128xf32>, vector<256x128xf32> -> vector<256x128xf32>
    %23 = arith.addf %17, %22 : vector<256x128xf32>
    %c0_31 = arith.constant 0 : index
    %c9 = arith.constant 9 : index
    %c0_32 = arith.constant 0 : index
    %24 = vector.load %arg7[%c0_31, %c9, %c0_32] : memref<18x32x128xf32, #tpu.memory_space<vmem>>, vector<16x16x32xf32>
    %25 = vector.shape_cast %24 : vector<16x16x32xf32> to vector<256x32xf32>
    %c2 = arith.constant 2 : index
    %c0_33 = arith.constant 0 : index
    %c0_34 = arith.constant 0 : index
    %26 = vector.load %arg2[%c2, %c0_33, %c0_34] : memref<27x32x128xf32, #tpu.memory_space<vmem>>, vector<1x32x128xf32>
    %27 = vector.shape_cast %26 : vector<1x32x128xf32> to vector<32x128xf32>
    %cst_35 = arith.constant dense<0.000000e+00> : vector<256x128xf32>
    %28 = tpu.matmul %25, %27, %cst_35 {dimension_numbers = #tpu.dot_dimension_numbers<[1], [0], [0], [1], [0, 0, 1, 1], [], []>} : vector<256x32xf32>, vector<32x128xf32>, vector<256x128xf32> -> vector<256x128xf32>
    %29 = arith.addf %23, %28 : vector<256x128xf32>
    %c1_36 = arith.constant 1 : index
    %c7_37 = arith.constant 7 : index
    %c0_38 = arith.constant 0 : index
    %30 = vector.load %arg7[%c1_36, %c7_37, %c0_38] : memref<18x32x128xf32, #tpu.memory_space<vmem>>, vector<16x16x32xf32>
    %31 = vector.shape_cast %30 : vector<16x16x32xf32> to vector<256x32xf32>
    %c3 = arith.constant 3 : index
    %c0_39 = arith.constant 0 : index
    %c0_40 = arith.constant 0 : index
    %32 = vector.load %arg2[%c3, %c0_39, %c0_40] : memref<27x32x128xf32, #tpu.memory_space<vmem>>, vector<1x32x128xf32>
    %33 = vector.shape_cast %32 : vector<1x32x128xf32> to vector<32x128xf32>
    %cst_41 = arith.constant dense<0.000000e+00> : vector<256x128xf32>
    %34 = tpu.matmul %31, %33, %cst_41 {dimension_numbers = #tpu.dot_dimension_numbers<[1], [0], [0], [1], [0, 0, 1, 1], [], []>} : vector<256x32xf32>, vector<32x128xf32>, vector<256x128xf32> -> vector<256x128xf32>
    %35 = arith.addf %29, %34 : vector<256x128xf32>
    %c1_42 = arith.constant 1 : index
    %c8_43 = arith.constant 8 : index
    %c0_44 = arith.constant 0 : index
    %36 = vector.load %arg7[%c1_42, %c8_43, %c0_44] : memref<18x32x128xf32, #tpu.memory_space<vmem>>, vector<16x16x32xf32>
    %37 = vector.shape_cast %36 : vector<16x16x32xf32> to vector<256x32xf32>
    %c4 = arith.constant 4 : index
    %c0_45 = arith.constant 0 : index
    %c0_46 = arith.constant 0 : index
    %38 = vector.load %arg2[%c4, %c0_45, %c0_46] : memref<27x32x128xf32, #tpu.memory_space<vmem>>, vector<1x32x128xf32>
    %39 = vector.shape_cast %38 : vector<1x32x128xf32> to vector<32x128xf32>
    %cst_47 = arith.constant dense<0.000000e+00> : vector<256x128xf32>
    %40 = tpu.matmul %37, %39, %cst_47 {dimension_numbers = #tpu.dot_dimension_numbers<[1], [0], [0], [1], [0, 0, 1, 1], [], []>} : vector<256x32xf32>, vector<32x128xf32>, vector<256x128xf32> -> vector<256x128xf32>
    %41 = arith.addf %35, %40 : vector<256x128xf32>
    %c1_48 = arith.constant 1 : index
    %c9_49 = arith.constant 9 : index
    %c0_50 = arith.constant 0 : index
    %42 = vector.load %arg7[%c1_48, %c9_49, %c0_50] : memref<18x32x128xf32, #tpu.memory_space<vmem>>, vector<16x16x32xf32>
    %43 = vector.shape_cast %42 : vector<16x16x32xf32> to vector<256x32xf32>
    %c5 = arith.constant 5 : index
    %c0_51 = arith.constant 0 : index
    %c0_52 = arith.constant 0 : index
    %44 = vector.load %arg2[%c5, %c0_51, %c0_52] : memref<27x32x128xf32, #tpu.memory_space<vmem>>, vector<1x32x128xf32>
    %45 = vector.shape_cast %44 : vector<1x32x128xf32> to vector<32x128xf32>
    %cst_53 = arith.constant dense<0.000000e+00> : vector<256x128xf32>
    %46 = tpu.matmul %43, %45, %cst_53 {dimension_numbers = #tpu.dot_dimension_numbers<[1], [0], [0], [1], [0, 0, 1, 1], [], []>} : vector<256x32xf32>, vector<32x128xf32>, vector<256x128xf32> -> vector<256x128xf32>
    %47 = arith.addf %41, %46 : vector<256x128xf32>
    %c2_54 = arith.constant 2 : index
    %c7_55 = arith.constant 7 : index
    %c0_56 = arith.constant 0 : index
    %48 = vector.load %arg7[%c2_54, %c7_55, %c0_56] : memref<18x32x128xf32, #tpu.memory_space<vmem>>, vector<16x16x32xf32>
    %49 = vector.shape_cast %48 : vector<16x16x32xf32> to vector<256x32xf32>
    %c6 = arith.constant 6 : index
    %c0_57 = arith.constant 0 : index
    %c0_58 = arith.constant 0 : index
    %50 = vector.load %arg2[%c6, %c0_57, %c0_58] : memref<27x32x128xf32, #tpu.memory_space<vmem>>, vector<1x32x128xf32>
    %51 = vector.shape_cast %50 : vector<1x32x128xf32> to vector<32x128xf32>
    %cst_59 = arith.constant dense<0.000000e+00> : vector<256x128xf32>
    %52 = tpu.matmul %49, %51, %cst_59 {dimension_numbers = #tpu.dot_dimension_numbers<[1], [0], [0], [1], [0, 0, 1, 1], [], []>} : vector<256x32xf32>, vector<32x128xf32>, vector<256x128xf32> -> vector<256x128xf32>
    %53 = arith.addf %47, %52 : vector<256x128xf32>
    %c2_60 = arith.constant 2 : index
    %c8_61 = arith.constant 8 : index
    %c0_62 = arith.constant 0 : index
    %54 = vector.load %arg7[%c2_60, %c8_61, %c0_62] : memref<18x32x128xf32, #tpu.memory_space<vmem>>, vector<16x16x32xf32>
    %55 = vector.shape_cast %54 : vector<16x16x32xf32> to vector<256x32xf32>
    %c7_63 = arith.constant 7 : index
    %c0_64 = arith.constant 0 : index
    %c0_65 = arith.constant 0 : index
    %56 = vector.load %arg2[%c7_63, %c0_64, %c0_65] : memref<27x32x128xf32, #tpu.memory_space<vmem>>, vector<1x32x128xf32>
    %57 = vector.shape_cast %56 : vector<1x32x128xf32> to vector<32x128xf32>
    %cst_66 = arith.constant dense<0.000000e+00> : vector<256x128xf32>
    %58 = tpu.matmul %55, %57, %cst_66 {dimension_numbers = #tpu.dot_dimension_numbers<[1], [0], [0], [1], [0, 0, 1, 1], [], []>} : vector<256x32xf32>, vector<32x128xf32>, vector<256x128xf32> -> vector<256x128xf32>
    %59 = arith.addf %53, %58 : vector<256x128xf32>
    %c2_67 = arith.constant 2 : index
    %c9_68 = arith.constant 9 : index
    %c0_69 = arith.constant 0 : index
    %60 = vector.load %arg7[%c2_67, %c9_68, %c0_69] : memref<18x32x128xf32, #tpu.memory_space<vmem>>, vector<16x16x32xf32>
    %61 = vector.shape_cast %60 : vector<16x16x32xf32> to vector<256x32xf32>
    %c8_70 = arith.constant 8 : index
    %c0_71 = arith.constant 0 : index
    %c0_72 = arith.constant 0 : index
    %62 = vector.load %arg2[%c8_70, %c0_71, %c0_72] : memref<27x32x128xf32, #tpu.memory_space<vmem>>, vector<1x32x128xf32>
    %63 = vector.shape_cast %62 : vector<1x32x128xf32> to vector<32x128xf32>
    %cst_73 = arith.constant dense<0.000000e+00> : vector<256x128xf32>
    %64 = tpu.matmul %61, %63, %cst_73 {dimension_numbers = #tpu.dot_dimension_numbers<[1], [0], [0], [1], [0, 0, 1, 1], [], []>} : vector<256x32xf32>, vector<32x128xf32>, vector<256x128xf32> -> vector<256x128xf32>
    %65 = arith.addf %59, %64 : vector<256x128xf32>
    %c0_74 = arith.constant 0 : index
    %c0_75 = arith.constant 0 : index
    %c0_76 = arith.constant 0 : index
    %66 = vector.load %arg3[%c0_74, %c0_75, %c0_76] : memref<3x1x128xf32, #tpu.memory_space<vmem>>, vector<1x1x128xf32>
    %67 = vector.shape_cast %66 : vector<1x1x128xf32> to vector<1x128xf32>
    %68 = vector.broadcast %67 : vector<1x128xf32> to vector<256x128xf32>
    %69 = arith.addf %65, %68 : vector<256x128xf32>
    %cst_77 = arith.constant 0.000000e+00 : f32
    %70 = vector.broadcast %cst_77 : f32 to vector<256x128xf32>
    %71 = arith.maximumf %69, %70 : vector<256x128xf32>
    %c1_78 = arith.constant 1 : index
    %c8_79 = arith.constant 8 : index
    %c0_80 = arith.constant 0 : index
    %72 = vector.load %arg7[%c1_78, %c8_79, %c0_80] : memref<18x32x128xf32, #tpu.memory_space<vmem>>, vector<16x16x128xf32>
    %73 = vector.shape_cast %71 : vector<256x128xf32> to vector<16x16x128xf32>
    %74 = arith.addf %72, %73 : vector<16x16x128xf32>
    %c1_81 = arith.constant 1 : index
    %c8_82 = arith.constant 8 : index
    %c0_83 = arith.constant 0 : index
    %75 = vector.load %arg7[%c1_81, %c8_82, %c0_83] : memref<18x32x128xf32, #tpu.memory_space<vmem>>, vector<16x16x128xf32>
    tpu.vector_store %arg7[%c1_81, %c8_82, %c0_83], %74 {strides = array<i32>} : memref<18x32x128xf32, #tpu.memory_space<vmem>>, vector<16x16x128xf32>,
    %c0_84 = arith.constant 0 : index
    %c7_85 = arith.constant 7 : index
    %c0_86 = arith.constant 0 : index
    %76 = vector.load %arg7[%c0_84, %c7_85, %c0_86] : memref<18x32x128xf32, #tpu.memory_space<vmem>>, vector<16x16x32xf32>
    %77 = vector.shape_cast %76 : vector<16x16x32xf32> to vector<256x32xf32>
    %c9_87 = arith.constant 9 : index
    %c0_88 = arith.constant 0 : index
    %c0_89 = arith.constant 0 : index
    %78 = vector.load %arg2[%c9_87, %c0_88, %c0_89] : memref<27x32x128xf32, #tpu.memory_space<vmem>>, vector<1x32x128xf32>
    %79 = vector.shape_cast %78 : vector<1x32x128xf32> to vector<32x128xf32>
    %cst_90 = arith.constant dense<0.000000e+00> : vector<256x128xf32>
    %80 = tpu.matmul %77, %79, %cst_90 {dimension_numbers = #tpu.dot_dimension_numbers<[1], [0], [0], [1], [0, 0, 1, 1], [], []>} : vector<256x32xf32>, vector<32x128xf32>, vector<256x128xf32> -> vector<256x128xf32>
    %c0_91 = arith.constant 0 : index
    %c8_92 = arith.constant 8 : index
    %c0_93 = arith.constant 0 : index
    %81 = vector.load %arg7[%c0_91, %c8_92, %c0_93] : memref<18x32x128xf32, #tpu.memory_space<vmem>>, vector<16x16x32xf32>
    %82 = vector.shape_cast %81 : vector<16x16x32xf32> to vector<256x32xf32>
    %c10 = arith.constant 10 : index
    %c0_94 = arith.constant 0 : index
    %c0_95 = arith.constant 0 : index
    %83 = vector.load %arg2[%c10, %c0_94, %c0_95] : memref<27x32x128xf32, #tpu.memory_space<vmem>>, vector<1x32x128xf32>
    %84 = vector.shape_cast %83 : vector<1x32x128xf32> to vector<32x128xf32>
    %cst_96 = arith.constant dense<0.000000e+00> : vector<256x128xf32>
    %85 = tpu.matmul %82, %84, %cst_96 {dimension_numbers = #tpu.dot_dimension_numbers<[1], [0], [0], [1], [0, 0, 1, 1], [], []>} : vector<256x32xf32>, vector<32x128xf32>, vector<256x128xf32> -> vector<256x128xf32>
    %86 = arith.addf %80, %85 : vector<256x128xf32>
    %c0_97 = arith.constant 0 : index
    %c9_98 = arith.constant 9 : index
    %c0_99 = arith.constant 0 : index
    %87 = vector.load %arg7[%c0_97, %c9_98, %c0_99] : memref<18x32x128xf32, #tpu.memory_space<vmem>>, vector<16x16x32xf32>
    %88 = vector.shape_cast %87 : vector<16x16x32xf32> to vector<256x32xf32>
    %c11 = arith.constant 11 : index
    %c0_100 = arith.constant 0 : index
    %c0_101 = arith.constant 0 : index
    %89 = vector.load %arg2[%c11, %c0_100, %c0_101] : memref<27x32x128xf32, #tpu.memory_space<vmem>>, vector<1x32x128xf32>
    %90 = vector.shape_cast %89 : vector<1x32x128xf32> to vector<32x128xf32>
    %cst_102 = arith.constant dense<0.000000e+00> : vector<256x128xf32>
    %91 = tpu.matmul %88, %90, %cst_102 {dimension_numbers = #tpu.dot_dimension_numbers<[1], [0], [0], [1], [0, 0, 1, 1], [], []>} : vector<256x32xf32>, vector<32x128xf32>, vector<256x128xf32> -> vector<256x128xf32>
    %92 = arith.addf %86, %91 : vector<256x128xf32>
    %c1_103 = arith.constant 1 : index
    %c7_104 = arith.constant 7 : index
    %c0_105 = arith.constant 0 : index
    %93 = vector.load %arg7[%c1_103, %c7_104, %c0_105] : memref<18x32x128xf32, #tpu.memory_space<vmem>>, vector<16x16x32xf32>
    %94 = vector.shape_cast %93 : vector<16x16x32xf32> to vector<256x32xf32>
    %c12 = arith.constant 12 : index
    %c0_106 = arith.constant 0 : index
    %c0_107 = arith.constant 0 : index
    %95 = vector.load %arg2[%c12, %c0_106, %c0_107] : memref<27x32x128xf32, #tpu.memory_space<vmem>>, vector<1x32x128xf32>
    %96 = vector.shape_cast %95 : vector<1x32x128xf32> to vector<32x128xf32>
    %cst_108 = arith.constant dense<0.000000e+00> : vector<256x128xf32>
    %97 = tpu.matmul %94, %96, %cst_108 {dimension_numbers = #tpu.dot_dimension_numbers<[1], [0], [0], [1], [0, 0, 1, 1], [], []>} : vector<256x32xf32>, vector<32x128xf32>, vector<256x128xf32> -> vector<256x128xf32>
    %98 = arith.addf %92, %97 : vector<256x128xf32>
    %c1_109 = arith.constant 1 : index
    %c8_110 = arith.constant 8 : index
    %c0_111 = arith.constant 0 : index
    %99 = vector.load %arg7[%c1_109, %c8_110, %c0_111] : memref<18x32x128xf32, #tpu.memory_space<vmem>>, vector<16x16x32xf32>
    %100 = vector.shape_cast %99 : vector<16x16x32xf32> to vector<256x32xf32>
    %c13 = arith.constant 13 : index
    %c0_112 = arith.constant 0 : index
    %c0_113 = arith.constant 0 : index
    %101 = vector.load %arg2[%c13, %c0_112, %c0_113] : memref<27x32x128xf32, #tpu.memory_space<vmem>>, vector<1x32x128xf32>
    %102 = vector.shape_cast %101 : vector<1x32x128xf32> to vector<32x128xf32>
    %cst_114 = arith.constant dense<0.000000e+00> : vector<256x128xf32>
    %103 = tpu.matmul %100, %102, %cst_114 {dimension_numbers = #tpu.dot_dimension_numbers<[1], [0], [0], [1], [0, 0, 1, 1], [], []>} : vector<256x32xf32>, vector<32x128xf32>, vector<256x128xf32> -> vector<256x128xf32>
    %104 = arith.addf %98, %103 : vector<256x128xf32>
    %c1_115 = arith.constant 1 : index
    %c9_116 = arith.constant 9 : index
    %c0_117 = arith.constant 0 : index
    %105 = vector.load %arg7[%c1_115, %c9_116, %c0_117] : memref<18x32x128xf32, #tpu.memory_space<vmem>>, vector<16x16x32xf32>
    %106 = vector.shape_cast %105 : vector<16x16x32xf32> to vector<256x32xf32>
    %c14 = arith.constant 14 : index
    %c0_118 = arith.constant 0 : index
    %c0_119 = arith.constant 0 : index
    %107 = vector.load %arg2[%c14, %c0_118, %c0_119] : memref<27x32x128xf32, #tpu.memory_space<vmem>>, vector<1x32x128xf32>
    %108 = vector.shape_cast %107 : vector<1x32x128xf32> to vector<32x128xf32>
    %cst_120 = arith.constant dense<0.000000e+00> : vector<256x128xf32>
    %109 = tpu.matmul %106, %108, %cst_120 {dimension_numbers = #tpu.dot_dimension_numbers<[1], [0], [0], [1], [0, 0, 1, 1], [], []>} : vector<256x32xf32>, vector<32x128xf32>, vector<256x128xf32> -> vector<256x128xf32>
    %110 = arith.addf %104, %109 : vector<256x128xf32>
    %c2_121 = arith.constant 2 : index
    %c7_122 = arith.constant 7 : index
    %c0_123 = arith.constant 0 : index
    %111 = vector.load %arg7[%c2_121, %c7_122, %c0_123] : memref<18x32x128xf32, #tpu.memory_space<vmem>>, vector<16x16x32xf32>
    %112 = vector.shape_cast %111 : vector<16x16x32xf32> to vector<256x32xf32>
    %c15 = arith.constant 15 : index
    %c0_124 = arith.constant 0 : index
    %c0_125 = arith.constant 0 : index
    %113 = vector.load %arg2[%c15, %c0_124, %c0_125] : memref<27x32x128xf32, #tpu.memory_space<vmem>>, vector<1x32x128xf32>
    %114 = vector.shape_cast %113 : vector<1x32x128xf32> to vector<32x128xf32>
    %cst_126 = arith.constant dense<0.000000e+00> : vector<256x128xf32>
    %115 = tpu.matmul %112, %114, %cst_126 {dimension_numbers = #tpu.dot_dimension_numbers<[1], [0], [0], [1], [0, 0, 1, 1], [], []>} : vector<256x32xf32>, vector<32x128xf32>, vector<256x128xf32> -> vector<256x128xf32>
    %116 = arith.addf %110, %115 : vector<256x128xf32>
    %c2_127 = arith.constant 2 : index
    %c8_128 = arith.constant 8 : index
    %c0_129 = arith.constant 0 : index
    %117 = vector.load %arg7[%c2_127, %c8_128, %c0_129] : memref<18x32x128xf32, #tpu.memory_space<vmem>>, vector<16x16x32xf32>
    %118 = vector.shape_cast %117 : vector<16x16x32xf32> to vector<256x32xf32>
    %c16 = arith.constant 16 : index
    %c0_130 = arith.constant 0 : index
    %c0_131 = arith.constant 0 : index
    %119 = vector.load %arg2[%c16, %c0_130, %c0_131] : memref<27x32x128xf32, #tpu.memory_space<vmem>>, vector<1x32x128xf32>
    %120 = vector.shape_cast %119 : vector<1x32x128xf32> to vector<32x128xf32>
    %cst_132 = arith.constant dense<0.000000e+00> : vector<256x128xf32>
    %121 = tpu.matmul %118, %120, %cst_132 {dimension_numbers = #tpu.dot_dimension_numbers<[1], [0], [0], [1], [0, 0, 1, 1], [], []>} : vector<256x32xf32>, vector<32x128xf32>, vector<256x128xf32> -> vector<256x128xf32>
    %122 = arith.addf %116, %121 : vector<256x128xf32>
    %c2_133 = arith.constant 2 : index
    %c9_134 = arith.constant 9 : index
    %c0_135 = arith.constant 0 : index
    %123 = vector.load %arg7[%c2_133, %c9_134, %c0_135] : memref<18x32x128xf32, #tpu.memory_space<vmem>>, vector<16x16x32xf32>
    %124 = vector.shape_cast %123 : vector<16x16x32xf32> to vector<256x32xf32>
    %c17_136 = arith.constant 17 : index
    %c0_137 = arith.constant 0 : index
    %c0_138 = arith.constant 0 : index
    %125 = vector.load %arg2[%c17_136, %c0_137, %c0_138] : memref<27x32x128xf32, #tpu.memory_space<vmem>>, vector<1x32x128xf32>
    %126 = vector.shape_cast %125 : vector<1x32x128xf32> to vector<32x128xf32>
    %cst_139 = arith.constant dense<0.000000e+00> : vector<256x128xf32>
    %127 = tpu.matmul %124, %126, %cst_139 {dimension_numbers = #tpu.dot_dimension_numbers<[1], [0], [0], [1], [0, 0, 1, 1], [], []>} : vector<256x32xf32>, vector<32x128xf32>, vector<256x128xf32> -> vector<256x128xf32>
    %128 = arith.addf %122, %127 : vector<256x128xf32>
    %c1_140 = arith.constant 1 : index
    %c0_141 = arith.constant 0 : index
    %c0_142 = arith.constant 0 : index
    %129 = vector.load %arg3[%c1_140, %c0_141, %c0_142] : memref<3x1x128xf32, #tpu.memory_space<vmem>>, vector<1x1x128xf32>
    %130 = vector.shape_cast %129 : vector<1x1x128xf32> to vector<1x128xf32>
    %131 = vector.broadcast %130 : vector<1x128xf32> to vector<256x128xf32>
    %132 = arith.addf %128, %131 : vector<256x128xf32>
    %cst_143 = arith.constant 0.000000e+00 : f32
    %133 = vector.broadcast %cst_143 : f32 to vector<256x128xf32>
    %134 = arith.maximumf %132, %133 : vector<256x128xf32>
    %c1_144 = arith.constant 1 : index
    %c8_145 = arith.constant 8 : index
    %c0_146 = arith.constant 0 : index
    %135 = vector.load %arg7[%c1_144, %c8_145, %c0_146] : memref<18x32x128xf32, #tpu.memory_space<vmem>>, vector<16x16x128xf32>
    %136 = vector.shape_cast %134 : vector<256x128xf32> to vector<16x16x128xf32>
    %137 = arith.addf %135, %136 : vector<16x16x128xf32>
    %c1_147 = arith.constant 1 : index
    %c8_148 = arith.constant 8 : index
    %c0_149 = arith.constant 0 : index
    %138 = vector.load %arg7[%c1_147, %c8_148, %c0_149] : memref<18x32x128xf32, #tpu.memory_space<vmem>>, vector<16x16x128xf32>
    tpu.vector_store %arg7[%c1_147, %c8_148, %c0_149], %137 {strides = array<i32>} : memref<18x32x128xf32, #tpu.memory_space<vmem>>, vector<16x16x128xf32>,
    %c0_150 = arith.constant 0 : index
    %c7_151 = arith.constant 7 : index
    %c0_152 = arith.constant 0 : index
    %139 = vector.load %arg7[%c0_150, %c7_151, %c0_152] : memref<18x32x128xf32, #tpu.memory_space<vmem>>, vector<16x16x32xf32>
    %140 = vector.shape_cast %139 : vector<16x16x32xf32> to vector<256x32xf32>
    %c18 = arith.constant 18 : index
    %c0_153 = arith.constant 0 : index
    %c0_154 = arith.constant 0 : index
    %141 = vector.load %arg2[%c18, %c0_153, %c0_154] : memref<27x32x128xf32, #tpu.memory_space<vmem>>, vector<1x32x128xf32>
    %142 = vector.shape_cast %141 : vector<1x32x128xf32> to vector<32x128xf32>
    %cst_155 = arith.constant dense<0.000000e+00> : vector<256x128xf32>
    %143 = tpu.matmul %140, %142, %cst_155 {dimension_numbers = #tpu.dot_dimension_numbers<[1], [0], [0], [1], [0, 0, 1, 1], [], []>} : vector<256x32xf32>, vector<32x128xf32>, vector<256x128xf32> -> vector<256x128xf32>
    %c0_156 = arith.constant 0 : index
    %c8_157 = arith.constant 8 : index
    %c0_158 = arith.constant 0 : index
    %144 = vector.load %arg7[%c0_156, %c8_157, %c0_158] : memref<18x32x128xf32, #tpu.memory_space<vmem>>, vector<16x16x32xf32>
    %145 = vector.shape_cast %144 : vector<16x16x32xf32> to vector<256x32xf32>
    %c19 = arith.constant 19 : index
    %c0_159 = arith.constant 0 : index
    %c0_160 = arith.constant 0 : index
    %146 = vector.load %arg2[%c19, %c0_159, %c0_160] : memref<27x32x128xf32, #tpu.memory_space<vmem>>, vector<1x32x128xf32>
    %147 = vector.shape_cast %146 : vector<1x32x128xf32> to vector<32x128xf32>
    %cst_161 = arith.constant dense<0.000000e+00> : vector<256x128xf32>
    %148 = tpu.matmul %145, %147, %cst_161 {dimension_numbers = #tpu.dot_dimension_numbers<[1], [0], [0], [1], [0, 0, 1, 1], [], []>} : vector<256x32xf32>, vector<32x128xf32>, vector<256x128xf32> -> vector<256x128xf32>
    %149 = arith.addf %143, %148 : vector<256x128xf32>
    %c0_162 = arith.constant 0 : index
    %c9_163 = arith.constant 9 : index
    %c0_164 = arith.constant 0 : index
    %150 = vector.load %arg7[%c0_162, %c9_163, %c0_164] : memref<18x32x128xf32, #tpu.memory_space<vmem>>, vector<16x16x32xf32>
    %151 = vector.shape_cast %150 : vector<16x16x32xf32> to vector<256x32xf32>
    %c20 = arith.constant 20 : index
    %c0_165 = arith.constant 0 : index
    %c0_166 = arith.constant 0 : index
    %152 = vector.load %arg2[%c20, %c0_165, %c0_166] : memref<27x32x128xf32, #tpu.memory_space<vmem>>, vector<1x32x128xf32>
    %153 = vector.shape_cast %152 : vector<1x32x128xf32> to vector<32x128xf32>
    %cst_167 = arith.constant dense<0.000000e+00> : vector<256x128xf32>
    %154 = tpu.matmul %151, %153, %cst_167 {dimension_numbers = #tpu.dot_dimension_numbers<[1], [0], [0], [1], [0, 0, 1, 1], [], []>} : vector<256x32xf32>, vector<32x128xf32>, vector<256x128xf32> -> vector<256x128xf32>
    %155 = arith.addf %149, %154 : vector<256x128xf32>
    %c1_168 = arith.constant 1 : index
    %c7_169 = arith.constant 7 : index
    %c0_170 = arith.constant 0 : index
    %156 = vector.load %arg7[%c1_168, %c7_169, %c0_170] : memref<18x32x128xf32, #tpu.memory_space<vmem>>, vector<16x16x32xf32>
    %157 = vector.shape_cast %156 : vector<16x16x32xf32> to vector<256x32xf32>
    %c21 = arith.constant 21 : index
    %c0_171 = arith.constant 0 : index
    %c0_172 = arith.constant 0 : index
    %158 = vector.load %arg2[%c21, %c0_171, %c0_172] : memref<27x32x128xf32, #tpu.memory_space<vmem>>, vector<1x32x128xf32>
    %159 = vector.shape_cast %158 : vector<1x32x128xf32> to vector<32x128xf32>
    %cst_173 = arith.constant dense<0.000000e+00> : vector<256x128xf32>
    %160 = tpu.matmul %157, %159, %cst_173 {dimension_numbers = #tpu.dot_dimension_numbers<[1], [0], [0], [1], [0, 0, 1, 1], [], []>} : vector<256x32xf32>, vector<32x128xf32>, vector<256x128xf32> -> vector<256x128xf32>
    %161 = arith.addf %155, %160 : vector<256x128xf32>
    %c1_174 = arith.constant 1 : index
    %c8_175 = arith.constant 8 : index
    %c0_176 = arith.constant 0 : index
    %162 = vector.load %arg7[%c1_174, %c8_175, %c0_176] : memref<18x32x128xf32, #tpu.memory_space<vmem>>, vector<16x16x32xf32>
    %163 = vector.shape_cast %162 : vector<16x16x32xf32> to vector<256x32xf32>
    %c22 = arith.constant 22 : index
    %c0_177 = arith.constant 0 : index
    %c0_178 = arith.constant 0 : index
    %164 = vector.load %arg2[%c22, %c0_177, %c0_178] : memref<27x32x128xf32, #tpu.memory_space<vmem>>, vector<1x32x128xf32>
    %165 = vector.shape_cast %164 : vector<1x32x128xf32> to vector<32x128xf32>
    %cst_179 = arith.constant dense<0.000000e+00> : vector<256x128xf32>
    %166 = tpu.matmul %163, %165, %cst_179 {dimension_numbers = #tpu.dot_dimension_numbers<[1], [0], [0], [1], [0, 0, 1, 1], [], []>} : vector<256x32xf32>, vector<32x128xf32>, vector<256x128xf32> -> vector<256x128xf32>
    %167 = arith.addf %161, %166 : vector<256x128xf32>
    %c1_180 = arith.constant 1 : index
    %c9_181 = arith.constant 9 : index
    %c0_182 = arith.constant 0 : index
    %168 = vector.load %arg7[%c1_180, %c9_181, %c0_182] : memref<18x32x128xf32, #tpu.memory_space<vmem>>, vector<16x16x32xf32>
    %169 = vector.shape_cast %168 : vector<16x16x32xf32> to vector<256x32xf32>
    %c23 = arith.constant 23 : index
    %c0_183 = arith.constant 0 : index
    %c0_184 = arith.constant 0 : index
    %170 = vector.load %arg2[%c23, %c0_183, %c0_184] : memref<27x32x128xf32, #tpu.memory_space<vmem>>, vector<1x32x128xf32>
    %171 = vector.shape_cast %170 : vector<1x32x128xf32> to vector<32x128xf32>
    %cst_185 = arith.constant dense<0.000000e+00> : vector<256x128xf32>
    %172 = tpu.matmul %169, %171, %cst_185 {dimension_numbers = #tpu.dot_dimension_numbers<[1], [0], [0], [1], [0, 0, 1, 1], [], []>} : vector<256x32xf32>, vector<32x128xf32>, vector<256x128xf32> -> vector<256x128xf32>
    %173 = arith.addf %167, %172 : vector<256x128xf32>
    %c2_186 = arith.constant 2 : index
    %c7_187 = arith.constant 7 : index
    %c0_188 = arith.constant 0 : index
    %174 = vector.load %arg7[%c2_186, %c7_187, %c0_188] : memref<18x32x128xf32, #tpu.memory_space<vmem>>, vector<16x16x32xf32>
    %175 = vector.shape_cast %174 : vector<16x16x32xf32> to vector<256x32xf32>
    %c24_189 = arith.constant 24 : index
    %c0_190 = arith.constant 0 : index
    %c0_191 = arith.constant 0 : index
    %176 = vector.load %arg2[%c24_189, %c0_190, %c0_191] : memref<27x32x128xf32, #tpu.memory_space<vmem>>, vector<1x32x128xf32>
    %177 = vector.shape_cast %176 : vector<1x32x128xf32> to vector<32x128xf32>
    %cst_192 = arith.constant dense<0.000000e+00> : vector<256x128xf32>
    %178 = tpu.matmul %175, %177, %cst_192 {dimension_numbers = #tpu.dot_dimension_numbers<[1], [0], [0], [1], [0, 0, 1, 1], [], []>} : vector<256x32xf32>, vector<32x128xf32>, vector<256x128xf32> -> vector<256x128xf32>
    %179 = arith.addf %173, %178 : vector<256x128xf32>
    %c2_193 = arith.constant 2 : index
    %c8_194 = arith.constant 8 : index
    %c0_195 = arith.constant 0 : index
    %180 = vector.load %arg7[%c2_193, %c8_194, %c0_195] : memref<18x32x128xf32, #tpu.memory_space<vmem>>, vector<16x16x32xf32>
    %181 = vector.shape_cast %180 : vector<16x16x32xf32> to vector<256x32xf32>
    %c25 = arith.constant 25 : index
    %c0_196 = arith.constant 0 : index
    %c0_197 = arith.constant 0 : index
    %182 = vector.load %arg2[%c25, %c0_196, %c0_197] : memref<27x32x128xf32, #tpu.memory_space<vmem>>, vector<1x32x128xf32>
    %183 = vector.shape_cast %182 : vector<1x32x128xf32> to vector<32x128xf32>
    %cst_198 = arith.constant dense<0.000000e+00> : vector<256x128xf32>
    %184 = tpu.matmul %181, %183, %cst_198 {dimension_numbers = #tpu.dot_dimension_numbers<[1], [0], [0], [1], [0, 0, 1, 1], [], []>} : vector<256x32xf32>, vector<32x128xf32>, vector<256x128xf32> -> vector<256x128xf32>
    %185 = arith.addf %179, %184 : vector<256x128xf32>
    %c2_199 = arith.constant 2 : index
    %c9_200 = arith.constant 9 : index
    %c0_201 = arith.constant 0 : index
    %186 = vector.load %arg7[%c2_199, %c9_200, %c0_201] : memref<18x32x128xf32, #tpu.memory_space<vmem>>, vector<16x16x32xf32>
    %187 = vector.shape_cast %186 : vector<16x16x32xf32> to vector<256x32xf32>
    %c26 = arith.constant 26 : index
    %c0_202 = arith.constant 0 : index
    %c0_203 = arith.constant 0 : index
    %188 = vector.load %arg2[%c26, %c0_202, %c0_203] : memref<27x32x128xf32, #tpu.memory_space<vmem>>, vector<1x32x128xf32>
    %189 = vector.shape_cast %188 : vector<1x32x128xf32> to vector<32x128xf32>
    %cst_204 = arith.constant dense<0.000000e+00> : vector<256x128xf32>
    %190 = tpu.matmul %187, %189, %cst_204 {dimension_numbers = #tpu.dot_dimension_numbers<[1], [0], [0], [1], [0, 0, 1, 1], [], []>} : vector<256x32xf32>, vector<32x128xf32>, vector<256x128xf32> -> vector<256x128xf32>
    %191 = arith.addf %185, %190 : vector<256x128xf32>
    %c2_205 = arith.constant 2 : index
    %c0_206 = arith.constant 0 : index
    %c0_207 = arith.constant 0 : index
    %192 = vector.load %arg3[%c2_205, %c0_206, %c0_207] : memref<3x1x128xf32, #tpu.memory_space<vmem>>, vector<1x1x128xf32>
    %193 = vector.shape_cast %192 : vector<1x1x128xf32> to vector<1x128xf32>
    %194 = vector.broadcast %193 : vector<1x128xf32> to vector<256x128xf32>
    %195 = arith.addf %191, %194 : vector<256x128xf32>
    %cst_208 = arith.constant 0.000000e+00 : f32
    %196 = vector.broadcast %cst_208 : f32 to vector<256x128xf32>
    %197 = arith.maximumf %195, %196 : vector<256x128xf32>
    %c1_209 = arith.constant 1 : index
    %c8_210 = arith.constant 8 : index
    %c0_211 = arith.constant 0 : index
    %198 = vector.load %arg7[%c1_209, %c8_210, %c0_211] : memref<18x32x128xf32, #tpu.memory_space<vmem>>, vector<16x16x128xf32>
    %199 = vector.shape_cast %197 : vector<256x128xf32> to vector<16x16x128xf32>
    %200 = arith.addf %198, %199 : vector<16x16x128xf32>
    %c1_212 = arith.constant 1 : index
    %c8_213 = arith.constant 8 : index
    %c0_214 = arith.constant 0 : index
    %201 = vector.load %arg7[%c1_212, %c8_213, %c0_214] : memref<18x32x128xf32, #tpu.memory_space<vmem>>, vector<16x16x128xf32>
    tpu.vector_store %arg7[%c1_212, %c8_213, %c0_214], %200 {strides = array<i32>} : memref<18x32x128xf32, #tpu.memory_space<vmem>>, vector<16x16x128xf32>,
    %c1_215 = arith.constant 1 : index
    %c8_216 = arith.constant 8 : index
    %c0_217 = arith.constant 0 : index
    %202 = vector.load %arg7[%c1_215, %c8_216, %c0_217] : memref<18x32x128xf32, #tpu.memory_space<vmem>>, vector<16x16x128xf32>
    %203 = vector.shape_cast %202 : vector<16x16x128xf32> to vector<256x128xf32>
    %c0_218 = arith.constant 0 : index
    %c0_219 = arith.constant 0 : index
    %204 = vector.load %arg4[%c0_218, %c0_219] : memref<128x16xf32, #tpu.memory_space<vmem>>, vector<128x16xf32>
    %cst_220 = arith.constant dense<0.000000e+00> : vector<256x16xf32>
    %205 = tpu.matmul %203, %204, %cst_220 {dimension_numbers = #tpu.dot_dimension_numbers<[1], [0], [0], [1], [0, 0, 1, 1], [], []>} : vector<256x128xf32>, vector<128x16xf32>, vector<256x16xf32> -> vector<256x16xf32>
    %c0_221 = arith.constant 0 : index
    %c0_222 = arith.constant 0 : index
    %206 = vector.load %arg5[%c0_221, %c0_222] : memref<1x16xf32, #tpu.memory_space<vmem>>, vector<1x16xf32>
    %207 = vector.broadcast %206 : vector<1x16xf32> to vector<256x16xf32>
    %208 = arith.addf %205, %207 : vector<256x16xf32>
    %209 = vector.shape_cast %208 : vector<256x16xf32> to vector<16x16x16xf32>
    %c0_223 = arith.constant 0 : index
    %c0_224 = arith.constant 0 : index
    %c0_225 = arith.constant 0 : index
    %c0_226 = arith.constant 0 : index
    %210 = vector.load %arg1[%c0_223, %c0_224, %c0_225, %c0_226] : memref<1x16x16x16xf32, #tpu.memory_space<vmem>>, vector<1x16x16x16xf32>
    %211 = vector.shape_cast %210 : vector<1x16x16x16xf32> to vector<16x16x16xf32>
    %212 = arith.addf %209, %211 : vector<16x16x16xf32>
    %c0_227 = arith.constant 0 : index
    %c0_228 = arith.constant 0 : index
    %c0_229 = arith.constant 0 : index
    %c0_230 = arith.constant 0 : index
    %213 = vector.load %arg6[%c0_227, %c0_228, %c0_229, %c0_230] : memref<1x16x16x16xf32, #tpu.memory_space<vmem>>, vector<1x16x16x16xf32>
    %214 = vector.shape_cast %213 : vector<1x16x16x16xf32> to vector<16x16x16xf32>
    %215 = vector.shape_cast %212 : vector<16x16x16xf32> to vector<1x16x16x16xf32>
    tpu.vector_store %arg6[%c0_227, %c0_228, %c0_229, %c0_230], %215 {strides = array<i32>} : memref<1x16x16x16xf32, #tpu.memory_space<vmem>>, vector<1x16x16x16xf32>,
    return
  }
  func.func @transform_0(%arg0: i32) -> (i32, i32, i32, i32) {
    %c0_i32 = arith.constant 0 : i32
    %c0_i32_0 = arith.constant 0 : i32
    %c0_i32_1 = arith.constant 0 : i32
    %c0_i32_2 = arith.constant 0 : i32
    return %arg0, %c0_i32, %c0_i32_0, %c0_i32_1 : i32, i32, i32, i32
  }
  func.func @transform_1(%arg0: i32) -> (i32, i32, i32) {
    %c0_i32 = arith.constant 0 : i32
    %c0_i32_0 = arith.constant 0 : i32
    %c0_i32_1 = arith.constant 0 : i32
    %c0_i32_2 = arith.constant 0 : i32
    return %c0_i32, %c0_i32_0, %c0_i32_1 : i32, i32, i32
  }
  func.func @transform_2(%arg0: i32) -> (i32, i32, i32) {
    %c0_i32 = arith.constant 0 : i32
    %c0_i32_0 = arith.constant 0 : i32
    %c0_i32_1 = arith.constant 0 : i32
    %c0_i32_2 = arith.constant 0 : i32
    return %c0_i32, %c0_i32_0, %c0_i32_1 : i32, i32, i32
  }
  func.func @transform_3(%arg0: i32) -> (i32, i32) {
    %c0_i32 = arith.constant 0 : i32
    %c0_i32_0 = arith.constant 0 : i32
    %c0_i32_1 = arith.constant 0 : i32
    return %c0_i32, %c0_i32_0 : i32, i32
  }
  func.func @transform_4(%arg0: i32) -> (i32, i32) {
    %c0_i32 = arith.constant 0 : i32
    %c0_i32_0 = arith.constant 0 : i32
    %c0_i32_1 = arith.constant 0 : i32
    return %c0_i32, %c0_i32_0 : i32, i32
  }
  func.func @transform_5(%arg0: i32) -> (i32, i32, i32, i32) {
    %c0_i32 = arith.constant 0 : i32
    %c0_i32_0 = arith.constant 0 : i32
    %c0_i32_1 = arith.constant 0 : i32
    %c0_i32_2 = arith.constant 0 : i32
    return %arg0, %c0_i32, %c0_i32_0, %c0_i32_1 : i32, i32, i32, i32
  }
}

</mosaic_0001>

<llo_original>
// kernel: tpu_custom_call.1
$region0: #{tpu_custom_call.1}
  #allocation0 [shape = 'u32[]', space=smem, size = 0x4, offset = 0x4, fixed_abs, tag = 'smem constant byte address 0x4 - core index']
  #allocation1 [shape = 'u32[144,128]{1,0:T(1,128)}', space=vmem, size = 0x12000, scoped, tag = 'internal scratch']
  #allocation2 [shape = 'f32[18,32,128]{2,1,0:T(8,128)}', space=vmem, size = 0x48000, scoped, tag = 'scratch operand']
  %s0 = inlined_call_operand.hbm [shape: f32[2,16,16,16], index: 0, kind: input, shape index: {}]
  %s1 = inlined_call_operand.hbm [shape: f32[27,32,128], index: 1, kind: input, shape index: {}]
  %s2 = inlined_call_operand.vmem [shape: f32[3,1,128], index: 2, kind: input, shape index: {}]
  %s3 = inlined_call_operand.vmem [shape: f32[128,16], index: 3, kind: input, shape index: {}]
  %s4 = inlined_call_operand.vmem [shape: f32[1,16], index: 4, kind: input, shape index: {}]
  %s5 = inlined_call_operand.hbm [shape: f32[2,16,16,16], index: 5, kind: output, shape index: {}]
  %s6 = sld [smem:[#allocation0]]
  $region61: #{tpu_custom_call.1} parent=0
    _
  %s8 = ssub.s32 1, %s6
  %s9 = scalar_select 0, %s8, %s6
  $region1: #{tpu_custom_call.1} parent=0
    #allocation3 [shape = 'u8[262144]{0}', space=vmem, size = 0x40000, scoped, tag = 'input window, operand 0']
    #allocation4 [shape = 's32[2]{0}', space=sflag, size = 0x8, scoped, tag = 'scoped memory for tpu_custom_call.1']
    #allocation5 [shape = 's32[2]{0}', space=sflag, size = 0x8, scoped, tag = 'scoped memory for tpu_custom_call.1']
    #allocation6 [shape = 'u8[442368]{0}', space=vmem, size = 0x6c000, scoped, tag = 'input window, operand 1, single buffered']
    #allocation7 [shape = 's32[1]{0}', space=sflag, size = 0x4, scoped, tag = 'scoped memory for tpu_custom_call.1']
    #allocation8 [shape = 'u8[262144]{0}', space=vmem, size = 0x40000, scoped, tag = 'output window, operand 0']
    %10 = vsyncpa [#allocation4], 0
    %s11 = scalar_lea.sflag [#allocation4], 1
    %12 = vsyncpa %s11, 0
    %13 = vsyncpa [#allocation7], 0
    %14 = vsyncpa [#allocation5], 0
    %s15 = scalar_lea.sflag [#allocation5], 1
    %16 = vsyncpa %s15, 0
    loop: start=0, step=1, limit=4
    $region2: #{tpu_custom_call.1} parent=1 // loop_pre_header
      _
    $region3: #{tpu_custom_call.1} parent=1 // loop_header
      %s18 = sphi 0, %s22
      %p19 = scmp.ge.s32.totalorder %s18, 4
      %s28 = sphi 0, %s30
      %s31 = sphi 0, %s28
      %s32 = sphi 0, %s31
      %s48 = sphi 0, %s32
      %s52 = sphi 0, %s52
      %s54 = sphi 0, %s52
      %s55 = sphi 0, %s54
      %s69 = sphi 0, %s55
      %s73 = sphi 0, %s73
      %s75 = sphi 0, %s73
      %s76 = sphi 0, %s75
      %s90 = sphi 0, %s76
      %s94 = sphi 0, %s94
      %s96 = sphi 0, %s94
      %s97 = sphi 0, %s96
      %s111 = sphi 0, %s97
      %s115 = sphi 0, %s115
      %s117 = sphi 0, %s115
      %s118 = sphi 0, %s117
      %s132 = sphi 0, %s118
      %s138 = sphi 0, %s140
      %s141 = sphi 0, %s138
      %s142 = sphi 0, %s141
      %s158 = sphi 0, %s142
    $region4: #{tpu_custom_call.1} parent=1 // loop_header_branch
      %21 = sbr.rel (%p19) target = $region8
    $region5: #{tpu_custom_call.1} parent=1 // loop_body
      %s23 = ssub.s32 %s18, 1
      %s24 = ssub.s32 %s18, 2
      %s25 = sadd.s32 %s18, 1
      %s26 = ssub.s32 %s18, %s25
      %p27 = scmp.eq.s32.totalorder %s26, 0
      %s29 = sadd.s32 %s28, 1
      %s30 = scalar_select %p27, %s28, %s29
      %p33 = pneg %p27
      %p34 = scmp.eq.s32.totalorder %s18, 1
      %p35 = por %p33, %p34
      %p36 = scmp.ne.s32.totalorder %s28, %s31
      %p37 = scmp.eq.s32.totalorder %s18, 0
      %p38 = por %p36, %p37
      %p39 = scmp.ne.s32.totalorder %s28, %s31
      %p40 = scmp.eq.s32.totalorder %s23, 1
      %p41 = por %p39, %p40
      %p42 = scmp.ne.s32.totalorder %s31, %s32
      %p43 = scmp.eq.s32.totalorder %s23, 0
      %p44 = por %p42, %p43
      %p45 = scmp.ne.s32.totalorder %s31, %s32
      %p46 = scmp.eq.s32.totalorder %s24, 1
      %p47 = por %p45, %p46
      %p49 = scmp.ne.s32.totalorder %s32, %s48
      %p50 = scmp.eq.s32.totalorder %s24, 0
      %p51 = por %p49, %p50
      %s53 = sadd.s32 %s52, 1
      %p56 = scmp.eq.s32.totalorder %s18, 1
      %p57 = scmp.ne.s32.totalorder %s52, %s54
      %p58 = scmp.eq.s32.totalorder %s18, 0
      %p59 = por %p57, %p58
      %p60 = scmp.ne.s32.totalorder %s52, %s54
      %p61 = scmp.eq.s32.totalorder %s23, 1
      %p62 = por %p60, %p61
      %p63 = scmp.ne.s32.totalorder %s54, %s55
      %p64 = scmp.eq.s32.totalorder %s23, 0
      %p65 = por %p63, %p64
      %p66 = scmp.ne.s32.totalorder %s54, %s55
      %p67 = scmp.eq.s32.totalorder %s24, 1
      %p68 = por %p66, %p67
      %p70 = scmp.ne.s32.totalorder %s55, %s69
      %p71 = scmp.eq.s32.totalorder %s24, 0
      %p72 = por %p70, %p71
      %s74 = sadd.s32 %s73, 1
      %p77 = scmp.eq.s32.totalorder %s18, 1
      %p78 = scmp.ne.s32.totalorder %s73, %s75
      %p79 = scmp.eq.s32.totalorder %s18, 0
      %p80 = por %p78, %p79
      %p81 = scmp.ne.s32.totalorder %s73, %s75
      %p82 = scmp.eq.s32.totalorder %s23, 1
      %p83 = por %p81, %p82
      %p84 = scmp.ne.s32.totalorder %s75, %s76
      %p85 = scmp.eq.s32.totalorder %s23, 0
      %p86 = por %p84, %p85
      %p87 = scmp.ne.s32.totalorder %s75, %s76
      %p88 = scmp.eq.s32.totalorder %s24, 1
      %p89 = por %p87, %p88
      %p91 = scmp.ne.s32.totalorder %s76, %s90
      %p92 = scmp.eq.s32.totalorder %s24, 0
      %p93 = por %p91, %p92
      %s95 = sadd.s32 %s94, 1
      %p98 = scmp.eq.s32.totalorder %s18, 1
      %p99 = scmp.ne.s32.totalorder %s94, %s96
      %p100 = scmp.eq.s32.totalorder %s18, 0
      %p101 = por %p99, %p100
      %p102 = scmp.ne.s32.totalorder %s94, %s96
      %p103 = scmp.eq.s32.totalorder %s23, 1
      %p104 = por %p102, %p103
      %p105 = scmp.ne.s32.totalorder %s96, %s97
      %p106 = scmp.eq.s32.totalorder %s23, 0
      %p107 = por %p105, %p106
      %p108 = scmp.ne.s32.totalorder %s96, %s97
      %p109 = scmp.eq.s32.totalorder %s24, 1
      %p110 = por %p108, %p109
      %p112 = scmp.ne.s32.totalorder %s97, %s111
      %p113 = scmp.eq.s32.totalorder %s24, 0
      %p114 = por %p112, %p113
      %s116 = sadd.s32 %s115, 1
      %p119 = scmp.eq.s32.totalorder %s18, 1
      %p120 = scmp.ne.s32.totalorder %s115, %s117
      %p121 = scmp.eq.s32.totalorder %s18, 0
      %p122 = por %p120, %p121
      %p123 = scmp.ne.s32.totalorder %s115, %s117
      %p124 = scmp.eq.s32.totalorder %s23, 1
      %p125 = por %p123, %p124
      %p126 = scmp.ne.s32.totalorder %s117, %s118
      %p127 = scmp.eq.s32.totalorder %s23, 0
      %p128 = por %p126, %p127
      %p129 = scmp.ne.s32.totalorder %s117, %s118
      %p130 = scmp.eq.s32.totalorder %s24, 1
      %p131 = por %p129, %p130
      %p133 = scmp.ne.s32.totalorder %s118, %s132
      %p134 = scmp.eq.s32.totalorder %s24, 0
      %p135 = por %p133, %p134
      %s136 = ssub.s32 %s18, %s25
      %p137 = scmp.eq.s32.totalorder %s136, 0
      %s139 = sadd.s32 %s138, 1
      %s140 = scalar_select %p137, %s138, %s139
      %p143 = pneg %p137
      %p144 = scmp.eq.s32.totalorder %s18, 1
      %p145 = por %p143, %p144
      %p146 = scmp.ne.s32.totalorder %s138, %s141
      %p147 = scmp.eq.s32.totalorder %s18, 0
      %p148 = por %p146, %p147
      %p149 = scmp.ne.s32.totalorder %s138, %s141
      %p150 = scmp.eq.s32.totalorder %s23, 1
      %p151 = por %p149, %p150
      %p152 = scmp.ne.s32.totalorder %s141, %s142
      %p153 = scmp.eq.s32.totalorder %s23, 0
      %p154 = por %p152, %p153
      %p155 = scmp.ne.s32.totalorder %s141, %s142
      %p156 = scmp.eq.s32.totalorder %s24, 1
      %p157 = por %p155, %p156
      %p159 = scmp.ne.s32.totalorder %s142, %s158
      %p160 = scmp.eq.s32.totalorder %s24, 0
      %p161 = por %p159, %p160
      %p162 = scmp.le.s32.totalorder 1, %s18
      %p163 = scmp.lt.s32.totalorder %s18, 3
      %p164 = pnand %p162, %p163
      %p165 = pneg %p164
      // Predicated region
      $region9: #{tpu_custom_call.1} parent=5 // pred_check
        _
      $region10: #{tpu_custom_call.1} parent=5 // pred_check_branch
        %167 = sbr.rel (%p164) target = $region12
      $region11: #{tpu_custom_call.1} parent=5 // pred_region
        %s168 = ssub.s32 %s18, 1
        // Predicated region
        $region13: #{tpu_custom_call.1} parent=11 // pred_check
          %p169 = pneg %p65
        $region14: #{tpu_custom_call.1} parent=11 // pred_check_branch
          %171 = sbr.rel (%p169) target = $region16
        $region15: #{tpu_custom_call.1} parent=11 // pred_region
          %s173 = ssub.s32 13824, 13824
          %174 = vsyncadd [#allocation7], %s173
          %s175 = sshll.u32 [#allocation6], 4
          %s176 = int_to_ptr.vmem [resolvable:$true] %s175
          %181 = dma.hbm_to_vmem [thread:$0]  %s1, 13824, %s176, [#allocation7], 128, 128, 8
        $region16: #{tpu_custom_call.1} parent=11 // pred_fallthru
          _
        // Predicated region
        $region17: #{tpu_custom_call.1} parent=11 // pred_check
          %p182 = pneg %p86
        $region18: #{tpu_custom_call.1} parent=11 // pred_check_branch
          %184 = sbr.rel (%p182) target = $region20
        $region19: #{tpu_custom_call.1} parent=11 // pred_region
          _
        $region20: #{tpu_custom_call.1} parent=11 // pred_fallthru
          _
        // Predicated region
        $region21: #{tpu_custom_call.1} parent=11 // pred_check
          %p185 = pneg %p107
        $region22: #{tpu_custom_call.1} parent=11 // pred_check_branch
          %187 = sbr.rel (%p185) target = $region24
        $region23: #{tpu_custom_call.1} parent=11 // pred_region
          _
        $region24: #{tpu_custom_call.1} parent=11 // pred_fallthru
          _
        // Predicated region
        $region25: #{tpu_custom_call.1} parent=11 // pred_check
          %p188 = pneg %p128
        $region26: #{tpu_custom_call.1} parent=11 // pred_check_branch
          %190 = sbr.rel (%p188) target = $region28
        $region27: #{tpu_custom_call.1} parent=11 // pred_region
          _
        $region28: #{tpu_custom_call.1} parent=11 // pred_fallthru
          _
      $region12: #{tpu_custom_call.1} parent=5 // pred_fallthru
        _
      %p191 = scmp.lt.s32.totalorder %s18, 2
      // Predicated region
      $region29: #{tpu_custom_call.1} parent=5 // pred_check
        %p192 = pneg %p191
      $region30: #{tpu_custom_call.1} parent=5 // pred_check_branch
        %194 = sbr.rel (%p192) target = $region32
      $region31: #{tpu_custom_call.1} parent=5 // pred_region
        // Predicated region
        $region33: #{tpu_custom_call.1} parent=31 // pred_check
          %p195 = pneg %p38
        $region34: #{tpu_custom_call.1} parent=31 // pred_check_branch
          %197 = sbr.rel (%p195) target = $region36
        $region35: #{tpu_custom_call.1} parent=31 // pred_region
          %s198 = sand.u32 %s28, 1
          %s199 = scalar_lea.sflag [#allocation4], %s198
          %s200 = sand.u32 %s28, 1
          %s201 = smul.addr %s200, 256
          %s202 = scalar_lea.vmem [#allocation3], %s201
          %s204 = ssub.s32 4096, 4096
          %205 = vsyncadd %s199, %s204
          %s206 = smul.addr %s18, 32
          %s207 = smul.addr %s206, 128
          %s208 = scalar_lea.hbm %s0, %s207
          %s209 = sshll.u32 %s202, 4
          %s210 = int_to_ptr.vmem [resolvable:$true] %s209
          %215 = dma.hbm_to_vmem [thread:$0]  %s208, 4096, %s210, %s199, 128, 128, 8
        $region36: #{tpu_custom_call.1} parent=31 // pred_fallthru
          _
      $region32: #{tpu_custom_call.1} parent=5 // pred_fallthru
        _
      %p216 = scmp.le.s32.totalorder 1, %s18
      %p217 = scmp.lt.s32.totalorder %s18, 3
      %p218 = pnand %p216, %p217
      %p219 = pneg %p218
      // Predicated region
      $region37: #{tpu_custom_call.1} parent=5 // pred_check
        _
      $region38: #{tpu_custom_call.1} parent=5 // pred_check_branch
        %221 = sbr.rel (%p218) target = $region40
      $region39: #{tpu_custom_call.1} parent=5 // pred_region
        %s222 = ssub.s32 %s18, 1
        %s223 = sand.u32 %s31, 1
        %s224 = scalar_lea.sflag [#allocation4], %s223
        %s225 = sand.u32 %s31, 1
        %s226 = smul.addr %s225, 256
        %s227 = scalar_lea.vmem [#allocation3], %s226
        // Predicated region
        $region41: #{tpu_custom_call.1} parent=39 // pred_check
          %p228 = pneg %p44
        $region42: #{tpu_custom_call.1} parent=39 // pred_check_branch
          %230 = sbr.rel (%p228) target = $region44
        $region43: #{tpu_custom_call.1} parent=39 // pred_region
          %231 = dma.done %s224, 4096
        $region44: #{tpu_custom_call.1} parent=39 // pred_fallthru
          _
        // Predicated region
        $region45: #{tpu_custom_call.1} parent=39 // pred_check
          %p232 = pneg %p65
        $region46: #{tpu_custom_call.1} parent=39 // pred_check_branch
          %234 = sbr.rel (%p232) target = $region48
        $region47: #{tpu_custom_call.1} parent=39 // pred_region
          %235 = dma.done [#allocation7], 13824
        $region48: #{tpu_custom_call.1} parent=39 // pred_fallthru
          _
        %s236 = sand.u32 %s31, 1
        %s237 = scalar_lea.sflag [#allocation4], %s236
        %s238 = sand.u32 %s31, 1
        %s239 = smul.addr %s238, 256
        %s240 = scalar_lea.vmem [#allocation3], %s239
        %p241 = pneg %p44
        %p242 = pneg %p41
        %p243 = pneg %p65
        %p244 = pneg %p62
        %p245 = pneg %p86
        %p246 = pneg %p83
        %p247 = pneg %p107
        %p248 = pneg %p104
        %p249 = pneg %p128
        %p250 = pneg %p125
        %p251 = pneg %p154
        %p252 = pneg %p151
        %s253 = sand.u32 %s141, 1
        %s254 = scalar_lea.sflag [#allocation5], %s253
        %s255 = sand.u32 %s141, 1
        %s256 = smul.addr %s255, 256
        %s257 = scalar_lea.vmem [#allocation8], %s256
        %258 = vst [vmem:[#allocation2] sm:$0xff] 0.0
        %259 = vst [vmem:[#allocation2 + $0x20] sm:$0xff] 0.0
        %260 = vst [vmem:[#allocation2 + $0x40] sm:$0xff] 0.0
        %261 = vst [vmem:[#allocation2 + $0x60] sm:$0xff] 0.0
        %262 = vst [vmem:[#allocation2 + $0x80] sm:$0xff] 0.0
        %263 = vst [vmem:[#allocation2 + $0xa0] sm:$0xff] 0.0
        %264 = vst [vmem:[#allocation2 + $0xc0] sm:$0xff] 0.0
        %265 = vst [vmem:[#allocation2 + $0xe0] sm:$0xff] 0.0
        %266 = vst [vmem:[#allocation2 + $0x100] sm:$0xff] 0.0
        %267 = vst [vmem:[#allocation2 + $0x120] sm:$0xff] 0.0
        %268 = vst [vmem:[#allocation2 + $0x140] sm:$0xff] 0.0
        %269 = vst [vmem:[#allocation2 + $0x160] sm:$0xff] 0.0
        %270 = vst [vmem:[#allocation2 + $0x180] sm:$0xff] 0.0
        %271 = vst [vmem:[#allocation2 + $0x1a0] sm:$0xff] 0.0
        %272 = vst [vmem:[#allocation2 + $0x1c0] sm:$0xff] 0.0
        %273 = vst [vmem:[#allocation2 + $0x1e0] sm:$0xff] 0.0
        %274 = vst [vmem:[#allocation2 + $0x200] sm:$0xff] 0.0
        %275 = vst [vmem:[#allocation2 + $0x220] sm:$0xff] 0.0
        %276 = vst [vmem:[#allocation2 + $0x18] sm:$0xff] 0.0
        %277 = vst [vmem:[#allocation2 + $0x38] sm:$0xff] 0.0
        %278 = vst [vmem:[#allocation2 + $0x58] sm:$0xff] 0.0
        %279 = vst [vmem:[#allocation2 + $0x78] sm:$0xff] 0.0
        %280 = vst [vmem:[#allocation2 + $0x98] sm:$0xff] 0.0
        %281 = vst [vmem:[#allocation2 + $0xb8] sm:$0xff] 0.0
        %282 = vst [vmem:[#allocation2 + $0xd8] sm:$0xff] 0.0
        %283 = vst [vmem:[#allocation2 + $0xf8] sm:$0xff] 0.0
        %284 = vst [vmem:[#allocation2 + $0x118] sm:$0xff] 0.0
        %285 = vst [vmem:[#allocation2 + $0x138] sm:$0xff] 0.0
        %286 = vst [vmem:[#allocation2 + $0x158] sm:$0xff] 0.0
        %287 = vst [vmem:[#allocation2 + $0x178] sm:$0xff] 0.0
        %288 = vst [vmem:[#allocation2 + $0x198] sm:$0xff] 0.0
        %289 = vst [vmem:[#allocation2 + $0x1b8] sm:$0xff] 0.0
        %290 = vst [vmem:[#allocation2 + $0x1d8] sm:$0xff] 0.0
        %291 = vst [vmem:[#allocation2 + $0x1f8] sm:$0xff] 0.0
        %292 = vst [vmem:[#allocation2 + $0x218] sm:$0xff] 0.0
        %293 = vst [vmem:[#allocation2 + $0x238] sm:$0xff] 0.0
        %294 = vst [vmem:[#allocation2 + $0x8] sm:$0xff] 0.0
        %295 = vst [vmem:[#allocation2 + $0x10] sm:$0xff] 0.0
        %s296 = scalar_lea.vmem [#allocation2], 544
        %297 = vst [vmem:[%s296 + $0x8] sm:$0xff] 0.0
        %298 = vst [vmem:[%s296 + $0x10] sm:$0xff] 0.0
        %v299 = vld [vmem:[%s227] sm:$0xff]
        %v300 = vld [vmem:[%s227 + $0x8] sm:$0xff]
        %v301 = vld [vmem:[%s227 + $0x10] sm:$0xff]
        %v302 = vld [vmem:[%s227 + $0x18] sm:$0xff]
        %v303 = vld [vmem:[%s227 + $0x20] sm:$0xff]
        %v304 = vld [vmem:[%s227 + $0x28] sm:$0xff]
        %v305 = vld [vmem:[%s227 + $0x30] sm:$0xff]
        %v306 = vld [vmem:[%s227 + $0x38] sm:$0xff]
        %v307 = vld [vmem:[%s227 + $0x40] sm:$0xff]
        %v308 = vld [vmem:[%s227 + $0x48] sm:$0xff]
        %v309 = vld [vmem:[%s227 + $0x50] sm:$0xff]
        %v310 = vld [vmem:[%s227 + $0x58] sm:$0xff]
        %v311 = vld [vmem:[%s227 + $0x60] sm:$0xff]
        %v312 = vld [vmem:[%s227 + $0x68] sm:$0xff]
        %v313 = vld [vmem:[%s227 + $0x70] sm:$0xff]
        %v314 = vld [vmem:[%s227 + $0x78] sm:$0xff]
        %v315 = vld [vmem:[%s227 + $0x80] sm:$0xff]
        %v316 = vld [vmem:[%s227 + $0x88] sm:$0xff]
        %v317 = vld [vmem:[%s227 + $0x90] sm:$0xff]
        %v318 = vld [vmem:[%s227 + $0x98] sm:$0xff]
        %v319 = vld [vmem:[%s227 + $0xa0] sm:$0xff]
        %v320 = vld [vmem:[%s227 + $0xa8] sm:$0xff]
        %v321 = vld [vmem:[%s227 + $0xb0] sm:$0xff]
        %v322 = vld [vmem:[%s227 + $0xb8] sm:$0xff]
        %v323 = vld [vmem:[%s227 + $0xc0] sm:$0xff]
        %v324 = vld [vmem:[%s227 + $0xc8] sm:$0xff]
        %v325 = vld [vmem:[%s227 + $0xd0] sm:$0xff]
        %v326 = vld [vmem:[%s227 + $0xd8] sm:$0xff]
        %v327 = vld [vmem:[%s227 + $0xe0] sm:$0xff]
        %v328 = vld [vmem:[%s227 + $0xe8] sm:$0xff]
        %v329 = vld [vmem:[%s227 + $0xf0] sm:$0xff]
        %v330 = vld [vmem:[%s227 + $0xf8] sm:$0xff]
        %vm331 = vcmask 130048
        %v332 = vsel %vm331, %v299, 0.0
        %v333 = vsel %vm331, %v300, 0.0
        %v334 = vsel %vm331, %v301, 0.0
        %v335 = vsel %vm331, %v302, 0.0
        %v336 = vsel %vm331, %v303, 0.0
        %v337 = vsel %vm331, %v304, 0.0
        %v338 = vsel %vm331, %v305, 0.0
        %v339 = vsel %vm331, %v306, 0.0
        %v340 = vsel %vm331, %v307, 0.0
        %v341 = vsel %vm331, %v308, 0.0
        %v342 = vsel %vm331, %v309, 0.0
        %v343 = vsel %vm331, %v310, 0.0
        %v344 = vsel %vm331, %v311, 0.0
        %v345 = vsel %vm331, %v312, 0.0
        %v346 = vsel %vm331, %v313, 0.0
        %v347 = vsel %vm331, %v314, 0.0
        %v348 = vsel %vm331, %v315, 0.0
        %v349 = vsel %vm331, %v316, 0.0
        %v350 = vsel %vm331, %v317, 0.0
        %v351 = vsel %vm331, %v318, 0.0
        %v352 = vsel %vm331, %v319, 0.0
        %v353 = vsel %vm331, %v320, 0.0
        %v354 = vsel %vm331, %v321, 0.0
        %v355 = vsel %vm331, %v322, 0.0
        %v356 = vsel %vm331, %v323, 0.0
        %v357 = vsel %vm331, %v324, 0.0
        %v358 = vsel %vm331, %v325, 0.0
        %v359 = vsel %vm331, %v326, 0.0
        %v360 = vsel %vm331, %v327, 0.0
        %v361 = vsel %vm331, %v328, 0.0
        %v362 = vsel %vm331, %v329, 0.0
        %v363 = vsel %vm331, %v330, 0.0
        %s364 = scalar_lea.vmem [#allocation2], 32
        %365 = vst [vmem:[%s364 + $0x8] sm:$0xff] %v332
        %366 = vst [vmem:[%s364 + $0x10] sm:$0xff] %v333
        %367 = vst [vmem:[%s364 + $0x28] sm:$0xff] %v334
        %368 = vst [vmem:[%s364 + $0x30] sm:$0xff] %v335
        %369 = vst [vmem:[%s364 + $0x48] sm:$0xff] %v336
        %370 = vst [vmem:[%s364 + $0x50] sm:$0xff] %v337
        %371 = vst [vmem:[%s364 + $0x68] sm:$0xff] %v338
        %372 = vst [vmem:[%s364 + $0x70] sm:$0xff] %v339
        %373 = vst [vmem:[%s364 + $0x88] sm:$0xff] %v340
        %374 = vst [vmem:[%s364 + $0x90] sm:$0xff] %v341
        %375 = vst [vmem:[%s364 + $0xa8] sm:$0xff] %v342
        %376 = vst [vmem:[%s364 + $0xb0] sm:$0xff] %v343
        %377 = vst [vmem:[%s364 + $0xc8] sm:$0xff] %v344
        %378 = vst [vmem:[%s364 + $0xd0] sm:$0xff] %v345
        %379 = vst [vmem:[%s364 + $0xe8] sm:$0xff] %v346
        %380 = vst [vmem:[%s364 + $0xf0] sm:$0xff] %v347
        %381 = vst [vmem:[%s364 + $0x108] sm:$0xff] %v348
        %382 = vst [vmem:[%s364 + $0x110] sm:$0xff] %v349
        %383 = vst [vmem:[%s364 + $0x128] sm:$0xff] %v350
        %384 = vst [vmem:[%s364 + $0x130] sm:$0xff] %v351
        %385 = vst [vmem:[%s364 + $0x148] sm:$0xff] %v352
        %386 = vst [vmem:[%s364 + $0x150] sm:$0xff] %v353
        %387 = vst [vmem:[%s364 + $0x168] sm:$0xff] %v354
        %388 = vst [vmem:[%s364 + $0x170] sm:$0xff] %v355
        %389 = vst [vmem:[%s364 + $0x188] sm:$0xff] %v356
        %390 = vst [vmem:[%s364 + $0x190] sm:$0xff] %v357
        %391 = vst [vmem:[%s364 + $0x1a8] sm:$0xff] %v358
        %392 = vst [vmem:[%s364 + $0x1b0] sm:$0xff] %v359
        %393 = vst [vmem:[%s364 + $0x1c8] sm:$0xff] %v360
        %394 = vst [vmem:[%s364 + $0x1d0] sm:$0xff] %v361
        %395 = vst [vmem:[%s364 + $0x1e8] sm:$0xff] %v362
        %396 = vst [vmem:[%s364 + $0x1f0] sm:$0xff] %v363
        %v397 = vld [vmem:[#allocation2 + $0x7] sm:$0xff]
        %v398 = vld [vmem:[#allocation2 + $0xf] sm:$0xff]
        %v399 = vld [vmem:[#allocation2 + $0x27] sm:$0xff]
        %v400 = vld [vmem:[#allocation2 + $0x2f] sm:$0xff]
        %v401 = vld [vmem:[#allocation2 + $0x47] sm:$0xff]
        %v402 = vld [vmem:[#allocation2 + $0x4f] sm:$0xff]
        %v403 = vld [vmem:[#allocation2 + $0x67] sm:$0xff]
        %v404 = vld [vmem:[#allocation2 + $0x6f] sm:$0xff]
        %v405 = vld [vmem:[#allocation2 + $0x87] sm:$0xff]
        %v406 = vld [vmem:[#allocation2 + $0x8f] sm:$0xff]
        %v407 = vld [vmem:[#allocation2 + $0xa7] sm:$0xff]
        %v408 = vld [vmem:[#allocation2 + $0xaf] sm:$0xff]
        %v409 = vld [vmem:[#allocation2 + $0xc7] sm:$0xff]
        %v410 = vld [vmem:[#allocation2 + $0xcf] sm:$0xff]
        %v411 = vld [vmem:[#allocation2 + $0xe7] sm:$0xff]
        %v412 = vld [vmem:[#allocation2 + $0xef] sm:$0xff]
        %v413 = vld [vmem:[#allocation2 + $0x107] sm:$0xff]
        %v414 = vld [vmem:[#allocation2 + $0x10f] sm:$0xff]
        %v415 = vld [vmem:[#allocation2 + $0x127] sm:$0xff]
        %v416 = vld [vmem:[#allocation2 + $0x12f] sm:$0xff]
        %v417 = vld [vmem:[#allocation2 + $0x147] sm:$0xff]
        %v418 = vld [vmem:[#allocation2 + $0x14f] sm:$0xff]
        %v419 = vld [vmem:[#allocation2 + $0x167] sm:$0xff]
        %v420 = vld [vmem:[#allocation2 + $0x16f] sm:$0xff]
        %v421 = vld [vmem:[#allocation2 + $0x187] sm:$0xff]
        %v422 = vld [vmem:[#allocation2 + $0x18f] sm:$0xff]
        %v423 = vld [vmem:[#allocation2 + $0x1a7] sm:$0xff]
        %v424 = vld [vmem:[#allocation2 + $0x1af] sm:$0xff]
        %v425 = vld [vmem:[#allocation2 + $0x1c7] sm:$0xff]
        %v426 = vld [vmem:[#allocation2 + $0x1cf] sm:$0xff]
        %v427 = vld [vmem:[#allocation2 + $0x1e7] sm:$0xff]
        %v428 = vld [vmem:[#allocation2 + $0x1ef] sm:$0xff]
        %v429 = vld [vmem:[#allocation6] sm:$0xff]
        %v430 = vld [vmem:[#allocation6 + $0x8] sm:$0xff]
        %v431 = vld [vmem:[#allocation6 + $0x10] sm:$0xff]
        %v432 = vld [vmem:[#allocation6 + $0x18] sm:$0xff]
        %v433 = vld [vmem:[#allocation2 + $0x8] sm:$0xff]
        %v434 = vld [vmem:[#allocation2 + $0x10] sm:$0xff]
        %v435 = vld [vmem:[#allocation2 + $0x28] sm:$0xff]
        %v436 = vld [vmem:[#allocation2 + $0x30] sm:$0xff]
        %v437 = vld [vmem:[#allocation2 + $0x48] sm:$0xff]
        %v438 = vld [vmem:[#allocation2 + $0x50] sm:$0xff]
        %v439 = vld [vmem:[#allocation2 + $0x68] sm:$0xff]
        %v440 = vld [vmem:[#allocation2 + $0x70] sm:$0xff]
        %v441 = vld [vmem:[#allocation2 + $0x88] sm:$0xff]
        %v442 = vld [vmem:[#allocation2 + $0x90] sm:$0xff]
        %v443 = vld [vmem:[#allocation2 + $0xa8] sm:$0xff]
        %v444 = vld [vmem:[#allocation2 + $0xb0] sm:$0xff]
        %v445 = vld [vmem:[#allocation2 + $0xc8] sm:$0xff]
        %v446 = vld [vmem:[#allocation2 + $0xd0] sm:$0xff]
        %v447 = vld [vmem:[#allocation2 + $0xe8] sm:$0xff]
        %v448 = vld [vmem:[#allocation2 + $0xf0] sm:$0xff]
        %v449 = vld [vmem:[#allocation2 + $0x108] sm:$0xff]
        %v450 = vld [vmem:[#allocation2 + $0x110] sm:$0xff]
        %v451 = vld [vmem:[#allocation2 + $0x128] sm:$0xff]
        %v452 = vld [vmem:[#allocation2 + $0x130] sm:$0xff]
        %v453 = vld [vmem:[#allocation2 + $0x148] sm:$0xff]
        %v454 = vld [vmem:[#allocation2 + $0x150] sm:$0xff]
        %v455 = vld [vmem:[#allocation2 + $0x168] sm:$0xff]
        %v456 = vld [vmem:[#allocation2 + $0x170] sm:$0xff]
        %v457 = vld [vmem:[#allocation2 + $0x188] sm:$0xff]
        %v458 = vld [vmem:[#allocation2 + $0x190] sm:$0xff]
        %v459 = vld [vmem:[#allocation2 + $0x1a8] sm:$0xff]
        %v460 = vld [vmem:[#allocation2 + $0x1b0] sm:$0xff]
        %v461 = vld [vmem:[#allocation2 + $0x1c8] sm:$0xff]
        %v462 = vld [vmem:[#allocation2 + $0x1d0] sm:$0xff]
        %v463 = vld [vmem:[#allocation2 + $0x1e8] sm:$0xff]
        %v464 = vld [vmem:[#allocation2 + $0x1f0] sm:$0xff]
        %s465 = scalar_lea.vmem [#allocation6], 32
        %v466 = vld [vmem:[%s465] sm:$0xff]
        %v467 = vld [vmem:[%s465 + $0x8] sm:$0xff]
        %v468 = vld [vmem:[%s465 + $0x10] sm:$0xff]
        %v469 = vld [vmem:[%s465 + $0x18] sm:$0xff]
        %vm470 = vcmask 261120
        %v472 = vsel %vm470, %v433, 0
        %v475 = vsel %vm470, %v434, 0
        %v478 = vsel %vm470, %v435, 0
        %v481 = vsel %vm470, %v436, 0
        %v484 = vsel %vm470, %v437, 0
        %v487 = vsel %vm470, %v438, 0
        %v490 = vsel %vm470, %v439, 0
        %v493 = vsel %vm470, %v440, 0
        %v496 = vsel %vm470, %v441, 0
        %v499 = vsel %vm470, %v442, 0
        %v502 = vsel %vm470, %v443, 0
        %v505 = vsel %vm470, %v444, 0
        %v508 = vsel %vm470, %v445, 0
        %v511 = vsel %vm470, %v446, 0
        %v514 = vsel %vm470, %v447, 0
        %v517 = vsel %vm470, %v448, 0
        %v520 = vsel %vm470, %v449, 0
        %v523 = vsel %vm470, %v450, 0
        %v526 = vsel %vm470, %v451, 0
        %v529 = vsel %vm470, %v452, 0
        %v532 = vsel %vm470, %v453, 0
        %v535 = vsel %vm470, %v454, 0
        %v538 = vsel %vm470, %v455, 0
        %v541 = vsel %vm470, %v456, 0
        %v544 = vsel %vm470, %v457, 0
        %v547 = vsel %vm470, %v458, 0
        %v550 = vsel %vm470, %v459, 0
        %v553 = vsel %vm470, %v460, 0
        %v556 = vsel %vm470, %v461, 0
        %v559 = vsel %vm470, %v462, 0
        %v562 = vsel %vm470, %v463, 0
        %v565 = vsel %vm470, %v464, 0
        %567 = vmatprep.subr.mxu0 0.0
        %568 = vmatpush1.msra.mxu0 %v466
        %569 = vmatprep.subr.mxu0 0.0
        %570 = vmatpush1.msra.mxu0 %v467
        %571 = vmatprep.subr.mxu0 0.0
        %572 = vmatpush1.msra.mxu0 %v468
        %573 = vmatprep.subr.mxu0 0.0
        %574 = vmatpush1.msra.mxu0 %v469
        %575 = vmatprep.subr.mxu0 0.0
        %576 = vmatpush1.msra.mxu0 0.0
        %577 = vmatprep.subr.mxu0 0.0
        %578 = vmatpush1.msra.mxu0 0.0
        %579 = vmatprep.subr.mxu0 0.0
        %580 = vmatpush1.msra.mxu0 0.0
        %581 = vmatprep.subr.mxu0 0.0
        %582 = vmatpush1.msra.mxu0 0.0
        %583 = vmatprep.subr.mxu0 0.0
        %584 = vmatpush1.msra.mxu0 0.0
        %585 = vmatprep.subr.mxu0 0.0
        %586 = vmatpush1.msra.mxu0 0.0
        %587 = vmatprep.subr.mxu0 0.0
        %588 = vmatpush1.msra.mxu0 0.0
        %589 = vmatprep.subr.mxu0 0.0
        %590 = vmatpush1.msra.mxu0 0.0
        %591 = vmatprep.subr.mxu0 0.0
        %592 = vmatpush1.msra.mxu0 0.0
        %593 = vmatprep.subr.mxu0 0.0
        %594 = vmatpush1.msra.mxu0 0.0
        %595 = vmatprep.subr.mxu0 0.0
        %596 = vmatpush1.msra.mxu0 0.0
        %597 = vmatprep.subr.mxu0 0.0
        %598 = vmatpush1.msra.mxu0 0.0
        %599 = vmatprep.subr.mxu0 0.0
        %600 = vmatpush1.msra.mxu0 0.0
        %601 = vmatprep.subr.mxu0 0.0
        %602 = vmatpush1.msra.mxu0 0.0
        %603 = vmatprep.subr.mxu0 0.0
        %604 = vmatpush1.msra.mxu0 0.0
        %605 = vmatprep.subr.mxu0 0.0
        %606 = vmatpush1.msra.mxu0 0.0
        %607 = vmatprep.subr.mxu0 0.0
        %608 = vmatpush1.msra.mxu0 0.0
        %609 = vmatprep.subr.mxu0 0.0
        %610 = vmatpush1.msra.mxu0 0.0
        %611 = vmatprep.subr.mxu0 0.0
        %612 = vmatpush1.msra.mxu0 0.0
        %613 = vmatprep.subr.mxu0 0.0
        %614 = vmatpush1.msra.mxu0 0.0
        %615 = vmatprep.subr.mxu0 0.0
        %616 = vmatpush1.msra.mxu0 0.0
        %617 = vmatprep.subr.mxu0 0.0
        %618 = vmatpush1.msra.mxu0 0.0
        %619 = vmatprep.subr.mxu0 0.0
        %620 = vmatpush1.msra.mxu0 0.0
        %621 = vmatprep.subr.mxu0 0.0
        %622 = vmatpush1.msra.mxu0 0.0
        %623 = vmatprep.subr.mxu0 0.0
        %624 = vmatpush1.msra.mxu0 0.0
        %625 = vmatprep.subr.mxu0 0.0
        %626 = vmatpush1.msra.mxu0 0.0
        %627 = vmatprep.subr.mxu0 0.0
        %628 = vmatpush1.msra.mxu0 0.0
        %629 = vmatprep.subr.mxu0 0.0
        %630 = vmatpush1.msra.mxu0 0.0
        %631 = vmatprep.mubr.f32.mxu0 0.0
        %632 = vmatmul.mubr.f32.gmra.mrb[0].mxu0 %v472
        %v633 = vpop.f32.mrb[0].mxu0
        %v634 = vadd.f32 0.0, %v633
        %v635 = vpop.f32.mrb[0].mxu0
        %636 = vmatprep.mubr.f32.mxu0 0.0
        %637 = vmatmul.mubr.f32.gmra.mrb[0].mxu0 %v475
        %v638 = vpop.f32.mrb[0].mxu0
        %v639 = vadd.f32 0.0, %v638
        %v640 = vpop.f32.mrb[0].mxu0
        %641 = vmatprep.mubr.f32.mxu0 0.0
        %642 = vmatmul.mubr.f32.gmra.mrb[0].mxu0 %v478
        %v643 = vpop.f32.mrb[0].mxu0
        %v644 = vadd.f32 0.0, %v643
        %v645 = vpop.f32.mrb[0].mxu0
        %646 = vmatprep.mubr.f32.mxu0 0.0
        %647 = vmatmul.mubr.f32.gmra.mrb[0].mxu0 %v481
        %v648 = vpop.f32.mrb[0].mxu0
        %v649 = vadd.f32 0.0, %v648
        %v650 = vpop.f32.mrb[0].mxu0
        %651 = vmatprep.mubr.f32.mxu0 0.0
        %652 = vmatmul.mubr.f32.gmra.mrb[0].mxu0 %v484
        %v653 = vpop.f32.mrb[0].mxu0
        %v654 = vadd.f32 0.0, %v653
        %v655 = vpop.f32.mrb[0].mxu0
        %656 = vmatprep.mubr.f32.mxu0 0.0
        %657 = vmatmul.mubr.f32.gmra.mrb[0].mxu0 %v487
        %v658 = vpop.f32.mrb[0].mxu0
        %v659 = vadd.f32 0.0, %v658
        %v660 = vpop.f32.mrb[0].mxu0
        %661 = vmatprep.mubr.f32.mxu0 0.0
        %662 = vmatmul.mubr.f32.gmra.mrb[0].mxu0 %v490
        %v663 = vpop.f32.mrb[0].mxu0
        %v664 = vadd.f32 0.0, %v663
        %v665 = vpop.f32.mrb[0].mxu0
        %666 = vmatprep.mubr.f32.mxu0 0.0
        %667 = vmatmul.mubr.f32.gmra.mrb[0].mxu0 %v493
        %v668 = vpop.f32.mrb[0].mxu0
        %v669 = vadd.f32 0.0, %v668
        %v670 = vpop.f32.mrb[0].mxu0
        %671 = vmatprep.mubr.f32.mxu0 0.0
        %672 = vmatmul.mubr.f32.gmra.mrb[0].mxu0 %v496
        %v673 = vpop.f32.mrb[0].mxu0
        %v674 = vadd.f32 0.0, %v673
        %v675 = vpop.f32.mrb[0].mxu0
        %676 = vmatprep.mubr.f32.mxu0 0.0
        %677 = vmatmul.mubr.f32.gmra.mrb[0].mxu0 %v499
        %v678 = vpop.f32.mrb[0].mxu0
        %v679 = vadd.f32 0.0, %v678
        %v680 = vpop.f32.mrb[0].mxu0
        %681 = vmatprep.mubr.f32.mxu0 0.0
        %682 = vmatmul.mubr.f32.gmra.mrb[0].mxu0 %v502
        %v683 = vpop.f32.mrb[0].mxu0
        %v684 = vadd.f32 0.0, %v683
        %v685 = vpop.f32.mrb[0].mxu0
        %686 = vmatprep.mubr.f32.mxu0 0.0
        %687 = vmatmul.mubr.f32.gmra.mrb[0].mxu0 %v505
        %v688 = vpop.f32.mrb[0].mxu0
        %v689 = vadd.f32 0.0, %v688
        %v690 = vpop.f32.mrb[0].mxu0
        %691 = vmatprep.mubr.f32.mxu0 0.0
        %692 = vmatmul.mubr.f32.gmra.mrb[0].mxu0 %v508
        %v693 = vpop.f32.mrb[0].mxu0
        %v694 = vadd.f32 0.0, %v693
        %v695 = vpop.f32.mrb[0].mxu0
        %696 = vmatprep.mubr.f32.mxu0 0.0
        %697 = vmatmul.mubr.f32.gmra.mrb[0].mxu0 %v511
        %v698 = vpop.f32.mrb[0].mxu0
        %v699 = vadd.f32 0.0, %v698
        %v700 = vpop.f32.mrb[0].mxu0
        %701 = vmatprep.mubr.f32.mxu0 0.0
        %702 = vmatmul.mubr.f32.gmra.mrb[0].mxu0 %v514
        %v703 = vpop.f32.mrb[0].mxu0
        %v704 = vadd.f32 0.0, %v703
        %v705 = vpop.f32.mrb[0].mxu0
        %706 = vmatprep.mubr.f32.mxu0 0.0
        %707 = vmatmul.mubr.f32.gmra.mrb[0].mxu0 %v517
        %v708 = vpop.f32.mrb[0].mxu0
        %v709 = vadd.f32 0.0, %v708
        %v710 = vpop.f32.mrb[0].mxu0
        %711 = vmatprep.mubr.f32.mxu0 0.0
        %712 = vmatmul.mubr.f32.gmra.mrb[0].mxu0 %v520
        %v713 = vpop.f32.mrb[0].mxu0
        %v714 = vadd.f32 0.0, %v713
        %v715 = vpop.f32.mrb[0].mxu0
        %716 = vmatprep.mubr.f32.mxu0 0.0
        %717 = vmatmul.mubr.f32.gmra.mrb[0].mxu0 %v523
        %v718 = vpop.f32.mrb[0].mxu0
        %v719 = vadd.f32 0.0, %v718
        %v720 = vpop.f32.mrb[0].mxu0
        %721 = vmatprep.mubr.f32.mxu0 0.0
        %722 = vmatmul.mubr.f32.gmra.mrb[0].mxu0 %v526
        %v723 = vpop.f32.mrb[0].mxu0
        %v724 = vadd.f32 0.0, %v723
        %v725 = vpop.f32.mrb[0].mxu0
        %726 = vmatprep.mubr.f32.mxu0 0.0
        %727 = vmatmul.mubr.f32.gmra.mrb[0].mxu0 %v529
        %v728 = vpop.f32.mrb[0].mxu0
        %v729 = vadd.f32 0.0, %v728
        %v730 = vpop.f32.mrb[0].mxu0
        %731 = vmatprep.mubr.f32.mxu0 0.0
        %732 = vmatmul.mubr.f32.gmra.mrb[0].mxu0 %v532
        %v733 = vpop.f32.mrb[0].mxu0
        %v734 = vadd.f32 0.0, %v733
        %v735 = vpop.f32.mrb[0].mxu0
        %736 = vmatprep.mubr.f32.mxu0 0.0
        %737 = vmatmul.mubr.f32.gmra.mrb[0].mxu0 %v535
        %v738 = vpop.f32.mrb[0].mxu0
        %v739 = vadd.f32 0.0, %v738
        %v740 = vpop.f32.mrb[0].mxu0
        %741 = vmatprep.mubr.f32.mxu0 0.0
        %742 = vmatmul.mubr.f32.gmra.mrb[0].mxu0 %v538
        %v743 = vpop.f32.mrb[0].mxu0
        %v744 = vadd.f32 0.0, %v743
        %v745 = vpop.f32.mrb[0].mxu0
        %746 = vmatprep.mubr.f32.mxu0 0.0
        %747 = vmatmul.mubr.f32.gmra.mrb[0].mxu0 %v541
        %v748 = vpop.f32.mrb[0].mxu0
        %v749 = vadd.f32 0.0, %v748
        %v750 = vpop.f32.mrb[0].mxu0
        %751 = vmatprep.mubr.f32.mxu0 0.0
        %752 = vmatmul.mubr.f32.gmra.mrb[0].mxu0 %v544
        %v753 = vpop.f32.mrb[0].mxu0
        %v754 = vadd.f32 0.0, %v753
        %v755 = vpop.f32.mrb[0].mxu0
        %756 = vmatprep.mubr.f32.mxu0 0.0
        %757 = vmatmul.mubr.f32.gmra.mrb[0].mxu0 %v547
        %v758 = vpop.f32.mrb[0].mxu0
        %v759 = vadd.f32 0.0, %v758
        %v760 = vpop.f32.mrb[0].mxu0
        %761 = vmatprep.mubr.f32.mxu0 0.0
        %762 = vmatmul.mubr.f32.gmra.mrb[0].mxu0 %v550
        %v763 = vpop.f32.mrb[0].mxu0
        %v764 = vadd.f32 0.0, %v763
        %v765 = vpop.f32.mrb[0].mxu0
        %766 = vmatprep.mubr.f32.mxu0 0.0
        %767 = vmatmul.mubr.f32.gmra.mrb[0].mxu0 %v553
        %v768 = vpop.f32.mrb[0].mxu0
        %v769 = vadd.f32 0.0, %v768
        %v770 = vpop.f32.mrb[0].mxu0
        %771 = vmatprep.mubr.f32.mxu0 0.0
        %772 = vmatmul.mubr.f32.gmra.mrb[0].mxu0 %v556
        %v773 = vpop.f32.mrb[0].mxu0
        %v774 = vadd.f32 0.0, %v773
        %v775 = vpop.f32.mrb[0].mxu0
        %776 = vmatprep.mubr.f32.mxu0 0.0
        %777 = vmatmul.mubr.f32.gmra.mrb[0].mxu0 %v559
        %v778 = vpop.f32.mrb[0].mxu0
        %v779 = vadd.f32 0.0, %v778
        %v780 = vpop.f32.mrb[0].mxu0
        %781 = vmatprep.mubr.f32.mxu0 0.0
        %782 = vmatmul.mubr.f32.gmra.mrb[0].mxu0 %v562
        %v783 = vpop.f32.mrb[0].mxu0
        %v784 = vadd.f32 0.0, %v783
        %v785 = vpop.f32.mrb[0].mxu0
        %786 = vmatprep.mubr.f32.mxu0 0.0
        %787 = vmatmul.mubr.f32.gmra.mrb[0].mxu0 %v565
        %v788 = vpop.f32.mrb[0].mxu0
        %v789 = vadd.f32 0.0, %v788
        %v790 = vpop.f32.mrb[0].mxu0
        %791 = vdwg.mxu0
        %v793 = vsel %vm470, %v397, 0
        %v796 = vsel %vm470, %v398, 0
        %v799 = vsel %vm470, %v399, 0
        %v802 = vsel %vm470, %v400, 0
        %v805 = vsel %vm470, %v401, 0
        %v808 = vsel %vm470, %v402, 0
        %v811 = vsel %vm470, %v403, 0
        %v814 = vsel %vm470, %v404, 0
        %v817 = vsel %vm470, %v405, 0
        %v820 = vsel %vm470, %v406, 0
        %v823 = vsel %vm470, %v407, 0
        %v826 = vsel %vm470, %v408, 0
        %v829 = vsel %vm470, %v409, 0
        %v832 = vsel %vm470, %v410, 0
        %v835 = vsel %vm470, %v411, 0
        %v838 = vsel %vm470, %v412, 0
        %v841 = vsel %vm470, %v413, 0
        %v844 = vsel %vm470, %v414, 0
        %v847 = vsel %vm470, %v415, 0
        %v850 = vsel %vm470, %v416, 0
        %v853 = vsel %vm470, %v417, 0
        %v856 = vsel %vm470, %v418, 0
        %v859 = vsel %vm470, %v419, 0
        %v862 = vsel %vm470, %v420, 0
        %v865 = vsel %vm470, %v421, 0
        %v868 = vsel %vm470, %v422, 0
        %v871 = vsel %vm470, %v423, 0
        %v874 = vsel %vm470, %v424, 0
        %v877 = vsel %vm470, %v425, 0
        %v880 = vsel %vm470, %v426, 0
        %v883 = vsel %vm470, %v427, 0
        %v886 = vsel %vm470, %v428, 0
        %888 = vmatprep.subr.mxu0 0.0
        %889 = vmatpush1.msra.mxu0 %v429
        %890 = vmatprep.subr.mxu0 0.0
        %891 = vmatpush1.msra.mxu0 %v430
        %892 = vmatprep.subr.mxu0 0.0
        %893 = vmatpush1.msra.mxu0 %v431
        %894 = vmatprep.subr.mxu0 0.0
        %895 = vmatpush1.msra.mxu0 %v432
        %896 = vmatprep.subr.mxu0 0.0
        %897 = vmatpush1.msra.mxu0 0.0
        %898 = vmatprep.subr.mxu0 0.0
        %899 = vmatpush1.msra.mxu0 0.0
        %900 = vmatprep.subr.mxu0 0.0
        %901 = vmatpush1.msra.mxu0 0.0
        %902 = vmatprep.subr.mxu0 0.0
        %903 = vmatpush1.msra.mxu0 0.0
        %904 = vmatprep.subr.mxu0 0.0
        %905 = vmatpush1.msra.mxu0 0.0
        %906 = vmatprep.subr.mxu0 0.0
        %907 = vmatpush1.msra.mxu0 0.0
        %908 = vmatprep.subr.mxu0 0.0
        %909 = vmatpush1.msra.mxu0 0.0
        %910 = vmatprep.subr.mxu0 0.0
        %911 = vmatpush1.msra.mxu0 0.0
        %912 = vmatprep.subr.mxu0 0.0
        %913 = vmatpush1.msra.mxu0 0.0
        %914 = vmatprep.subr.mxu0 0.0
        %915 = vmatpush1.msra.mxu0 0.0
        %916 = vmatprep.subr.mxu0 0.0
        %917 = vmatpush1.msra.mxu0 0.0
        %918 = vmatprep.subr.mxu0 0.0
        %919 = vmatpush1.msra.mxu0 0.0
        %920 = vmatprep.subr.mxu0 0.0
        %921 = vmatpush1.msra.mxu0 0.0
        %922 = vmatprep.subr.mxu0 0.0
        %923 = vmatpush1.msra.mxu0 0.0
        %924 = vmatprep.subr.mxu0 0.0
        %925 = vmatpush1.msra.mxu0 0.0
        %926 = vmatprep.subr.mxu0 0.0
        %927 = vmatpush1.msra.mxu0 0.0
        %928 = vmatprep.subr.mxu0 0.0
        %929 = vmatpush1.msra.mxu0 0.0
        %930 = vmatprep.subr.mxu0 0.0
        %931 = vmatpush1.msra.mxu0 0.0
        %932 = vmatprep.subr.mxu0 0.0
        %933 = vmatpush1.msra.mxu0 0.0
        %934 = vmatprep.subr.mxu0 0.0
        %935 = vmatpush1.msra.mxu0 0.0
        %936 = vmatprep.subr.mxu0 0.0
        %937 = vmatpush1.msra.mxu0 0.0
        %938 = vmatprep.subr.mxu0 0.0
        %939 = vmatpush1.msra.mxu0 0.0
        %940 = vmatprep.subr.mxu0 0.0
        %941 = vmatpush1.msra.mxu0 0.0
        %942 = vmatprep.subr.mxu0 0.0
        %943 = vmatpush1.msra.mxu0 0.0
        %944 = vmatprep.subr.mxu0 0.0
        %945 = vmatpush1.msra.mxu0 0.0
        %946 = vmatprep.subr.mxu0 0.0
        %947 = vmatpush1.msra.mxu0 0.0
        %948 = vmatprep.subr.mxu0 0.0
        %949 = vmatpush1.msra.mxu0 0.0
        %950 = vmatprep.subr.mxu0 0.0
        %951 = vmatpush1.msra.mxu0 0.0
        %952 = vmatprep.mubr.f32.mxu0 0.0
        %953 = vmatmul.mubr.f32.gmra.mrb[0].mxu0 %v793
        %v954 = vpop.f32.mrb[0].mxu0
        %v955 = vadd.f32 %v634, %v954
        %v956 = vpop.f32.mrb[0].mxu0
        %957 = vmatprep.mubr.f32.mxu0 0.0
        %958 = vmatmul.mubr.f32.gmra.mrb[0].mxu0 %v796
        %v959 = vpop.f32.mrb[0].mxu0
        %v960 = vadd.f32 %v639, %v959
        %v961 = vpop.f32.mrb[0].mxu0
        %962 = vmatprep.mubr.f32.mxu0 0.0
        %963 = vmatmul.mubr.f32.gmra.mrb[0].mxu0 %v799
        %v964 = vpop.f32.mrb[0].mxu0
        %v965 = vadd.f32 %v644, %v964
        %v966 = vpop.f32.mrb[0].mxu0
        %967 = vmatprep.mubr.f32.mxu0 0.0
        %968 = vmatmul.mubr.f32.gmra.mrb[0].mxu0 %v802
        %v969 = vpop.f32.mrb[0].mxu0
        %v970 = vadd.f32 %v649, %v969
        %v971 = vpop.f32.mrb[0].mxu0
        %972 = vmatprep.mubr.f32.mxu0 0.0
        %973 = vmatmul.mubr.f32.gmra.mrb[0].mxu0 %v805
        %v974 = vpop.f32.mrb[0].mxu0
        %v975 = vadd.f32 %v654, %v974
        %v976 = vpop.f32.mrb[0].mxu0
        %977 = vmatprep.mubr.f32.mxu0 0.0
        %978 = vmatmul.mubr.f32.gmra.mrb[0].mxu0 %v808
        %v979 = vpop.f32.mrb[0].mxu0
        %v980 = vadd.f32 %v659, %v979
        %v981 = vpop.f32.mrb[0].mxu0
        %982 = vmatprep.mubr.f32.mxu0 0.0
        %983 = vmatmul.mubr.f32.gmra.mrb[0].mxu0 %v811
        %v984 = vpop.f32.mrb[0].mxu0
        %v985 = vadd.f32 %v664, %v984
        %v986 = vpop.f32.mrb[0].mxu0
        %987 = vmatprep.mubr.f32.mxu0 0.0
        %988 = vmatmul.mubr.f32.gmra.mrb[0].mxu0 %v814
        %v989 = vpop.f32.mrb[0].mxu0
        %v990 = vadd.f32 %v669, %v989
        %v991 = vpop.f32.mrb[0].mxu0
        %992 = vmatprep.mubr.f32.mxu0 0.0
        %993 = vmatmul.mubr.f32.gmra.mrb[0].mxu0 %v817
        %v994 = vpop.f32.mrb[0].mxu0
        %v995 = vadd.f32 %v674, %v994
        %v996 = vpop.f32.mrb[0].mxu0
        %997 = vmatprep.mubr.f32.mxu0 0.0
        %998 = vmatmul.mubr.f32.gmra.mrb[0].mxu0 %v820
        %v999 = vpop.f32.mrb[0].mxu0
        %v1000 = vadd.f32 %v679, %v999
        %v1001 = vpop.f32.mrb[0].mxu0
        %1002 = vmatprep.mubr.f32.mxu0 0.0
        %1003 = vmatmul.mubr.f32.gmra.mrb[0].mxu0 %v823
        %v1004 = vpop.f32.mrb[0].mxu0
        %v1005 = vadd.f32 %v684, %v1004
        %v1006 = vpop.f32.mrb[0].mxu0
        %1007 = vmatprep.mubr.f32.mxu0 0.0
        %1008 = vmatmul.mubr.f32.gmra.mrb[0].mxu0 %v826
        %v1009 = vpop.f32.mrb[0].mxu0
        %v1010 = vadd.f32 %v689, %v1009
        %v1011 = vpop.f32.mrb[0].mxu0
        %1012 = vmatprep.mubr.f32.mxu0 0.0
        %1013 = vmatmul.mubr.f32.gmra.mrb[0].mxu0 %v829
        %v1014 = vpop.f32.mrb[0].mxu0
        %v1015 = vadd.f32 %v694, %v1014
        %v1016 = vpop.f32.mrb[0].mxu0
        %1017 = vmatprep.mubr.f32.mxu0 0.0
        %1018 = vmatmul.mubr.f32.gmra.mrb[0].mxu0 %v832
        %v1019 = vpop.f32.mrb[0].mxu0
        %v1020 = vadd.f32 %v699, %v1019
        %v1021 = vpop.f32.mrb[0].mxu0
        %1022 = vmatprep.mubr.f32.mxu0 0.0
        %1023 = vmatmul.mubr.f32.gmra.mrb[0].mxu0 %v835
        %v1024 = vpop.f32.mrb[0].mxu0
        %v1025 = vadd.f32 %v704, %v1024
        %v1026 = vpop.f32.mrb[0].mxu0
        %1027 = vmatprep.mubr.f32.mxu0 0.0
        %1028 = vmatmul.mubr.f32.gmra.mrb[0].mxu0 %v838
        %v1029 = vpop.f32.mrb[0].mxu0
        %v1030 = vadd.f32 %v709, %v1029
        %v1031 = vpop.f32.mrb[0].mxu0
        %1032 = vmatprep.mubr.f32.mxu0 0.0
        %1033 = vmatmul.mubr.f32.gmra.mrb[0].mxu0 %v841
        %v1034 = vpop.f32.mrb[0].mxu0
        %v1035 = vadd.f32 %v714, %v1034
        %v1036 = vpop.f32.mrb[0].mxu0
        %1037 = vmatprep.mubr.f32.mxu0 0.0
        %1038 = vmatmul.mubr.f32.gmra.mrb[0].mxu0 %v844
        %v1039 = vpop.f32.mrb[0].mxu0
        %v1040 = vadd.f32 %v719, %v1039
        %v1041 = vpop.f32.mrb[0].mxu0
        %1042 = vmatprep.mubr.f32.mxu0 0.0
        %1043 = vmatmul.mubr.f32.gmra.mrb[0].mxu0 %v847
        %v1044 = vpop.f32.mrb[0].mxu0
        %v1045 = vadd.f32 %v724, %v1044
        %v1046 = vpop.f32.mrb[0].mxu0
        %1047 = vmatprep.mubr.f32.mxu0 0.0
        %1048 = vmatmul.mubr.f32.gmra.mrb[0].mxu0 %v850
        %v1049 = vpop.f32.mrb[0].mxu0
        %v1050 = vadd.f32 %v729, %v1049
        %v1051 = vpop.f32.mrb[0].mxu0
        %1052 = vmatprep.mubr.f32.mxu0 0.0
        %1053 = vmatmul.mubr.f32.gmra.mrb[0].mxu0 %v853
        %v1054 = vpop.f32.mrb[0].mxu0
        %v1055 = vadd.f32 %v734, %v1054
        %v1056 = vpop.f32.mrb[0].mxu0
        %1057 = vmatprep.mubr.f32.mxu0 0.0
        %1058 = vmatmul.mubr.f32.gmra.mrb[0].mxu0 %v856
        %v1059 = vpop.f32.mrb[0].mxu0
        %v1060 = vadd.f32 %v739, %v1059
        %v1061 = vpop.f32.mrb[0].mxu0
        %1062 = vmatprep.mubr.f32.mxu0 0.0
        %1063 = vmatmul.mubr.f32.gmra.mrb[0].mxu0 %v859
        %v1064 = vpop.f32.mrb[0].mxu0
        %v1065 = vadd.f32 %v744, %v1064
        %v1066 = vpop.f32.mrb[0].mxu0
        %1067 = vmatprep.mubr.f32.mxu0 0.0
        %1068 = vmatmul.mubr.f32.gmra.mrb[0].mxu0 %v862
        %v1069 = vpop.f32.mrb[0].mxu0
        %v1070 = vadd.f32 %v749, %v1069
        %v1071 = vpop.f32.mrb[0].mxu0
        %1072 = vmatprep.mubr.f32.mxu0 0.0
        %1073 = vmatmul.mubr.f32.gmra.mrb[0].mxu0 %v865
        %v1074 = vpop.f32.mrb[0].mxu0
        %v1075 = vadd.f32 %v754, %v1074
        %v1076 = vpop.f32.mrb[0].mxu0
        %1077 = vmatprep.mubr.f32.mxu0 0.0
        %1078 = vmatmul.mubr.f32.gmra.mrb[0].mxu0 %v868
        %v1079 = vpop.f32.mrb[0].mxu0
        %v1080 = vadd.f32 %v759, %v1079
        %v1081 = vpop.f32.mrb[0].mxu0
        %1082 = vmatprep.mubr.f32.mxu0 0.0
        %1083 = vmatmul.mubr.f32.gmra.mrb[0].mxu0 %v871
        %v1084 = vpop.f32.mrb[0].mxu0
        %v1085 = vadd.f32 %v764, %v1084
        %v1086 = vpop.f32.mrb[0].mxu0
        %1087 = vmatprep.mubr.f32.mxu0 0.0
        %1088 = vmatmul.mubr.f32.gmra.mrb[0].mxu0 %v874
        %v1089 = vpop.f32.mrb[0].mxu0
        %v1090 = vadd.f32 %v769, %v1089
        %v1091 = vpop.f32.mrb[0].mxu0
        %1092 = vmatprep.mubr.f32.mxu0 0.0
        %1093 = vmatmul.mubr.f32.gmra.mrb[0].mxu0 %v877
        %v1094 = vpop.f32.mrb[0].mxu0
        %v1095 = vadd.f32 %v774, %v1094
        %v1096 = vpop.f32.mrb[0].mxu0
        %1097 = vmatprep.mubr.f32.mxu0 0.0
        %1098 = vmatmul.mubr.f32.gmra.mrb[0].mxu0 %v880
        %v1099 = vpop.f32.mrb[0].mxu0
        %v1100 = vadd.f32 %v779, %v1099
        %v1101 = vpop.f32.mrb[0].mxu0
        %1102 = vmatprep.mubr.f32.mxu0 0.0
        %1103 = vmatmul.mubr.f32.gmra.mrb[0].mxu0 %v883
        %v1104 = vpop.f32.mrb[0].mxu0
        %v1105 = vadd.f32 %v784, %v1104
        %v1106 = vpop.f32.mrb[0].mxu0
        %1107 = vmatprep.mubr.f32.mxu0 0.0
        %1108 = vmatmul.mubr.f32.gmra.mrb[0].mxu0 %v886
        %v1109 = vpop.f32.mrb[0].mxu0
        %v1110 = vadd.f32 %v789, %v1109
        %v1111 = vpop.f32.mrb[0].mxu0
        %1112 = vdwg.mxu0
        %v1113 = vld [vmem:[#allocation2 + $0x9] sm:$0xff]
        %v1114 = vld [vmem:[#allocation2 + $0x11] sm:$0xff]
        %v1115 = vld [vmem:[#allocation2 + $0x29] sm:$0xff]
        %v1116 = vld [vmem:[#allocation2 + $0x31] sm:$0xff]
        %v1117 = vld [vmem:[#allocation2 + $0x49] sm:$0xff]
        %v1118 = vld [vmem:[#allocation2 + $0x51] sm:$0xff]
        %v1119 = vld [vmem:[#allocation2 + $0x69] sm:$0xff]
        %v1120 = vld [vmem:[#allocation2 + $0x71] sm:$0xff]
        %v1121 = vld [vmem:[#allocation2 + $0x89] sm:$0xff]
        %v1122 = vld [vmem:[#allocation2 + $0x91] sm:$0xff]
        %v1123 = vld [vmem:[#allocation2 + $0xa9] sm:$0xff]
        %v1124 = vld [vmem:[#allocation2 + $0xb1] sm:$0xff]
        %v1125 = vld [vmem:[#allocation2 + $0xc9] sm:$0xff]
        %v1126 = vld [vmem:[#allocation2 + $0xd1] sm:$0xff]
        %v1127 = vld [vmem:[#allocation2 + $0xe9] sm:$0xff]
        %v1128 = vld [vmem:[#allocation2 + $0xf1] sm:$0xff]
        %v1129 = vld [vmem:[#allocation2 + $0x109] sm:$0xff]
        %v1130 = vld [vmem:[#allocation2 + $0x111] sm:$0xff]
        %v1131 = vld [vmem:[#allocation2 + $0x129] sm:$0xff]
        %v1132 = vld [vmem:[#allocation2 + $0x131] sm:$0xff]
        %v1133 = vld [vmem:[#allocation2 + $0x149] sm:$0xff]
        %v1134 = vld [vmem:[#allocation2 + $0x151] sm:$0xff]
        %v1135 = vld [vmem:[#allocation2 + $0x169] sm:$0xff]
        %v1136 = vld [vmem:[#allocation2 + $0x171] sm:$0xff]
        %v1137 = vld [vmem:[#allocation2 + $0x189] sm:$0xff]
        %v1138 = vld [vmem:[#allocation2 + $0x191] sm:$0xff]
        %v1139 = vld [vmem:[#allocation2 + $0x1a9] sm:$0xff]
        %v1140 = vld [vmem:[#allocation2 + $0x1b1] sm:$0xff]
        %v1141 = vld [vmem:[#allocation2 + $0x1c9] sm:$0xff]
        %v1142 = vld [vmem:[#allocation2 + $0x1d1] sm:$0xff]
        %v1143 = vld [vmem:[#allocation2 + $0x1e9] sm:$0xff]
        %v1144 = vld [vmem:[#allocation2 + $0x1f1] sm:$0xff]
        %s1145 = scalar_lea.vmem [#allocation6], 64
        %v1146 = vld [vmem:[%s1145] sm:$0xff]
        %v1147 = vld [vmem:[%s1145 + $0x8] sm:$0xff]
        %v1148 = vld [vmem:[%s1145 + $0x10] sm:$0xff]
        %v1149 = vld [vmem:[%s1145 + $0x18] sm:$0xff]
        %v1151 = vsel %vm470, %v1113, 0
        %v1154 = vsel %vm470, %v1114, 0
        %v1157 = vsel %vm470, %v1115, 0
        %v1160 = vsel %vm470, %v1116, 0
        %v1163 = vsel %vm470, %v1117, 0
        %v1166 = vsel %vm470, %v1118, 0
        %v1169 = vsel %vm470, %v1119, 0
        %v1172 = vsel %vm470, %v1120, 0
        %v1175 = vsel %vm470, %v1121, 0
        %v1178 = vsel %vm470, %v1122, 0
        %v1181 = vsel %vm470, %v1123, 0
        %v1184 = vsel %vm470, %v1124, 0
        %v1187 = vsel %vm470, %v1125, 0
        %v1190 = vsel %vm470, %v1126, 0
        %v1193 = vsel %vm470, %v1127, 0
        %v1196 = vsel %vm470, %v1128, 0
        %v1199 = vsel %vm470, %v1129, 0
        %v1202 = vsel %vm470, %v1130, 0
        %v1205 = vsel %vm470, %v1131, 0
        %v1208 = vsel %vm470, %v1132, 0
        %v1211 = vsel %vm470, %v1133, 0
        %v1214 = vsel %vm470, %v1134, 0
        %v1217 = vsel %vm470, %v1135, 0
        %v1220 = vsel %vm470, %v1136, 0
        %v1223 = vsel %vm470, %v1137, 0
        %v1226 = vsel %vm470, %v1138, 0
        %v1229 = vsel %vm470, %v1139, 0
        %v1232 = vsel %vm470, %v1140, 0
        %v1235 = vsel %vm470, %v1141, 0
        %v1238 = vsel %vm470, %v1142, 0
        %v1241 = vsel %vm470, %v1143, 0
        %v1244 = vsel %vm470, %v1144, 0
        %1246 = vmatprep.subr.mxu0 0.0
        %1247 = vmatpush1.msra.mxu0 %v1146
        %1248 = vmatprep.subr.mxu0 0.0
        %1249 = vmatpush1.msra.mxu0 %v1147
        %1250 = vmatprep.subr.mxu0 0.0
        %1251 = vmatpush1.msra.mxu0 %v1148
        %1252 = vmatprep.subr.mxu0 0.0
        %1253 = vmatpush1.msra.mxu0 %v1149
        %1254 = vmatprep.subr.mxu0 0.0
        %1255 = vmatpush1.msra.mxu0 0.0
        %1256 = vmatprep.subr.mxu0 0.0
        %1257 = vmatpush1.msra.mxu0 0.0
        %1258 = vmatprep.subr.mxu0 0.0
        %1259 = vmatpush1.msra.mxu0 0.0
        %1260 = vmatprep.subr.mxu0 0.0
        %1261 = vmatpush1.msra.mxu0 0.0
        %1262 = vmatprep.subr.mxu0 0.0
        %1263 = vmatpush1.msra.mxu0 0.0
        %1264 = vmatprep.subr.mxu0 0.0
        %1265 = vmatpush1.msra.mxu0 0.0
        %1266 = vmatprep.subr.mxu0 0.0
        %1267 = vmatpush1.msra.mxu0 0.0
        %1268 = vmatprep.subr.mxu0 0.0
        %1269 = vmatpush1.msra.mxu0 0.0
        %1270 = vmatprep.subr.mxu0 0.0
        %1271 = vmatpush1.msra.mxu0 0.0
        %1272 = vmatprep.subr.mxu0 0.0
        %1273 = vmatpush1.msra.mxu0 0.0
        %1274 = vmatprep.subr.mxu0 0.0
        %1275 = vmatpush1.msra.mxu0 0.0
        %1276 = vmatprep.subr.mxu0 0.0
        %1277 = vmatpush1.msra.mxu0 0.0
        %1278 = vmatprep.subr.mxu0 0.0
        %1279 = vmatpush1.msra.mxu0 0.0
        %1280 = vmatprep.subr.mxu0 0.0
        %1281 = vmatpush1.msra.mxu0 0.0
        %1282 = vmatprep.subr.mxu0 0.0
        %1283 = vmatpush1.msra.mxu0 0.0
        %1284 = vmatprep.subr.mxu0 0.0
        %1285 = vmatpush1.msra.mxu0 0.0
        %1286 = vmatprep.subr.mxu0 0.0
        %1287 = vmatpush1.msra.mxu0 0.0
        %1288 = vmatprep.subr.mxu0 0.0
        %1289 = vmatpush1.msra.mxu0 0.0
        %1290 = vmatprep.subr.mxu0 0.0
        %1291 = vmatpush1.msra.mxu0 0.0
        %1292 = vmatprep.subr.mxu0 0.0
        %1293 = vmatpush1.msra.mxu0 0.0
        %1294 = vmatprep.subr.mxu0 0.0
        %1295 = vmatpush1.msra.mxu0 0.0
        %1296 = vmatprep.subr.mxu0 0.0
        %1297 = vmatpush1.msra.mxu0 0.0
        %1298 = vmatprep.subr.mxu0 0.0
        %1299 = vmatpush1.msra.mxu0 0.0
        %1300 = vmatprep.subr.mxu0 0.0
        %1301 = vmatpush1.msra.mxu0 0.0
        %1302 = vmatprep.subr.mxu0 0.0
        %1303 = vmatpush1.msra.mxu0 0.0
        %1304 = vmatprep.subr.mxu0 0.0
        %1305 = vmatpush1.msra.mxu0 0.0
        %1306 = vmatprep.subr.mxu0 0.0
        %1307 = vmatpush1.msra.mxu0 0.0
        %1308 = vmatprep.subr.mxu0 0.0
        %1309 = vmatpush1.msra.mxu0 0.0
        %1310 = vmatprep.mubr.f32.mxu0 0.0
        %1311 = vmatmul.mubr.f32.gmra.mrb[0].mxu0 %v1151
        %v1312 = vpop.f32.mrb[0].mxu0
        %v1313 = vadd.f32 0.0, %v1312
        %v1314 = vpop.f32.mrb[0].mxu0
        %1315 = vmatprep.mubr.f32.mxu0 0.0
        %1316 = vmatmul.mubr.f32.gmra.mrb[0].mxu0 %v1154
        %v1317 = vpop.f32.mrb[0].mxu0
        %v1318 = vadd.f32 0.0, %v1317
        %v1319 = vpop.f32.mrb[0].mxu0
        %1320 = vmatprep.mubr.f32.mxu0 0.0
        %1321 = vmatmul.mubr.f32.gmra.mrb[0].mxu0 %v1157
        %v1322 = vpop.f32.mrb[0].mxu0
        %v1323 = vadd.f32 0.0, %v1322
        %v1324 = vpop.f32.mrb[0].mxu0
        %1325 = vmatprep.mubr.f32.mxu0 0.0
        %1326 = vmatmul.mubr.f32.gmra.mrb[0].mxu0 %v1160
        %v1327 = vpop.f32.mrb[0].mxu0
        %v1328 = vadd.f32 0.0, %v1327
        %v1329 = vpop.f32.mrb[0].mxu0
        %1330 = vmatprep.mubr.f32.mxu0 0.0
        %1331 = vmatmul.mubr.f32.gmra.mrb[0].mxu0 %v1163
        %v1332 = vpop.f32.mrb[0].mxu0
        %v1333 = vadd.f32 0.0, %v1332
        %v1334 = vpop.f32.mrb[0].mxu0
        %1335 = vmatprep.mubr.f32.mxu0 0.0
        %1336 = vmatmul.mubr.f32.gmra.mrb[0].mxu0 %v1166
        %v1337 = vpop.f32.mrb[0].mxu0
        %v1338 = vadd.f32 0.0, %v1337
        %v1339 = vpop.f32.mrb[0].mxu0
        %1340 = vmatprep.mubr.f32.mxu0 0.0
        %1341 = vmatmul.mubr.f32.gmra.mrb[0].mxu0 %v1169
        %v1342 = vpop.f32.mrb[0].mxu0
        %v1343 = vadd.f32 0.0, %v1342
        %v1344 = vpop.f32.mrb[0].mxu0
        %1345 = vmatprep.mubr.f32.mxu0 0.0
        %1346 = vmatmul.mubr.f32.gmra.mrb[0].mxu0 %v1172
        %v1347 = vpop.f32.mrb[0].mxu0
        %v1348 = vadd.f32 0.0, %v1347
        %v1349 = vpop.f32.mrb[0].mxu0
        %1350 = vmatprep.mubr.f32.mxu0 0.0
        %1351 = vmatmul.mubr.f32.gmra.mrb[0].mxu0 %v1175
        %v1352 = vpop.f32.mrb[0].mxu0
        %v1353 = vadd.f32 0.0, %v1352
        %v1354 = vpop.f32.mrb[0].mxu0
        %1355 = vmatprep.mubr.f32.mxu0 0.0
        %1356 = vmatmul.mubr.f32.gmra.mrb[0].mxu0 %v1178
        %v1357 = vpop.f32.mrb[0].mxu0
        %v1358 = vadd.f32 0.0, %v1357
        %v1359 = vpop.f32.mrb[0].mxu0
        %1360 = vmatprep.mubr.f32.mxu0 0.0
        %1361 = vmatmul.mubr.f32.gmra.mrb[0].mxu0 %v1181
        %v1362 = vpop.f32.mrb[0].mxu0
        %v1363 = vadd.f32 0.0, %v1362
        %v1364 = vpop.f32.mrb[0].mxu0
        %1365 = vmatprep.mubr.f32.mxu0 0.0
        %1366 = vmatmul.mubr.f32.gmra.mrb[0].mxu0 %v1184
        %v1367 = vpop.f32.mrb[0].mxu0
        %v1368 = vadd.f32 0.0, %v1367
        %v1369 = vpop.f32.mrb[0].mxu0
        %1370 = vmatprep.mubr.f32.mxu0 0.0
        %1371 = vmatmul.mubr.f32.gmra.mrb[0].mxu0 %v1187
        %v1372 = vpop.f32.mrb[0].mxu0
        %v1373 = vadd.f32 0.0, %v1372
        %v1374 = vpop.f32.mrb[0].mxu0
        %1375 = vmatprep.mubr.f32.mxu0 0.0
        %1376 = vmatmul.mubr.f32.gmra.mrb[0].mxu0 %v1190
        %v1377 = vpop.f32.mrb[0].mxu0
        %v1378 = vadd.f32 0.0, %v1377
        %v1379 = vpop.f32.mrb[0].mxu0
        %1380 = vmatprep.mubr.f32.mxu0 0.0
        %1381 = vmatmul.mubr.f32.gmra.mrb[0].mxu0 %v1193
        %v1382 = vpop.f32.mrb[0].mxu0
        %v1383 = vadd.f32 0.0, %v1382
        %v1384 = vpop.f32.mrb[0].mxu0
        %1385 = vmatprep.mubr.f32.mxu0 0.0
        %1386 = vmatmul.mubr.f32.gmra.mrb[0].mxu0 %v1196
        %v1387 = vpop.f32.mrb[0].mxu0
        %v1388 = vadd.f32 0.0, %v1387
        %v1389 = vpop.f32.mrb[0].mxu0
        %1390 = vmatprep.mubr.f32.mxu0 0.0
        %1391 = vmatmul.mubr.f32.gmra.mrb[0].mxu0 %v1199
        %v1392 = vpop.f32.mrb[0].mxu0
        %v1393 = vadd.f32 0.0, %v1392
        %v1394 = vpop.f32.mrb[0].mxu0
        %1395 = vmatprep.mubr.f32.mxu0 0.0
        %1396 = vmatmul.mubr.f32.gmra.mrb[0].mxu0 %v1202
        %v1397 = vpop.f32.mrb[0].mxu0
        %v1398 = vadd.f32 0.0, %v1397
        %v1399 = vpop.f32.mrb[0].mxu0
        %1400 = vmatprep.mubr.f32.mxu0 0.0
        %1401 = vmatmul.mubr.f32.gmra.mrb[0].mxu0 %v1205
        %v1402 = vpop.f32.mrb[0].mxu0
        %v1403 = vadd.f32 0.0, %v1402
        %v1404 = vpop.f32.mrb[0].mxu0
        %1405 = vmatprep.mubr.f32.mxu0 0.0
        %1406 = vmatmul.mubr.f32.gmra.mrb[0].mxu0 %v1208
        %v1407 = vpop.f32.mrb[0].mxu0
        %v1408 = vadd.f32 0.0, %v1407
        %v1409 = vpop.f32.mrb[0].mxu0
        %1410 = vmatprep.mubr.f32.mxu0 0.0
        %1411 = vmatmul.mubr.f32.gmra.mrb[0].mxu0 %v1211
        %v1412 = vpop.f32.mrb[0].mxu0
        %v1413 = vadd.f32 0.0, %v1412
        %v1414 = vpop.f32.mrb[0].mxu0
        %1415 = vmatprep.mubr.f32.mxu0 0.0
        %1416 = vmatmul.mubr.f32.gmra.mrb[0].mxu0 %v1214
        %v1417 = vpop.f32.mrb[0].mxu0
        %v1418 = vadd.f32 0.0, %v1417
        %v1419 = vpop.f32.mrb[0].mxu0
        %1420 = vmatprep.mubr.f32.mxu0 0.0
        %1421 = vmatmul.mubr.f32.gmra.mrb[0].mxu0 %v1217
        %v1422 = vpop.f32.mrb[0].mxu0
        %v1423 = vadd.f32 0.0, %v1422
        %v1424 = vpop.f32.mrb[0].mxu0
        %1425 = vmatprep.mubr.f32.mxu0 0.0
        %1426 = vmatmul.mubr.f32.gmra.mrb[0].mxu0 %v1220
        %v1427 = vpop.f32.mrb[0].mxu0
        %v1428 = vadd.f32 0.0, %v1427
        %v1429 = vpop.f32.mrb[0].mxu0
        %1430 = vmatprep.mubr.f32.mxu0 0.0
        %1431 = vmatmul.mubr.f32.gmra.mrb[0].mxu0 %v1223
        %v1432 = vpop.f32.mrb[0].mxu0
        %v1433 = vadd.f32 0.0, %v1432
        %v1434 = vpop.f32.mrb[0].mxu0
        %1435 = vmatprep.mubr.f32.mxu0 0.0
        %1436 = vmatmul.mubr.f32.gmra.mrb[0].mxu0 %v1226
        %v1437 = vpop.f32.mrb[0].mxu0
        %v1438 = vadd.f32 0.0, %v1437
        %v1439 = vpop.f32.mrb[0].mxu0
        %1440 = vmatprep.mubr.f32.mxu0 0.0
        %1441 = vmatmul.mubr.f32.gmra.mrb[0].mxu0 %v1229
        %v1442 = vpop.f32.mrb[0].mxu0
        %v1443 = vadd.f32 0.0, %v1442
        %v1444 = vpop.f32.mrb[0].mxu0
        %1445 = vmatprep.mubr.f32.mxu0 0.0
        %1446 = vmatmul.mubr.f32.gmra.mrb[0].mxu0 %v1232
        %v1447 = vpop.f32.mrb[0].mxu0
        %v1448 = vadd.f32 0.0, %v1447
        %v1449 = vpop.f32.mrb[0].mxu0
        %1450 = vmatprep.mubr.f32.mxu0 0.0
        %1451 = vmatmul.mubr.f32.gmra.mrb[0].mxu0 %v1235
        %v1452 = vpop.f32.mrb[0].mxu0
        %v1453 = vadd.f32 0.0, %v1452
        %v1454 = vpop.f32.mrb[0].mxu0
        %1455 = vmatprep.mubr.f32.mxu0 0.0
        %1456 = vmatmul.mubr.f32.gmra.mrb[0].mxu0 %v1238
        %v1457 = vpop.f32.mrb[0].mxu0
        %v1458 = vadd.f32 0.0, %v1457
        %v1459 = vpop.f32.mrb[0].mxu0
        %1460 = vmatprep.mubr.f32.mxu0 0.0
        %1461 = vmatmul.mubr.f32.gmra.mrb[0].mxu0 %v1241
        %v1462 = vpop.f32.mrb[0].mxu0
        %v1463 = vadd.f32 0.0, %v1462
        %v1464 = vpop.f32.mrb[0].mxu0
        %1465 = vmatprep.mubr.f32.mxu0 0.0
        %1466 = vmatmul.mubr.f32.gmra.mrb[0].mxu0 %v1244
        %v1467 = vpop.f32.mrb[0].mxu0
        %v1468 = vadd.f32 0.0, %v1467
        %v1469 = vpop.f32.mrb[0].mxu0
        %1470 = vdwg.mxu0
        %v1471 = vadd.f32 %v955, %v1313
        %v1472 = vadd.f32 %v960, %v1318
        %v1473 = vadd.f32 %v965, %v1323
        %v1474 = vadd.f32 %v970, %v1328
        %v1475 = vadd.f32 %v975, %v1333
        %v1476 = vadd.f32 %v980, %v1338
        %v1477 = vadd.f32 %v985, %v1343
        %v1478 = vadd.f32 %v990, %v1348
        %v1479 = vadd.f32 %v995, %v1353
        %v1480 = vadd.f32 %v1000, %v1358
        %v1481 = vadd.f32 %v1005, %v1363
        %v1482 = vadd.f32 %v1010, %v1368
        %v1483 = vadd.f32 %v1015, %v1373
        %v1484 = vadd.f32 %v1020, %v1378
        %v1485 = vadd.f32 %v1025, %v1383
        %v1486 = vadd.f32 %v1030, %v1388
        %v1487 = vadd.f32 %v1035, %v1393
        %v1488 = vadd.f32 %v1040, %v1398
        %v1489 = vadd.f32 %v1045, %v1403
        %v1490 = vadd.f32 %v1050, %v1408
        %v1491 = vadd.f32 %v1055, %v1413
        %v1492 = vadd.f32 %v1060, %v1418
        %v1493 = vadd.f32 %v1065, %v1423
        %v1494 = vadd.f32 %v1070, %v1428
        %v1495 = vadd.f32 %v1075, %v1433
        %v1496 = vadd.f32 %v1080, %v1438
        %v1497 = vadd.f32 %v1085, %v1443
        %v1498 = vadd.f32 %v1090, %v1448
        %v1499 = vadd.f32 %v1095, %v1453
        %v1500 = vadd.f32 %v1100, %v1458
        %v1501 = vadd.f32 %v1105, %v1463
        %v1502 = vadd.f32 %v1110, %v1468
        %v1503 = vld [vmem:[%s364 + $0x7] sm:$0xff]
        %v1504 = vld [vmem:[%s364 + $0xf] sm:$0xff]
        %v1505 = vld [vmem:[%s364 + $0x27] sm:$0xff]
        %v1506 = vld [vmem:[%s364 + $0x2f] sm:$0xff]
        %v1507 = vld [vmem:[%s364 + $0x47] sm:$0xff]
        %v1508 = vld [vmem:[%s364 + $0x4f] sm:$0xff]
        %v1509 = vld [vmem:[%s364 + $0x67] sm:$0xff]
        %v1510 = vld [vmem:[%s364 + $0x6f] sm:$0xff]
        %v1511 = vld [vmem:[%s364 + $0x87] sm:$0xff]
        %v1512 = vld [vmem:[%s364 + $0x8f] sm:$0xff]
        %v1513 = vld [vmem:[%s364 + $0xa7] sm:$0xff]
        %v1514 = vld [vmem:[%s364 + $0xaf] sm:$0xff]
        %v1515 = vld [vmem:[%s364 + $0xc7] sm:$0xff]
        %v1516 = vld [vmem:[%s364 + $0xcf] sm:$0xff]
        %v1517 = vld [vmem:[%s364 + $0xe7] sm:$0xff]
        %v1518 = vld [vmem:[%s364 + $0xef] sm:$0xff]
        %v1519 = vld [vmem:[%s364 + $0x107] sm:$0xff]
        %v1520 = vld [vmem:[%s364 + $0x10f] sm:$0xff]
        %v1521 = vld [vmem:[%s364 + $0x127] sm:$0xff]
        %v1522 = vld [vmem:[%s364 + $0x12f] sm:$0xff]
        %v1523 = vld [vmem:[%s364 + $0x147] sm:$0xff]
        %v1524 = vld [vmem:[%s364 + $0x14f] sm:$0xff]
        %v1525 = vld [vmem:[%s364 + $0x167] sm:$0xff]
        %v1526 = vld [vmem:[%s364 + $0x16f] sm:$0xff]
        %v1527 = vld [vmem:[%s364 + $0x187] sm:$0xff]
        %v1528 = vld [vmem:[%s364 + $0x18f] sm:$0xff]
        %v1529 = vld [vmem:[%s364 + $0x1a7] sm:$0xff]
        %v1530 = vld [vmem:[%s364 + $0x1af] sm:$0xff]
        %v1531 = vld [vmem:[%s364 + $0x1c7] sm:$0xff]
        %v1532 = vld [vmem:[%s364 + $0x1cf] sm:$0xff]
        %v1533 = vld [vmem:[%s364 + $0x1e7] sm:$0xff]
        %v1534 = vld [vmem:[%s364 + $0x1ef] sm:$0xff]
        %s1535 = scalar_lea.vmem [#allocation6], 96
        %v1536 = vld [vmem:[%s1535] sm:$0xff]
        %v1537 = vld [vmem:[%s1535 + $0x8] sm:$0xff]
        %v1538 = vld [vmem:[%s1535 + $0x10] sm:$0xff]
        %v1539 = vld [vmem:[%s1535 + $0x18] sm:$0xff]
        %v1541 = vsel %vm470, %v1503, 0
        %v1544 = vsel %vm470, %v1504, 0
        %v1547 = vsel %vm470, %v1505, 0
        %v1550 = vsel %vm470, %v1506, 0
        %v1553 = vsel %vm470, %v1507, 0
        %v1556 = vsel %vm470, %v1508, 0
        %v1559 = vsel %vm470, %v1509, 0
        %v1562 = vsel %vm470, %v1510, 0
        %v1565 = vsel %vm470, %v1511, 0
        %v1568 = vsel %vm470, %v1512, 0
        %v1571 = vsel %vm470, %v1513, 0
        %v1574 = vsel %vm470, %v1514, 0
        %v1577 = vsel %vm470, %v1515, 0
        %v1580 = vsel %vm470, %v1516, 0
        %v1583 = vsel %vm470, %v1517, 0
        %v1586 = vsel %vm470, %v1518, 0
        %v1589 = vsel %vm470, %v1519, 0
        %v1592 = vsel %vm470, %v1520, 0
        %v1595 = vsel %vm470, %v1521, 0
        %v1598 = vsel %vm470, %v1522, 0
        %v1601 = vsel %vm470, %v1523, 0
        %v1604 = vsel %vm470, %v1524, 0
        %v1607 = vsel %vm470, %v1525, 0
        %v1610 = vsel %vm470, %v1526, 0
        %v1613 = vsel %vm470, %v1527, 0
        %v1616 = vsel %vm470, %v1528, 0
        %v1619 = vsel %vm470, %v1529, 0
        %v1622 = vsel %vm470, %v1530, 0
        %v1625 = vsel %vm470, %v1531, 0
        %v1628 = vsel %vm470, %v1532, 0
        %v1631 = vsel %vm470, %v1533, 0
        %v1634 = vsel %vm470, %v1534, 0
        %1636 = vmatprep.subr.mxu0 0.0
        %1637 = vmatpush1.msra.mxu0 %v1536
        %1638 = vmatprep.subr.mxu0 0.0
        %1639 = vmatpush1.msra.mxu0 %v1537
        %1640 = vmatprep.subr.mxu0 0.0
        %1641 = vmatpush1.msra.mxu0 %v1538
        %1642 = vmatprep.subr.mxu0 0.0
        %1643 = vmatpush1.msra.mxu0 %v1539
        %1644 = vmatprep.subr.mxu0 0.0
        %1645 = vmatpush1.msra.mxu0 0.0
        %1646 = vmatprep.subr.mxu0 0.0
        %1647 = vmatpush1.msra.mxu0 0.0
        %1648 = vmatprep.subr.mxu0 0.0
        %1649 = vmatpush1.msra.mxu0 0.0
        %1650 = vmatprep.subr.mxu0 0.0
        %1651 = vmatpush1.msra.mxu0 0.0
        %1652 = vmatprep.subr.mxu0 0.0
        %1653 = vmatpush1.msra.mxu0 0.0
        %1654 = vmatprep.subr.mxu0 0.0
        %1655 = vmatpush1.msra.mxu0 0.0
        %1656 = vmatprep.subr.mxu0 0.0
        %1657 = vmatpush1.msra.mxu0 0.0
        %1658 = vmatprep.subr.mxu0 0.0
        %1659 = vmatpush1.msra.mxu0 0.0
        %1660 = vmatprep.subr.mxu0 0.0
        %1661 = vmatpush1.msra.mxu0 0.0
        %1662 = vmatprep.subr.mxu0 0.0
        %1663 = vmatpush1.msra.mxu0 0.0
        %1664 = vmatprep.subr.mxu0 0.0
        %1665 = vmatpush1.msra.mxu0 0.0
        %1666 = vmatprep.subr.mxu0 0.0
        %1667 = vmatpush1.msra.mxu0 0.0
        %1668 = vmatprep.subr.mxu0 0.0
        %1669 = vmatpush1.msra.mxu0 0.0
        %1670 = vmatprep.subr.mxu0 0.0
        %1671 = vmatpush1.msra.mxu0 0.0
        %1672 = vmatprep.subr.mxu0 0.0
        %1673 = vmatpush1.msra.mxu0 0.0
        %1674 = vmatprep.subr.mxu0 0.0
        %1675 = vmatpush1.msra.mxu0 0.0
        %1676 = vmatprep.subr.mxu0 0.0
        %1677 = vmatpush1.msra.mxu0 0.0
        %1678 = vmatprep.subr.mxu0 0.0
        %1679 = vmatpush1.msra.mxu0 0.0
        %1680 = vmatprep.subr.mxu0 0.0
        %1681 = vmatpush1.msra.mxu0 0.0
        %1682 = vmatprep.subr.mxu0 0.0
        %1683 = vmatpush1.msra.mxu0 0.0
        %1684 = vmatprep.subr.mxu0 0.0
        %1685 = vmatpush1.msra.mxu0 0.0
        %1686 = vmatprep.subr.mxu0 0.0
        %1687 = vmatpush1.msra.mxu0 0.0
        %1688 = vmatprep.subr.mxu0 0.0
        %1689 = vmatpush1.msra.mxu0 0.0
        %1690 = vmatprep.subr.mxu0 0.0
        %1691 = vmatpush1.msra.mxu0 0.0
        %1692 = vmatprep.subr.mxu0 0.0
        %1693 = vmatpush1.msra.mxu0 0.0
        %1694 = vmatprep.subr.mxu0 0.0
        %1695 = vmatpush1.msra.mxu0 0.0
        %1696 = vmatprep.subr.mxu0 0.0
        %1697 = vmatpush1.msra.mxu0 0.0
        %1698 = vmatprep.subr.mxu0 0.0
        %1699 = vmatpush1.msra.mxu0 0.0
        %1700 = vmatprep.mubr.f32.mxu0 0.0
        %1701 = vmatmul.mubr.f32.gmra.mrb[0].mxu0 %v1541
        %v1702 = vpop.f32.mrb[0].mxu0
        %v1703 = vadd.f32 0.0, %v1702
        %v1704 = vpop.f32.mrb[0].mxu0
        %1705 = vmatprep.mubr.f32.mxu0 0.0
        %1706 = vmatmul.mubr.f32.gmra.mrb[0].mxu0 %v1544
        %v1707 = vpop.f32.mrb[0].mxu0
        %v1708 = vadd.f32 0.0, %v1707
        %v1709 = vpop.f32.mrb[0].mxu0
        %1710 = vmatprep.mubr.f32.mxu0 0.0
        %1711 = vmatmul.mubr.f32.gmra.mrb[0].mxu0 %v1547
        %v1712 = vpop.f32.mrb[0].mxu0
        %v1713 = vadd.f32 0.0, %v1712
        %v1714 = vpop.f32.mrb[0].mxu0
        %1715 = vmatprep.mubr.f32.mxu0 0.0
        %1716 = vmatmul.mubr.f32.gmra.mrb[0].mxu0 %v1550
        %v1717 = vpop.f32.mrb[0].mxu0
        %v1718 = vadd.f32 0.0, %v1717
        %v1719 = vpop.f32.mrb[0].mxu0
        %1720 = vmatprep.mubr.f32.mxu0 0.0
        %1721 = vmatmul.mubr.f32.gmra.mrb[0].mxu0 %v1553
        %v1722 = vpop.f32.mrb[0].mxu0
        %v1723 = vadd.f32 0.0, %v1722
        %v1724 = vpop.f32.mrb[0].mxu0
        %1725 = vmatprep.mubr.f32.mxu0 0.0
        %1726 = vmatmul.mubr.f32.gmra.mrb[0].mxu0 %v1556
        %v1727 = vpop.f32.mrb[0].mxu0
        %v1728 = vadd.f32 0.0, %v1727
        %v1729 = vpop.f32.mrb[0].mxu0
        %1730 = vmatprep.mubr.f32.mxu0 0.0
        %1731 = vmatmul.mubr.f32.gmra.mrb[0].mxu0 %v1559
        %v1732 = vpop.f32.mrb[0].mxu0
        %v1733 = vadd.f32 0.0, %v1732
        %v1734 = vpop.f32.mrb[0].mxu0
        %1735 = vmatprep.mubr.f32.mxu0 0.0
        %1736 = vmatmul.mubr.f32.gmra.mrb[0].mxu0 %v1562
        %v1737 = vpop.f32.mrb[0].mxu0
        %v1738 = vadd.f32 0.0, %v1737
        %v1739 = vpop.f32.mrb[0].mxu0
        %1740 = vmatprep.mubr.f32.mxu0 0.0
        %1741 = vmatmul.mubr.f32.gmra.mrb[0].mxu0 %v1565
        %v1742 = vpop.f32.mrb[0].mxu0
        %v1743 = vadd.f32 0.0, %v1742
        %v1744 = vpop.f32.mrb[0].mxu0
        %1745 = vmatprep.mubr.f32.mxu0 0.0
        %1746 = vmatmul.mubr.f32.gmra.mrb[0].mxu0 %v1568
        %v1747 = vpop.f32.mrb[0].mxu0
        %v1748 = vadd.f32 0.0, %v1747
        %v1749 = vpop.f32.mrb[0].mxu0
        %1750 = vmatprep.mubr.f32.mxu0 0.0
        %1751 = vmatmul.mubr.f32.gmra.mrb[0].mxu0 %v1571
        %v1752 = vpop.f32.mrb[0].mxu0
        %v1753 = vadd.f32 0.0, %v1752
        %v1754 = vpop.f32.mrb[0].mxu0
        %1755 = vmatprep.mubr.f32.mxu0 0.0
        %1756 = vmatmul.mubr.f32.gmra.mrb[0].mxu0 %v1574
        %v1757 = vpop.f32.mrb[0].mxu0
        %v1758 = vadd.f32 0.0, %v1757
        %v1759 = vpop.f32.mrb[0].mxu0
        %1760 = vmatprep.mubr.f32.mxu0 0.0
        %1761 = vmatmul.mubr.f32.gmra.mrb[0].mxu0 %v1577
        %v1762 = vpop.f32.mrb[0].mxu0
        %v1763 = vadd.f32 0.0, %v1762
        %v1764 = vpop.f32.mrb[0].mxu0
        %1765 = vmatprep.mubr.f32.mxu0 0.0
        %1766 = vmatmul.mubr.f32.gmra.mrb[0].mxu0 %v1580
        %v1767 = vpop.f32.mrb[0].mxu0
        %v1768 = vadd.f32 0.0, %v1767
        %v1769 = vpop.f32.mrb[0].mxu0
        %1770 = vmatprep.mubr.f32.mxu0 0.0
        %1771 = vmatmul.mubr.f32.gmra.mrb[0].mxu0 %v1583
        %v1772 = vpop.f32.mrb[0].mxu0
        %v1773 = vadd.f32 0.0, %v1772
        %v1774 = vpop.f32.mrb[0].mxu0
        %1775 = vmatprep.mubr.f32.mxu0 0.0
        %1776 = vmatmul.mubr.f32.gmra.mrb[0].mxu0 %v1586
        %v1777 = vpop.f32.mrb[0].mxu0
        %v1778 = vadd.f32 0.0, %v1777
        %v1779 = vpop.f32.mrb[0].mxu0
        %1780 = vmatprep.mubr.f32.mxu0 0.0
        %1781 = vmatmul.mubr.f32.gmra.mrb[0].mxu0 %v1589
        %v1782 = vpop.f32.mrb[0].mxu0
        %v1783 = vadd.f32 0.0, %v1782
        %v1784 = vpop.f32.mrb[0].mxu0
        %1785 = vmatprep.mubr.f32.mxu0 0.0
        %1786 = vmatmul.mubr.f32.gmra.mrb[0].mxu0 %v1592
        %v1787 = vpop.f32.mrb[0].mxu0
        %v1788 = vadd.f32 0.0, %v1787
        %v1789 = vpop.f32.mrb[0].mxu0
        %1790 = vmatprep.mubr.f32.mxu0 0.0
        %1791 = vmatmul.mubr.f32.gmra.mrb[0].mxu0 %v1595
        %v1792 = vpop.f32.mrb[0].mxu0
        %v1793 = vadd.f32 0.0, %v1792
        %v1794 = vpop.f32.mrb[0].mxu0
        %1795 = vmatprep.mubr.f32.mxu0 0.0
        %1796 = vmatmul.mubr.f32.gmra.mrb[0].mxu0 %v1598
        %v1797 = vpop.f32.mrb[0].mxu0
        %v1798 = vadd.f32 0.0, %v1797
        %v1799 = vpop.f32.mrb[0].mxu0
        %1800 = vmatprep.mubr.f32.mxu0 0.0
        %1801 = vmatmul.mubr.f32.gmra.mrb[0].mxu0 %v1601
        %v1802 = vpop.f32.mrb[0].mxu0
        %v1803 = vadd.f32 0.0, %v1802
        %v1804 = vpop.f32.mrb[0].mxu0
        %1805 = vmatprep.mubr.f32.mxu0 0.0
        %1806 = vmatmul.mubr.f32.gmra.mrb[0].mxu0 %v1604
        %v1807 = vpop.f32.mrb[0].mxu0
        %v1808 = vadd.f32 0.0, %v1807
        %v1809 = vpop.f32.mrb[0].mxu0
        %1810 = vmatprep.mubr.f32.mxu0 0.0
        %1811 = vmatmul.mubr.f32.gmra.mrb[0].mxu0 %v1607
        %v1812 = vpop.f32.mrb[0].mxu0
        %v1813 = vadd.f32 0.0, %v1812
        %v1814 = vpop.f32.mrb[0].mxu0
        %1815 = vmatprep.mubr.f32.mxu0 0.0
        %1816 = vmatmul.mubr.f32.gmra.mrb[0].mxu0 %v1610
        %v1817 = vpop.f32.mrb[0].mxu0
        %v1818 = vadd.f32 0.0, %v1817
        %v1819 = vpop.f32.mrb[0].mxu0
        %1820 = vmatprep.mubr.f32.mxu0 0.0
        %1821 = vmatmul.mubr.f32.gmra.mrb[0].mxu0 %v1613
        %v1822 = vpop.f32.mrb[0].mxu0
        %v1823 = vadd.f32 0.0, %v1822
        %v1824 = vpop.f32.mrb[0].mxu0
        %1825 = vmatprep.mubr.f32.mxu0 0.0
        %1826 = vmatmul.mubr.f32.gmra.mrb[0].mxu0 %v1616
        %v1827 = vpop.f32.mrb[0].mxu0
        %v1828 = vadd.f32 0.0, %v1827
        %v1829 = vpop.f32.mrb[0].mxu0
        %1830 = vmatprep.mubr.f32.mxu0 0.0
        %1831 = vmatmul.mubr.f32.gmra.mrb[0].mxu0 %v1619
        %v1832 = vpop.f32.mrb[0].mxu0
        %v1833 = vadd.f32 0.0, %v1832
        %v1834 = vpop.f32.mrb[0].mxu0
        %1835 = vmatprep.mubr.f32.mxu0 0.0
        %1836 = vmatmul.mubr.f32.gmra.mrb[0].mxu0 %v1622
        %v1837 = vpop.f32.mrb[0].mxu0
        %v1838 = vadd.f32 0.0, %v1837
        %v1839 = vpop.f32.mrb[0].mxu0
        %1840 = vmatprep.mubr.f32.mxu0 0.0
        %1841 = vmatmul.mubr.f32.gmra.mrb[0].mxu0 %v1625
        %v1842 = vpop.f32.mrb[0].mxu0
        %v1843 = vadd.f32 0.0, %v1842
        %v1844 = vpop.f32.mrb[0].mxu0
        %1845 = vmatprep.mubr.f32.mxu0 0.0
        %1846 = vmatmul.mubr.f32.gmra.mrb[0].mxu0 %v1628
        %v1847 = vpop.f32.mrb[0].mxu0
        %v1848 = vadd.f32 0.0, %v1847
        %v1849 = vpop.f32.mrb[0].mxu0
        %1850 = vmatprep.mubr.f32.mxu0 0.0
        %1851 = vmatmul.mubr.f32.gmra.mrb[0].mxu0 %v1631
        %v1852 = vpop.f32.mrb[0].mxu0
        %v1853 = vadd.f32 0.0, %v1852
        %v1854 = vpop.f32.mrb[0].mxu0
        %1855 = vmatprep.mubr.f32.mxu0 0.0
        %1856 = vmatmul.mubr.f32.gmra.mrb[0].mxu0 %v1634
        %v1857 = vpop.f32.mrb[0].mxu0
        %v1858 = vadd.f32 0.0, %v1857
        %v1859 = vpop.f32.mrb[0].mxu0
        %1860 = vdwg.mxu0
        %v1861 = vadd.f32 %v1471, %v1703
        %v1862 = vadd.f32 %v1472, %v1708
        %v1863 = vadd.f32 %v1473, %v1713
        %v1864 = vadd.f32 %v1474, %v1718
        %v1865 = vadd.f32 %v1475, %v1723
        %v1866 = vadd.f32 %v1476, %v1728
        %v1867 = vadd.f32 %v1477, %v1733
        %v1868 = vadd.f32 %v1478, %v1738
        %v1869 = vadd.f32 %v1479, %v1743
        %v1870 = vadd.f32 %v1480, %v1748
        %v1871 = vadd.f32 %v1481, %v1753
        %v1872 = vadd.f32 %v1482, %v1758
        %v1873 = vadd.f32 %v1483, %v1763
        %v1874 = vadd.f32 %v1484, %v1768
        %v1875 = vadd.f32 %v1485, %v1773
        %v1876 = vadd.f32 %v1486, %v1778
        %v1877 = vadd.f32 %v1487, %v1783
        %v1878 = vadd.f32 %v1488, %v1788
        %v1879 = vadd.f32 %v1489, %v1793
        %v1880 = vadd.f32 %v1490, %v1798
        %v1881 = vadd.f32 %v1491, %v1803
        %v1882 = vadd.f32 %v1492, %v1808
        %v1883 = vadd.f32 %v1493, %v1813
        %v1884 = vadd.f32 %v1494, %v1818
        %v1885 = vadd.f32 %v1495, %v1823
        %v1886 = vadd.f32 %v1496, %v1828
        %v1887 = vadd.f32 %v1497, %v1833
        %v1888 = vadd.f32 %v1498, %v1838
        %v1889 = vadd.f32 %v1499, %v1843
        %v1890 = vadd.f32 %v1500, %v1848
        %v1891 = vadd.f32 %v1501, %v1853
        %v1892 = vadd.f32 %v1502, %v1858
        %v1893 = vld [vmem:[%s364 + $0x8] sm:$0xff]
        %v1894 = vld [vmem:[%s364 + $0x10] sm:$0xff]
        %v1895 = vld [vmem:[%s364 + $0x28] sm:$0xff]
        %v1896 = vld [vmem:[%s364 + $0x30] sm:$0xff]
        %v1897 = vld [vmem:[%s364 + $0x48] sm:$0xff]
        %v1898 = vld [vmem:[%s364 + $0x50] sm:$0xff]
        %v1899 = vld [vmem:[%s364 + $0x68] sm:$0xff]
        %v1900 = vld [vmem:[%s364 + $0x70] sm:$0xff]
        %v1901 = vld [vmem:[%s364 + $0x88] sm:$0xff]
        %v1902 = vld [vmem:[%s364 + $0x90] sm:$0xff]
        %v1903 = vld [vmem:[%s364 + $0xa8] sm:$0xff]
        %v1904 = vld [vmem:[%s364 + $0xb0] sm:$0xff]
        %v1905 = vld [vmem:[%s364 + $0xc8] sm:$0xff]
        %v1906 = vld [vmem:[%s364 + $0xd0] sm:$0xff]
        %v1907 = vld [vmem:[%s364 + $0xe8] sm:$0xff]
        %v1908 = vld [vmem:[%s364 + $0xf0] sm:$0xff]
        %v1909 = vld [vmem:[%s364 + $0x108] sm:$0xff]
        %v1910 = vld [vmem:[%s364 + $0x110] sm:$0xff]
        %v1911 = vld [vmem:[%s364 + $0x128] sm:$0xff]
        %v1912 = vld [vmem:[%s364 + $0x130] sm:$0xff]
        %v1913 = vld [vmem:[%s364 + $0x148] sm:$0xff]
        %v1914 = vld [vmem:[%s364 + $0x150] sm:$0xff]
        %v1915 = vld [vmem:[%s364 + $0x168] sm:$0xff]
        %v1916 = vld [vmem:[%s364 + $0x170] sm:$0xff]
        %v1917 = vld [vmem:[%s364 + $0x188] sm:$0xff]
        %v1918 = vld [vmem:[%s364 + $0x190] sm:$0xff]
        %v1919 = vld [vmem:[%s364 + $0x1a8] sm:$0xff]
        %v1920 = vld [vmem:[%s364 + $0x1b0] sm:$0xff]
        %v1921 = vld [vmem:[%s364 + $0x1c8] sm:$0xff]
        %v1922 = vld [vmem:[%s364 + $0x1d0] sm:$0xff]
        %v1923 = vld [vmem:[%s364 + $0x1e8] sm:$0xff]
        %v1924 = vld [vmem:[%s364 + $0x1f0] sm:$0xff]
        %s1925 = scalar_lea.vmem [#allocation6], 128
        %v1926 = vld [vmem:[%s1925] sm:$0xff]
        %v1927 = vld [vmem:[%s1925 + $0x8] sm:$0xff]
        %v1928 = vld [vmem:[%s1925 + $0x10] sm:$0xff]
        %v1929 = vld [vmem:[%s1925 + $0x18] sm:$0xff]
        %v1931 = vsel %vm470, %v1893, 0
        %v1934 = vsel %vm470, %v1894, 0
        %v1937 = vsel %vm470, %v1895, 0
        %v1940 = vsel %vm470, %v1896, 0
        %v1943 = vsel %vm470, %v1897, 0
        %v1946 = vsel %vm470, %v1898, 0
        %v1949 = vsel %vm470, %v1899, 0
        %v1952 = vsel %vm470, %v1900, 0
        %v1955 = vsel %vm470, %v1901, 0
        %v1958 = vsel %vm470, %v1902, 0
        %v1961 = vsel %vm470, %v1903, 0
        %v1964 = vsel %vm470, %v1904, 0
        %v1967 = vsel %vm470, %v1905, 0
        %v1970 = vsel %vm470, %v1906, 0
        %v1973 = vsel %vm470, %v1907, 0
        %v1976 = vsel %vm470, %v1908, 0
        %v1979 = vsel %vm470, %v1909, 0
        %v1982 = vsel %vm470, %v1910, 0
        %v1985 = vsel %vm470, %v1911, 0
        %v1988 = vsel %vm470, %v1912, 0
        %v1991 = vsel %vm470, %v1913, 0
        %v1994 = vsel %vm470, %v1914, 0
        %v1997 = vsel %vm470, %v1915, 0
        %v2000 = vsel %vm470, %v1916, 0
        %v2003 = vsel %vm470, %v1917, 0
        %v2006 = vsel %vm470, %v1918, 0
        %v2009 = vsel %vm470, %v1919, 0
        %v2012 = vsel %vm470, %v1920, 0
        %v2015 = vsel %vm470, %v1921, 0
        %v2018 = vsel %vm470, %v1922, 0
        %v2021 = vsel %vm470, %v1923, 0
        %v2024 = vsel %vm470, %v1924, 0
        %2026 = vmatprep.subr.mxu0 0.0
        %2027 = vmatpush1.msra.mxu0 %v1926
        %2028 = vmatprep.subr.mxu0 0.0
        %2029 = vmatpush1.msra.mxu0 %v1927
        %2030 = vmatprep.subr.mxu0 0.0
        %2031 = vmatpush1.msra.mxu0 %v1928
        %2032 = vmatprep.subr.mxu0 0.0
        %2033 = vmatpush1.msra.mxu0 %v1929
        %2034 = vmatprep.subr.mxu0 0.0
        %2035 = vmatpush1.msra.mxu0 0.0
        %2036 = vmatprep.subr.mxu0 0.0
        %2037 = vmatpush1.msra.mxu0 0.0
        %2038 = vmatprep.subr.mxu0 0.0
        %2039 = vmatpush1.msra.mxu0 0.0
        %2040 = vmatprep.subr.mxu0 0.0
        %2041 = vmatpush1.msra.mxu0 0.0
        %2042 = vmatprep.subr.mxu0 0.0
        %2043 = vmatpush1.msra.mxu0 0.0
        %2044 = vmatprep.subr.mxu0 0.0
        %2045 = vmatpush1.msra.mxu0 0.0
        %2046 = vmatprep.subr.mxu0 0.0
        %2047 = vmatpush1.msra.mxu0 0.0
        %2048 = vmatprep.subr.mxu0 0.0
        %2049 = vmatpush1.msra.mxu0 0.0
        %2050 = vmatprep.subr.mxu0 0.0
        %2051 = vmatpush1.msra.mxu0 0.0
        %2052 = vmatprep.subr.mxu0 0.0
        %2053 = vmatpush1.msra.mxu0 0.0
        %2054 = vmatprep.subr.mxu0 0.0
        %2055 = vmatpush1.msra.mxu0 0.0
        %2056 = vmatprep.subr.mxu0 0.0
        %2057 = vmatpush1.msra.mxu0 0.0
        %2058 = vmatprep.subr.mxu0 0.0
        %2059 = vmatpush1.msra.mxu0 0.0
        %2060 = vmatprep.subr.mxu0 0.0
        %2061 = vmatpush1.msra.mxu0 0.0
        %2062 = vmatprep.subr.mxu0 0.0
        %2063 = vmatpush1.msra.mxu0 0.0
        %2064 = vmatprep.subr.mxu0 0.0
        %2065 = vmatpush1.msra.mxu0 0.0
        %2066 = vmatprep.subr.mxu0 0.0
        %2067 = vmatpush1.msra.mxu0 0.0
        %2068 = vmatprep.subr.mxu0 0.0
        %2069 = vmatpush1.msra.mxu0 0.0
        %2070 = vmatprep.subr.mxu0 0.0
        %2071 = vmatpush1.msra.mxu0 0.0
        %2072 = vmatprep.subr.mxu0 0.0
        %2073 = vmatpush1.msra.mxu0 0.0
        %2074 = vmatprep.subr.mxu0 0.0
        %2075 = vmatpush1.msra.mxu0 0.0
        %2076 = vmatprep.subr.mxu0 0.0
        %2077 = vmatpush1.msra.mxu0 0.0
        %2078 = vmatprep.subr.mxu0 0.0
        %2079 = vmatpush1.msra.mxu0 0.0
        %2080 = vmatprep.subr.mxu0 0.0
        %2081 = vmatpush1.msra.mxu0 0.0
        %2082 = vmatprep.subr.mxu0 0.0
        %2083 = vmatpush1.msra.mxu0 0.0
        %2084 = vmatprep.subr.mxu0 0.0
        %2085 = vmatpush1.msra.mxu0 0.0
        %2086 = vmatprep.subr.mxu0 0.0
        %2087 = vmatpush1.msra.mxu0 0.0
        %2088 = vmatprep.subr.mxu0 0.0
        %2089 = vmatpush1.msra.mxu0 0.0
        %2090 = vmatprep.mubr.f32.mxu0 0.0
        %2091 = vmatmul.mubr.f32.gmra.mrb[0].mxu0 %v1931
        %v2092 = vpop.f32.mrb[0].mxu0
        %v2093 = vadd.f32 0.0, %v2092
        %v2094 = vpop.f32.mrb[0].mxu0
        %2095 = vmatprep.mubr.f32.mxu0 0.0
        %2096 = vmatmul.mubr.f32.gmra.mrb[0].mxu0 %v1934
        %v2097 = vpop.f32.mrb[0].mxu0
        %v2098 = vadd.f32 0.0, %v2097
        %v2099 = vpop.f32.mrb[0].mxu0
        %2100 = vmatprep.mubr.f32.mxu0 0.0
        %2101 = vmatmul.mubr.f32.gmra.mrb[0].mxu0 %v1937
        %v2102 = vpop.f32.mrb[0].mxu0
        %v2103 = vadd.f32 0.0, %v2102
        %v2104 = vpop.f32.mrb[0].mxu0
        %2105 = vmatprep.mubr.f32.mxu0 0.0
        %2106 = vmatmul.mubr.f32.gmra.mrb[0].mxu0 %v1940
        %v2107 = vpop.f32.mrb[0].mxu0
        %v2108 = vadd.f32 0.0, %v2107
        %v2109 = vpop.f32.mrb[0].mxu0
        %2110 = vmatprep.mubr.f32.mxu0 0.0
        %2111 = vmatmul.mubr.f32.gmra.mrb[0].mxu0 %v1943
        %v2112 = vpop.f32.mrb[0].mxu0
        %v2113 = vadd.f32 0.0, %v2112
        %v2114 = vpop.f32.mrb[0].mxu0
        %2115 = vmatprep.mubr.f32.mxu0 0.0
        %2116 = vmatmul.mubr.f32.gmra.mrb[0].mxu0 %v1946
        %v2117 = vpop.f32.mrb[0].mxu0
        %v2118 = vadd.f32 0.0, %v2117
        %v2119 = vpop.f32.mrb[0].mxu0
        %2120 = vmatprep.mubr.f32.mxu0 0.0
        %2121 = vmatmul.mubr.f32.gmra.mrb[0].mxu0 %v1949
        %v2122 = vpop.f32.mrb[0].mxu0
        %v2123 = vadd.f32 0.0, %v2122
        %v2124 = vpop.f32.mrb[0].mxu0
        %2125 = vmatprep.mubr.f32.mxu0 0.0
        %2126 = vmatmul.mubr.f32.gmra.mrb[0].mxu0 %v1952
        %v2127 = vpop.f32.mrb[0].mxu0
        %v2128 = vadd.f32 0.0, %v2127
        %v2129 = vpop.f32.mrb[0].mxu0
        %2130 = vmatprep.mubr.f32.mxu0 0.0
        %2131 = vmatmul.mubr.f32.gmra.mrb[0].mxu0 %v1955
        %v2132 = vpop.f32.mrb[0].mxu0
        %v2133 = vadd.f32 0.0, %v2132
        %v2134 = vpop.f32.mrb[0].mxu0
        %2135 = vmatprep.mubr.f32.mxu0 0.0
        %2136 = vmatmul.mubr.f32.gmra.mrb[0].mxu0 %v1958
        %v2137 = vpop.f32.mrb[0].mxu0
        %v2138 = vadd.f32 0.0, %v2137
        %v2139 = vpop.f32.mrb[0].mxu0
        %2140 = vmatprep.mubr.f32.mxu0 0.0
        %2141 = vmatmul.mubr.f32.gmra.mrb[0].mxu0 %v1961
        %v2142 = vpop.f32.mrb[0].mxu0
        %v2143 = vadd.f32 0.0, %v2142
        %v2144 = vpop.f32.mrb[0].mxu0
        %2145 = vmatprep.mubr.f32.mxu0 0.0
        %2146 = vmatmul.mubr.f32.gmra.mrb[0].mxu0 %v1964
        %v2147 = vpop.f32.mrb[0].mxu0
        %v2148 = vadd.f32 0.0, %v2147
        %v2149 = vpop.f32.mrb[0].mxu0
        %2150 = vmatprep.mubr.f32.mxu0 0.0
        %2151 = vmatmul.mubr.f32.gmra.mrb[0].mxu0 %v1967
        %v2152 = vpop.f32.mrb[0].mxu0
        %v2153 = vadd.f32 0.0, %v2152
        %v2154 = vpop.f32.mrb[0].mxu0
        %2155 = vmatprep.mubr.f32.mxu0 0.0
        %2156 = vmatmul.mubr.f32.gmra.mrb[0].mxu0 %v1970
        %v2157 = vpop.f32.mrb[0].mxu0
        %v2158 = vadd.f32 0.0, %v2157
        %v2159 = vpop.f32.mrb[0].mxu0
        %2160 = vmatprep.mubr.f32.mxu0 0.0
        %2161 = vmatmul.mubr.f32.gmra.mrb[0].mxu0 %v1973
        %v2162 = vpop.f32.mrb[0].mxu0
        %v2163 = vadd.f32 0.0, %v2162
        %v2164 = vpop.f32.mrb[0].mxu0
        %2165 = vmatprep.mubr.f32.mxu0 0.0
        %2166 = vmatmul.mubr.f32.gmra.mrb[0].mxu0 %v1976
        %v2167 = vpop.f32.mrb[0].mxu0
        %v2168 = vadd.f32 0.0, %v2167
        %v2169 = vpop.f32.mrb[0].mxu0
        %2170 = vmatprep.mubr.f32.mxu0 0.0
        %2171 = vmatmul.mubr.f32.gmra.mrb[0].mxu0 %v1979
        %v2172 = vpop.f32.mrb[0].mxu0
        %v2173 = vadd.f32 0.0, %v2172
        %v2174 = vpop.f32.mrb[0].mxu0
        %2175 = vmatprep.mubr.f32.mxu0 0.0
        %2176 = vmatmul.mubr.f32.gmra.mrb[0].mxu0 %v1982
        %v2177 = vpop.f32.mrb[0].mxu0
        %v2178 = vadd.f32 0.0, %v2177
        %v2179 = vpop.f32.mrb[0].mxu0
        %2180 = vmatprep.mubr.f32.mxu0 0.0
        %2181 = vmatmul.mubr.f32.gmra.mrb[0].mxu0 %v1985
        %v2182 = vpop.f32.mrb[0].mxu0
        %v2183 = vadd.f32 0.0, %v2182
        %v2184 = vpop.f32.mrb[0].mxu0
        %2185 = vmatprep.mubr.f32.mxu0 0.0
        %2186 = vmatmul.mubr.f32.gmra.mrb[0].mxu0 %v1988
        %v2187 = vpop.f32.mrb[0].mxu0
        %v2188 = vadd.f32 0.0, %v2187
        %v2189 = vpop.f32.mrb[0].mxu0
        %2190 = vmatprep.mubr.f32.mxu0 0.0
        %2191 = vmatmul.mubr.f32.gmra.mrb[0].mxu0 %v1991
        %v2192 = vpop.f32.mrb[0].mxu0
        %v2193 = vadd.f32 0.0, %v2192
        %v2194 = vpop.f32.mrb[0].mxu0
        %2195 = vmatprep.mubr.f32.mxu0 0.0
        %2196 = vmatmul.mubr.f32.gmra.mrb[0].mxu0 %v1994
        %v2197 = vpop.f32.mrb[0].mxu0
        %v2198 = vadd.f32 0.0, %v2197
        %v2199 = vpop.f32.mrb[0].mxu0
        %2200 = vmatprep.mubr.f32.mxu0 0.0
        %2201 = vmatmul.mubr.f32.gmra.mrb[0].mxu0 %v1997
        %v2202 = vpop.f32.mrb[0].mxu0
        %v2203 = vadd.f32 0.0, %v2202
        %v2204 = vpop.f32.mrb[0].mxu0
        %2205 = vmatprep.mubr.f32.mxu0 0.0
        %2206 = vmatmul.mubr.f32.gmra.mrb[0].mxu0 %v2000
        %v2207 = vpop.f32.mrb[0].mxu0
        %v2208 = vadd.f32 0.0, %v2207
        %v2209 = vpop.f32.mrb[0].mxu0
        %2210 = vmatprep.mubr.f32.mxu0 0.0
        %2211 = vmatmul.mubr.f32.gmra.mrb[0].mxu0 %v2003
        %v2212 = vpop.f32.mrb[0].mxu0
        %v2213 = vadd.f32 0.0, %v2212
        %v2214 = vpop.f32.mrb[0].mxu0
        %2215 = vmatprep.mubr.f32.mxu0 0.0
        %2216 = vmatmul.mubr.f32.gmra.mrb[0].mxu0 %v2006
        %v2217 = vpop.f32.mrb[0].mxu0
        %v2218 = vadd.f32 0.0, %v2217
        %v2219 = vpop.f32.mrb[0].mxu0
        %2220 = vmatprep.mubr.f32.mxu0 0.0
        %2221 = vmatmul.mubr.f32.gmra.mrb[0].mxu0 %v2009
        %v2222 = vpop.f32.mrb[0].mxu0
        %v2223 = vadd.f32 0.0, %v2222
        %v2224 = vpop.f32.mrb[0].mxu0
        %2225 = vmatprep.mubr.f32.mxu0 0.0
        %2226 = vmatmul.mubr.f32.gmra.mrb[0].mxu0 %v2012
        %v2227 = vpop.f32.mrb[0].mxu0
        %v2228 = vadd.f32 0.0, %v2227
        %v2229 = vpop.f32.mrb[0].mxu0
        %2230 = vmatprep.mubr.f32.mxu0 0.0
        %2231 = vmatmul.mubr.f32.gmra.mrb[0].mxu0 %v2015
        %v2232 = vpop.f32.mrb[0].mxu0
        %v2233 = vadd.f32 0.0, %v2232
        %v2234 = vpop.f32.mrb[0].mxu0
        %2235 = vmatprep.mubr.f32.mxu0 0.0
        %2236 = vmatmul.mubr.f32.gmra.mrb[0].mxu0 %v2018
        %v2237 = vpop.f32.mrb[0].mxu0
        %v2238 = vadd.f32 0.0, %v2237
        %v2239 = vpop.f32.mrb[0].mxu0
        %2240 = vmatprep.mubr.f32.mxu0 0.0
        %2241 = vmatmul.mubr.f32.gmra.mrb[0].mxu0 %v2021
        %v2242 = vpop.f32.mrb[0].mxu0
        %v2243 = vadd.f32 0.0, %v2242
        %v2244 = vpop.f32.mrb[0].mxu0
        %2245 = vmatprep.mubr.f32.mxu0 0.0
        %2246 = vmatmul.mubr.f32.gmra.mrb[0].mxu0 %v2024
        %v2247 = vpop.f32.mrb[0].mxu0
        %v2248 = vadd.f32 0.0, %v2247
        %v2249 = vpop.f32.mrb[0].mxu0
        %2250 = vdwg.mxu0
        %v2251 = vadd.f32 %v1861, %v2093
        %v2252 = vadd.f32 %v1862, %v2098
        %v2253 = vadd.f32 %v1863, %v2103
        %v2254 = vadd.f32 %v1864, %v2108
        %v2255 = vadd.f32 %v1865, %v2113
        %v2256 = vadd.f32 %v1866, %v2118
        %v2257 = vadd.f32 %v1867, %v2123
        %v2258 = vadd.f32 %v1868, %v2128
        %v2259 = vadd.f32 %v1869, %v2133
        %v2260 = vadd.f32 %v1870, %v2138
        %v2261 = vadd.f32 %v1871, %v2143
        %v2262 = vadd.f32 %v1872, %v2148
        %v2263 = vadd.f32 %v1873, %v2153
        %v2264 = vadd.f32 %v1874, %v2158
        %v2265 = vadd.f32 %v1875, %v2163
        %v2266 = vadd.f32 %v1876, %v2168
        %v2267 = vadd.f32 %v1877, %v2173
        %v2268 = vadd.f32 %v1878, %v2178
        %v2269 = vadd.f32 %v1879, %v2183
        %v2270 = vadd.f32 %v1880, %v2188
        %v2271 = vadd.f32 %v1881, %v2193
        %v2272 = vadd.f32 %v1882, %v2198
        %v2273 = vadd.f32 %v1883, %v2203
        %v2274 = vadd.f32 %v1884, %v2208
        %v2275 = vadd.f32 %v1885, %v2213
        %v2276 = vadd.f32 %v1886, %v2218
        %v2277 = vadd.f32 %v1887, %v2223
        %v2278 = vadd.f32 %v1888, %v2228
        %v2279 = vadd.f32 %v1889, %v2233
        %v2280 = vadd.f32 %v1890, %v2238
        %v2281 = vadd.f32 %v1891, %v2243
        %v2282 = vadd.f32 %v1892, %v2248
        %v2283 = vld [vmem:[%s364 + $0x9] sm:$0xff]
        %v2284 = vld [vmem:[%s364 + $0x11] sm:$0xff]
        %v2285 = vld [vmem:[%s364 + $0x29] sm:$0xff]
        %v2286 = vld [vmem:[%s364 + $0x31] sm:$0xff]
        %v2287 = vld [vmem:[%s364 + $0x49] sm:$0xff]
        %v2288 = vld [vmem:[%s364 + $0x51] sm:$0xff]
        %v2289 = vld [vmem:[%s364 + $0x69] sm:$0xff]
        %v2290 = vld [vmem:[%s364 + $0x71] sm:$0xff]
        %v2291 = vld [vmem:[%s364 + $0x89] sm:$0xff]
        %v2292 = vld [vmem:[%s364 + $0x91] sm:$0xff]
        %v2293 = vld [vmem:[%s364 + $0xa9] sm:$0xff]
        %v2294 = vld [vmem:[%s364 + $0xb1] sm:$0xff]
        %v2295 = vld [vmem:[%s364 + $0xc9] sm:$0xff]
        %v2296 = vld [vmem:[%s364 + $0xd1] sm:$0xff]
        %v2297 = vld [vmem:[%s364 + $0xe9] sm:$0xff]
        %v2298 = vld [vmem:[%s364 + $0xf1] sm:$0xff]
        %v2299 = vld [vmem:[%s364 + $0x109] sm:$0xff]
        %v2300 = vld [vmem:[%s364 + $0x111] sm:$0xff]
        %v2301 = vld [vmem:[%s364 + $0x129] sm:$0xff]
        %v2302 = vld [vmem:[%s364 + $0x131] sm:$0xff]
        %v2303 = vld [vmem:[%s364 + $0x149] sm:$0xff]
        %v2304 = vld [vmem:[%s364 + $0x151] sm:$0xff]
        %v2305 = vld [vmem:[%s364 + $0x169] sm:$0xff]
        %v2306 = vld [vmem:[%s364 + $0x171] sm:$0xff]
        %v2307 = vld [vmem:[%s364 + $0x189] sm:$0xff]
        %v2308 = vld [vmem:[%s364 + $0x191] sm:$0xff]
        %v2309 = vld [vmem:[%s364 + $0x1a9] sm:$0xff]
        %v2310 = vld [vmem:[%s364 + $0x1b1] sm:$0xff]
        %v2311 = vld [vmem:[%s364 + $0x1c9] sm:$0xff]
        %v2312 = vld [vmem:[%s364 + $0x1d1] sm:$0xff]
        %v2313 = vld [vmem:[%s364 + $0x1e9] sm:$0xff]
        %v2314 = vld [vmem:[%s364 + $0x1f1] sm:$0xff]
        %s2315 = scalar_lea.vmem [#allocation6], 160
        %v2316 = vld [vmem:[%s2315] sm:$0xff]
        %v2317 = vld [vmem:[%s2315 + $0x8] sm:$0xff]
        %v2318 = vld [vmem:[%s2315 + $0x10] sm:$0xff]
        %v2319 = vld [vmem:[%s2315 + $0x18] sm:$0xff]
        %v2321 = vsel %vm470, %v2283, 0
        %v2324 = vsel %vm470, %v2284, 0
        %v2327 = vsel %vm470, %v2285, 0
        %v2330 = vsel %vm470, %v2286, 0
        %v2333 = vsel %vm470, %v2287, 0
        %v2336 = vsel %vm470, %v2288, 0
        %v2339 = vsel %vm470, %v2289, 0
        %v2342 = vsel %vm470, %v2290, 0
        %v2345 = vsel %vm470, %v2291, 0
        %v2348 = vsel %vm470, %v2292, 0
        %v2351 = vsel %vm470, %v2293, 0
        %v2354 = vsel %vm470, %v2294, 0
        %v2357 = vsel %vm470, %v2295, 0
        %v2360 = vsel %vm470, %v2296, 0
        %v2363 = vsel %vm470, %v2297, 0
        %v2366 = vsel %vm470, %v2298, 0
        %v2369 = vsel %vm470, %v2299, 0
        %v2372 = vsel %vm470, %v2300, 0
        %v2375 = vsel %vm470, %v2301, 0
        %v2378 = vsel %vm470, %v2302, 0
        %v2381 = vsel %vm470, %v2303, 0
        %v2384 = vsel %vm470, %v2304, 0
        %v2387 = vsel %vm470, %v2305, 0
        %v2390 = vsel %vm470, %v2306, 0
        %v2393 = vsel %vm470, %v2307, 0
        %v2396 = vsel %vm470, %v2308, 0
        %v2399 = vsel %vm470, %v2309, 0
        %v2402 = vsel %vm470, %v2310, 0
        %v2405 = vsel %vm470, %v2311, 0
        %v2408 = vsel %vm470, %v2312, 0
        %v2411 = vsel %vm470, %v2313, 0
        %v2414 = vsel %vm470, %v2314, 0
        %2416 = vmatprep.subr.mxu0 0.0
        %2417 = vmatpush1.msra.mxu0 %v2316
        %2418 = vmatprep.subr.mxu0 0.0
        %2419 = vmatpush1.msra.mxu0 %v2317
        %2420 = vmatprep.subr.mxu0 0.0
        %2421 = vmatpush1.msra.mxu0 %v2318
        %2422 = vmatprep.subr.mxu0 0.0
        %2423 = vmatpush1.msra.mxu0 %v2319
        %2424 = vmatprep.subr.mxu0 0.0
        %2425 = vmatpush1.msra.mxu0 0.0
        %2426 = vmatprep.subr.mxu0 0.0
        %2427 = vmatpush1.msra.mxu0 0.0
        %2428 = vmatprep.subr.mxu0 0.0
        %2429 = vmatpush1.msra.mxu0 0.0
        %2430 = vmatprep.subr.mxu0 0.0
        %2431 = vmatpush1.msra.mxu0 0.0
        %2432 = vmatprep.subr.mxu0 0.0
        %2433 = vmatpush1.msra.mxu0 0.0
        %2434 = vmatprep.subr.mxu0 0.0
        %2435 = vmatpush1.msra.mxu0 0.0
        %2436 = vmatprep.subr.mxu0 0.0
        %2437 = vmatpush1.msra.mxu0 0.0
        %2438 = vmatprep.subr.mxu0 0.0
        %2439 = vmatpush1.msra.mxu0 0.0
        %2440 = vmatprep.subr.mxu0 0.0
        %2441 = vmatpush1.msra.mxu0 0.0
        %2442 = vmatprep.subr.mxu0 0.0
        %2443 = vmatpush1.msra.mxu0 0.0
        %2444 = vmatprep.subr.mxu0 0.0
        %2445 = vmatpush1.msra.mxu0 0.0
        %2446 = vmatprep.subr.mxu0 0.0
        %2447 = vmatpush1.msra.mxu0 0.0
        %2448 = vmatprep.subr.mxu0 0.0
        %2449 = vmatpush1.msra.mxu0 0.0
        %2450 = vmatprep.subr.mxu0 0.0
        %2451 = vmatpush1.msra.mxu0 0.0
        %2452 = vmatprep.subr.mxu0 0.0
        %2453 = vmatpush1.msra.mxu0 0.0
        %2454 = vmatprep.subr.mxu0 0.0
        %2455 = vmatpush1.msra.mxu0 0.0
        %2456 = vmatprep.subr.mxu0 0.0
        %2457 = vmatpush1.msra.mxu0 0.0
        %2458 = vmatprep.subr.mxu0 0.0
        %2459 = vmatpush1.msra.mxu0 0.0
        %2460 = vmatprep.subr.mxu0 0.0
        %2461 = vmatpush1.msra.mxu0 0.0
        %2462 = vmatprep.subr.mxu0 0.0
        %2463 = vmatpush1.msra.mxu0 0.0
        %2464 = vmatprep.subr.mxu0 0.0
        %2465 = vmatpush1.msra.mxu0 0.0
        %2466 = vmatprep.subr.mxu0 0.0
        %2467 = vmatpush1.msra.mxu0 0.0
        %2468 = vmatprep.subr.mxu0 0.0
        %2469 = vmatpush1.msra.mxu0 0.0
        %2470 = vmatprep.subr.mxu0 0.0
        %2471 = vmatpush1.msra.mxu0 0.0
        %2472 = vmatprep.subr.mxu0 0.0
        %2473 = vmatpush1.msra.mxu0 0.0
        %2474 = vmatprep.subr.mxu0 0.0
        %2475 = vmatpush1.msra.mxu0 0.0
        %2476 = vmatprep.subr.mxu0 0.0
        %2477 = vmatpush1.msra.mxu0 0.0
        %2478 = vmatprep.subr.mxu0 0.0
        %2479 = vmatpush1.msra.mxu0 0.0
        %2480 = vmatprep.mubr.f32.mxu0 0.0
        %2481 = vmatmul.mubr.f32.gmra.mrb[0].mxu0 %v2321
        %v2482 = vpop.f32.mrb[0].mxu0
        %v2483 = vadd.f32 0.0, %v2482
        %v2484 = vpop.f32.mrb[0].mxu0
        %2485 = vmatprep.mubr.f32.mxu0 0.0
        %2486 = vmatmul.mubr.f32.gmra.mrb[0].mxu0 %v2324
        %v2487 = vpop.f32.mrb[0].mxu0
        %v2488 = vadd.f32 0.0, %v2487
        %v2489 = vpop.f32.mrb[0].mxu0
        %2490 = vmatprep.mubr.f32.mxu0 0.0
        %2491 = vmatmul.mubr.f32.gmra.mrb[0].mxu0 %v2327
        %v2492 = vpop.f32.mrb[0].mxu0
        %v2493 = vadd.f32 0.0, %v2492
        %v2494 = vpop.f32.mrb[0].mxu0
        %2495 = vmatprep.mubr.f32.mxu0 0.0
        %2496 = vmatmul.mubr.f32.gmra.mrb[0].mxu0 %v2330
        %v2497 = vpop.f32.mrb[0].mxu0
        %v2498 = vadd.f32 0.0, %v2497
        %v2499 = vpop.f32.mrb[0].mxu0
        %2500 = vmatprep.mubr.f32.mxu0 0.0
        %2501 = vmatmul.mubr.f32.gmra.mrb[0].mxu0 %v2333
        %v2502 = vpop.f32.mrb[0].mxu0
        %v2503 = vadd.f32 0.0, %v2502
        %v2504 = vpop.f32.mrb[0].mxu0
        %2505 = vmatprep.mubr.f32.mxu0 0.0
        %2506 = vmatmul.mubr.f32.gmra.mrb[0].mxu0 %v2336
        %v2507 = vpop.f32.mrb[0].mxu0
        %v2508 = vadd.f32 0.0, %v2507
        %v2509 = vpop.f32.mrb[0].mxu0
        %2510 = vmatprep.mubr.f32.mxu0 0.0
        %2511 = vmatmul.mubr.f32.gmra.mrb[0].mxu0 %v2339
        %v2512 = vpop.f32.mrb[0].mxu0
        %v2513 = vadd.f32 0.0, %v2512
        %v2514 = vpop.f32.mrb[0].mxu0
        %2515 = vmatprep.mubr.f32.mxu0 0.0
        %2516 = vmatmul.mubr.f32.gmra.mrb[0].mxu0 %v2342
        %v2517 = vpop.f32.mrb[0].mxu0
        %v2518 = vadd.f32 0.0, %v2517
        %v2519 = vpop.f32.mrb[0].mxu0
        %2520 = vmatprep.mubr.f32.mxu0 0.0
        %2521 = vmatmul.mubr.f32.gmra.mrb[0].mxu0 %v2345
        %v2522 = vpop.f32.mrb[0].mxu0
        %v2523 = vadd.f32 0.0, %v2522
        %v2524 = vpop.f32.mrb[0].mxu0
        %2525 = vmatprep.mubr.f32.mxu0 0.0
        %2526 = vmatmul.mubr.f32.gmra.mrb[0].mxu0 %v2348
        %v2527 = vpop.f32.mrb[0].mxu0
        %v2528 = vadd.f32 0.0, %v2527
        %v2529 = vpop.f32.mrb[0].mxu0
        %2530 = vmatprep.mubr.f32.mxu0 0.0
        %2531 = vmatmul.mubr.f32.gmra.mrb[0].mxu0 %v2351
        %v2532 = vpop.f32.mrb[0].mxu0
        %v2533 = vadd.f32 0.0, %v2532
        %v2534 = vpop.f32.mrb[0].mxu0
        %2535 = vmatprep.mubr.f32.mxu0 0.0
        %2536 = vmatmul.mubr.f32.gmra.mrb[0].mxu0 %v2354
        %v2537 = vpop.f32.mrb[0].mxu0
        %v2538 = vadd.f32 0.0, %v2537
        %v2539 = vpop.f32.mrb[0].mxu0
        %2540 = vmatprep.mubr.f32.mxu0 0.0
        %2541 = vmatmul.mubr.f32.gmra.mrb[0].mxu0 %v2357
        %v2542 = vpop.f32.mrb[0].mxu0
        %v2543 = vadd.f32 0.0, %v2542
        %v2544 = vpop.f32.mrb[0].mxu0
        %2545 = vmatprep.mubr.f32.mxu0 0.0
        %2546 = vmatmul.mubr.f32.gmra.mrb[0].mxu0 %v2360
        %v2547 = vpop.f32.mrb[0].mxu0
        %v2548 = vadd.f32 0.0, %v2547
        %v2549 = vpop.f32.mrb[0].mxu0
        %2550 = vmatprep.mubr.f32.mxu0 0.0
        %2551 = vmatmul.mubr.f32.gmra.mrb[0].mxu0 %v2363
        %v2552 = vpop.f32.mrb[0].mxu0
        %v2553 = vadd.f32 0.0, %v2552
        %v2554 = vpop.f32.mrb[0].mxu0
        %2555 = vmatprep.mubr.f32.mxu0 0.0
        %2556 = vmatmul.mubr.f32.gmra.mrb[0].mxu0 %v2366
        %v2557 = vpop.f32.mrb[0].mxu0
        %v2558 = vadd.f32 0.0, %v2557
        %v2559 = vpop.f32.mrb[0].mxu0
        %2560 = vmatprep.mubr.f32.mxu0 0.0
        %2561 = vmatmul.mubr.f32.gmra.mrb[0].mxu0 %v2369
        %v2562 = vpop.f32.mrb[0].mxu0
        %v2563 = vadd.f32 0.0, %v2562
        %v2564 = vpop.f32.mrb[0].mxu0
        %2565 = vmatprep.mubr.f32.mxu0 0.0
        %2566 = vmatmul.mubr.f32.gmra.mrb[0].mxu0 %v2372
        %v2567 = vpop.f32.mrb[0].mxu0
        %v2568 = vadd.f32 0.0, %v2567
        %v2569 = vpop.f32.mrb[0].mxu0
        %2570 = vmatprep.mubr.f32.mxu0 0.0
        %2571 = vmatmul.mubr.f32.gmra.mrb[0].mxu0 %v2375
        %v2572 = vpop.f32.mrb[0].mxu0
        %v2573 = vadd.f32 0.0, %v2572
        %v2574 = vpop.f32.mrb[0].mxu0
        %2575 = vmatprep.mubr.f32.mxu0 0.0
        %2576 = vmatmul.mubr.f32.gmra.mrb[0].mxu0 %v2378
        %v2577 = vpop.f32.mrb[0].mxu0
        %v2578 = vadd.f32 0.0, %v2577
        %v2579 = vpop.f32.mrb[0].mxu0
        %2580 = vmatprep.mubr.f32.mxu0 0.0
        %2581 = vmatmul.mubr.f32.gmra.mrb[0].mxu0 %v2381
        %v2582 = vpop.f32.mrb[0].mxu0
        %v2583 = vadd.f32 0.0, %v2582
        %v2584 = vpop.f32.mrb[0].mxu0
        %2585 = vmatprep.mubr.f32.mxu0 0.0
        %2586 = vmatmul.mubr.f32.gmra.mrb[0].mxu0 %v2384
        %v2587 = vpop.f32.mrb[0].mxu0
        %v2588 = vadd.f32 0.0, %v2587
        %v2589 = vpop.f32.mrb[0].mxu0
        %2590 = vmatprep.mubr.f32.mxu0 0.0
        %2591 = vmatmul.mubr.f32.gmra.mrb[0].mxu0 %v2387
        %v2592 = vpop.f32.mrb[0].mxu0
        %v2593 = vadd.f32 0.0, %v2592
        %v2594 = vpop.f32.mrb[0].mxu0
        %2595 = vmatprep.mubr.f32.mxu0 0.0
        %2596 = vmatmul.mubr.f32.gmra.mrb[0].mxu0 %v2390
        %v2597 = vpop.f32.mrb[0].mxu0
        %v2598 = vadd.f32 0.0, %v2597
        %v2599 = vpop.f32.mrb[0].mxu0
        %2600 = vmatprep.mubr.f32.mxu0 0.0
        %2601 = vmatmul.mubr.f32.gmra.mrb[0].mxu0 %v2393
        %v2602 = vpop.f32.mrb[0].mxu0
        %v2603 = vadd.f32 0.0, %v2602
        %v2604 = vpop.f32.mrb[0].mxu0
        %2605 = vmatprep.mubr.f32.mxu0 0.0
        %2606 = vmatmul.mubr.f32.gmra.mrb[0].mxu0 %v2396
        %v2607 = vpop.f32.mrb[0].mxu0
        %v2608 = vadd.f32 0.0, %v2607
        %v2609 = vpop.f32.mrb[0].mxu0
        %2610 = vmatprep.mubr.f32.mxu0 0.0
        %2611 = vmatmul.mubr.f32.gmra.mrb[0].mxu0 %v2399
        %v2612 = vpop.f32.mrb[0].mxu0
        %v2613 = vadd.f32 0.0, %v2612
        %v2614 = vpop.f32.mrb[0].mxu0
        %2615 = vmatprep.mubr.f32.mxu0 0.0
        %2616 = vmatmul.mubr.f32.gmra.mrb[0].mxu0 %v2402
        %v2617 = vpop.f32.mrb[0].mxu0
        %v2618 = vadd.f32 0.0, %v2617
        %v2619 = vpop.f32.mrb[0].mxu0
        %2620 = vmatprep.mubr.f32.mxu0 0.0
        %2621 = vmatmul.mubr.f32.gmra.mrb[0].mxu0 %v2405
        %v2622 = vpop.f32.mrb[0].mxu0
        %v2623 = vadd.f32 0.0, %v2622
        %v2624 = vpop.f32.mrb[0].mxu0
        %2625 = vmatprep.mubr.f32.mxu0 0.0
        %2626 = vmatmul.mubr.f32.gmra.mrb[0].mxu0 %v2408
        %v2627 = vpop.f32.mrb[0].mxu0
        %v2628 = vadd.f32 0.0, %v2627
        %v2629 = vpop.f32.mrb[0].mxu0
        %2630 = vmatprep.mubr.f32.mxu0 0.0
        %2631 = vmatmul.mubr.f32.gmra.mrb[0].mxu0 %v2411
        %v2632 = vpop.f32.mrb[0].mxu0
        %v2633 = vadd.f32 0.0, %v2632
        %v2634 = vpop.f32.mrb[0].mxu0
        %2635 = vmatprep.mubr.f32.mxu0 0.0
        %2636 = vmatmul.mubr.f32.gmra.mrb[0].mxu0 %v2414
        %v2637 = vpop.f32.mrb[0].mxu0
        %v2638 = vadd.f32 0.0, %v2637
        %v2639 = vpop.f32.mrb[0].mxu0
        %2640 = vdwg.mxu0
        %v2641 = vadd.f32 %v2251, %v2483
        %v2642 = vadd.f32 %v2252, %v2488
        %v2643 = vadd.f32 %v2253, %v2493
        %v2644 = vadd.f32 %v2254, %v2498
        %v2645 = vadd.f32 %v2255, %v2503
        %v2646 = vadd.f32 %v2256, %v2508
        %v2647 = vadd.f32 %v2257, %v2513
        %v2648 = vadd.f32 %v2258, %v2518
        %v2649 = vadd.f32 %v2259, %v2523
        %v2650 = vadd.f32 %v2260, %v2528
        %v2651 = vadd.f32 %v2261, %v2533
        %v2652 = vadd.f32 %v2262, %v2538
        %v2653 = vadd.f32 %v2263, %v2543
        %v2654 = vadd.f32 %v2264, %v2548
        %v2655 = vadd.f32 %v2265, %v2553
        %v2656 = vadd.f32 %v2266, %v2558
        %v2657 = vadd.f32 %v2267, %v2563
        %v2658 = vadd.f32 %v2268, %v2568
        %v2659 = vadd.f32 %v2269, %v2573
        %v2660 = vadd.f32 %v2270, %v2578
        %v2661 = vadd.f32 %v2271, %v2583
        %v2662 = vadd.f32 %v2272, %v2588
        %v2663 = vadd.f32 %v2273, %v2593
        %v2664 = vadd.f32 %v2274, %v2598
        %v2665 = vadd.f32 %v2275, %v2603
        %v2666 = vadd.f32 %v2276, %v2608
        %v2667 = vadd.f32 %v2277, %v2613
        %v2668 = vadd.f32 %v2278, %v2618
        %v2669 = vadd.f32 %v2279, %v2623
        %v2670 = vadd.f32 %v2280, %v2628
        %v2671 = vadd.f32 %v2281, %v2633
        %v2672 = vadd.f32 %v2282, %v2638
        %s2673 = scalar_lea.vmem [#allocation2], 64
        %v2674 = vld [vmem:[%s2673 + $0x7] sm:$0xff]
        %v2675 = vld [vmem:[%s2673 + $0xf] sm:$0xff]
        %v2676 = vld [vmem:[%s2673 + $0x27] sm:$0xff]
        %v2677 = vld [vmem:[%s2673 + $0x2f] sm:$0xff]
        %v2678 = vld [vmem:[%s2673 + $0x47] sm:$0xff]
        %v2679 = vld [vmem:[%s2673 + $0x4f] sm:$0xff]
        %v2680 = vld [vmem:[%s2673 + $0x67] sm:$0xff]
        %v2681 = vld [vmem:[%s2673 + $0x6f] sm:$0xff]
        %v2682 = vld [vmem:[%s2673 + $0x87] sm:$0xff]
        %v2683 = vld [vmem:[%s2673 + $0x8f] sm:$0xff]
        %v2684 = vld [vmem:[%s2673 + $0xa7] sm:$0xff]
        %v2685 = vld [vmem:[%s2673 + $0xaf] sm:$0xff]
        %v2686 = vld [vmem:[%s2673 + $0xc7] sm:$0xff]
        %v2687 = vld [vmem:[%s2673 + $0xcf] sm:$0xff]
        %v2688 = vld [vmem:[%s2673 + $0xe7] sm:$0xff]
        %v2689 = vld [vmem:[%s2673 + $0xef] sm:$0xff]
        %v2690 = vld [vmem:[%s2673 + $0x107] sm:$0xff]
        %v2691 = vld [vmem:[%s2673 + $0x10f] sm:$0xff]
        %v2692 = vld [vmem:[%s2673 + $0x127] sm:$0xff]
        %v2693 = vld [vmem:[%s2673 + $0x12f] sm:$0xff]
        %v2694 = vld [vmem:[%s2673 + $0x147] sm:$0xff]
        %v2695 = vld [vmem:[%s2673 + $0x14f] sm:$0xff]
        %v2696 = vld [vmem:[%s2673 + $0x167] sm:$0xff]
        %v2697 = vld [vmem:[%s2673 + $0x16f] sm:$0xff]
        %v2698 = vld [vmem:[%s2673 + $0x187] sm:$0xff]
        %v2699 = vld [vmem:[%s2673 + $0x18f] sm:$0xff]
        %v2700 = vld [vmem:[%s2673 + $0x1a7] sm:$0xff]
        %v2701 = vld [vmem:[%s2673 + $0x1af] sm:$0xff]
        %v2702 = vld [vmem:[%s2673 + $0x1c7] sm:$0xff]
        %v2703 = vld [vmem:[%s2673 + $0x1cf] sm:$0xff]
        %v2704 = vld [vmem:[%s2673 + $0x1e7] sm:$0xff]
        %v2705 = vld [vmem:[%s2673 + $0x1ef] sm:$0xff]
        %s2706 = scalar_lea.vmem [#allocation6], 192
        %v2707 = vld [vmem:[%s2706] sm:$0xff]
        %v2708 = vld [vmem:[%s2706 + $0x8] sm:$0xff]
        %v2709 = vld [vmem:[%s2706 + $0x10] sm:$0xff]
        %v2710 = vld [vmem:[%s2706 + $0x18] sm:$0xff]
        %v2712 = vsel %vm470, %v2674, 0
        %v2715 = vsel %vm470, %v2675, 0
        %v2718 = vsel %vm470, %v2676, 0
        %v2721 = vsel %vm470, %v2677, 0
        %v2724 = vsel %vm470, %v2678, 0
        %v2727 = vsel %vm470, %v2679, 0
        %v2730 = vsel %vm470, %v2680, 0
        %v2733 = vsel %vm470, %v2681, 0
        %v2736 = vsel %vm470, %v2682, 0
        %v2739 = vsel %vm470, %v2683, 0
        %v2742 = vsel %vm470, %v2684, 0
        %v2745 = vsel %vm470, %v2685, 0
        %v2748 = vsel %vm470, %v2686, 0
        %v2751 = vsel %vm470, %v2687, 0
        %v2754 = vsel %vm470, %v2688, 0
        %v2757 = vsel %vm470, %v2689, 0
        %v2760 = vsel %vm470, %v2690, 0
        %v2763 = vsel %vm470, %v2691, 0
        %v2766 = vsel %vm470, %v2692, 0
        %v2769 = vsel %vm470, %v2693, 0
        %v2772 = vsel %vm470, %v2694, 0
        %v2775 = vsel %vm470, %v2695, 0
        %v2778 = vsel %vm470, %v2696, 0
        %v2781 = vsel %vm470, %v2697, 0
        %v2784 = vsel %vm470, %v2698, 0
        %v2787 = vsel %vm470, %v2699, 0
        %v2790 = vsel %vm470, %v2700, 0
        %v2793 = vsel %vm470, %v2701, 0
        %v2796 = vsel %vm470, %v2702, 0
        %v2799 = vsel %vm470, %v2703, 0
        %v2802 = vsel %vm470, %v2704, 0
        %v2805 = vsel %vm470, %v2705, 0
        %2807 = vmatprep.subr.mxu0 0.0
        %2808 = vmatpush1.msra.mxu0 %v2707
        %2809 = vmatprep.subr.mxu0 0.0
        %2810 = vmatpush1.msra.mxu0 %v2708
        %2811 = vmatprep.subr.mxu0 0.0
        %2812 = vmatpush1.msra.mxu0 %v2709
        %2813 = vmatprep.subr.mxu0 0.0
        %2814 = vmatpush1.msra.mxu0 %v2710
        %2815 = vmatprep.subr.mxu0 0.0
        %2816 = vmatpush1.msra.mxu0 0.0
        %2817 = vmatprep.subr.mxu0 0.0
        %2818 = vmatpush1.msra.mxu0 0.0
        %2819 = vmatprep.subr.mxu0 0.0
        %2820 = vmatpush1.msra.mxu0 0.0
        %2821 = vmatprep.subr.mxu0 0.0
        %2822 = vmatpush1.msra.mxu0 0.0
        %2823 = vmatprep.subr.mxu0 0.0
        %2824 = vmatpush1.msra.mxu0 0.0
        %2825 = vmatprep.subr.mxu0 0.0
        %2826 = vmatpush1.msra.mxu0 0.0
        %2827 = vmatprep.subr.mxu0 0.0
        %2828 = vmatpush1.msra.mxu0 0.0
        %2829 = vmatprep.subr.mxu0 0.0
        %2830 = vmatpush1.msra.mxu0 0.0
        %2831 = vmatprep.subr.mxu0 0.0
        %2832 = vmatpush1.msra.mxu0 0.0
        %2833 = vmatprep.subr.mxu0 0.0
        %2834 = vmatpush1.msra.mxu0 0.0
        %2835 = vmatprep.subr.mxu0 0.0
        %2836 = vmatpush1.msra.mxu0 0.0
        %2837 = vmatprep.subr.mxu0 0.0
        %2838 = vmatpush1.msra.mxu0 0.0
        %2839 = vmatprep.subr.mxu0 0.0
        %2840 = vmatpush1.msra.mxu0 0.0
        %2841 = vmatprep.subr.mxu0 0.0
        %2842 = vmatpush1.msra.mxu0 0.0
        %2843 = vmatprep.subr.mxu0 0.0
        %2844 = vmatpush1.msra.mxu0 0.0
        %2845 = vmatprep.subr.mxu0 0.0
        %2846 = vmatpush1.msra.mxu0 0.0
        %2847 = vmatprep.subr.mxu0 0.0
        %2848 = vmatpush1.msra.mxu0 0.0
        %2849 = vmatprep.subr.mxu0 0.0
        %2850 = vmatpush1.msra.mxu0 0.0
        %2851 = vmatprep.subr.mxu0 0.0
        %2852 = vmatpush1.msra.mxu0 0.0
        %2853 = vmatprep.subr.mxu0 0.0
        %2854 = vmatpush1.msra.mxu0 0.0
        %2855 = vmatprep.subr.mxu0 0.0
        %2856 = vmatpush1.msra.mxu0 0.0
        %2857 = vmatprep.subr.mxu0 0.0
        %2858 = vmatpush1.msra.mxu0 0.0
        %2859 = vmatprep.subr.mxu0 0.0
        %2860 = vmatpush1.msra.mxu0 0.0
        %2861 = vmatprep.subr.mxu0 0.0
        %2862 = vmatpush1.msra.mxu0 0.0
        %2863 = vmatprep.subr.mxu0 0.0
        %2864 = vmatpush1.msra.mxu0 0.0
        %2865 = vmatprep.subr.mxu0 0.0
        %2866 = vmatpush1.msra.mxu0 0.0
        %2867 = vmatprep.subr.mxu0 0.0
        %2868 = vmatpush1.msra.mxu0 0.0
        %2869 = vmatprep.subr.mxu0 0.0
        %2870 = vmatpush1.msra.mxu0 0.0
        %2871 = vmatprep.mubr.f32.mxu0 0.0
        %2872 = vmatmul.mubr.f32.gmra.mrb[0].mxu0 %v2712
        %v2873 = vpop.f32.mrb[0].mxu0
        %v2874 = vadd.f32 0.0, %v2873
        %v2875 = vpop.f32.mrb[0].mxu0
        %2876 = vmatprep.mubr.f32.mxu0 0.0
        %2877 = vmatmul.mubr.f32.gmra.mrb[0].mxu0 %v2715
        %v2878 = vpop.f32.mrb[0].mxu0
        %v2879 = vadd.f32 0.0, %v2878
        %v2880 = vpop.f32.mrb[0].mxu0
        %2881 = vmatprep.mubr.f32.mxu0 0.0
        %2882 = vmatmul.mubr.f32.gmra.mrb[0].mxu0 %v2718
        %v2883 = vpop.f32.mrb[0].mxu0
        %v2884 = vadd.f32 0.0, %v2883
        %v2885 = vpop.f32.mrb[0].mxu0
        %2886 = vmatprep.mubr.f32.mxu0 0.0
        %2887 = vmatmul.mubr.f32.gmra.mrb[0].mxu0 %v2721
        %v2888 = vpop.f32.mrb[0].mxu0
        %v2889 = vadd.f32 0.0, %v2888
        %v2890 = vpop.f32.mrb[0].mxu0
        %2891 = vmatprep.mubr.f32.mxu0 0.0
        %2892 = vmatmul.mubr.f32.gmra.mrb[0].mxu0 %v2724
        %v2893 = vpop.f32.mrb[0].mxu0
        %v2894 = vadd.f32 0.0, %v2893
        %v2895 = vpop.f32.mrb[0].mxu0
        %2896 = vmatprep.mubr.f32.mxu0 0.0
        %2897 = vmatmul.mubr.f32.gmra.mrb[0].mxu0 %v2727
        %v2898 = vpop.f32.mrb[0].mxu0
        %v2899 = vadd.f32 0.0, %v2898
        %v2900 = vpop.f32.mrb[0].mxu0
        %2901 = vmatprep.mubr.f32.mxu0 0.0
        %2902 = vmatmul.mubr.f32.gmra.mrb[0].mxu0 %v2730
        %v2903 = vpop.f32.mrb[0].mxu0
        %v2904 = vadd.f32 0.0, %v2903
        %v2905 = vpop.f32.mrb[0].mxu0
        %2906 = vmatprep.mubr.f32.mxu0 0.0
        %2907 = vmatmul.mubr.f32.gmra.mrb[0].mxu0 %v2733
        %v2908 = vpop.f32.mrb[0].mxu0
        %v2909 = vadd.f32 0.0, %v2908
        %v2910 = vpop.f32.mrb[0].mxu0
        %2911 = vmatprep.mubr.f32.mxu0 0.0
        %2912 = vmatmul.mubr.f32.gmra.mrb[0].mxu0 %v2736
        %v2913 = vpop.f32.mrb[0].mxu0
        %v2914 = vadd.f32 0.0, %v2913
        %v2915 = vpop.f32.mrb[0].mxu0
        %2916 = vmatprep.mubr.f32.mxu0 0.0
        %2917 = vmatmul.mubr.f32.gmra.mrb[0].mxu0 %v2739
        %v2918 = vpop.f32.mrb[0].mxu0
        %v2919 = vadd.f32 0.0, %v2918
        %v2920 = vpop.f32.mrb[0].mxu0
        %2921 = vmatprep.mubr.f32.mxu0 0.0
        %2922 = vmatmul.mubr.f32.gmra.mrb[0].mxu0 %v2742
        %v2923 = vpop.f32.mrb[0].mxu0
        %v2924 = vadd.f32 0.0, %v2923
        %v2925 = vpop.f32.mrb[0].mxu0
        %2926 = vmatprep.mubr.f32.mxu0 0.0
        %2927 = vmatmul.mubr.f32.gmra.mrb[0].mxu0 %v2745
        %v2928 = vpop.f32.mrb[0].mxu0
        %v2929 = vadd.f32 0.0, %v2928
        %v2930 = vpop.f32.mrb[0].mxu0
        %2931 = vmatprep.mubr.f32.mxu0 0.0
        %2932 = vmatmul.mubr.f32.gmra.mrb[0].mxu0 %v2748
        %v2933 = vpop.f32.mrb[0].mxu0
        %v2934 = vadd.f32 0.0, %v2933
        %v2935 = vpop.f32.mrb[0].mxu0
        %2936 = vmatprep.mubr.f32.mxu0 0.0
        %2937 = vmatmul.mubr.f32.gmra.mrb[0].mxu0 %v2751
        %v2938 = vpop.f32.mrb[0].mxu0
        %v2939 = vadd.f32 0.0, %v2938
        %v2940 = vpop.f32.mrb[0].mxu0
        %2941 = vmatprep.mubr.f32.mxu0 0.0
        %2942 = vmatmul.mubr.f32.gmra.mrb[0].mxu0 %v2754
        %v2943 = vpop.f32.mrb[0].mxu0
        %v2944 = vadd.f32 0.0, %v2943
        %v2945 = vpop.f32.mrb[0].mxu0
        %2946 = vmatprep.mubr.f32.mxu0 0.0
        %2947 = vmatmul.mubr.f32.gmra.mrb[0].mxu0 %v2757
        %v2948 = vpop.f32.mrb[0].mxu0
        %v2949 = vadd.f32 0.0, %v2948
        %v2950 = vpop.f32.mrb[0].mxu0
        %2951 = vmatprep.mubr.f32.mxu0 0.0
        %2952 = vmatmul.mubr.f32.gmra.mrb[0].mxu0 %v2760
        %v2953 = vpop.f32.mrb[0].mxu0
        %v2954 = vadd.f32 0.0, %v2953
        %v2955 = vpop.f32.mrb[0].mxu0
        %2956 = vmatprep.mubr.f32.mxu0 0.0
        %2957 = vmatmul.mubr.f32.gmra.mrb[0].mxu0 %v2763
        %v2958 = vpop.f32.mrb[0].mxu0
        %v2959 = vadd.f32 0.0, %v2958
        %v2960 = vpop.f32.mrb[0].mxu0
        %2961 = vmatprep.mubr.f32.mxu0 0.0
        %2962 = vmatmul.mubr.f32.gmra.mrb[0].mxu0 %v2766
        %v2963 = vpop.f32.mrb[0].mxu0
        %v2964 = vadd.f32 0.0, %v2963
        %v2965 = vpop.f32.mrb[0].mxu0
        %2966 = vmatprep.mubr.f32.mxu0 0.0
        %2967 = vmatmul.mubr.f32.gmra.mrb[0].mxu0 %v2769
        %v2968 = vpop.f32.mrb[0].mxu0
        %v2969 = vadd.f32 0.0, %v2968
        %v2970 = vpop.f32.mrb[0].mxu0
        %2971 = vmatprep.mubr.f32.mxu0 0.0
        %2972 = vmatmul.mubr.f32.gmra.mrb[0].mxu0 %v2772
        %v2973 = vpop.f32.mrb[0].mxu0
        %v2974 = vadd.f32 0.0, %v2973
        %v2975 = vpop.f32.mrb[0].mxu0
        %2976 = vmatprep.mubr.f32.mxu0 0.0
        %2977 = vmatmul.mubr.f32.gmra.mrb[0].mxu0 %v2775
        %v2978 = vpop.f32.mrb[0].mxu0
        %v2979 = vadd.f32 0.0, %v2978
        %v2980 = vpop.f32.mrb[0].mxu0
        %2981 = vmatprep.mubr.f32.mxu0 0.0
        %2982 = vmatmul.mubr.f32.gmra.mrb[0].mxu0 %v2778
        %v2983 = vpop.f32.mrb[0].mxu0
        %v2984 = vadd.f32 0.0, %v2983
        %v2985 = vpop.f32.mrb[0].mxu0
        %2986 = vmatprep.mubr.f32.mxu0 0.0
        %2987 = vmatmul.mubr.f32.gmra.mrb[0].mxu0 %v2781
        %v2988 = vpop.f32.mrb[0].mxu0
        %v2989 = vadd.f32 0.0, %v2988
        %v2990 = vpop.f32.mrb[0].mxu0
        %2991 = vmatprep.mubr.f32.mxu0 0.0
        %2992 = vmatmul.mubr.f32.gmra.mrb[0].mxu0 %v2784
        %v2993 = vpop.f32.mrb[0].mxu0
        %v2994 = vadd.f32 0.0, %v2993
        %v2995 = vpop.f32.mrb[0].mxu0
        %2996 = vmatprep.mubr.f32.mxu0 0.0
        %2997 = vmatmul.mubr.f32.gmra.mrb[0].mxu0 %v2787
        %v2998 = vpop.f32.mrb[0].mxu0
        %v2999 = vadd.f32 0.0, %v2998
        %v3000 = vpop.f32.mrb[0].mxu0
        %3001 = vmatprep.mubr.f32.mxu0 0.0
        %3002 = vmatmul.mubr.f32.gmra.mrb[0].mxu0 %v2790
        %v3003 = vpop.f32.mrb[0].mxu0
        %v3004 = vadd.f32 0.0, %v3003
        %v3005 = vpop.f32.mrb[0].mxu0
        %3006 = vmatprep.mubr.f32.mxu0 0.0
        %3007 = vmatmul.mubr.f32.gmra.mrb[0].mxu0 %v2793
        %v3008 = vpop.f32.mrb[0].mxu0
        %v3009 = vadd.f32 0.0, %v3008
        %v3010 = vpop.f32.mrb[0].mxu0
        %3011 = vmatprep.mubr.f32.mxu0 0.0
        %3012 = vmatmul.mubr.f32.gmra.mrb[0].mxu0 %v2796
        %v3013 = vpop.f32.mrb[0].mxu0
        %v3014 = vadd.f32 0.0, %v3013
        %v3015 = vpop.f32.mrb[0].mxu0
        %3016 = vmatprep.mubr.f32.mxu0 0.0
        %3017 = vmatmul.mubr.f32.gmra.mrb[0].mxu0 %v2799
        %v3018 = vpop.f32.mrb[0].mxu0
        %v3019 = vadd.f32 0.0, %v3018
        %v3020 = vpop.f32.mrb[0].mxu0
        %3021 = vmatprep.mubr.f32.mxu0 0.0
        %3022 = vmatmul.mubr.f32.gmra.mrb[0].mxu0 %v2802
        %v3023 = vpop.f32.mrb[0].mxu0
        %v3024 = vadd.f32 0.0, %v3023
        %v3025 = vpop.f32.mrb[0].mxu0
        %3026 = vmatprep.mubr.f32.mxu0 0.0
        %3027 = vmatmul.mubr.f32.gmra.mrb[0].mxu0 %v2805
        %v3028 = vpop.f32.mrb[0].mxu0
        %v3029 = vadd.f32 0.0, %v3028
        %v3030 = vpop.f32.mrb[0].mxu0
        %3031 = vdwg.mxu0
        %v3032 = vadd.f32 %v2641, %v2874
        %v3033 = vadd.f32 %v2642, %v2879
        %v3034 = vadd.f32 %v2643, %v2884
        %v3035 = vadd.f32 %v2644, %v2889
        %v3036 = vadd.f32 %v2645, %v2894
        %v3037 = vadd.f32 %v2646, %v2899
        %v3038 = vadd.f32 %v2647, %v2904
        %v3039 = vadd.f32 %v2648, %v2909
        %v3040 = vadd.f32 %v2649, %v2914
        %v3041 = vadd.f32 %v2650, %v2919
        %v3042 = vadd.f32 %v2651, %v2924
        %v3043 = vadd.f32 %v2652, %v2929
        %v3044 = vadd.f32 %v2653, %v2934
        %v3045 = vadd.f32 %v2654, %v2939
        %v3046 = vadd.f32 %v2655, %v2944
        %v3047 = vadd.f32 %v2656, %v2949
        %v3048 = vadd.f32 %v2657, %v2954
        %v3049 = vadd.f32 %v2658, %v2959
        %v3050 = vadd.f32 %v2659, %v2964
        %v3051 = vadd.f32 %v2660, %v2969
        %v3052 = vadd.f32 %v2661, %v2974
        %v3053 = vadd.f32 %v2662, %v2979
        %v3054 = vadd.f32 %v2663, %v2984
        %v3055 = vadd.f32 %v2664, %v2989
        %v3056 = vadd.f32 %v2665, %v2994
        %v3057 = vadd.f32 %v2666, %v2999
        %v3058 = vadd.f32 %v2667, %v3004
        %v3059 = vadd.f32 %v2668, %v3009
        %v3060 = vadd.f32 %v2669, %v3014
        %v3061 = vadd.f32 %v2670, %v3019
        %v3062 = vadd.f32 %v2671, %v3024
        %v3063 = vadd.f32 %v2672, %v3029
        %v3064 = vld [vmem:[%s2673 + $0x8] sm:$0xff]
        %v3065 = vld [vmem:[%s2673 + $0x10] sm:$0xff]
        %v3066 = vld [vmem:[%s2673 + $0x28] sm:$0xff]
        %v3067 = vld [vmem:[%s2673 + $0x30] sm:$0xff]
        %v3068 = vld [vmem:[%s2673 + $0x48] sm:$0xff]
        %v3069 = vld [vmem:[%s2673 + $0x50] sm:$0xff]
        %v3070 = vld [vmem:[%s2673 + $0x68] sm:$0xff]
        %v3071 = vld [vmem:[%s2673 + $0x70] sm:$0xff]
        %v3072 = vld [vmem:[%s2673 + $0x88] sm:$0xff]
        %v3073 = vld [vmem:[%s2673 + $0x90] sm:$0xff]
        %v3074 = vld [vmem:[%s2673 + $0xa8] sm:$0xff]
        %v3075 = vld [vmem:[%s2673 + $0xb0] sm:$0xff]
        %v3076 = vld [vmem:[%s2673 + $0xc8] sm:$0xff]
        %v3077 = vld [vmem:[%s2673 + $0xd0] sm:$0xff]
        %v3078 = vld [vmem:[%s2673 + $0xe8] sm:$0xff]
        %v3079 = vld [vmem:[%s2673 + $0xf0] sm:$0xff]
        %v3080 = vld [vmem:[%s2673 + $0x108] sm:$0xff]
        %v3081 = vld [vmem:[%s2673 + $0x110] sm:$0xff]
        %v3082 = vld [vmem:[%s2673 + $0x128] sm:$0xff]
        %v3083 = vld [vmem:[%s2673 + $0x130] sm:$0xff]
        %v3084 = vld [vmem:[%s2673 + $0x148] sm:$0xff]
        %v3085 = vld [vmem:[%s2673 + $0x150] sm:$0xff]
        %v3086 = vld [vmem:[%s2673 + $0x168] sm:$0xff]
        %v3087 = vld [vmem:[%s2673 + $0x170] sm:$0xff]
        %v3088 = vld [vmem:[%s2673 + $0x188] sm:$0xff]
        %v3089 = vld [vmem:[%s2673 + $0x190] sm:$0xff]
        %v3090 = vld [vmem:[%s2673 + $0x1a8] sm:$0xff]
        %v3091 = vld [vmem:[%s2673 + $0x1b0] sm:$0xff]
        %v3092 = vld [vmem:[%s2673 + $0x1c8] sm:$0xff]
        %v3093 = vld [vmem:[%s2673 + $0x1d0] sm:$0xff]
        %v3094 = vld [vmem:[%s2673 + $0x1e8] sm:$0xff]
        %v3095 = vld [vmem:[%s2673 + $0x1f0] sm:$0xff]
        %s3096 = scalar_lea.vmem [#allocation6], 224
        %v3097 = vld [vmem:[%s3096] sm:$0xff]
        %v3098 = vld [vmem:[%s3096 + $0x8] sm:$0xff]
        %v3099 = vld [vmem:[%s3096 + $0x10] sm:$0xff]
        %v3100 = vld [vmem:[%s3096 + $0x18] sm:$0xff]
        %v3102 = vsel %vm470, %v3064, 0
        %v3105 = vsel %vm470, %v3065, 0
        %v3108 = vsel %vm470, %v3066, 0
        %v3111 = vsel %vm470, %v3067, 0
        %v3114 = vsel %vm470, %v3068, 0
        %v3117 = vsel %vm470, %v3069, 0
        %v3120 = vsel %vm470, %v3070, 0
        %v3123 = vsel %vm470, %v3071, 0
        %v3126 = vsel %vm470, %v3072, 0
        %v3129 = vsel %vm470, %v3073, 0
        %v3132 = vsel %vm470, %v3074, 0
        %v3135 = vsel %vm470, %v3075, 0
        %v3138 = vsel %vm470, %v3076, 0
        %v3141 = vsel %vm470, %v3077, 0
        %v3144 = vsel %vm470, %v3078, 0
        %v3147 = vsel %vm470, %v3079, 0
        %v3150 = vsel %vm470, %v3080, 0
        %v3153 = vsel %vm470, %v3081, 0
        %v3156 = vsel %vm470, %v3082, 0
        %v3159 = vsel %vm470, %v3083, 0
        %v3162 = vsel %vm470, %v3084, 0
        %v3165 = vsel %vm470, %v3085, 0
        %v3168 = vsel %vm470, %v3086, 0
        %v3171 = vsel %vm470, %v3087, 0
        %v3174 = vsel %vm470, %v3088, 0
        %v3177 = vsel %vm470, %v3089, 0
        %v3180 = vsel %vm470, %v3090, 0
        %v3183 = vsel %vm470, %v3091, 0
        %v3186 = vsel %vm470, %v3092, 0
        %v3189 = vsel %vm470, %v3093, 0
        %v3192 = vsel %vm470, %v3094, 0
        %v3195 = vsel %vm470, %v3095, 0
        %3197 = vmatprep.subr.mxu0 0.0
        %3198 = vmatpush1.msra.mxu0 %v3097
        %3199 = vmatprep.subr.mxu0 0.0
        %3200 = vmatpush1.msra.mxu0 %v3098
        %3201 = vmatprep.subr.mxu0 0.0
        %3202 = vmatpush1.msra.mxu0 %v3099
        %3203 = vmatprep.subr.mxu0 0.0
        %3204 = vmatpush1.msra.mxu0 %v3100
        %3205 = vmatprep.subr.mxu0 0.0
        %3206 = vmatpush1.msra.mxu0 0.0
        %3207 = vmatprep.subr.mxu0 0.0
        %3208 = vmatpush1.msra.mxu0 0.0
        %3209 = vmatprep.subr.mxu0 0.0
        %3210 = vmatpush1.msra.mxu0 0.0
        %3211 = vmatprep.subr.mxu0 0.0
        %3212 = vmatpush1.msra.mxu0 0.0
        %3213 = vmatprep.subr.mxu0 0.0
        %3214 = vmatpush1.msra.mxu0 0.0
        %3215 = vmatprep.subr.mxu0 0.0
        %3216 = vmatpush1.msra.mxu0 0.0
        %3217 = vmatprep.subr.mxu0 0.0
        %3218 = vmatpush1.msra.mxu0 0.0
        %3219 = vmatprep.subr.mxu0 0.0
        %3220 = vmatpush1.msra.mxu0 0.0
        %3221 = vmatprep.subr.mxu0 0.0
        %3222 = vmatpush1.msra.mxu0 0.0
        %3223 = vmatprep.subr.mxu0 0.0
        %3224 = vmatpush1.msra.mxu0 0.0
        %3225 = vmatprep.subr.mxu0 0.0
        %3226 = vmatpush1.msra.mxu0 0.0
        %3227 = vmatprep.subr.mxu0 0.0
        %3228 = vmatpush1.msra.mxu0 0.0
        %3229 = vmatprep.subr.mxu0 0.0
        %3230 = vmatpush1.msra.mxu0 0.0
        %3231 = vmatprep.subr.mxu0 0.0
        %3232 = vmatpush1.msra.mxu0 0.0
        %3233 = vmatprep.subr.mxu0 0.0
        %3234 = vmatpush1.msra.mxu0 0.0
        %3235 = vmatprep.subr.mxu0 0.0
        %3236 = vmatpush1.msra.mxu0 0.0
        %3237 = vmatprep.subr.mxu0 0.0
        %3238 = vmatpush1.msra.mxu0 0.0
        %3239 = vmatprep.subr.mxu0 0.0
        %3240 = vmatpush1.msra.mxu0 0.0
        %3241 = vmatprep.subr.mxu0 0.0
        %3242 = vmatpush1.msra.mxu0 0.0
        %3243 = vmatprep.subr.mxu0 0.0
        %3244 = vmatpush1.msra.mxu0 0.0
        %3245 = vmatprep.subr.mxu0 0.0
        %3246 = vmatpush1.msra.mxu0 0.0
        %3247 = vmatprep.subr.mxu0 0.0
        %3248 = vmatpush1.msra.mxu0 0.0
        %3249 = vmatprep.subr.mxu0 0.0
        %3250 = vmatpush1.msra.mxu0 0.0
        %3251 = vmatprep.subr.mxu0 0.0
        %3252 = vmatpush1.msra.mxu0 0.0
        %3253 = vmatprep.subr.mxu0 0.0
        %3254 = vmatpush1.msra.mxu0 0.0
        %3255 = vmatprep.subr.mxu0 0.0
        %3256 = vmatpush1.msra.mxu0 0.0
        %3257 = vmatprep.subr.mxu0 0.0
        %3258 = vmatpush1.msra.mxu0 0.0
        %3259 = vmatprep.subr.mxu0 0.0
        %3260 = vmatpush1.msra.mxu0 0.0
        %3261 = vmatprep.mubr.f32.mxu0 0.0
        %3262 = vmatmul.mubr.f32.gmra.mrb[0].mxu0 %v3102
        %v3263 = vpop.f32.mrb[0].mxu0
        %v3264 = vadd.f32 0.0, %v3263
        %v3265 = vpop.f32.mrb[0].mxu0
        %3266 = vmatprep.mubr.f32.mxu0 0.0
        %3267 = vmatmul.mubr.f32.gmra.mrb[0].mxu0 %v3105
        %v3268 = vpop.f32.mrb[0].mxu0
        %v3269 = vadd.f32 0.0, %v3268
        %v3270 = vpop.f32.mrb[0].mxu0
        %3271 = vmatprep.mubr.f32.mxu0 0.0
        %3272 = vmatmul.mubr.f32.gmra.mrb[0].mxu0 %v3108
        %v3273 = vpop.f32.mrb[0].mxu0
        %v3274 = vadd.f32 0.0, %v3273
        %v3275 = vpop.f32.mrb[0].mxu0
        %3276 = vmatprep.mubr.f32.mxu0 0.0
        %3277 = vmatmul.mubr.f32.gmra.mrb[0].mxu0 %v3111
        %v3278 = vpop.f32.mrb[0].mxu0
        %v3279 = vadd.f32 0.0, %v3278
        %v3280 = vpop.f32.mrb[0].mxu0
        %3281 = vmatprep.mubr.f32.mxu0 0.0
        %3282 = vmatmul.mubr.f32.gmra.mrb[0].mxu0 %v3114
        %v3283 = vpop.f32.mrb[0].mxu0
        %v3284 = vadd.f32 0.0, %v3283
        %v3285 = vpop.f32.mrb[0].mxu0
        %3286 = vmatprep.mubr.f32.mxu0 0.0
        %3287 = vmatmul.mubr.f32.gmra.mrb[0].mxu0 %v3117
        %v3288 = vpop.f32.mrb[0].mxu0
        %v3289 = vadd.f32 0.0, %v3288
        %v3290 = vpop.f32.mrb[0].mxu0
        %3291 = vmatprep.mubr.f32.mxu0 0.0
        %3292 = vmatmul.mubr.f32.gmra.mrb[0].mxu0 %v3120
        %v3293 = vpop.f32.mrb[0].mxu0
        %v3294 = vadd.f32 0.0, %v3293
        %v3295 = vpop.f32.mrb[0].mxu0
        %3296 = vmatprep.mubr.f32.mxu0 0.0
        %3297 = vmatmul.mubr.f32.gmra.mrb[0].mxu0 %v3123
        %v3298 = vpop.f32.mrb[0].mxu0
        %v3299 = vadd.f32 0.0, %v3298
        %v3300 = vpop.f32.mrb[0].mxu0
        %3301 = vmatprep.mubr.f32.mxu0 0.0
        %3302 = vmatmul.mubr.f32.gmra.mrb[0].mxu0 %v3126
        %v3303 = vpop.f32.mrb[0].mxu0
        %v3304 = vadd.f32 0.0, %v3303
        %v3305 = vpop.f32.mrb[0].mxu0
        %3306 = vmatprep.mubr.f32.mxu0 0.0
        %3307 = vmatmul.mubr.f32.gmra.mrb[0].mxu0 %v3129
        %v3308 = vpop.f32.mrb[0].mxu0
        %v3309 = vadd.f32 0.0, %v3308
        %v3310 = vpop.f32.mrb[0].mxu0
        %3311 = vmatprep.mubr.f32.mxu0 0.0
        %3312 = vmatmul.mubr.f32.gmra.mrb[0].mxu0 %v3132
        %v3313 = vpop.f32.mrb[0].mxu0
        %v3314 = vadd.f32 0.0, %v3313
        %v3315 = vpop.f32.mrb[0].mxu0
        %3316 = vmatprep.mubr.f32.mxu0 0.0
        %3317 = vmatmul.mubr.f32.gmra.mrb[0].mxu0 %v3135
        %v3318 = vpop.f32.mrb[0].mxu0
        %v3319 = vadd.f32 0.0, %v3318
        %v3320 = vpop.f32.mrb[0].mxu0
        %3321 = vmatprep.mubr.f32.mxu0 0.0
        %3322 = vmatmul.mubr.f32.gmra.mrb[0].mxu0 %v3138
        %v3323 = vpop.f32.mrb[0].mxu0
        %v3324 = vadd.f32 0.0, %v3323
        %v3325 = vpop.f32.mrb[0].mxu0
        %3326 = vmatprep.mubr.f32.mxu0 0.0
        %3327 = vmatmul.mubr.f32.gmra.mrb[0].mxu0 %v3141
        %v3328 = vpop.f32.mrb[0].mxu0
        %v3329 = vadd.f32 0.0, %v3328
        %v3330 = vpop.f32.mrb[0].mxu0
        %3331 = vmatprep.mubr.f32.mxu0 0.0
        %3332 = vmatmul.mubr.f32.gmra.mrb[0].mxu0 %v3144
        %v3333 = vpop.f32.mrb[0].mxu0
        %v3334 = vadd.f32 0.0, %v3333
        %v3335 = vpop.f32.mrb[0].mxu0
        %3336 = vmatprep.mubr.f32.mxu0 0.0
        %3337 = vmatmul.mubr.f32.gmra.mrb[0].mxu0 %v3147
        %v3338 = vpop.f32.mrb[0].mxu0
        %v3339 = vadd.f32 0.0, %v3338
        %v3340 = vpop.f32.mrb[0].mxu0
        %3341 = vmatprep.mubr.f32.mxu0 0.0
        %3342 = vmatmul.mubr.f32.gmra.mrb[0].mxu0 %v3150
        %v3343 = vpop.f32.mrb[0].mxu0
        %v3344 = vadd.f32 0.0, %v3343
        %v3345 = vpop.f32.mrb[0].mxu0
        %3346 = vmatprep.mubr.f32.mxu0 0.0
        %3347 = vmatmul.mubr.f32.gmra.mrb[0].mxu0 %v3153
        %v3348 = vpop.f32.mrb[0].mxu0
        %v3349 = vadd.f32 0.0, %v3348
        %v3350 = vpop.f32.mrb[0].mxu0
        %3351 = vmatprep.mubr.f32.mxu0 0.0
        %3352 = vmatmul.mubr.f32.gmra.mrb[0].mxu0 %v3156
        %v3353 = vpop.f32.mrb[0].mxu0
        %v3354 = vadd.f32 0.0, %v3353
        %v3355 = vpop.f32.mrb[0].mxu0
        %3356 = vmatprep.mubr.f32.mxu0 0.0
        %3357 = vmatmul.mubr.f32.gmra.mrb[0].mxu0 %v3159
        %v3358 = vpop.f32.mrb[0].mxu0
        %v3359 = vadd.f32 0.0, %v3358
        %v3360 = vpop.f32.mrb[0].mxu0
        %3361 = vmatprep.mubr.f32.mxu0 0.0
        %3362 = vmatmul.mubr.f32.gmra.mrb[0].mxu0 %v3162
        %v3363 = vpop.f32.mrb[0].mxu0
        %v3364 = vadd.f32 0.0, %v3363
        %v3365 = vpop.f32.mrb[0].mxu0
        %3366 = vmatprep.mubr.f32.mxu0 0.0
        %3367 = vmatmul.mubr.f32.gmra.mrb[0].mxu0 %v3165
        %v3368 = vpop.f32.mrb[0].mxu0
        %v3369 = vadd.f32 0.0, %v3368
        %v3370 = vpop.f32.mrb[0].mxu0
        %3371 = vmatprep.mubr.f32.mxu0 0.0
        %3372 = vmatmul.mubr.f32.gmra.mrb[0].mxu0 %v3168
        %v3373 = vpop.f32.mrb[0].mxu0
        %v3374 = vadd.f32 0.0, %v3373
        %v3375 = vpop.f32.mrb[0].mxu0
        %3376 = vmatprep.mubr.f32.mxu0 0.0
        %3377 = vmatmul.mubr.f32.gmra.mrb[0].mxu0 %v3171
        %v3378 = vpop.f32.mrb[0].mxu0
        %v3379 = vadd.f32 0.0, %v3378
        %v3380 = vpop.f32.mrb[0].mxu0
        %3381 = vmatprep.mubr.f32.mxu0 0.0
        %3382 = vmatmul.mubr.f32.gmra.mrb[0].mxu0 %v3174
        %v3383 = vpop.f32.mrb[0].mxu0
        %v3384 = vadd.f32 0.0, %v3383
        %v3385 = vpop.f32.mrb[0].mxu0
        %3386 = vmatprep.mubr.f32.mxu0 0.0
        %3387 = vmatmul.mubr.f32.gmra.mrb[0].mxu0 %v3177
        %v3388 = vpop.f32.mrb[0].mxu0
        %v3389 = vadd.f32 0.0, %v3388
        %v3390 = vpop.f32.mrb[0].mxu0
        %3391 = vmatprep.mubr.f32.mxu0 0.0
        %3392 = vmatmul.mubr.f32.gmra.mrb[0].mxu0 %v3180
        %v3393 = vpop.f32.mrb[0].mxu0
        %v3394 = vadd.f32 0.0, %v3393
        %v3395 = vpop.f32.mrb[0].mxu0
        %3396 = vmatprep.mubr.f32.mxu0 0.0
        %3397 = vmatmul.mubr.f32.gmra.mrb[0].mxu0 %v3183
        %v3398 = vpop.f32.mrb[0].mxu0
        %v3399 = vadd.f32 0.0, %v3398
        %v3400 = vpop.f32.mrb[0].mxu0
        %3401 = vmatprep.mubr.f32.mxu0 0.0
        %3402 = vmatmul.mubr.f32.gmra.mrb[0].mxu0 %v3186
        %v3403 = vpop.f32.mrb[0].mxu0
        %v3404 = vadd.f32 0.0, %v3403
        %v3405 = vpop.f32.mrb[0].mxu0
        %3406 = vmatprep.mubr.f32.mxu0 0.0
        %3407 = vmatmul.mubr.f32.gmra.mrb[0].mxu0 %v3189
        %v3408 = vpop.f32.mrb[0].mxu0
        %v3409 = vadd.f32 0.0, %v3408
        %v3410 = vpop.f32.mrb[0].mxu0
        %3411 = vmatprep.mubr.f32.mxu0 0.0
        %3412 = vmatmul.mubr.f32.gmra.mrb[0].mxu0 %v3192
        %v3413 = vpop.f32.mrb[0].mxu0
        %v3414 = vadd.f32 0.0, %v3413
        %v3415 = vpop.f32.mrb[0].mxu0
        %3416 = vmatprep.mubr.f32.mxu0 0.0
        %3417 = vmatmul.mubr.f32.gmra.mrb[0].mxu0 %v3195
        %v3418 = vpop.f32.mrb[0].mxu0
        %v3419 = vadd.f32 0.0, %v3418
        %v3420 = vpop.f32.mrb[0].mxu0
        %3421 = vdwg.mxu0
        %v3422 = vadd.f32 %v3032, %v3264
        %v3423 = vadd.f32 %v3033, %v3269
        %v3424 = vadd.f32 %v3034, %v3274
        %v3425 = vadd.f32 %v3035, %v3279
        %v3426 = vadd.f32 %v3036, %v3284
        %v3427 = vadd.f32 %v3037, %v3289
        %v3428 = vadd.f32 %v3038, %v3294
        %v3429 = vadd.f32 %v3039, %v3299
        %v3430 = vadd.f32 %v3040, %v3304
        %v3431 = vadd.f32 %v3041, %v3309
        %v3432 = vadd.f32 %v3042, %v3314
        %v3433 = vadd.f32 %v3043, %v3319
        %v3434 = vadd.f32 %v3044, %v3324
        %v3435 = vadd.f32 %v3045, %v3329
        %v3436 = vadd.f32 %v3046, %v3334
        %v3437 = vadd.f32 %v3047, %v3339
        %v3438 = vadd.f32 %v3048, %v3344
        %v3439 = vadd.f32 %v3049, %v3349
        %v3440 = vadd.f32 %v3050, %v3354
        %v3441 = vadd.f32 %v3051, %v3359
        %v3442 = vadd.f32 %v3052, %v3364
        %v3443 = vadd.f32 %v3053, %v3369
        %v3444 = vadd.f32 %v3054, %v3374
        %v3445 = vadd.f32 %v3055, %v3379
        %v3446 = vadd.f32 %v3056, %v3384
        %v3447 = vadd.f32 %v3057, %v3389
        %v3448 = vadd.f32 %v3058, %v3394
        %v3449 = vadd.f32 %v3059, %v3399
        %v3450 = vadd.f32 %v3060, %v3404
        %v3451 = vadd.f32 %v3061, %v3409
        %v3452 = vadd.f32 %v3062, %v3414
        %v3453 = vadd.f32 %v3063, %v3419
        %v3454 = vld [vmem:[%s2673 + $0x9] sm:$0xff]
        %v3455 = vld [vmem:[%s2673 + $0x11] sm:$0xff]
        %v3456 = vld [vmem:[%s2673 + $0x29] sm:$0xff]
        %v3457 = vld [vmem:[%s2673 + $0x31] sm:$0xff]
        %v3458 = vld [vmem:[%s2673 + $0x49] sm:$0xff]
        %v3459 = vld [vmem:[%s2673 + $0x51] sm:$0xff]
        %v3460 = vld [vmem:[%s2673 + $0x69] sm:$0xff]
        %v3461 = vld [vmem:[%s2673 + $0x71] sm:$0xff]
        %v3462 = vld [vmem:[%s2673 + $0x89] sm:$0xff]
        %v3463 = vld [vmem:[%s2673 + $0x91] sm:$0xff]
        %v3464 = vld [vmem:[%s2673 + $0xa9] sm:$0xff]
        %v3465 = vld [vmem:[%s2673 + $0xb1] sm:$0xff]
        %v3466 = vld [vmem:[%s2673 + $0xc9] sm:$0xff]
        %v3467 = vld [vmem:[%s2673 + $0xd1] sm:$0xff]
        %v3468 = vld [vmem:[%s2673 + $0xe9] sm:$0xff]
        %v3469 = vld [vmem:[%s2673 + $0xf1] sm:$0xff]
        %v3470 = vld [vmem:[%s2673 + $0x109] sm:$0xff]
        %v3471 = vld [vmem:[%s2673 + $0x111] sm:$0xff]
        %v3472 = vld [vmem:[%s2673 + $0x129] sm:$0xff]
        %v3473 = vld [vmem:[%s2673 + $0x131] sm:$0xff]
        %v3474 = vld [vmem:[%s2673 + $0x149] sm:$0xff]
        %v3475 = vld [vmem:[%s2673 + $0x151] sm:$0xff]
        %v3476 = vld [vmem:[%s2673 + $0x169] sm:$0xff]
        %v3477 = vld [vmem:[%s2673 + $0x171] sm:$0xff]
        %v3478 = vld [vmem:[%s2673 + $0x189] sm:$0xff]
        %v3479 = vld [vmem:[%s2673 + $0x191] sm:$0xff]
        %v3480 = vld [vmem:[%s2673 + $0x1a9] sm:$0xff]
        %v3481 = vld [vmem:[%s2673 + $0x1b1] sm:$0xff]
        %v3482 = vld [vmem:[%s2673 + $0x1c9] sm:$0xff]
        %v3483 = vld [vmem:[%s2673 + $0x1d1] sm:$0xff]
        %v3484 = vld [vmem:[%s2673 + $0x1e9] sm:$0xff]
        %v3485 = vld [vmem:[%s2673 + $0x1f1] sm:$0xff]
        %s3486 = scalar_lea.vmem [#allocation6], 256
        %v3487 = vld [vmem:[%s3486] sm:$0xff]
        %v3488 = vld [vmem:[%s3486 + $0x8] sm:$0xff]
        %v3489 = vld [vmem:[%s3486 + $0x10] sm:$0xff]
        %v3490 = vld [vmem:[%s3486 + $0x18] sm:$0xff]
        %v3492 = vsel %vm470, %v3454, 0
        %v3495 = vsel %vm470, %v3455, 0
        %v3498 = vsel %vm470, %v3456, 0
        %v3501 = vsel %vm470, %v3457, 0
        %v3504 = vsel %vm470, %v3458, 0
        %v3507 = vsel %vm470, %v3459, 0
        %v3510 = vsel %vm470, %v3460, 0
        %v3513 = vsel %vm470, %v3461, 0
        %v3516 = vsel %vm470, %v3462, 0
        %v3519 = vsel %vm470, %v3463, 0
        %v3522 = vsel %vm470, %v3464, 0
        %v3525 = vsel %vm470, %v3465, 0
        %v3528 = vsel %vm470, %v3466, 0
        %v3531 = vsel %vm470, %v3467, 0
        %v3534 = vsel %vm470, %v3468, 0
        %v3537 = vsel %vm470, %v3469, 0
        %v3540 = vsel %vm470, %v3470, 0
        %v3543 = vsel %vm470, %v3471, 0
        %v3546 = vsel %vm470, %v3472, 0
        %v3549 = vsel %vm470, %v3473, 0
        %v3552 = vsel %vm470, %v3474, 0
        %v3555 = vsel %vm470, %v3475, 0
        %v3558 = vsel %vm470, %v3476, 0
        %v3561 = vsel %vm470, %v3477, 0
        %v3564 = vsel %vm470, %v3478, 0
        %v3567 = vsel %vm470, %v3479, 0
        %v3570 = vsel %vm470, %v3480, 0
        %v3573 = vsel %vm470, %v3481, 0
        %v3576 = vsel %vm470, %v3482, 0
        %v3579 = vsel %vm470, %v3483, 0
        %v3582 = vsel %vm470, %v3484, 0
        %v3585 = vsel %vm470, %v3485, 0
        %3587 = vmatprep.subr.mxu0 0.0
        %3588 = vmatpush1.msra.mxu0 %v3487
        %3589 = vmatprep.subr.mxu0 0.0
        %3590 = vmatpush1.msra.mxu0 %v3488
        %3591 = vmatprep.subr.mxu0 0.0
        %3592 = vmatpush1.msra.mxu0 %v3489
        %3593 = vmatprep.subr.mxu0 0.0
        %3594 = vmatpush1.msra.mxu0 %v3490
        %3595 = vmatprep.subr.mxu0 0.0
        %3596 = vmatpush1.msra.mxu0 0.0
        %3597 = vmatprep.subr.mxu0 0.0
        %3598 = vmatpush1.msra.mxu0 0.0
        %3599 = vmatprep.subr.mxu0 0.0
        %3600 = vmatpush1.msra.mxu0 0.0
        %3601 = vmatprep.subr.mxu0 0.0
        %3602 = vmatpush1.msra.mxu0 0.0
        %3603 = vmatprep.subr.mxu0 0.0
        %3604 = vmatpush1.msra.mxu0 0.0
        %3605 = vmatprep.subr.mxu0 0.0
        %3606 = vmatpush1.msra.mxu0 0.0
        %3607 = vmatprep.subr.mxu0 0.0
        %3608 = vmatpush1.msra.mxu0 0.0
        %3609 = vmatprep.subr.mxu0 0.0
        %3610 = vmatpush1.msra.mxu0 0.0
        %3611 = vmatprep.subr.mxu0 0.0
        %3612 = vmatpush1.msra.mxu0 0.0
        %3613 = vmatprep.subr.mxu0 0.0
        %3614 = vmatpush1.msra.mxu0 0.0
        %3615 = vmatprep.subr.mxu0 0.0
        %3616 = vmatpush1.msra.mxu0 0.0
        %3617 = vmatprep.subr.mxu0 0.0
        %3618 = vmatpush1.msra.mxu0 0.0
        %3619 = vmatprep.subr.mxu0 0.0
        %3620 = vmatpush1.msra.mxu0 0.0
        %3621 = vmatprep.subr.mxu0 0.0
        %3622 = vmatpush1.msra.mxu0 0.0
        %3623 = vmatprep.subr.mxu0 0.0
        %3624 = vmatpush1.msra.mxu0 0.0
        %3625 = vmatprep.subr.mxu0 0.0
        %3626 = vmatpush1.msra.mxu0 0.0
        %3627 = vmatprep.subr.mxu0 0.0
        %3628 = vmatpush1.msra.mxu0 0.0
        %3629 = vmatprep.subr.mxu0 0.0
        %3630 = vmatpush1.msra.mxu0 0.0
        %3631 = vmatprep.subr.mxu0 0.0
        %3632 = vmatpush1.msra.mxu0 0.0
        %3633 = vmatprep.subr.mxu0 0.0
        %3634 = vmatpush1.msra.mxu0 0.0
        %3635 = vmatprep.subr.mxu0 0.0
        %3636 = vmatpush1.msra.mxu0 0.0
        %3637 = vmatprep.subr.mxu0 0.0
        %3638 = vmatpush1.msra.mxu0 0.0
        %3639 = vmatprep.subr.mxu0 0.0
        %3640 = vmatpush1.msra.mxu0 0.0
        %3641 = vmatprep.subr.mxu0 0.0
        %3642 = vmatpush1.msra.mxu0 0.0
        %3643 = vmatprep.subr.mxu0 0.0
        %3644 = vmatpush1.msra.mxu0 0.0
        %3645 = vmatprep.subr.mxu0 0.0
        %3646 = vmatpush1.msra.mxu0 0.0
        %3647 = vmatprep.subr.mxu0 0.0
        %3648 = vmatpush1.msra.mxu0 0.0
        %3649 = vmatprep.subr.mxu0 0.0
        %3650 = vmatpush1.msra.mxu0 0.0
        %3651 = vmatprep.mubr.f32.mxu0 0.0
        %3652 = vmatmul.mubr.f32.gmra.mrb[0].mxu0 %v3492
        %v3653 = vpop.f32.mrb[0].mxu0
        %v3654 = vadd.f32 0.0, %v3653
        %v3655 = vpop.f32.mrb[0].mxu0
        %3656 = vmatprep.mubr.f32.mxu0 0.0
        %3657 = vmatmul.mubr.f32.gmra.mrb[0].mxu0 %v3495
        %v3658 = vpop.f32.mrb[0].mxu0
        %v3659 = vadd.f32 0.0, %v3658
        %v3660 = vpop.f32.mrb[0].mxu0
        %3661 = vmatprep.mubr.f32.mxu0 0.0
        %3662 = vmatmul.mubr.f32.gmra.mrb[0].mxu0 %v3498
        %v3663 = vpop.f32.mrb[0].mxu0
        %v3664 = vadd.f32 0.0, %v3663
        %v3665 = vpop.f32.mrb[0].mxu0
        %3666 = vmatprep.mubr.f32.mxu0 0.0
        %3667 = vmatmul.mubr.f32.gmra.mrb[0].mxu0 %v3501
        %v3668 = vpop.f32.mrb[0].mxu0
        %v3669 = vadd.f32 0.0, %v3668
        %v3670 = vpop.f32.mrb[0].mxu0
        %3671 = vmatprep.mubr.f32.mxu0 0.0
        %3672 = vmatmul.mubr.f32.gmra.mrb[0].mxu0 %v3504
        %v3673 = vpop.f32.mrb[0].mxu0
        %v3674 = vadd.f32 0.0, %v3673
        %v3675 = vpop.f32.mrb[0].mxu0
        %3676 = vmatprep.mubr.f32.mxu0 0.0
        %3677 = vmatmul.mubr.f32.gmra.mrb[0].mxu0 %v3507
        %v3678 = vpop.f32.mrb[0].mxu0
        %v3679 = vadd.f32 0.0, %v3678
        %v3680 = vpop.f32.mrb[0].mxu0
        %3681 = vmatprep.mubr.f32.mxu0 0.0
        %3682 = vmatmul.mubr.f32.gmra.mrb[0].mxu0 %v3510
        %v3683 = vpop.f32.mrb[0].mxu0
        %v3684 = vadd.f32 0.0, %v3683
        %v3685 = vpop.f32.mrb[0].mxu0
        %3686 = vmatprep.mubr.f32.mxu0 0.0
        %3687 = vmatmul.mubr.f32.gmra.mrb[0].mxu0 %v3513
        %v3688 = vpop.f32.mrb[0].mxu0
        %v3689 = vadd.f32 0.0, %v3688
        %v3690 = vpop.f32.mrb[0].mxu0
        %3691 = vmatprep.mubr.f32.mxu0 0.0
        %3692 = vmatmul.mubr.f32.gmra.mrb[0].mxu0 %v3516
        %v3693 = vpop.f32.mrb[0].mxu0
        %v3694 = vadd.f32 0.0, %v3693
        %v3695 = vpop.f32.mrb[0].mxu0
        %3696 = vmatprep.mubr.f32.mxu0 0.0
        %3697 = vmatmul.mubr.f32.gmra.mrb[0].mxu0 %v3519
        %v3698 = vpop.f32.mrb[0].mxu0
        %v3699 = vadd.f32 0.0, %v3698
        %v3700 = vpop.f32.mrb[0].mxu0
        %3701 = vmatprep.mubr.f32.mxu0 0.0
        %3702 = vmatmul.mubr.f32.gmra.mrb[0].mxu0 %v3522
        %v3703 = vpop.f32.mrb[0].mxu0
        %v3704 = vadd.f32 0.0, %v3703
        %v3705 = vpop.f32.mrb[0].mxu0
        %3706 = vmatprep.mubr.f32.mxu0 0.0
        %3707 = vmatmul.mubr.f32.gmra.mrb[0].mxu0 %v3525
        %v3708 = vpop.f32.mrb[0].mxu0
        %v3709 = vadd.f32 0.0, %v3708
        %v3710 = vpop.f32.mrb[0].mxu0
        %3711 = vmatprep.mubr.f32.mxu0 0.0
        %3712 = vmatmul.mubr.f32.gmra.mrb[0].mxu0 %v3528
        %v3713 = vpop.f32.mrb[0].mxu0
        %v3714 = vadd.f32 0.0, %v3713
        %v3715 = vpop.f32.mrb[0].mxu0
        %3716 = vmatprep.mubr.f32.mxu0 0.0
        %3717 = vmatmul.mubr.f32.gmra.mrb[0].mxu0 %v3531
        %v3718 = vpop.f32.mrb[0].mxu0
        %v3719 = vadd.f32 0.0, %v3718
        %v3720 = vpop.f32.mrb[0].mxu0
        %3721 = vmatprep.mubr.f32.mxu0 0.0
        %3722 = vmatmul.mubr.f32.gmra.mrb[0].mxu0 %v3534
        %v3723 = vpop.f32.mrb[0].mxu0
        %v3724 = vadd.f32 0.0, %v3723
        %v3725 = vpop.f32.mrb[0].mxu0
        %3726 = vmatprep.mubr.f32.mxu0 0.0
        %3727 = vmatmul.mubr.f32.gmra.mrb[0].mxu0 %v3537
        %v3728 = vpop.f32.mrb[0].mxu0
        %v3729 = vadd.f32 0.0, %v3728
        %v3730 = vpop.f32.mrb[0].mxu0
        %3731 = vmatprep.mubr.f32.mxu0 0.0
        %3732 = vmatmul.mubr.f32.gmra.mrb[0].mxu0 %v3540
        %v3733 = vpop.f32.mrb[0].mxu0
        %v3734 = vadd.f32 0.0, %v3733
        %v3735 = vpop.f32.mrb[0].mxu0
        %3736 = vmatprep.mubr.f32.mxu0 0.0
        %3737 = vmatmul.mubr.f32.gmra.mrb[0].mxu0 %v3543
        %v3738 = vpop.f32.mrb[0].mxu0
        %v3739 = vadd.f32 0.0, %v3738
        %v3740 = vpop.f32.mrb[0].mxu0
        %3741 = vmatprep.mubr.f32.mxu0 0.0
        %3742 = vmatmul.mubr.f32.gmra.mrb[0].mxu0 %v3546
        %v3743 = vpop.f32.mrb[0].mxu0
        %v3744 = vadd.f32 0.0, %v3743
        %v3745 = vpop.f32.mrb[0].mxu0
        %3746 = vmatprep.mubr.f32.mxu0 0.0
        %3747 = vmatmul.mubr.f32.gmra.mrb[0].mxu0 %v3549
        %v3748 = vpop.f32.mrb[0].mxu0
        %v3749 = vadd.f32 0.0, %v3748
        %v3750 = vpop.f32.mrb[0].mxu0
        %3751 = vmatprep.mubr.f32.mxu0 0.0
        %3752 = vmatmul.mubr.f32.gmra.mrb[0].mxu0 %v3552
        %v3753 = vpop.f32.mrb[0].mxu0
        %v3754 = vadd.f32 0.0, %v3753
        %v3755 = vpop.f32.mrb[0].mxu0
        %3756 = vmatprep.mubr.f32.mxu0 0.0
        %3757 = vmatmul.mubr.f32.gmra.mrb[0].mxu0 %v3555
        %v3758 = vpop.f32.mrb[0].mxu0
        %v3759 = vadd.f32 0.0, %v3758
        %v3760 = vpop.f32.mrb[0].mxu0
        %3761 = vmatprep.mubr.f32.mxu0 0.0
        %3762 = vmatmul.mubr.f32.gmra.mrb[0].mxu0 %v3558
        %v3763 = vpop.f32.mrb[0].mxu0
        %v3764 = vadd.f32 0.0, %v3763
        %v3765 = vpop.f32.mrb[0].mxu0
        %3766 = vmatprep.mubr.f32.mxu0 0.0
        %3767 = vmatmul.mubr.f32.gmra.mrb[0].mxu0 %v3561
        %v3768 = vpop.f32.mrb[0].mxu0
        %v3769 = vadd.f32 0.0, %v3768
        %v3770 = vpop.f32.mrb[0].mxu0
        %3771 = vmatprep.mubr.f32.mxu0 0.0
        %3772 = vmatmul.mubr.f32.gmra.mrb[0].mxu0 %v3564
        %v3773 = vpop.f32.mrb[0].mxu0
        %v3774 = vadd.f32 0.0, %v3773
        %v3775 = vpop.f32.mrb[0].mxu0
        %3776 = vmatprep.mubr.f32.mxu0 0.0
        %3777 = vmatmul.mubr.f32.gmra.mrb[0].mxu0 %v3567
        %v3778 = vpop.f32.mrb[0].mxu0
        %v3779 = vadd.f32 0.0, %v3778
        %v3780 = vpop.f32.mrb[0].mxu0
        %3781 = vmatprep.mubr.f32.mxu0 0.0
        %3782 = vmatmul.mubr.f32.gmra.mrb[0].mxu0 %v3570
        %v3783 = vpop.f32.mrb[0].mxu0
        %v3784 = vadd.f32 0.0, %v3783
        %v3785 = vpop.f32.mrb[0].mxu0
        %3786 = vmatprep.mubr.f32.mxu0 0.0
        %3787 = vmatmul.mubr.f32.gmra.mrb[0].mxu0 %v3573
        %v3788 = vpop.f32.mrb[0].mxu0
        %v3789 = vadd.f32 0.0, %v3788
        %v3790 = vpop.f32.mrb[0].mxu0
        %3791 = vmatprep.mubr.f32.mxu0 0.0
        %3792 = vmatmul.mubr.f32.gmra.mrb[0].mxu0 %v3576
        %v3793 = vpop.f32.mrb[0].mxu0
        %v3794 = vadd.f32 0.0, %v3793
        %v3795 = vpop.f32.mrb[0].mxu0
        %3796 = vmatprep.mubr.f32.mxu0 0.0
        %3797 = vmatmul.mubr.f32.gmra.mrb[0].mxu0 %v3579
        %v3798 = vpop.f32.mrb[0].mxu0
        %v3799 = vadd.f32 0.0, %v3798
        %v3800 = vpop.f32.mrb[0].mxu0
        %3801 = vmatprep.mubr.f32.mxu0 0.0
        %3802 = vmatmul.mubr.f32.gmra.mrb[0].mxu0 %v3582
        %v3803 = vpop.f32.mrb[0].mxu0
        %v3804 = vadd.f32 0.0, %v3803
        %v3805 = vpop.f32.mrb[0].mxu0
        %3806 = vmatprep.mubr.f32.mxu0 0.0
        %3807 = vmatmul.mubr.f32.gmra.mrb[0].mxu0 %v3585
        %v3808 = vpop.f32.mrb[0].mxu0
        %v3809 = vadd.f32 0.0, %v3808
        %v3810 = vpop.f32.mrb[0].mxu0
        %3811 = vdwg.mxu0
        %v3812 = vadd.f32 %v3422, %v3654
        %v3813 = vadd.f32 %v3423, %v3659
        %v3814 = vadd.f32 %v3424, %v3664
        %v3815 = vadd.f32 %v3425, %v3669
        %v3816 = vadd.f32 %v3426, %v3674
        %v3817 = vadd.f32 %v3427, %v3679
        %v3818 = vadd.f32 %v3428, %v3684
        %v3819 = vadd.f32 %v3429, %v3689
        %v3820 = vadd.f32 %v3430, %v3694
        %v3821 = vadd.f32 %v3431, %v3699
        %v3822 = vadd.f32 %v3432, %v3704
        %v3823 = vadd.f32 %v3433, %v3709
        %v3824 = vadd.f32 %v3434, %v3714
        %v3825 = vadd.f32 %v3435, %v3719
        %v3826 = vadd.f32 %v3436, %v3724
        %v3827 = vadd.f32 %v3437, %v3729
        %v3828 = vadd.f32 %v3438, %v3734
        %v3829 = vadd.f32 %v3439, %v3739
        %v3830 = vadd.f32 %v3440, %v3744
        %v3831 = vadd.f32 %v3441, %v3749
        %v3832 = vadd.f32 %v3442, %v3754
        %v3833 = vadd.f32 %v3443, %v3759
        %v3834 = vadd.f32 %v3444, %v3764
        %v3835 = vadd.f32 %v3445, %v3769
        %v3836 = vadd.f32 %v3446, %v3774
        %v3837 = vadd.f32 %v3447, %v3779
        %v3838 = vadd.f32 %v3448, %v3784
        %v3839 = vadd.f32 %v3449, %v3789
        %v3840 = vadd.f32 %v3450, %v3794
        %v3841 = vadd.f32 %v3451, %v3799
        %v3842 = vadd.f32 %v3452, %v3804
        %v3843 = vadd.f32 %v3453, %v3809
        %v3844 = vld [vmem:[%s2] sm:$0x1]
        %v3846 = vlaneseq
        %v3847 = vshrl.u32 %v3846, 7
        %v3848 = vsub.s32 0, %v3847
        %v3849 = vrot.slane %v3844, %v3848
        %v3851 = vadd.f32 %v3812, %v3849
        %v3852 = vadd.f32 %v3813, %v3849
        %v3853 = vadd.f32 %v3814, %v3849
        %v3854 = vadd.f32 %v3815, %v3849
        %v3855 = vadd.f32 %v3816, %v3849
        %v3856 = vadd.f32 %v3817, %v3849
        %v3857 = vadd.f32 %v3818, %v3849
        %v3858 = vadd.f32 %v3819, %v3849
        %v3859 = vadd.f32 %v3820, %v3849
        %v3860 = vadd.f32 %v3821, %v3849
        %v3861 = vadd.f32 %v3822, %v3849
        %v3862 = vadd.f32 %v3823, %v3849
        %v3863 = vadd.f32 %v3824, %v3849
        %v3864 = vadd.f32 %v3825, %v3849
        %v3865 = vadd.f32 %v3826, %v3849
        %v3866 = vadd.f32 %v3827, %v3849
        %v3867 = vadd.f32 %v3828, %v3849
        %v3868 = vadd.f32 %v3829, %v3849
        %v3869 = vadd.f32 %v3830, %v3849
        %v3870 = vadd.f32 %v3831, %v3849
        %v3871 = vadd.f32 %v3832, %v3849
        %v3872 = vadd.f32 %v3833, %v3849
        %v3873 = vadd.f32 %v3834, %v3849
        %v3874 = vadd.f32 %v3835, %v3849
        %v3875 = vadd.f32 %v3836, %v3849
        %v3876 = vadd.f32 %v3837, %v3849
        %v3877 = vadd.f32 %v3838, %v3849
        %v3878 = vadd.f32 %v3839, %v3849
        %v3879 = vadd.f32 %v3840, %v3849
        %v3880 = vadd.f32 %v3841, %v3849
        %v3881 = vadd.f32 %v3842, %v3849
        %v3882 = vadd.f32 %v3843, %v3849
        %v3883 = vmax.f32 %v3851, 0.0
        %v3884 = vmax.f32 %v3852, 0.0
        %v3885 = vmax.f32 %v3853, 0.0
        %v3886 = vmax.f32 %v3854, 0.0
        %v3887 = vmax.f32 %v3855, 0.0
        %v3888 = vmax.f32 %v3856, 0.0
        %v3889 = vmax.f32 %v3857, 0.0
        %v3890 = vmax.f32 %v3858, 0.0
        %v3891 = vmax.f32 %v3859, 0.0
        %v3892 = vmax.f32 %v3860, 0.0
        %v3893 = vmax.f32 %v3861, 0.0
        %v3894 = vmax.f32 %v3862, 0.0
        %v3895 = vmax.f32 %v3863, 0.0
        %v3896 = vmax.f32 %v3864, 0.0
        %v3897 = vmax.f32 %v3865, 0.0
        %v3898 = vmax.f32 %v3866, 0.0
        %v3899 = vmax.f32 %v3867, 0.0
        %v3900 = vmax.f32 %v3868, 0.0
        %v3901 = vmax.f32 %v3869, 0.0
        %v3902 = vmax.f32 %v3870, 0.0
        %v3903 = vmax.f32 %v3871, 0.0
        %v3904 = vmax.f32 %v3872, 0.0
        %v3905 = vmax.f32 %v3873, 0.0
        %v3906 = vmax.f32 %v3874, 0.0
        %v3907 = vmax.f32 %v3875, 0.0
        %v3908 = vmax.f32 %v3876, 0.0
        %v3909 = vmax.f32 %v3877, 0.0
        %v3910 = vmax.f32 %v3878, 0.0
        %v3911 = vmax.f32 %v3879, 0.0
        %v3912 = vmax.f32 %v3880, 0.0
        %v3913 = vmax.f32 %v3881, 0.0
        %v3914 = vmax.f32 %v3882, 0.0
        %v3915 = vadd.f32 %v1893, %v3883
        %v3916 = vadd.f32 %v1894, %v3884
        %v3917 = vadd.f32 %v1895, %v3885
        %v3918 = vadd.f32 %v1896, %v3886
        %v3919 = vadd.f32 %v1897, %v3887
        %v3920 = vadd.f32 %v1898, %v3888
        %v3921 = vadd.f32 %v1899, %v3889
        %v3922 = vadd.f32 %v1900, %v3890
        %v3923 = vadd.f32 %v1901, %v3891
        %v3924 = vadd.f32 %v1902, %v3892
        %v3925 = vadd.f32 %v1903, %v3893
        %v3926 = vadd.f32 %v1904, %v3894
        %v3927 = vadd.f32 %v1905, %v3895
        %v3928 = vadd.f32 %v1906, %v3896
        %v3929 = vadd.f32 %v1907, %v3897
        %v3930 = vadd.f32 %v1908, %v3898
        %v3931 = vadd.f32 %v1909, %v3899
        %v3932 = vadd.f32 %v1910, %v3900
        %v3933 = vadd.f32 %v1911, %v3901
        %v3934 = vadd.f32 %v1912, %v3902
        %v3935 = vadd.f32 %v1913, %v3903
        %v3936 = vadd.f32 %v1914, %v3904
        %v3937 = vadd.f32 %v1915, %v3905
        %v3938 = vadd.f32 %v1916, %v3906
        %v3939 = vadd.f32 %v1917, %v3907
        %v3940 = vadd.f32 %v1918, %v3908
        %v3941 = vadd.f32 %v1919, %v3909
        %v3942 = vadd.f32 %v1920, %v3910
        %v3943 = vadd.f32 %v1921, %v3911
        %v3944 = vadd.f32 %v1922, %v3912
        %v3945 = vadd.f32 %v1923, %v3913
        %v3946 = vadd.f32 %v1924, %v3914
        %3947 = vst [vmem:[%s364 + $0x8] sm:$0xff] %v3915
        %3948 = vst [vmem:[%s364 + $0x10] sm:$0xff] %v3916
        %3949 = vst [vmem:[%s364 + $0x28] sm:$0xff] %v3917
        %3950 = vst [vmem:[%s364 + $0x30] sm:$0xff] %v3918
        %3951 = vst [vmem:[%s364 + $0x48] sm:$0xff] %v3919
        %3952 = vst [vmem:[%s364 + $0x50] sm:$0xff] %v3920
        %3953 = vst [vmem:[%s364 + $0x68] sm:$0xff] %v3921
        %3954 = vst [vmem:[%s364 + $0x70] sm:$0xff] %v3922
        %3955 = vst [vmem:[%s364 + $0x88] sm:$0xff] %v3923
        %3956 = vst [vmem:[%s364 + $0x90] sm:$0xff] %v3924
        %3957 = vst [vmem:[%s364 + $0xa8] sm:$0xff] %v3925
        %3958 = vst [vmem:[%s364 + $0xb0] sm:$0xff] %v3926
        %3959 = vst [vmem:[%s364 + $0xc8] sm:$0xff] %v3927
        %3960 = vst [vmem:[%s364 + $0xd0] sm:$0xff] %v3928
        %3961 = vst [vmem:[%s364 + $0xe8] sm:$0xff] %v3929
        %3962 = vst [vmem:[%s364 + $0xf0] sm:$0xff] %v3930
        %3963 = vst [vmem:[%s364 + $0x108] sm:$0xff] %v3931
        %3964 = vst [vmem:[%s364 + $0x110] sm:$0xff] %v3932
        %3965 = vst [vmem:[%s364 + $0x128] sm:$0xff] %v3933
        %3966 = vst [vmem:[%s364 + $0x130] sm:$0xff] %v3934
        %3967 = vst [vmem:[%s364 + $0x148] sm:$0xff] %v3935
        %3968 = vst [vmem:[%s364 + $0x150] sm:$0xff] %v3936
        %3969 = vst [vmem:[%s364 + $0x168] sm:$0xff] %v3937
        %3970 = vst [vmem:[%s364 + $0x170] sm:$0xff] %v3938
        %3971 = vst [vmem:[%s364 + $0x188] sm:$0xff] %v3939
        %3972 = vst [vmem:[%s364 + $0x190] sm:$0xff] %v3940
        %3973 = vst [vmem:[%s364 + $0x1a8] sm:$0xff] %v3941
        %3974 = vst [vmem:[%s364 + $0x1b0] sm:$0xff] %v3942
        %3975 = vst [vmem:[%s364 + $0x1c8] sm:$0xff] %v3943
        %3976 = vst [vmem:[%s364 + $0x1d0] sm:$0xff] %v3944
        %3977 = vst [vmem:[%s364 + $0x1e8] sm:$0xff] %v3945
        %3978 = vst [vmem:[%s364 + $0x1f0] sm:$0xff] %v3946
        %v3979 = vld [vmem:[#allocation2 + $0x7] sm:$0xff]
        %v3980 = vld [vmem:[#allocation2 + $0xf] sm:$0xff]
        %v3981 = vld [vmem:[#allocation2 + $0x27] sm:$0xff]
        %v3982 = vld [vmem:[#allocation2 + $0x2f] sm:$0xff]
        %v3983 = vld [vmem:[#allocation2 + $0x47] sm:$0xff]
        %v3984 = vld [vmem:[#allocation2 + $0x4f] sm:$0xff]
        %v3985 = vld [vmem:[#allocation2 + $0x67] sm:$0xff]
        %v3986 = vld [vmem:[#allocation2 + $0x6f] sm:$0xff]
        %v3987 = vld [vmem:[#allocation2 + $0x87] sm:$0xff]
        %v3988 = vld [vmem:[#allocation2 + $0x8f] sm:$0xff]
        %v3989 = vld [vmem:[#allocation2 + $0xa7] sm:$0xff]
        %v3990 = vld [vmem:[#allocation2 + $0xaf] sm:$0xff]
        %v3991 = vld [vmem:[#allocation2 + $0xc7] sm:$0xff]
        %v3992 = vld [vmem:[#allocation2 + $0xcf] sm:$0xff]
        %v3993 = vld [vmem:[#allocation2 + $0xe7] sm:$0xff]
        %v3994 = vld [vmem:[#allocation2 + $0xef] sm:$0xff]
        %v3995 = vld [vmem:[#allocation2 + $0x107] sm:$0xff]
        %v3996 = vld [vmem:[#allocation2 + $0x10f] sm:$0xff]
        %v3997 = vld [vmem:[#allocation2 + $0x127] sm:$0xff]
        %v3998 = vld [vmem:[#allocation2 + $0x12f] sm:$0xff]
        %v3999 = vld [vmem:[#allocation2 + $0x147] sm:$0xff]
        %v4000 = vld [vmem:[#allocation2 + $0x14f] sm:$0xff]
        %v4001 = vld [vmem:[#allocation2 + $0x167] sm:$0xff]
        %v4002 = vld [vmem:[#allocation2 + $0x16f] sm:$0xff]
        %v4003 = vld [vmem:[#allocation2 + $0x187] sm:$0xff]
        %v4004 = vld [vmem:[#allocation2 + $0x18f] sm:$0xff]
        %v4005 = vld [vmem:[#allocation2 + $0x1a7] sm:$0xff]
        %v4006 = vld [vmem:[#allocation2 + $0x1af] sm:$0xff]
        %v4007 = vld [vmem:[#allocation2 + $0x1c7] sm:$0xff]
        %v4008 = vld [vmem:[#allocation2 + $0x1cf] sm:$0xff]
        %v4009 = vld [vmem:[#allocation2 + $0x1e7] sm:$0xff]
        %v4010 = vld [vmem:[#allocation2 + $0x1ef] sm:$0xff]
        %s4011 = scalar_lea.vmem [#allocation6], 288
        %v4012 = vld [vmem:[%s4011] sm:$0xff]
        %v4013 = vld [vmem:[%s4011 + $0x8] sm:$0xff]
        %v4014 = vld [vmem:[%s4011 + $0x10] sm:$0xff]
        %v4015 = vld [vmem:[%s4011 + $0x18] sm:$0xff]
        %v4016 = vld [vmem:[#allocation2 + $0x8] sm:$0xff]
        %v4017 = vld [vmem:[#allocation2 + $0x10] sm:$0xff]
        %v4018 = vld [vmem:[#allocation2 + $0x28] sm:$0xff]
        %v4019 = vld [vmem:[#allocation2 + $0x30] sm:$0xff]
        %v4020 = vld [vmem:[#allocation2 + $0x48] sm:$0xff]
        %v4021 = vld [vmem:[#allocation2 + $0x50] sm:$0xff]
        %v4022 = vld [vmem:[#allocation2 + $0x68] sm:$0xff]
        %v4023 = vld [vmem:[#allocation2 + $0x70] sm:$0xff]
        %v4024 = vld [vmem:[#allocation2 + $0x88] sm:$0xff]
        %v4025 = vld [vmem:[#allocation2 + $0x90] sm:$0xff]
        %v4026 = vld [vmem:[#allocation2 + $0xa8] sm:$0xff]
        %v4027 = vld [vmem:[#allocation2 + $0xb0] sm:$0xff]
        %v4028 = vld [vmem:[#allocation2 + $0xc8] sm:$0xff]
        %v4029 = vld [vmem:[#allocation2 + $0xd0] sm:$0xff]
        %v4030 = vld [vmem:[#allocation2 + $0xe8] sm:$0xff]
        %v4031 = vld [vmem:[#allocation2 + $0xf0] sm:$0xff]
        %v4032 = vld [vmem:[#allocation2 + $0x108] sm:$0xff]
        %v4033 = vld [vmem:[#allocation2 + $0x110] sm:$0xff]
        %v4034 = vld [vmem:[#allocation2 + $0x128] sm:$0xff]
        %v4035 = vld [vmem:[#allocation2 + $0x130] sm:$0xff]
        %v4036 = vld [vmem:[#allocation2 + $0x148] sm:$0xff]
        %v4037 = vld [vmem:[#allocation2 + $0x150] sm:$0xff]
        %v4038 = vld [vmem:[#allocation2 + $0x168] sm:$0xff]
        %v4039 = vld [vmem:[#allocation2 + $0x170] sm:$0xff]
        %v4040 = vld [vmem:[#allocation2 + $0x188] sm:$0xff]
        %v4041 = vld [vmem:[#allocation2 + $0x190] sm:$0xff]
        %v4042 = vld [vmem:[#allocation2 + $0x1a8] sm:$0xff]
        %v4043 = vld [vmem:[#allocation2 + $0x1b0] sm:$0xff]
        %v4044 = vld [vmem:[#allocation2 + $0x1c8] sm:$0xff]
        %v4045 = vld [vmem:[#allocation2 + $0x1d0] sm:$0xff]
        %v4046 = vld [vmem:[#allocation2 + $0x1e8] sm:$0xff]
        %v4047 = vld [vmem:[#allocation2 + $0x1f0] sm:$0xff]
        %s4048 = scalar_lea.vmem [#allocation6], 320
        %v4049 = vld [vmem:[%s4048] sm:$0xff]
        %v4050 = vld [vmem:[%s4048 + $0x8] sm:$0xff]
        %v4051 = vld [vmem:[%s4048 + $0x10] sm:$0xff]
        %v4052 = vld [vmem:[%s4048 + $0x18] sm:$0xff]
        %v4054 = vsel %vm470, %v4016, 0
        %v4057 = vsel %vm470, %v4017, 0
        %v4060 = vsel %vm470, %v4018, 0
        %v4063 = vsel %vm470, %v4019, 0
        %v4066 = vsel %vm470, %v4020, 0
        %v4069 = vsel %vm470, %v4021, 0
        %v4072 = vsel %vm470, %v4022, 0
        %v4075 = vsel %vm470, %v4023, 0
        %v4078 = vsel %vm470, %v4024, 0
        %v4081 = vsel %vm470, %v4025, 0
        %v4084 = vsel %vm470, %v4026, 0
        %v4087 = vsel %vm470, %v4027, 0
        %v4090 = vsel %vm470, %v4028, 0
        %v4093 = vsel %vm470, %v4029, 0
        %v4096 = vsel %vm470, %v4030, 0
        %v4099 = vsel %vm470, %v4031, 0
        %v4102 = vsel %vm470, %v4032, 0
        %v4105 = vsel %vm470, %v4033, 0
        %v4108 = vsel %vm470, %v4034, 0
        %v4111 = vsel %vm470, %v4035, 0
        %v4114 = vsel %vm470, %v4036, 0
        %v4117 = vsel %vm470, %v4037, 0
        %v4120 = vsel %vm470, %v4038, 0
        %v4123 = vsel %vm470, %v4039, 0
        %v4126 = vsel %vm470, %v4040, 0
        %v4129 = vsel %vm470, %v4041, 0
        %v4132 = vsel %vm470, %v4042, 0
        %v4135 = vsel %vm470, %v4043, 0
        %v4138 = vsel %vm470, %v4044, 0
        %v4141 = vsel %vm470, %v4045, 0
        %v4144 = vsel %vm470, %v4046, 0
        %v4147 = vsel %vm470, %v4047, 0
        %4149 = vmatprep.subr.mxu0 0.0
        %4150 = vmatpush1.msra.mxu0 %v4049
        %4151 = vmatprep.subr.mxu0 0.0
        %4152 = vmatpush1.msra.mxu0 %v4050
        %4153 = vmatprep.subr.mxu0 0.0
        %4154 = vmatpush1.msra.mxu0 %v4051
        %4155 = vmatprep.subr.mxu0 0.0
        %4156 = vmatpush1.msra.mxu0 %v4052
        %4157 = vmatprep.subr.mxu0 0.0
        %4158 = vmatpush1.msra.mxu0 0.0
        %4159 = vmatprep.subr.mxu0 0.0
        %4160 = vmatpush1.msra.mxu0 0.0
        %4161 = vmatprep.subr.mxu0 0.0
        %4162 = vmatpush1.msra.mxu0 0.0
        %4163 = vmatprep.subr.mxu0 0.0
        %4164 = vmatpush1.msra.mxu0 0.0
        %4165 = vmatprep.subr.mxu0 0.0
        %4166 = vmatpush1.msra.mxu0 0.0
        %4167 = vmatprep.subr.mxu0 0.0
        %4168 = vmatpush1.msra.mxu0 0.0
        %4169 = vmatprep.subr.mxu0 0.0
        %4170 = vmatpush1.msra.mxu0 0.0
        %4171 = vmatprep.subr.mxu0 0.0
        %4172 = vmatpush1.msra.mxu0 0.0
        %4173 = vmatprep.subr.mxu0 0.0
        %4174 = vmatpush1.msra.mxu0 0.0
        %4175 = vmatprep.subr.mxu0 0.0
        %4176 = vmatpush1.msra.mxu0 0.0
        %4177 = vmatprep.subr.mxu0 0.0
        %4178 = vmatpush1.msra.mxu0 0.0
        %4179 = vmatprep.subr.mxu0 0.0
        %4180 = vmatpush1.msra.mxu0 0.0
        %4181 = vmatprep.subr.mxu0 0.0
        %4182 = vmatpush1.msra.mxu0 0.0
        %4183 = vmatprep.subr.mxu0 0.0
        %4184 = vmatpush1.msra.mxu0 0.0
        %4185 = vmatprep.subr.mxu0 0.0
        %4186 = vmatpush1.msra.mxu0 0.0
        %4187 = vmatprep.subr.mxu0 0.0
        %4188 = vmatpush1.msra.mxu0 0.0
        %4189 = vmatprep.subr.mxu0 0.0
        %4190 = vmatpush1.msra.mxu0 0.0
        %4191 = vmatprep.subr.mxu0 0.0
        %4192 = vmatpush1.msra.mxu0 0.0
        %4193 = vmatprep.subr.mxu0 0.0
        %4194 = vmatpush1.msra.mxu0 0.0
        %4195 = vmatprep.subr.mxu0 0.0
        %4196 = vmatpush1.msra.mxu0 0.0
        %4197 = vmatprep.subr.mxu0 0.0
        %4198 = vmatpush1.msra.mxu0 0.0
        %4199 = vmatprep.subr.mxu0 0.0
        %4200 = vmatpush1.msra.mxu0 0.0
        %4201 = vmatprep.subr.mxu0 0.0
        %4202 = vmatpush1.msra.mxu0 0.0
        %4203 = vmatprep.subr.mxu0 0.0
        %4204 = vmatpush1.msra.mxu0 0.0
        %4205 = vmatprep.subr.mxu0 0.0
        %4206 = vmatpush1.msra.mxu0 0.0
        %4207 = vmatprep.subr.mxu0 0.0
        %4208 = vmatpush1.msra.mxu0 0.0
        %4209 = vmatprep.subr.mxu0 0.0
        %4210 = vmatpush1.msra.mxu0 0.0
        %4211 = vmatprep.subr.mxu0 0.0
        %4212 = vmatpush1.msra.mxu0 0.0
        %4213 = vmatprep.mubr.f32.mxu0 0.0
        %4214 = vmatmul.mubr.f32.gmra.mrb[0].mxu0 %v4054
        %v4215 = vpop.f32.mrb[0].mxu0
        %v4216 = vadd.f32 0.0, %v4215
        %v4217 = vpop.f32.mrb[0].mxu0
        %4218 = vmatprep.mubr.f32.mxu0 0.0
        %4219 = vmatmul.mubr.f32.gmra.mrb[0].mxu0 %v4057
        %v4220 = vpop.f32.mrb[0].mxu0
        %v4221 = vadd.f32 0.0, %v4220
        %v4222 = vpop.f32.mrb[0].mxu0
        %4223 = vmatprep.mubr.f32.mxu0 0.0
        %4224 = vmatmul.mubr.f32.gmra.mrb[0].mxu0 %v4060
        %v4225 = vpop.f32.mrb[0].mxu0
        %v4226 = vadd.f32 0.0, %v4225
        %v4227 = vpop.f32.mrb[0].mxu0
        %4228 = vmatprep.mubr.f32.mxu0 0.0
        %4229 = vmatmul.mubr.f32.gmra.mrb[0].mxu0 %v4063
        %v4230 = vpop.f32.mrb[0].mxu0
        %v4231 = vadd.f32 0.0, %v4230
        %v4232 = vpop.f32.mrb[0].mxu0
        %4233 = vmatprep.mubr.f32.mxu0 0.0
        %4234 = vmatmul.mubr.f32.gmra.mrb[0].mxu0 %v4066
        %v4235 = vpop.f32.mrb[0].mxu0
        %v4236 = vadd.f32 0.0, %v4235
        %v4237 = vpop.f32.mrb[0].mxu0
        %4238 = vmatprep.mubr.f32.mxu0 0.0
        %4239 = vmatmul.mubr.f32.gmra.mrb[0].mxu0 %v4069
        %v4240 = vpop.f32.mrb[0].mxu0
        %v4241 = vadd.f32 0.0, %v4240
        %v4242 = vpop.f32.mrb[0].mxu0
        %4243 = vmatprep.mubr.f32.mxu0 0.0
        %4244 = vmatmul.mubr.f32.gmra.mrb[0].mxu0 %v4072
        %v4245 = vpop.f32.mrb[0].mxu0
        %v4246 = vadd.f32 0.0, %v4245
        %v4247 = vpop.f32.mrb[0].mxu0
        %4248 = vmatprep.mubr.f32.mxu0 0.0
        %4249 = vmatmul.mubr.f32.gmra.mrb[0].mxu0 %v4075
        %v4250 = vpop.f32.mrb[0].mxu0
        %v4251 = vadd.f32 0.0, %v4250
        %v4252 = vpop.f32.mrb[0].mxu0
        %4253 = vmatprep.mubr.f32.mxu0 0.0
        %4254 = vmatmul.mubr.f32.gmra.mrb[0].mxu0 %v4078
        %v4255 = vpop.f32.mrb[0].mxu0
        %v4256 = vadd.f32 0.0, %v4255
        %v4257 = vpop.f32.mrb[0].mxu0
        %4258 = vmatprep.mubr.f32.mxu0 0.0
        %4259 = vmatmul.mubr.f32.gmra.mrb[0].mxu0 %v4081
        %v4260 = vpop.f32.mrb[0].mxu0
        %v4261 = vadd.f32 0.0, %v4260
        %v4262 = vpop.f32.mrb[0].mxu0
        %4263 = vmatprep.mubr.f32.mxu0 0.0
        %4264 = vmatmul.mubr.f32.gmra.mrb[0].mxu0 %v4084
        %v4265 = vpop.f32.mrb[0].mxu0
        %v4266 = vadd.f32 0.0, %v4265
        %v4267 = vpop.f32.mrb[0].mxu0
        %4268 = vmatprep.mubr.f32.mxu0 0.0
        %4269 = vmatmul.mubr.f32.gmra.mrb[0].mxu0 %v4087
        %v4270 = vpop.f32.mrb[0].mxu0
        %v4271 = vadd.f32 0.0, %v4270
        %v4272 = vpop.f32.mrb[0].mxu0
        %4273 = vmatprep.mubr.f32.mxu0 0.0
        %4274 = vmatmul.mubr.f32.gmra.mrb[0].mxu0 %v4090
        %v4275 = vpop.f32.mrb[0].mxu0
        %v4276 = vadd.f32 0.0, %v4275
        %v4277 = vpop.f32.mrb[0].mxu0
        %4278 = vmatprep.mubr.f32.mxu0 0.0
        %4279 = vmatmul.mubr.f32.gmra.mrb[0].mxu0 %v4093
        %v4280 = vpop.f32.mrb[0].mxu0
        %v4281 = vadd.f32 0.0, %v4280
        %v4282 = vpop.f32.mrb[0].mxu0
        %4283 = vmatprep.mubr.f32.mxu0 0.0
        %4284 = vmatmul.mubr.f32.gmra.mrb[0].mxu0 %v4096
        %v4285 = vpop.f32.mrb[0].mxu0
        %v4286 = vadd.f32 0.0, %v4285
        %v4287 = vpop.f32.mrb[0].mxu0
        %4288 = vmatprep.mubr.f32.mxu0 0.0
        %4289 = vmatmul.mubr.f32.gmra.mrb[0].mxu0 %v4099
        %v4290 = vpop.f32.mrb[0].mxu0
        %v4291 = vadd.f32 0.0, %v4290
        %v4292 = vpop.f32.mrb[0].mxu0
        %4293 = vmatprep.mubr.f32.mxu0 0.0
        %4294 = vmatmul.mubr.f32.gmra.mrb[0].mxu0 %v4102
        %v4295 = vpop.f32.mrb[0].mxu0
        %v4296 = vadd.f32 0.0, %v4295
        %v4297 = vpop.f32.mrb[0].mxu0
        %4298 = vmatprep.mubr.f32.mxu0 0.0
        %4299 = vmatmul.mubr.f32.gmra.mrb[0].mxu0 %v4105
        %v4300 = vpop.f32.mrb[0].mxu0
        %v4301 = vadd.f32 0.0, %v4300
        %v4302 = vpop.f32.mrb[0].mxu0
        %4303 = vmatprep.mubr.f32.mxu0 0.0
        %4304 = vmatmul.mubr.f32.gmra.mrb[0].mxu0 %v4108
        %v4305 = vpop.f32.mrb[0].mxu0
        %v4306 = vadd.f32 0.0, %v4305
        %v4307 = vpop.f32.mrb[0].mxu0
        %4308 = vmatprep.mubr.f32.mxu0 0.0
        %4309 = vmatmul.mubr.f32.gmra.mrb[0].mxu0 %v4111
        %v4310 = vpop.f32.mrb[0].mxu0
        %v4311 = vadd.f32 0.0, %v4310
        %v4312 = vpop.f32.mrb[0].mxu0
        %4313 = vmatprep.mubr.f32.mxu0 0.0
        %4314 = vmatmul.mubr.f32.gmra.mrb[0].mxu0 %v4114
        %v4315 = vpop.f32.mrb[0].mxu0
        %v4316 = vadd.f32 0.0, %v4315
        %v4317 = vpop.f32.mrb[0].mxu0
        %4318 = vmatprep.mubr.f32.mxu0 0.0
        %4319 = vmatmul.mubr.f32.gmra.mrb[0].mxu0 %v4117
        %v4320 = vpop.f32.mrb[0].mxu0
        %v4321 = vadd.f32 0.0, %v4320
        %v4322 = vpop.f32.mrb[0].mxu0
        %4323 = vmatprep.mubr.f32.mxu0 0.0
        %4324 = vmatmul.mubr.f32.gmra.mrb[0].mxu0 %v4120
        %v4325 = vpop.f32.mrb[0].mxu0
        %v4326 = vadd.f32 0.0, %v4325
        %v4327 = vpop.f32.mrb[0].mxu0
        %4328 = vmatprep.mubr.f32.mxu0 0.0
        %4329 = vmatmul.mubr.f32.gmra.mrb[0].mxu0 %v4123
        %v4330 = vpop.f32.mrb[0].mxu0
        %v4331 = vadd.f32 0.0, %v4330
        %v4332 = vpop.f32.mrb[0].mxu0
        %4333 = vmatprep.mubr.f32.mxu0 0.0
        %4334 = vmatmul.mubr.f32.gmra.mrb[0].mxu0 %v4126
        %v4335 = vpop.f32.mrb[0].mxu0
        %v4336 = vadd.f32 0.0, %v4335
        %v4337 = vpop.f32.mrb[0].mxu0
        %4338 = vmatprep.mubr.f32.mxu0 0.0
        %4339 = vmatmul.mubr.f32.gmra.mrb[0].mxu0 %v4129
        %v4340 = vpop.f32.mrb[0].mxu0
        %v4341 = vadd.f32 0.0, %v4340
        %v4342 = vpop.f32.mrb[0].mxu0
        %4343 = vmatprep.mubr.f32.mxu0 0.0
        %4344 = vmatmul.mubr.f32.gmra.mrb[0].mxu0 %v4132
        %v4345 = vpop.f32.mrb[0].mxu0
        %v4346 = vadd.f32 0.0, %v4345
        %v4347 = vpop.f32.mrb[0].mxu0
        %4348 = vmatprep.mubr.f32.mxu0 0.0
        %4349 = vmatmul.mubr.f32.gmra.mrb[0].mxu0 %v4135
        %v4350 = vpop.f32.mrb[0].mxu0
        %v4351 = vadd.f32 0.0, %v4350
        %v4352 = vpop.f32.mrb[0].mxu0
        %4353 = vmatprep.mubr.f32.mxu0 0.0
        %4354 = vmatmul.mubr.f32.gmra.mrb[0].mxu0 %v4138
        %v4355 = vpop.f32.mrb[0].mxu0
        %v4356 = vadd.f32 0.0, %v4355
        %v4357 = vpop.f32.mrb[0].mxu0
        %4358 = vmatprep.mubr.f32.mxu0 0.0
        %4359 = vmatmul.mubr.f32.gmra.mrb[0].mxu0 %v4141
        %v4360 = vpop.f32.mrb[0].mxu0
        %v4361 = vadd.f32 0.0, %v4360
        %v4362 = vpop.f32.mrb[0].mxu0
        %4363 = vmatprep.mubr.f32.mxu0 0.0
        %4364 = vmatmul.mubr.f32.gmra.mrb[0].mxu0 %v4144
        %v4365 = vpop.f32.mrb[0].mxu0
        %v4366 = vadd.f32 0.0, %v4365
        %v4367 = vpop.f32.mrb[0].mxu0
        %4368 = vmatprep.mubr.f32.mxu0 0.0
        %4369 = vmatmul.mubr.f32.gmra.mrb[0].mxu0 %v4147
        %v4370 = vpop.f32.mrb[0].mxu0
        %v4371 = vadd.f32 0.0, %v4370
        %v4372 = vpop.f32.mrb[0].mxu0
        %4373 = vdwg.mxu0
        %v4375 = vsel %vm470, %v3979, 0
        %v4378 = vsel %vm470, %v3980, 0
        %v4381 = vsel %vm470, %v3981, 0
        %v4384 = vsel %vm470, %v3982, 0
        %v4387 = vsel %vm470, %v3983, 0
        %v4390 = vsel %vm470, %v3984, 0
        %v4393 = vsel %vm470, %v3985, 0
        %v4396 = vsel %vm470, %v3986, 0
        %v4399 = vsel %vm470, %v3987, 0
        %v4402 = vsel %vm470, %v3988, 0
        %v4405 = vsel %vm470, %v3989, 0
        %v4408 = vsel %vm470, %v3990, 0
        %v4411 = vsel %vm470, %v3991, 0
        %v4414 = vsel %vm470, %v3992, 0
        %v4417 = vsel %vm470, %v3993, 0
        %v4420 = vsel %vm470, %v3994, 0
        %v4423 = vsel %vm470, %v3995, 0
        %v4426 = vsel %vm470, %v3996, 0
        %v4429 = vsel %vm470, %v3997, 0
        %v4432 = vsel %vm470, %v3998, 0
        %v4435 = vsel %vm470, %v3999, 0
        %v4438 = vsel %vm470, %v4000, 0
        %v4441 = vsel %vm470, %v4001, 0
        %v4444 = vsel %vm470, %v4002, 0
        %v4447 = vsel %vm470, %v4003, 0
        %v4450 = vsel %vm470, %v4004, 0
        %v4453 = vsel %vm470, %v4005, 0
        %v4456 = vsel %vm470, %v4006, 0
        %v4459 = vsel %vm470, %v4007, 0
        %v4462 = vsel %vm470, %v4008, 0
        %v4465 = vsel %vm470, %v4009, 0
        %v4468 = vsel %vm470, %v4010, 0
        %4470 = vmatprep.subr.mxu0 0.0
        %4471 = vmatpush1.msra.mxu0 %v4012
        %4472 = vmatprep.subr.mxu0 0.0
        %4473 = vmatpush1.msra.mxu0 %v4013
        %4474 = vmatprep.subr.mxu0 0.0
        %4475 = vmatpush1.msra.mxu0 %v4014
        %4476 = vmatprep.subr.mxu0 0.0
        %4477 = vmatpush1.msra.mxu0 %v4015
        %4478 = vmatprep.subr.mxu0 0.0
        %4479 = vmatpush1.msra.mxu0 0.0
        %4480 = vmatprep.subr.mxu0 0.0
        %4481 = vmatpush1.msra.mxu0 0.0
        %4482 = vmatprep.subr.mxu0 0.0
        %4483 = vmatpush1.msra.mxu0 0.0
        %4484 = vmatprep.subr.mxu0 0.0
        %4485 = vmatpush1.msra.mxu0 0.0
        %4486 = vmatprep.subr.mxu0 0.0
        %4487 = vmatpush1.msra.mxu0 0.0
        %4488 = vmatprep.subr.mxu0 0.0
        %4489 = vmatpush1.msra.mxu0 0.0
        %4490 = vmatprep.subr.mxu0 0.0
        %4491 = vmatpush1.msra.mxu0 0.0
        %4492 = vmatprep.subr.mxu0 0.0
        %4493 = vmatpush1.msra.mxu0 0.0
        %4494 = vmatprep.subr.mxu0 0.0
        %4495 = vmatpush1.msra.mxu0 0.0
        %4496 = vmatprep.subr.mxu0 0.0
        %4497 = vmatpush1.msra.mxu0 0.0
        %4498 = vmatprep.subr.mxu0 0.0
        %4499 = vmatpush1.msra.mxu0 0.0
        %4500 = vmatprep.subr.mxu0 0.0
        %4501 = vmatpush1.msra.mxu0 0.0
        %4502 = vmatprep.subr.mxu0 0.0
        %4503 = vmatpush1.msra.mxu0 0.0
        %4504 = vmatprep.subr.mxu0 0.0
        %4505 = vmatpush1.msra.mxu0 0.0
        %4506 = vmatprep.subr.mxu0 0.0
        %4507 = vmatpush1.msra.mxu0 0.0
        %4508 = vmatprep.subr.mxu0 0.0
        %4509 = vmatpush1.msra.mxu0 0.0
        %4510 = vmatprep.subr.mxu0 0.0
        %4511 = vmatpush1.msra.mxu0 0.0
        %4512 = vmatprep.subr.mxu0 0.0
        %4513 = vmatpush1.msra.mxu0 0.0
        %4514 = vmatprep.subr.mxu0 0.0
        %4515 = vmatpush1.msra.mxu0 0.0
        %4516 = vmatprep.subr.mxu0 0.0
        %4517 = vmatpush1.msra.mxu0 0.0
        %4518 = vmatprep.subr.mxu0 0.0
        %4519 = vmatpush1.msra.mxu0 0.0
        %4520 = vmatprep.subr.mxu0 0.0
        %4521 = vmatpush1.msra.mxu0 0.0
        %4522 = vmatprep.subr.mxu0 0.0
        %4523 = vmatpush1.msra.mxu0 0.0
        %4524 = vmatprep.subr.mxu0 0.0
        %4525 = vmatpush1.msra.mxu0 0.0
        %4526 = vmatprep.subr.mxu0 0.0
        %4527 = vmatpush1.msra.mxu0 0.0
        %4528 = vmatprep.subr.mxu0 0.0
        %4529 = vmatpush1.msra.mxu0 0.0
        %4530 = vmatprep.subr.mxu0 0.0
        %4531 = vmatpush1.msra.mxu0 0.0
        %4532 = vmatprep.subr.mxu0 0.0
        %4533 = vmatpush1.msra.mxu0 0.0
        %4534 = vmatprep.mubr.f32.mxu0 0.0
        %4535 = vmatmul.mubr.f32.gmra.mrb[0].mxu0 %v4375
        %v4536 = vpop.f32.mrb[0].mxu0
        %v4537 = vadd.f32 %v4216, %v4536
        %v4538 = vpop.f32.mrb[0].mxu0
        %4539 = vmatprep.mubr.f32.mxu0 0.0
        %4540 = vmatmul.mubr.f32.gmra.mrb[0].mxu0 %v4378
        %v4541 = vpop.f32.mrb[0].mxu0
        %v4542 = vadd.f32 %v4221, %v4541
        %v4543 = vpop.f32.mrb[0].mxu0
        %4544 = vmatprep.mubr.f32.mxu0 0.0
        %4545 = vmatmul.mubr.f32.gmra.mrb[0].mxu0 %v4381
        %v4546 = vpop.f32.mrb[0].mxu0
        %v4547 = vadd.f32 %v4226, %v4546
        %v4548 = vpop.f32.mrb[0].mxu0
        %4549 = vmatprep.mubr.f32.mxu0 0.0
        %4550 = vmatmul.mubr.f32.gmra.mrb[0].mxu0 %v4384
        %v4551 = vpop.f32.mrb[0].mxu0
        %v4552 = vadd.f32 %v4231, %v4551
        %v4553 = vpop.f32.mrb[0].mxu0
        %4554 = vmatprep.mubr.f32.mxu0 0.0
        %4555 = vmatmul.mubr.f32.gmra.mrb[0].mxu0 %v4387
        %v4556 = vpop.f32.mrb[0].mxu0
        %v4557 = vadd.f32 %v4236, %v4556
        %v4558 = vpop.f32.mrb[0].mxu0
        %4559 = vmatprep.mubr.f32.mxu0 0.0
        %4560 = vmatmul.mubr.f32.gmra.mrb[0].mxu0 %v4390
        %v4561 = vpop.f32.mrb[0].mxu0
        %v4562 = vadd.f32 %v4241, %v4561
        %v4563 = vpop.f32.mrb[0].mxu0
        %4564 = vmatprep.mubr.f32.mxu0 0.0
        %4565 = vmatmul.mubr.f32.gmra.mrb[0].mxu0 %v4393
        %v4566 = vpop.f32.mrb[0].mxu0
        %v4567 = vadd.f32 %v4246, %v4566
        %v4568 = vpop.f32.mrb[0].mxu0
        %4569 = vmatprep.mubr.f32.mxu0 0.0
        %4570 = vmatmul.mubr.f32.gmra.mrb[0].mxu0 %v4396
        %v4571 = vpop.f32.mrb[0].mxu0
        %v4572 = vadd.f32 %v4251, %v4571
        %v4573 = vpop.f32.mrb[0].mxu0
        %4574 = vmatprep.mubr.f32.mxu0 0.0
        %4575 = vmatmul.mubr.f32.gmra.mrb[0].mxu0 %v4399
        %v4576 = vpop.f32.mrb[0].mxu0
        %v4577 = vadd.f32 %v4256, %v4576
        %v4578 = vpop.f32.mrb[0].mxu0
        %4579 = vmatprep.mubr.f32.mxu0 0.0
        %4580 = vmatmul.mubr.f32.gmra.mrb[0].mxu0 %v4402
        %v4581 = vpop.f32.mrb[0].mxu0
        %v4582 = vadd.f32 %v4261, %v4581
        %v4583 = vpop.f32.mrb[0].mxu0
        %4584 = vmatprep.mubr.f32.mxu0 0.0
        %4585 = vmatmul.mubr.f32.gmra.mrb[0].mxu0 %v4405
        %v4586 = vpop.f32.mrb[0].mxu0
        %v4587 = vadd.f32 %v4266, %v4586
        %v4588 = vpop.f32.mrb[0].mxu0
        %4589 = vmatprep.mubr.f32.mxu0 0.0
        %4590 = vmatmul.mubr.f32.gmra.mrb[0].mxu0 %v4408
        %v4591 = vpop.f32.mrb[0].mxu0
        %v4592 = vadd.f32 %v4271, %v4591
        %v4593 = vpop.f32.mrb[0].mxu0
        %4594 = vmatprep.mubr.f32.mxu0 0.0
        %4595 = vmatmul.mubr.f32.gmra.mrb[0].mxu0 %v4411
        %v4596 = vpop.f32.mrb[0].mxu0
        %v4597 = vadd.f32 %v4276, %v4596
        %v4598 = vpop.f32.mrb[0].mxu0
        %4599 = vmatprep.mubr.f32.mxu0 0.0
        %4600 = vmatmul.mubr.f32.gmra.mrb[0].mxu0 %v4414
        %v4601 = vpop.f32.mrb[0].mxu0
        %v4602 = vadd.f32 %v4281, %v4601
        %v4603 = vpop.f32.mrb[0].mxu0
        %4604 = vmatprep.mubr.f32.mxu0 0.0
        %4605 = vmatmul.mubr.f32.gmra.mrb[0].mxu0 %v4417
        %v4606 = vpop.f32.mrb[0].mxu0
        %v4607 = vadd.f32 %v4286, %v4606
        %v4608 = vpop.f32.mrb[0].mxu0
        %4609 = vmatprep.mubr.f32.mxu0 0.0
        %4610 = vmatmul.mubr.f32.gmra.mrb[0].mxu0 %v4420
        %v4611 = vpop.f32.mrb[0].mxu0
        %v4612 = vadd.f32 %v4291, %v4611
        %v4613 = vpop.f32.mrb[0].mxu0
        %4614 = vmatprep.mubr.f32.mxu0 0.0
        %4615 = vmatmul.mubr.f32.gmra.mrb[0].mxu0 %v4423
        %v4616 = vpop.f32.mrb[0].mxu0
        %v4617 = vadd.f32 %v4296, %v4616
        %v4618 = vpop.f32.mrb[0].mxu0
        %4619 = vmatprep.mubr.f32.mxu0 0.0
        %4620 = vmatmul.mubr.f32.gmra.mrb[0].mxu0 %v4426
        %v4621 = vpop.f32.mrb[0].mxu0
        %v4622 = vadd.f32 %v4301, %v4621
        %v4623 = vpop.f32.mrb[0].mxu0
        %4624 = vmatprep.mubr.f32.mxu0 0.0
        %4625 = vmatmul.mubr.f32.gmra.mrb[0].mxu0 %v4429
        %v4626 = vpop.f32.mrb[0].mxu0
        %v4627 = vadd.f32 %v4306, %v4626
        %v4628 = vpop.f32.mrb[0].mxu0
        %4629 = vmatprep.mubr.f32.mxu0 0.0
        %4630 = vmatmul.mubr.f32.gmra.mrb[0].mxu0 %v4432
        %v4631 = vpop.f32.mrb[0].mxu0
        %v4632 = vadd.f32 %v4311, %v4631
        %v4633 = vpop.f32.mrb[0].mxu0
        %4634 = vmatprep.mubr.f32.mxu0 0.0
        %4635 = vmatmul.mubr.f32.gmra.mrb[0].mxu0 %v4435
        %v4636 = vpop.f32.mrb[0].mxu0
        %v4637 = vadd.f32 %v4316, %v4636
        %v4638 = vpop.f32.mrb[0].mxu0
        %4639 = vmatprep.mubr.f32.mxu0 0.0
        %4640 = vmatmul.mubr.f32.gmra.mrb[0].mxu0 %v4438
        %v4641 = vpop.f32.mrb[0].mxu0
        %v4642 = vadd.f32 %v4321, %v4641
        %v4643 = vpop.f32.mrb[0].mxu0
        %4644 = vmatprep.mubr.f32.mxu0 0.0
        %4645 = vmatmul.mubr.f32.gmra.mrb[0].mxu0 %v4441
        %v4646 = vpop.f32.mrb[0].mxu0
        %v4647 = vadd.f32 %v4326, %v4646
        %v4648 = vpop.f32.mrb[0].mxu0
        %4649 = vmatprep.mubr.f32.mxu0 0.0
        %4650 = vmatmul.mubr.f32.gmra.mrb[0].mxu0 %v4444
        %v4651 = vpop.f32.mrb[0].mxu0
        %v4652 = vadd.f32 %v4331, %v4651
        %v4653 = vpop.f32.mrb[0].mxu0
        %4654 = vmatprep.mubr.f32.mxu0 0.0
        %4655 = vmatmul.mubr.f32.gmra.mrb[0].mxu0 %v4447
        %v4656 = vpop.f32.mrb[0].mxu0
        %v4657 = vadd.f32 %v4336, %v4656
        %v4658 = vpop.f32.mrb[0].mxu0
        %4659 = vmatprep.mubr.f32.mxu0 0.0
        %4660 = vmatmul.mubr.f32.gmra.mrb[0].mxu0 %v4450
        %v4661 = vpop.f32.mrb[0].mxu0
        %v4662 = vadd.f32 %v4341, %v4661
        %v4663 = vpop.f32.mrb[0].mxu0
        %4664 = vmatprep.mubr.f32.mxu0 0.0
        %4665 = vmatmul.mubr.f32.gmra.mrb[0].mxu0 %v4453
        %v4666 = vpop.f32.mrb[0].mxu0
        %v4667 = vadd.f32 %v4346, %v4666
        %v4668 = vpop.f32.mrb[0].mxu0
        %4669 = vmatprep.mubr.f32.mxu0 0.0
        %4670 = vmatmul.mubr.f32.gmra.mrb[0].mxu0 %v4456
        %v4671 = vpop.f32.mrb[0].mxu0
        %v4672 = vadd.f32 %v4351, %v4671
        %v4673 = vpop.f32.mrb[0].mxu0
        %4674 = vmatprep.mubr.f32.mxu0 0.0
        %4675 = vmatmul.mubr.f32.gmra.mrb[0].mxu0 %v4459
        %v4676 = vpop.f32.mrb[0].mxu0
        %v4677 = vadd.f32 %v4356, %v4676
        %v4678 = vpop.f32.mrb[0].mxu0
        %4679 = vmatprep.mubr.f32.mxu0 0.0
        %4680 = vmatmul.mubr.f32.gmra.mrb[0].mxu0 %v4462
        %v4681 = vpop.f32.mrb[0].mxu0
        %v4682 = vadd.f32 %v4361, %v4681
        %v4683 = vpop.f32.mrb[0].mxu0
        %4684 = vmatprep.mubr.f32.mxu0 0.0
        %4685 = vmatmul.mubr.f32.gmra.mrb[0].mxu0 %v4465
        %v4686 = vpop.f32.mrb[0].mxu0
        %v4687 = vadd.f32 %v4366, %v4686
        %v4688 = vpop.f32.mrb[0].mxu0
        %4689 = vmatprep.mubr.f32.mxu0 0.0
        %4690 = vmatmul.mubr.f32.gmra.mrb[0].mxu0 %v4468
        %v4691 = vpop.f32.mrb[0].mxu0
        %v4692 = vadd.f32 %v4371, %v4691
        %v4693 = vpop.f32.mrb[0].mxu0
        %4694 = vdwg.mxu0
        %v4695 = vld [vmem:[#allocation2 + $0x9] sm:$0xff]
        %v4696 = vld [vmem:[#allocation2 + $0x11] sm:$0xff]
        %v4697 = vld [vmem:[#allocation2 + $0x29] sm:$0xff]
        %v4698 = vld [vmem:[#allocation2 + $0x31] sm:$0xff]
        %v4699 = vld [vmem:[#allocation2 + $0x49] sm:$0xff]
        %v4700 = vld [vmem:[#allocation2 + $0x51] sm:$0xff]
        %v4701 = vld [vmem:[#allocation2 + $0x69] sm:$0xff]
        %v4702 = vld [vmem:[#allocation2 + $0x71] sm:$0xff]
        %v4703 = vld [vmem:[#allocation2 + $0x89] sm:$0xff]
        %v4704 = vld [vmem:[#allocation2 + $0x91] sm:$0xff]
        %v4705 = vld [vmem:[#allocation2 + $0xa9] sm:$0xff]
        %v4706 = vld [vmem:[#allocation2 + $0xb1] sm:$0xff]
        %v4707 = vld [vmem:[#allocation2 + $0xc9] sm:$0xff]
        %v4708 = vld [vmem:[#allocation2 + $0xd1] sm:$0xff]
        %v4709 = vld [vmem:[#allocation2 + $0xe9] sm:$0xff]
        %v4710 = vld [vmem:[#allocation2 + $0xf1] sm:$0xff]
        %v4711 = vld [vmem:[#allocation2 + $0x109] sm:$0xff]
        %v4712 = vld [vmem:[#allocation2 + $0x111] sm:$0xff]
        %v4713 = vld [vmem:[#allocation2 + $0x129] sm:$0xff]
        %v4714 = vld [vmem:[#allocation2 + $0x131] sm:$0xff]
        %v4715 = vld [vmem:[#allocation2 + $0x149] sm:$0xff]
        %v4716 = vld [vmem:[#allocation2 + $0x151] sm:$0xff]
        %v4717 = vld [vmem:[#allocation2 + $0x169] sm:$0xff]
        %v4718 = vld [vmem:[#allocation2 + $0x171] sm:$0xff]
        %v4719 = vld [vmem:[#allocation2 + $0x189] sm:$0xff]
        %v4720 = vld [vmem:[#allocation2 + $0x191] sm:$0xff]
        %v4721 = vld [vmem:[#allocation2 + $0x1a9] sm:$0xff]
        %v4722 = vld [vmem:[#allocation2 + $0x1b1] sm:$0xff]
        %v4723 = vld [vmem:[#allocation2 + $0x1c9] sm:$0xff]
        %v4724 = vld [vmem:[#allocation2 + $0x1d1] sm:$0xff]
        %v4725 = vld [vmem:[#allocation2 + $0x1e9] sm:$0xff]
        %v4726 = vld [vmem:[#allocation2 + $0x1f1] sm:$0xff]
        %s4727 = scalar_lea.vmem [#allocation6], 352
        %v4728 = vld [vmem:[%s4727] sm:$0xff]
        %v4729 = vld [vmem:[%s4727 + $0x8] sm:$0xff]
        %v4730 = vld [vmem:[%s4727 + $0x10] sm:$0xff]
        %v4731 = vld [vmem:[%s4727 + $0x18] sm:$0xff]
        %v4733 = vsel %vm470, %v4695, 0
        %v4736 = vsel %vm470, %v4696, 0
        %v4739 = vsel %vm470, %v4697, 0
        %v4742 = vsel %vm470, %v4698, 0
        %v4745 = vsel %vm470, %v4699, 0
        %v4748 = vsel %vm470, %v4700, 0
        %v4751 = vsel %vm470, %v4701, 0
        %v4754 = vsel %vm470, %v4702, 0
        %v4757 = vsel %vm470, %v4703, 0
        %v4760 = vsel %vm470, %v4704, 0
        %v4763 = vsel %vm470, %v4705, 0
        %v4766 = vsel %vm470, %v4706, 0
        %v4769 = vsel %vm470, %v4707, 0
        %v4772 = vsel %vm470, %v4708, 0
        %v4775 = vsel %vm470, %v4709, 0
        %v4778 = vsel %vm470, %v4710, 0
        %v4781 = vsel %vm470, %v4711, 0
        %v4784 = vsel %vm470, %v4712, 0
        %v4787 = vsel %vm470, %v4713, 0
        %v4790 = vsel %vm470, %v4714, 0
        %v4793 = vsel %vm470, %v4715, 0
        %v4796 = vsel %vm470, %v4716, 0
        %v4799 = vsel %vm470, %v4717, 0
        %v4802 = vsel %vm470, %v4718, 0
        %v4805 = vsel %vm470, %v4719, 0
        %v4808 = vsel %vm470, %v4720, 0
        %v4811 = vsel %vm470, %v4721, 0
        %v4814 = vsel %vm470, %v4722, 0
        %v4817 = vsel %vm470, %v4723, 0
        %v4820 = vsel %vm470, %v4724, 0
        %v4823 = vsel %vm470, %v4725, 0
        %v4826 = vsel %vm470, %v4726, 0
        %4828 = vmatprep.subr.mxu0 0.0
        %4829 = vmatpush1.msra.mxu0 %v4728
        %4830 = vmatprep.subr.mxu0 0.0
        %4831 = vmatpush1.msra.mxu0 %v4729
        %4832 = vmatprep.subr.mxu0 0.0
        %4833 = vmatpush1.msra.mxu0 %v4730
        %4834 = vmatprep.subr.mxu0 0.0
        %4835 = vmatpush1.msra.mxu0 %v4731
        %4836 = vmatprep.subr.mxu0 0.0
        %4837 = vmatpush1.msra.mxu0 0.0
        %4838 = vmatprep.subr.mxu0 0.0
        %4839 = vmatpush1.msra.mxu0 0.0
        %4840 = vmatprep.subr.mxu0 0.0
        %4841 = vmatpush1.msra.mxu0 0.0
        %4842 = vmatprep.subr.mxu0 0.0
        %4843 = vmatpush1.msra.mxu0 0.0
        %4844 = vmatprep.subr.mxu0 0.0
        %4845 = vmatpush1.msra.mxu0 0.0
        %4846 = vmatprep.subr.mxu0 0.0
        %4847 = vmatpush1.msra.mxu0 0.0
        %4848 = vmatprep.subr.mxu0 0.0
        %4849 = vmatpush1.msra.mxu0 0.0
        %4850 = vmatprep.subr.mxu0 0.0
        %4851 = vmatpush1.msra.mxu0 0.0
        %4852 = vmatprep.subr.mxu0 0.0
        %4853 = vmatpush1.msra.mxu0 0.0
        %4854 = vmatprep.subr.mxu0 0.0
        %4855 = vmatpush1.msra.mxu0 0.0
        %4856 = vmatprep.subr.mxu0 0.0
        %4857 = vmatpush1.msra.mxu0 0.0
        %4858 = vmatprep.subr.mxu0 0.0
        %4859 = vmatpush1.msra.mxu0 0.0
        %4860 = vmatprep.subr.mxu0 0.0
        %4861 = vmatpush1.msra.mxu0 0.0
        %4862 = vmatprep.subr.mxu0 0.0
        %4863 = vmatpush1.msra.mxu0 0.0
        %4864 = vmatprep.subr.mxu0 0.0
        %4865 = vmatpush1.msra.mxu0 0.0
        %4866 = vmatprep.subr.mxu0 0.0
        %4867 = vmatpush1.msra.mxu0 0.0
        %4868 = vmatprep.subr.mxu0 0.0
        %4869 = vmatpush1.msra.mxu0 0.0
        %4870 = vmatprep.subr.mxu0 0.0
        %4871 = vmatpush1.msra.mxu0 0.0
        %4872 = vmatprep.subr.mxu0 0.0
        %4873 = vmatpush1.msra.mxu0 0.0
        %4874 = vmatprep.subr.mxu0 0.0
        %4875 = vmatpush1.msra.mxu0 0.0
        %4876 = vmatprep.subr.mxu0 0.0
        %4877 = vmatpush1.msra.mxu0 0.0
        %4878 = vmatprep.subr.mxu0 0.0
        %4879 = vmatpush1.msra.mxu0 0.0
        %4880 = vmatprep.subr.mxu0 0.0
        %4881 = vmatpush1.msra.mxu0 0.0
        %4882 = vmatprep.subr.mxu0 0.0
        %4883 = vmatpush1.msra.mxu0 0.0
        %4884 = vmatprep.subr.mxu0 0.0
        %4885 = vmatpush1.msra.mxu0 0.0
        %4886 = vmatprep.subr.mxu0 0.0
        %4887 = vmatpush1.msra.mxu0 0.0
        %4888 = vmatprep.subr.mxu0 0.0
        %4889 = vmatpush1.msra.mxu0 0.0
        %4890 = vmatprep.subr.mxu0 0.0
        %4891 = vmatpush1.msra.mxu0 0.0
        %4892 = vmatprep.mubr.f32.mxu0 0.0
        %4893 = vmatmul.mubr.f32.gmra.mrb[0].mxu0 %v4733
        %v4894 = vpop.f32.mrb[0].mxu0
        %v4895 = vadd.f32 0.0, %v4894
        %v4896 = vpop.f32.mrb[0].mxu0
        %4897 = vmatprep.mubr.f32.mxu0 0.0
        %4898 = vmatmul.mubr.f32.gmra.mrb[0].mxu0 %v4736
        %v4899 = vpop.f32.mrb[0].mxu0
        %v4900 = vadd.f32 0.0, %v4899
        %v4901 = vpop.f32.mrb[0].mxu0
        %4902 = vmatprep.mubr.f32.mxu0 0.0
        %4903 = vmatmul.mubr.f32.gmra.mrb[0].mxu0 %v4739
        %v4904 = vpop.f32.mrb[0].mxu0
        %v4905 = vadd.f32 0.0, %v4904
        %v4906 = vpop.f32.mrb[0].mxu0
        %4907 = vmatprep.mubr.f32.mxu0 0.0
        %4908 = vmatmul.mubr.f32.gmra.mrb[0].mxu0 %v4742
        %v4909 = vpop.f32.mrb[0].mxu0
        %v4910 = vadd.f32 0.0, %v4909
        %v4911 = vpop.f32.mrb[0].mxu0
        %4912 = vmatprep.mubr.f32.mxu0 0.0
        %4913 = vmatmul.mubr.f32.gmra.mrb[0].mxu0 %v4745
        %v4914 = vpop.f32.mrb[0].mxu0
        %v4915 = vadd.f32 0.0, %v4914
        %v4916 = vpop.f32.mrb[0].mxu0
        %4917 = vmatprep.mubr.f32.mxu0 0.0
        %4918 = vmatmul.mubr.f32.gmra.mrb[0].mxu0 %v4748
        %v4919 = vpop.f32.mrb[0].mxu0
        %v4920 = vadd.f32 0.0, %v4919
        %v4921 = vpop.f32.mrb[0].mxu0
        %4922 = vmatprep.mubr.f32.mxu0 0.0
        %4923 = vmatmul.mubr.f32.gmra.mrb[0].mxu0 %v4751
        %v4924 = vpop.f32.mrb[0].mxu0
        %v4925 = vadd.f32 0.0, %v4924
        %v4926 = vpop.f32.mrb[0].mxu0
        %4927 = vmatprep.mubr.f32.mxu0 0.0
        %4928 = vmatmul.mubr.f32.gmra.mrb[0].mxu0 %v4754
        %v4929 = vpop.f32.mrb[0].mxu0
        %v4930 = vadd.f32 0.0, %v4929
        %v4931 = vpop.f32.mrb[0].mxu0
        %4932 = vmatprep.mubr.f32.mxu0 0.0
        %4933 = vmatmul.mubr.f32.gmra.mrb[0].mxu0 %v4757
        %v4934 = vpop.f32.mrb[0].mxu0
        %v4935 = vadd.f32 0.0, %v4934
        %v4936 = vpop.f32.mrb[0].mxu0
        %4937 = vmatprep.mubr.f32.mxu0 0.0
        %4938 = vmatmul.mubr.f32.gmra.mrb[0].mxu0 %v4760
        %v4939 = vpop.f32.mrb[0].mxu0
        %v4940 = vadd.f32 0.0, %v4939
        %v4941 = vpop.f32.mrb[0].mxu0
        %4942 = vmatprep.mubr.f32.mxu0 0.0
        %4943 = vmatmul.mubr.f32.gmra.mrb[0].mxu0 %v4763
        %v4944 = vpop.f32.mrb[0].mxu0
        %v4945 = vadd.f32 0.0, %v4944
        %v4946 = vpop.f32.mrb[0].mxu0
        %4947 = vmatprep.mubr.f32.mxu0 0.0
        %4948 = vmatmul.mubr.f32.gmra.mrb[0].mxu0 %v4766
        %v4949 = vpop.f32.mrb[0].mxu0
        %v4950 = vadd.f32 0.0, %v4949
        %v4951 = vpop.f32.mrb[0].mxu0
        %4952 = vmatprep.mubr.f32.mxu0 0.0
        %4953 = vmatmul.mubr.f32.gmra.mrb[0].mxu0 %v4769
        %v4954 = vpop.f32.mrb[0].mxu0
        %v4955 = vadd.f32 0.0, %v4954
        %v4956 = vpop.f32.mrb[0].mxu0
        %4957 = vmatprep.mubr.f32.mxu0 0.0
        %4958 = vmatmul.mubr.f32.gmra.mrb[0].mxu0 %v4772
        %v4959 = vpop.f32.mrb[0].mxu0
        %v4960 = vadd.f32 0.0, %v4959
        %v4961 = vpop.f32.mrb[0].mxu0
        %4962 = vmatprep.mubr.f32.mxu0 0.0
        %4963 = vmatmul.mubr.f32.gmra.mrb[0].mxu0 %v4775
        %v4964 = vpop.f32.mrb[0].mxu0
        %v4965 = vadd.f32 0.0, %v4964
        %v4966 = vpop.f32.mrb[0].mxu0
        %4967 = vmatprep.mubr.f32.mxu0 0.0
        %4968 = vmatmul.mubr.f32.gmra.mrb[0].mxu0 %v4778
        %v4969 = vpop.f32.mrb[0].mxu0
        %v4970 = vadd.f32 0.0, %v4969
        %v4971 = vpop.f32.mrb[0].mxu0
        %4972 = vmatprep.mubr.f32.mxu0 0.0
        %4973 = vmatmul.mubr.f32.gmra.mrb[0].mxu0 %v4781
        %v4974 = vpop.f32.mrb[0].mxu0
        %v4975 = vadd.f32 0.0, %v4974
        %v4976 = vpop.f32.mrb[0].mxu0
        %4977 = vmatprep.mubr.f32.mxu0 0.0
        %4978 = vmatmul.mubr.f32.gmra.mrb[0].mxu0 %v4784
        %v4979 = vpop.f32.mrb[0].mxu0
        %v4980 = vadd.f32 0.0, %v4979
        %v4981 = vpop.f32.mrb[0].mxu0
        %4982 = vmatprep.mubr.f32.mxu0 0.0
        %4983 = vmatmul.mubr.f32.gmra.mrb[0].mxu0 %v4787
        %v4984 = vpop.f32.mrb[0].mxu0
        %v4985 = vadd.f32 0.0, %v4984
        %v4986 = vpop.f32.mrb[0].mxu0
        %4987 = vmatprep.mubr.f32.mxu0 0.0
        %4988 = vmatmul.mubr.f32.gmra.mrb[0].mxu0 %v4790
        %v4989 = vpop.f32.mrb[0].mxu0
        %v4990 = vadd.f32 0.0, %v4989
        %v4991 = vpop.f32.mrb[0].mxu0
        %4992 = vmatprep.mubr.f32.mxu0 0.0
        %4993 = vmatmul.mubr.f32.gmra.mrb[0].mxu0 %v4793
        %v4994 = vpop.f32.mrb[0].mxu0
        %v4995 = vadd.f32 0.0, %v4994
        %v4996 = vpop.f32.mrb[0].mxu0
        %4997 = vmatprep.mubr.f32.mxu0 0.0
        %4998 = vmatmul.mubr.f32.gmra.mrb[0].mxu0 %v4796
        %v4999 = vpop.f32.mrb[0].mxu0
        %v5000 = vadd.f32 0.0, %v4999
        %v5001 = vpop.f32.mrb[0].mxu0
        %5002 = vmatprep.mubr.f32.mxu0 0.0
        %5003 = vmatmul.mubr.f32.gmra.mrb[0].mxu0 %v4799
        %v5004 = vpop.f32.mrb[0].mxu0
        %v5005 = vadd.f32 0.0, %v5004
        %v5006 = vpop.f32.mrb[0].mxu0
        %5007 = vmatprep.mubr.f32.mxu0 0.0
        %5008 = vmatmul.mubr.f32.gmra.mrb[0].mxu0 %v4802
        %v5009 = vpop.f32.mrb[0].mxu0
        %v5010 = vadd.f32 0.0, %v5009
        %v5011 = vpop.f32.mrb[0].mxu0
        %5012 = vmatprep.mubr.f32.mxu0 0.0
        %5013 = vmatmul.mubr.f32.gmra.mrb[0].mxu0 %v4805
        %v5014 = vpop.f32.mrb[0].mxu0
        %v5015 = vadd.f32 0.0, %v5014
        %v5016 = vpop.f32.mrb[0].mxu0
        %5017 = vmatprep.mubr.f32.mxu0 0.0
        %5018 = vmatmul.mubr.f32.gmra.mrb[0].mxu0 %v4808
        %v5019 = vpop.f32.mrb[0].mxu0
        %v5020 = vadd.f32 0.0, %v5019
        %v5021 = vpop.f32.mrb[0].mxu0
        %5022 = vmatprep.mubr.f32.mxu0 0.0
        %5023 = vmatmul.mubr.f32.gmra.mrb[0].mxu0 %v4811
        %v5024 = vpop.f32.mrb[0].mxu0
        %v5025 = vadd.f32 0.0, %v5024
        %v5026 = vpop.f32.mrb[0].mxu0
        %5027 = vmatprep.mubr.f32.mxu0 0.0
        %5028 = vmatmul.mubr.f32.gmra.mrb[0].mxu0 %v4814
        %v5029 = vpop.f32.mrb[0].mxu0
        %v5030 = vadd.f32 0.0, %v5029
        %v5031 = vpop.f32.mrb[0].mxu0
        %5032 = vmatprep.mubr.f32.mxu0 0.0
        %5033 = vmatmul.mubr.f32.gmra.mrb[0].mxu0 %v4817
        %v5034 = vpop.f32.mrb[0].mxu0
        %v5035 = vadd.f32 0.0, %v5034
        %v5036 = vpop.f32.mrb[0].mxu0
        %5037 = vmatprep.mubr.f32.mxu0 0.0
        %5038 = vmatmul.mubr.f32.gmra.mrb[0].mxu0 %v4820
        %v5039 = vpop.f32.mrb[0].mxu0
        %v5040 = vadd.f32 0.0, %v5039
        %v5041 = vpop.f32.mrb[0].mxu0
        %5042 = vmatprep.mubr.f32.mxu0 0.0
        %5043 = vmatmul.mubr.f32.gmra.mrb[0].mxu0 %v4823
        %v5044 = vpop.f32.mrb[0].mxu0
        %v5045 = vadd.f32 0.0, %v5044
        %v5046 = vpop.f32.mrb[0].mxu0
        %5047 = vmatprep.mubr.f32.mxu0 0.0
        %5048 = vmatmul.mubr.f32.gmra.mrb[0].mxu0 %v4826
        %v5049 = vpop.f32.mrb[0].mxu0
        %v5050 = vadd.f32 0.0, %v5049
        %v5051 = vpop.f32.mrb[0].mxu0
        %5052 = vdwg.mxu0
        %v5053 = vadd.f32 %v4537, %v4895
        %v5054 = vadd.f32 %v4542, %v4900
        %v5055 = vadd.f32 %v4547, %v4905
        %v5056 = vadd.f32 %v4552, %v4910
        %v5057 = vadd.f32 %v4557, %v4915
        %v5058 = vadd.f32 %v4562, %v4920
        %v5059 = vadd.f32 %v4567, %v4925
        %v5060 = vadd.f32 %v4572, %v4930
        %v5061 = vadd.f32 %v4577, %v4935
        %v5062 = vadd.f32 %v4582, %v4940
        %v5063 = vadd.f32 %v4587, %v4945
        %v5064 = vadd.f32 %v4592, %v4950
        %v5065 = vadd.f32 %v4597, %v4955
        %v5066 = vadd.f32 %v4602, %v4960
        %v5067 = vadd.f32 %v4607, %v4965
        %v5068 = vadd.f32 %v4612, %v4970
        %v5069 = vadd.f32 %v4617, %v4975
        %v5070 = vadd.f32 %v4622, %v4980
        %v5071 = vadd.f32 %v4627, %v4985
        %v5072 = vadd.f32 %v4632, %v4990
        %v5073 = vadd.f32 %v4637, %v4995
        %v5074 = vadd.f32 %v4642, %v5000
        %v5075 = vadd.f32 %v4647, %v5005
        %v5076 = vadd.f32 %v4652, %v5010
        %v5077 = vadd.f32 %v4657, %v5015
        %v5078 = vadd.f32 %v4662, %v5020
        %v5079 = vadd.f32 %v4667, %v5025
        %v5080 = vadd.f32 %v4672, %v5030
        %v5081 = vadd.f32 %v4677, %v5035
        %v5082 = vadd.f32 %v4682, %v5040
        %v5083 = vadd.f32 %v4687, %v5045
        %v5084 = vadd.f32 %v4692, %v5050
        %v5085 = vld [vmem:[%s364 + $0x7] sm:$0xff]
        %v5086 = vld [vmem:[%s364 + $0xf] sm:$0xff]
        %v5087 = vld [vmem:[%s364 + $0x27] sm:$0xff]
        %v5088 = vld [vmem:[%s364 + $0x2f] sm:$0xff]
        %v5089 = vld [vmem:[%s364 + $0x47] sm:$0xff]
        %v5090 = vld [vmem:[%s364 + $0x4f] sm:$0xff]
        %v5091 = vld [vmem:[%s364 + $0x67] sm:$0xff]
        %v5092 = vld [vmem:[%s364 + $0x6f] sm:$0xff]
        %v5093 = vld [vmem:[%s364 + $0x87] sm:$0xff]
        %v5094 = vld [vmem:[%s364 + $0x8f] sm:$0xff]
        %v5095 = vld [vmem:[%s364 + $0xa7] sm:$0xff]
        %v5096 = vld [vmem:[%s364 + $0xaf] sm:$0xff]
        %v5097 = vld [vmem:[%s364 + $0xc7] sm:$0xff]
        %v5098 = vld [vmem:[%s364 + $0xcf] sm:$0xff]
        %v5099 = vld [vmem:[%s364 + $0xe7] sm:$0xff]
        %v5100 = vld [vmem:[%s364 + $0xef] sm:$0xff]
        %v5101 = vld [vmem:[%s364 + $0x107] sm:$0xff]
        %v5102 = vld [vmem:[%s364 + $0x10f] sm:$0xff]
        %v5103 = vld [vmem:[%s364 + $0x127] sm:$0xff]
        %v5104 = vld [vmem:[%s364 + $0x12f] sm:$0xff]
        %v5105 = vld [vmem:[%s364 + $0x147] sm:$0xff]
        %v5106 = vld [vmem:[%s364 + $0x14f] sm:$0xff]
        %v5107 = vld [vmem:[%s364 + $0x167] sm:$0xff]
        %v5108 = vld [vmem:[%s364 + $0x16f] sm:$0xff]
        %v5109 = vld [vmem:[%s364 + $0x187] sm:$0xff]
        %v5110 = vld [vmem:[%s364 + $0x18f] sm:$0xff]
        %v5111 = vld [vmem:[%s364 + $0x1a7] sm:$0xff]
        %v5112 = vld [vmem:[%s364 + $0x1af] sm:$0xff]
        %v5113 = vld [vmem:[%s364 + $0x1c7] sm:$0xff]
        %v5114 = vld [vmem:[%s364 + $0x1cf] sm:$0xff]
        %v5115 = vld [vmem:[%s364 + $0x1e7] sm:$0xff]
        %v5116 = vld [vmem:[%s364 + $0x1ef] sm:$0xff]
        %s5117 = scalar_lea.vmem [#allocation6], 384
        %v5118 = vld [vmem:[%s5117] sm:$0xff]
        %v5119 = vld [vmem:[%s5117 + $0x8] sm:$0xff]
        %v5120 = vld [vmem:[%s5117 + $0x10] sm:$0xff]
        %v5121 = vld [vmem:[%s5117 + $0x18] sm:$0xff]
        %v5123 = vsel %vm470, %v5085, 0
        %v5126 = vsel %vm470, %v5086, 0
        %v5129 = vsel %vm470, %v5087, 0
        %v5132 = vsel %vm470, %v5088, 0
        %v5135 = vsel %vm470, %v5089, 0
        %v5138 = vsel %vm470, %v5090, 0
        %v5141 = vsel %vm470, %v5091, 0
        %v5144 = vsel %vm470, %v5092, 0
        %v5147 = vsel %vm470, %v5093, 0
        %v5150 = vsel %vm470, %v5094, 0
        %v5153 = vsel %vm470, %v5095, 0
        %v5156 = vsel %vm470, %v5096, 0
        %v5159 = vsel %vm470, %v5097, 0
        %v5162 = vsel %vm470, %v5098, 0
        %v5165 = vsel %vm470, %v5099, 0
        %v5168 = vsel %vm470, %v5100, 0
        %v5171 = vsel %vm470, %v5101, 0
        %v5174 = vsel %vm470, %v5102, 0
        %v5177 = vsel %vm470, %v5103, 0
        %v5180 = vsel %vm470, %v5104, 0
        %v5183 = vsel %vm470, %v5105, 0
        %v5186 = vsel %vm470, %v5106, 0
        %v5189 = vsel %vm470, %v5107, 0
        %v5192 = vsel %vm470, %v5108, 0
        %v5195 = vsel %vm470, %v5109, 0
        %v5198 = vsel %vm470, %v5110, 0
        %v5201 = vsel %vm470, %v5111, 0
        %v5204 = vsel %vm470, %v5112, 0
        %v5207 = vsel %vm470, %v5113, 0
        %v5210 = vsel %vm470, %v5114, 0
        %v5213 = vsel %vm470, %v5115, 0
        %v5216 = vsel %vm470, %v5116, 0
        %5218 = vmatprep.subr.mxu0 0.0
        %5219 = vmatpush1.msra.mxu0 %v5118
        %5220 = vmatprep.subr.mxu0 0.0
        %5221 = vmatpush1.msra.mxu0 %v5119
        %5222 = vmatprep.subr.mxu0 0.0
        %5223 = vmatpush1.msra.mxu0 %v5120
        %5224 = vmatprep.subr.mxu0 0.0
        %5225 = vmatpush1.msra.mxu0 %v5121
        %5226 = vmatprep.subr.mxu0 0.0
        %5227 = vmatpush1.msra.mxu0 0.0
        %5228 = vmatprep.subr.mxu0 0.0
        %5229 = vmatpush1.msra.mxu0 0.0
        %5230 = vmatprep.subr.mxu0 0.0
        %5231 = vmatpush1.msra.mxu0 0.0
        %5232 = vmatprep.subr.mxu0 0.0
        %5233 = vmatpush1.msra.mxu0 0.0
        %5234 = vmatprep.subr.mxu0 0.0
        %5235 = vmatpush1.msra.mxu0 0.0
        %5236 = vmatprep.subr.mxu0 0.0
        %5237 = vmatpush1.msra.mxu0 0.0
        %5238 = vmatprep.subr.mxu0 0.0
        %5239 = vmatpush1.msra.mxu0 0.0
        %5240 = vmatprep.subr.mxu0 0.0
        %5241 = vmatpush1.msra.mxu0 0.0
        %5242 = vmatprep.subr.mxu0 0.0
        %5243 = vmatpush1.msra.mxu0 0.0
        %5244 = vmatprep.subr.mxu0 0.0
        %5245 = vmatpush1.msra.mxu0 0.0
        %5246 = vmatprep.subr.mxu0 0.0
        %5247 = vmatpush1.msra.mxu0 0.0
        %5248 = vmatprep.subr.mxu0 0.0
        %5249 = vmatpush1.msra.mxu0 0.0
        %5250 = vmatprep.subr.mxu0 0.0
        %5251 = vmatpush1.msra.mxu0 0.0
        %5252 = vmatprep.subr.mxu0 0.0
        %5253 = vmatpush1.msra.mxu0 0.0
        %5254 = vmatprep.subr.mxu0 0.0
        %5255 = vmatpush1.msra.mxu0 0.0
        %5256 = vmatprep.subr.mxu0 0.0
        %5257 = vmatpush1.msra.mxu0 0.0
        %5258 = vmatprep.subr.mxu0 0.0
        %5259 = vmatpush1.msra.mxu0 0.0
        %5260 = vmatprep.subr.mxu0 0.0
        %5261 = vmatpush1.msra.mxu0 0.0
        %5262 = vmatprep.subr.mxu0 0.0
        %5263 = vmatpush1.msra.mxu0 0.0
        %5264 = vmatprep.subr.mxu0 0.0
        %5265 = vmatpush1.msra.mxu0 0.0
        %5266 = vmatprep.subr.mxu0 0.0
        %5267 = vmatpush1.msra.mxu0 0.0
        %5268 = vmatprep.subr.mxu0 0.0
        %5269 = vmatpush1.msra.mxu0 0.0
        %5270 = vmatprep.subr.mxu0 0.0
        %5271 = vmatpush1.msra.mxu0 0.0
        %5272 = vmatprep.subr.mxu0 0.0
        %5273 = vmatpush1.msra.mxu0 0.0
        %5274 = vmatprep.subr.mxu0 0.0
        %5275 = vmatpush1.msra.mxu0 0.0
        %5276 = vmatprep.subr.mxu0 0.0
        %5277 = vmatpush1.msra.mxu0 0.0
        %5278 = vmatprep.subr.mxu0 0.0
        %5279 = vmatpush1.msra.mxu0 0.0
        %5280 = vmatprep.subr.mxu0 0.0
        %5281 = vmatpush1.msra.mxu0 0.0
        %5282 = vmatprep.mubr.f32.mxu0 0.0
        %5283 = vmatmul.mubr.f32.gmra.mrb[0].mxu0 %v5123
        %v5284 = vpop.f32.mrb[0].mxu0
        %v5285 = vadd.f32 0.0, %v5284
        %v5286 = vpop.f32.mrb[0].mxu0
        %5287 = vmatprep.mubr.f32.mxu0 0.0
        %5288 = vmatmul.mubr.f32.gmra.mrb[0].mxu0 %v5126
        %v5289 = vpop.f32.mrb[0].mxu0
        %v5290 = vadd.f32 0.0, %v5289
        %v5291 = vpop.f32.mrb[0].mxu0
        %5292 = vmatprep.mubr.f32.mxu0 0.0
        %5293 = vmatmul.mubr.f32.gmra.mrb[0].mxu0 %v5129
        %v5294 = vpop.f32.mrb[0].mxu0
        %v5295 = vadd.f32 0.0, %v5294
        %v5296 = vpop.f32.mrb[0].mxu0
        %5297 = vmatprep.mubr.f32.mxu0 0.0
        %5298 = vmatmul.mubr.f32.gmra.mrb[0].mxu0 %v5132
        %v5299 = vpop.f32.mrb[0].mxu0
        %v5300 = vadd.f32 0.0, %v5299
        %v5301 = vpop.f32.mrb[0].mxu0
        %5302 = vmatprep.mubr.f32.mxu0 0.0
        %5303 = vmatmul.mubr.f32.gmra.mrb[0].mxu0 %v5135
        %v5304 = vpop.f32.mrb[0].mxu0
        %v5305 = vadd.f32 0.0, %v5304
        %v5306 = vpop.f32.mrb[0].mxu0
        %5307 = vmatprep.mubr.f32.mxu0 0.0
        %5308 = vmatmul.mubr.f32.gmra.mrb[0].mxu0 %v5138
        %v5309 = vpop.f32.mrb[0].mxu0
        %v5310 = vadd.f32 0.0, %v5309
        %v5311 = vpop.f32.mrb[0].mxu0
        %5312 = vmatprep.mubr.f32.mxu0 0.0
        %5313 = vmatmul.mubr.f32.gmra.mrb[0].mxu0 %v5141
        %v5314 = vpop.f32.mrb[0].mxu0
        %v5315 = vadd.f32 0.0, %v5314
        %v5316 = vpop.f32.mrb[0].mxu0
        %5317 = vmatprep.mubr.f32.mxu0 0.0
        %5318 = vmatmul.mubr.f32.gmra.mrb[0].mxu0 %v5144
        %v5319 = vpop.f32.mrb[0].mxu0
        %v5320 = vadd.f32 0.0, %v5319
        %v5321 = vpop.f32.mrb[0].mxu0
        %5322 = vmatprep.mubr.f32.mxu0 0.0
        %5323 = vmatmul.mubr.f32.gmra.mrb[0].mxu0 %v5147
        %v5324 = vpop.f32.mrb[0].mxu0
        %v5325 = vadd.f32 0.0, %v5324
        %v5326 = vpop.f32.mrb[0].mxu0
        %5327 = vmatprep.mubr.f32.mxu0 0.0
        %5328 = vmatmul.mubr.f32.gmra.mrb[0].mxu0 %v5150
        %v5329 = vpop.f32.mrb[0].mxu0
        %v5330 = vadd.f32 0.0, %v5329
        %v5331 = vpop.f32.mrb[0].mxu0
        %5332 = vmatprep.mubr.f32.mxu0 0.0
        %5333 = vmatmul.mubr.f32.gmra.mrb[0].mxu0 %v5153
        %v5334 = vpop.f32.mrb[0].mxu0
        %v5335 = vadd.f32 0.0, %v5334
        %v5336 = vpop.f32.mrb[0].mxu0
        %5337 = vmatprep.mubr.f32.mxu0 0.0
        %5338 = vmatmul.mubr.f32.gmra.mrb[0].mxu0 %v5156
        %v5339 = vpop.f32.mrb[0].mxu0
        %v5340 = vadd.f32 0.0, %v5339
        %v5341 = vpop.f32.mrb[0].mxu0
        %5342 = vmatprep.mubr.f32.mxu0 0.0
        %5343 = vmatmul.mubr.f32.gmra.mrb[0].mxu0 %v5159
        %v5344 = vpop.f32.mrb[0].mxu0
        %v5345 = vadd.f32 0.0, %v5344
        %v5346 = vpop.f32.mrb[0].mxu0
        %5347 = vmatprep.mubr.f32.mxu0 0.0
        %5348 = vmatmul.mubr.f32.gmra.mrb[0].mxu0 %v5162
        %v5349 = vpop.f32.mrb[0].mxu0
        %v5350 = vadd.f32 0.0, %v5349
        %v5351 = vpop.f32.mrb[0].mxu0
        %5352 = vmatprep.mubr.f32.mxu0 0.0
        %5353 = vmatmul.mubr.f32.gmra.mrb[0].mxu0 %v5165
        %v5354 = vpop.f32.mrb[0].mxu0
        %v5355 = vadd.f32 0.0, %v5354
        %v5356 = vpop.f32.mrb[0].mxu0
        %5357 = vmatprep.mubr.f32.mxu0 0.0
        %5358 = vmatmul.mubr.f32.gmra.mrb[0].mxu0 %v5168
        %v5359 = vpop.f32.mrb[0].mxu0
        %v5360 = vadd.f32 0.0, %v5359
        %v5361 = vpop.f32.mrb[0].mxu0
        %5362 = vmatprep.mubr.f32.mxu0 0.0
        %5363 = vmatmul.mubr.f32.gmra.mrb[0].mxu0 %v5171
        %v5364 = vpop.f32.mrb[0].mxu0
        %v5365 = vadd.f32 0.0, %v5364
        %v5366 = vpop.f32.mrb[0].mxu0
        %5367 = vmatprep.mubr.f32.mxu0 0.0
        %5368 = vmatmul.mubr.f32.gmra.mrb[0].mxu0 %v5174
        %v5369 = vpop.f32.mrb[0].mxu0
        %v5370 = vadd.f32 0.0, %v5369
        %v5371 = vpop.f32.mrb[0].mxu0
        %5372 = vmatprep.mubr.f32.mxu0 0.0
        %5373 = vmatmul.mubr.f32.gmra.mrb[0].mxu0 %v5177
        %v5374 = vpop.f32.mrb[0].mxu0
        %v5375 = vadd.f32 0.0, %v5374
        %v5376 = vpop.f32.mrb[0].mxu0
        %5377 = vmatprep.mubr.f32.mxu0 0.0
        %5378 = vmatmul.mubr.f32.gmra.mrb[0].mxu0 %v5180
        %v5379 = vpop.f32.mrb[0].mxu0
        %v5380 = vadd.f32 0.0, %v5379
        %v5381 = vpop.f32.mrb[0].mxu0
        %5382 = vmatprep.mubr.f32.mxu0 0.0
        %5383 = vmatmul.mubr.f32.gmra.mrb[0].mxu0 %v5183
        %v5384 = vpop.f32.mrb[0].mxu0
        %v5385 = vadd.f32 0.0, %v5384
        %v5386 = vpop.f32.mrb[0].mxu0
        %5387 = vmatprep.mubr.f32.mxu0 0.0
        %5388 = vmatmul.mubr.f32.gmra.mrb[0].mxu0 %v5186
        %v5389 = vpop.f32.mrb[0].mxu0
        %v5390 = vadd.f32 0.0, %v5389
        %v5391 = vpop.f32.mrb[0].mxu0
        %5392 = vmatprep.mubr.f32.mxu0 0.0
        %5393 = vmatmul.mubr.f32.gmra.mrb[0].mxu0 %v5189
        %v5394 = vpop.f32.mrb[0].mxu0
        %v5395 = vadd.f32 0.0, %v5394
        %v5396 = vpop.f32.mrb[0].mxu0
        %5397 = vmatprep.mubr.f32.mxu0 0.0
        %5398 = vmatmul.mubr.f32.gmra.mrb[0].mxu0 %v5192
        %v5399 = vpop.f32.mrb[0].mxu0
        %v5400 = vadd.f32 0.0, %v5399
        %v5401 = vpop.f32.mrb[0].mxu0
        %5402 = vmatprep.mubr.f32.mxu0 0.0
        %5403 = vmatmul.mubr.f32.gmra.mrb[0].mxu0 %v5195
        %v5404 = vpop.f32.mrb[0].mxu0
        %v5405 = vadd.f32 0.0, %v5404
        %v5406 = vpop.f32.mrb[0].mxu0
        %5407 = vmatprep.mubr.f32.mxu0 0.0
        %5408 = vmatmul.mubr.f32.gmra.mrb[0].mxu0 %v5198
        %v5409 = vpop.f32.mrb[0].mxu0
        %v5410 = vadd.f32 0.0, %v5409
        %v5411 = vpop.f32.mrb[0].mxu0
        %5412 = vmatprep.mubr.f32.mxu0 0.0
        %5413 = vmatmul.mubr.f32.gmra.mrb[0].mxu0 %v5201
        %v5414 = vpop.f32.mrb[0].mxu0
        %v5415 = vadd.f32 0.0, %v5414
        %v5416 = vpop.f32.mrb[0].mxu0
        %5417 = vmatprep.mubr.f32.mxu0 0.0
        %5418 = vmatmul.mubr.f32.gmra.mrb[0].mxu0 %v5204
        %v5419 = vpop.f32.mrb[0].mxu0
        %v5420 = vadd.f32 0.0, %v5419
        %v5421 = vpop.f32.mrb[0].mxu0
        %5422 = vmatprep.mubr.f32.mxu0 0.0
        %5423 = vmatmul.mubr.f32.gmra.mrb[0].mxu0 %v5207
        %v5424 = vpop.f32.mrb[0].mxu0
        %v5425 = vadd.f32 0.0, %v5424
        %v5426 = vpop.f32.mrb[0].mxu0
        %5427 = vmatprep.mubr.f32.mxu0 0.0
        %5428 = vmatmul.mubr.f32.gmra.mrb[0].mxu0 %v5210
        %v5429 = vpop.f32.mrb[0].mxu0
        %v5430 = vadd.f32 0.0, %v5429
        %v5431 = vpop.f32.mrb[0].mxu0
        %5432 = vmatprep.mubr.f32.mxu0 0.0
        %5433 = vmatmul.mubr.f32.gmra.mrb[0].mxu0 %v5213
        %v5434 = vpop.f32.mrb[0].mxu0
        %v5435 = vadd.f32 0.0, %v5434
        %v5436 = vpop.f32.mrb[0].mxu0
        %5437 = vmatprep.mubr.f32.mxu0 0.0
        %5438 = vmatmul.mubr.f32.gmra.mrb[0].mxu0 %v5216
        %v5439 = vpop.f32.mrb[0].mxu0
        %v5440 = vadd.f32 0.0, %v5439
        %v5441 = vpop.f32.mrb[0].mxu0
        %5442 = vdwg.mxu0
        %v5443 = vadd.f32 %v5053, %v5285
        %v5444 = vadd.f32 %v5054, %v5290
        %v5445 = vadd.f32 %v5055, %v5295
        %v5446 = vadd.f32 %v5056, %v5300
        %v5447 = vadd.f32 %v5057, %v5305
        %v5448 = vadd.f32 %v5058, %v5310
        %v5449 = vadd.f32 %v5059, %v5315
        %v5450 = vadd.f32 %v5060, %v5320
        %v5451 = vadd.f32 %v5061, %v5325
        %v5452 = vadd.f32 %v5062, %v5330
        %v5453 = vadd.f32 %v5063, %v5335
        %v5454 = vadd.f32 %v5064, %v5340
        %v5455 = vadd.f32 %v5065, %v5345
        %v5456 = vadd.f32 %v5066, %v5350
        %v5457 = vadd.f32 %v5067, %v5355
        %v5458 = vadd.f32 %v5068, %v5360
        %v5459 = vadd.f32 %v5069, %v5365
        %v5460 = vadd.f32 %v5070, %v5370
        %v5461 = vadd.f32 %v5071, %v5375
        %v5462 = vadd.f32 %v5072, %v5380
        %v5463 = vadd.f32 %v5073, %v5385
        %v5464 = vadd.f32 %v5074, %v5390
        %v5465 = vadd.f32 %v5075, %v5395
        %v5466 = vadd.f32 %v5076, %v5400
        %v5467 = vadd.f32 %v5077, %v5405
        %v5468 = vadd.f32 %v5078, %v5410
        %v5469 = vadd.f32 %v5079, %v5415
        %v5470 = vadd.f32 %v5080, %v5420
        %v5471 = vadd.f32 %v5081, %v5425
        %v5472 = vadd.f32 %v5082, %v5430
        %v5473 = vadd.f32 %v5083, %v5435
        %v5474 = vadd.f32 %v5084, %v5440
        %v5475 = vld [vmem:[%s364 + $0x8] sm:$0xff]
        %v5476 = vld [vmem:[%s364 + $0x10] sm:$0xff]
        %v5477 = vld [vmem:[%s364 + $0x28] sm:$0xff]
        %v5478 = vld [vmem:[%s364 + $0x30] sm:$0xff]
        %v5479 = vld [vmem:[%s364 + $0x48] sm:$0xff]
        %v5480 = vld [vmem:[%s364 + $0x50] sm:$0xff]
        %v5481 = vld [vmem:[%s364 + $0x68] sm:$0xff]
        %v5482 = vld [vmem:[%s364 + $0x70] sm:$0xff]
        %v5483 = vld [vmem:[%s364 + $0x88] sm:$0xff]
        %v5484 = vld [vmem:[%s364 + $0x90] sm:$0xff]
        %v5485 = vld [vmem:[%s364 + $0xa8] sm:$0xff]
        %v5486 = vld [vmem:[%s364 + $0xb0] sm:$0xff]
        %v5487 = vld [vmem:[%s364 + $0xc8] sm:$0xff]
        %v5488 = vld [vmem:[%s364 + $0xd0] sm:$0xff]
        %v5489 = vld [vmem:[%s364 + $0xe8] sm:$0xff]
        %v5490 = vld [vmem:[%s364 + $0xf0] sm:$0xff]
        %v5491 = vld [vmem:[%s364 + $0x108] sm:$0xff]
        %v5492 = vld [vmem:[%s364 + $0x110] sm:$0xff]
        %v5493 = vld [vmem:[%s364 + $0x128] sm:$0xff]
        %v5494 = vld [vmem:[%s364 + $0x130] sm:$0xff]
        %v5495 = vld [vmem:[%s364 + $0x148] sm:$0xff]
        %v5496 = vld [vmem:[%s364 + $0x150] sm:$0xff]
        %v5497 = vld [vmem:[%s364 + $0x168] sm:$0xff]
        %v5498 = vld [vmem:[%s364 + $0x170] sm:$0xff]
        %v5499 = vld [vmem:[%s364 + $0x188] sm:$0xff]
        %v5500 = vld [vmem:[%s364 + $0x190] sm:$0xff]
        %v5501 = vld [vmem:[%s364 + $0x1a8] sm:$0xff]
        %v5502 = vld [vmem:[%s364 + $0x1b0] sm:$0xff]
        %v5503 = vld [vmem:[%s364 + $0x1c8] sm:$0xff]
        %v5504 = vld [vmem:[%s364 + $0x1d0] sm:$0xff]
        %v5505 = vld [vmem:[%s364 + $0x1e8] sm:$0xff]
        %v5506 = vld [vmem:[%s364 + $0x1f0] sm:$0xff]
        %s5507 = scalar_lea.vmem [#allocation6], 416
        %v5508 = vld [vmem:[%s5507] sm:$0xff]
        %v5509 = vld [vmem:[%s5507 + $0x8] sm:$0xff]
        %v5510 = vld [vmem:[%s5507 + $0x10] sm:$0xff]
        %v5511 = vld [vmem:[%s5507 + $0x18] sm:$0xff]
        %v5513 = vsel %vm470, %v5475, 0
        %v5516 = vsel %vm470, %v5476, 0
        %v5519 = vsel %vm470, %v5477, 0
        %v5522 = vsel %vm470, %v5478, 0
        %v5525 = vsel %vm470, %v5479, 0
        %v5528 = vsel %vm470, %v5480, 0
        %v5531 = vsel %vm470, %v5481, 0
        %v5534 = vsel %vm470, %v5482, 0
        %v5537 = vsel %vm470, %v5483, 0
        %v5540 = vsel %vm470, %v5484, 0
        %v5543 = vsel %vm470, %v5485, 0
        %v5546 = vsel %vm470, %v5486, 0
        %v5549 = vsel %vm470, %v5487, 0
        %v5552 = vsel %vm470, %v5488, 0
        %v5555 = vsel %vm470, %v5489, 0
        %v5558 = vsel %vm470, %v5490, 0
        %v5561 = vsel %vm470, %v5491, 0
        %v5564 = vsel %vm470, %v5492, 0
        %v5567 = vsel %vm470, %v5493, 0
        %v5570 = vsel %vm470, %v5494, 0
        %v5573 = vsel %vm470, %v5495, 0
        %v5576 = vsel %vm470, %v5496, 0
        %v5579 = vsel %vm470, %v5497, 0
        %v5582 = vsel %vm470, %v5498, 0
        %v5585 = vsel %vm470, %v5499, 0
        %v5588 = vsel %vm470, %v5500, 0
        %v5591 = vsel %vm470, %v5501, 0
        %v5594 = vsel %vm470, %v5502, 0
        %v5597 = vsel %vm470, %v5503, 0
        %v5600 = vsel %vm470, %v5504, 0
        %v5603 = vsel %vm470, %v5505, 0
        %v5606 = vsel %vm470, %v5506, 0
        %5608 = vmatprep.subr.mxu0 0.0
        %5609 = vmatpush1.msra.mxu0 %v5508
        %5610 = vmatprep.subr.mxu0 0.0
        %5611 = vmatpush1.msra.mxu0 %v5509
        %5612 = vmatprep.subr.mxu0 0.0
        %5613 = vmatpush1.msra.mxu0 %v5510
        %5614 = vmatprep.subr.mxu0 0.0
        %5615 = vmatpush1.msra.mxu0 %v5511
        %5616 = vmatprep.subr.mxu0 0.0
        %5617 = vmatpush1.msra.mxu0 0.0
        %5618 = vmatprep.subr.mxu0 0.0
        %5619 = vmatpush1.msra.mxu0 0.0
        %5620 = vmatprep.subr.mxu0 0.0
        %5621 = vmatpush1.msra.mxu0 0.0
        %5622 = vmatprep.subr.mxu0 0.0
        %5623 = vmatpush1.msra.mxu0 0.0
        %5624 = vmatprep.subr.mxu0 0.0
        %5625 = vmatpush1.msra.mxu0 0.0
        %5626 = vmatprep.subr.mxu0 0.0
        %5627 = vmatpush1.msra.mxu0 0.0
        %5628 = vmatprep.subr.mxu0 0.0
        %5629 = vmatpush1.msra.mxu0 0.0
        %5630 = vmatprep.subr.mxu0 0.0
        %5631 = vmatpush1.msra.mxu0 0.0
        %5632 = vmatprep.subr.mxu0 0.0
        %5633 = vmatpush1.msra.mxu0 0.0
        %5634 = vmatprep.subr.mxu0 0.0
        %5635 = vmatpush1.msra.mxu0 0.0
        %5636 = vmatprep.subr.mxu0 0.0
        %5637 = vmatpush1.msra.mxu0 0.0
        %5638 = vmatprep.subr.mxu0 0.0
        %5639 = vmatpush1.msra.mxu0 0.0
        %5640 = vmatprep.subr.mxu0 0.0
        %5641 = vmatpush1.msra.mxu0 0.0
        %5642 = vmatprep.subr.mxu0 0.0
        %5643 = vmatpush1.msra.mxu0 0.0
        %5644 = vmatprep.subr.mxu0 0.0
        %5645 = vmatpush1.msra.mxu0 0.0
        %5646 = vmatprep.subr.mxu0 0.0
        %5647 = vmatpush1.msra.mxu0 0.0
        %5648 = vmatprep.subr.mxu0 0.0
        %5649 = vmatpush1.msra.mxu0 0.0
        %5650 = vmatprep.subr.mxu0 0.0
        %5651 = vmatpush1.msra.mxu0 0.0
        %5652 = vmatprep.subr.mxu0 0.0
        %5653 = vmatpush1.msra.mxu0 0.0
        %5654 = vmatprep.subr.mxu0 0.0
        %5655 = vmatpush1.msra.mxu0 0.0
        %5656 = vmatprep.subr.mxu0 0.0
        %5657 = vmatpush1.msra.mxu0 0.0
        %5658 = vmatprep.subr.mxu0 0.0
        %5659 = vmatpush1.msra.mxu0 0.0
        %5660 = vmatprep.subr.mxu0 0.0
        %5661 = vmatpush1.msra.mxu0 0.0
        %5662 = vmatprep.subr.mxu0 0.0
        %5663 = vmatpush1.msra.mxu0 0.0
        %5664 = vmatprep.subr.mxu0 0.0
        %5665 = vmatpush1.msra.mxu0 0.0
        %5666 = vmatprep.subr.mxu0 0.0
        %5667 = vmatpush1.msra.mxu0 0.0
        %5668 = vmatprep.subr.mxu0 0.0
        %5669 = vmatpush1.msra.mxu0 0.0
        %5670 = vmatprep.subr.mxu0 0.0
        %5671 = vmatpush1.msra.mxu0 0.0
        %5672 = vmatprep.mubr.f32.mxu0 0.0
        %5673 = vmatmul.mubr.f32.gmra.mrb[0].mxu0 %v5513
        %v5674 = vpop.f32.mrb[0].mxu0
        %v5675 = vadd.f32 0.0, %v5674
        %v5676 = vpop.f32.mrb[0].mxu0
        %5677 = vmatprep.mubr.f32.mxu0 0.0
        %5678 = vmatmul.mubr.f32.gmra.mrb[0].mxu0 %v5516
        %v5679 = vpop.f32.mrb[0].mxu0
        %v5680 = vadd.f32 0.0, %v5679
        %v5681 = vpop.f32.mrb[0].mxu0
        %5682 = vmatprep.mubr.f32.mxu0 0.0
        %5683 = vmatmul.mubr.f32.gmra.mrb[0].mxu0 %v5519
        %v5684 = vpop.f32.mrb[0].mxu0
        %v5685 = vadd.f32 0.0, %v5684
        %v5686 = vpop.f32.mrb[0].mxu0
        %5687 = vmatprep.mubr.f32.mxu0 0.0
        %5688 = vmatmul.mubr.f32.gmra.mrb[0].mxu0 %v5522
        %v5689 = vpop.f32.mrb[0].mxu0
        %v5690 = vadd.f32 0.0, %v5689
        %v5691 = vpop.f32.mrb[0].mxu0
        %5692 = vmatprep.mubr.f32.mxu0 0.0
        %5693 = vmatmul.mubr.f32.gmra.mrb[0].mxu0 %v5525
        %v5694 = vpop.f32.mrb[0].mxu0
        %v5695 = vadd.f32 0.0, %v5694
        %v5696 = vpop.f32.mrb[0].mxu0
        %5697 = vmatprep.mubr.f32.mxu0 0.0
        %5698 = vmatmul.mubr.f32.gmra.mrb[0].mxu0 %v5528
        %v5699 = vpop.f32.mrb[0].mxu0
        %v5700 = vadd.f32 0.0, %v5699
        %v5701 = vpop.f32.mrb[0].mxu0
        %5702 = vmatprep.mubr.f32.mxu0 0.0
        %5703 = vmatmul.mubr.f32.gmra.mrb[0].mxu0 %v5531
        %v5704 = vpop.f32.mrb[0].mxu0
        %v5705 = vadd.f32 0.0, %v5704
        %v5706 = vpop.f32.mrb[0].mxu0
        %5707 = vmatprep.mubr.f32.mxu0 0.0
        %5708 = vmatmul.mubr.f32.gmra.mrb[0].mxu0 %v5534
        %v5709 = vpop.f32.mrb[0].mxu0
        %v5710 = vadd.f32 0.0, %v5709
        %v5711 = vpop.f32.mrb[0].mxu0
        %5712 = vmatprep.mubr.f32.mxu0 0.0
        %5713 = vmatmul.mubr.f32.gmra.mrb[0].mxu0 %v5537
        %v5714 = vpop.f32.mrb[0].mxu0
        %v5715 = vadd.f32 0.0, %v5714
        %v5716 = vpop.f32.mrb[0].mxu0
        %5717 = vmatprep.mubr.f32.mxu0 0.0
        %5718 = vmatmul.mubr.f32.gmra.mrb[0].mxu0 %v5540
        %v5719 = vpop.f32.mrb[0].mxu0
        %v5720 = vadd.f32 0.0, %v5719
        %v5721 = vpop.f32.mrb[0].mxu0
        %5722 = vmatprep.mubr.f32.mxu0 0.0
        %5723 = vmatmul.mubr.f32.gmra.mrb[0].mxu0 %v5543
        %v5724 = vpop.f32.mrb[0].mxu0
        %v5725 = vadd.f32 0.0, %v5724
        %v5726 = vpop.f32.mrb[0].mxu0
        %5727 = vmatprep.mubr.f32.mxu0 0.0
        %5728 = vmatmul.mubr.f32.gmra.mrb[0].mxu0 %v5546
        %v5729 = vpop.f32.mrb[0].mxu0
        %v5730 = vadd.f32 0.0, %v5729
        %v5731 = vpop.f32.mrb[0].mxu0
        %5732 = vmatprep.mubr.f32.mxu0 0.0
        %5733 = vmatmul.mubr.f32.gmra.mrb[0].mxu0 %v5549
        %v5734 = vpop.f32.mrb[0].mxu0
        %v5735 = vadd.f32 0.0, %v5734
        %v5736 = vpop.f32.mrb[0].mxu0
        %5737 = vmatprep.mubr.f32.mxu0 0.0
        %5738 = vmatmul.mubr.f32.gmra.mrb[0].mxu0 %v5552
        %v5739 = vpop.f32.mrb[0].mxu0
        %v5740 = vadd.f32 0.0, %v5739
        %v5741 = vpop.f32.mrb[0].mxu0
        %5742 = vmatprep.mubr.f32.mxu0 0.0
        %5743 = vmatmul.mubr.f32.gmra.mrb[0].mxu0 %v5555
        %v5744 = vpop.f32.mrb[0].mxu0
        %v5745 = vadd.f32 0.0, %v5744
        %v5746 = vpop.f32.mrb[0].mxu0
        %5747 = vmatprep.mubr.f32.mxu0 0.0
        %5748 = vmatmul.mubr.f32.gmra.mrb[0].mxu0 %v5558
        %v5749 = vpop.f32.mrb[0].mxu0
        %v5750 = vadd.f32 0.0, %v5749
        %v5751 = vpop.f32.mrb[0].mxu0
        %5752 = vmatprep.mubr.f32.mxu0 0.0
        %5753 = vmatmul.mubr.f32.gmra.mrb[0].mxu0 %v5561
        %v5754 = vpop.f32.mrb[0].mxu0
        %v5755 = vadd.f32 0.0, %v5754
        %v5756 = vpop.f32.mrb[0].mxu0
        %5757 = vmatprep.mubr.f32.mxu0 0.0
        %5758 = vmatmul.mubr.f32.gmra.mrb[0].mxu0 %v5564
        %v5759 = vpop.f32.mrb[0].mxu0
        %v5760 = vadd.f32 0.0, %v5759
        %v5761 = vpop.f32.mrb[0].mxu0
        %5762 = vmatprep.mubr.f32.mxu0 0.0
        %5763 = vmatmul.mubr.f32.gmra.mrb[0].mxu0 %v5567
        %v5764 = vpop.f32.mrb[0].mxu0
        %v5765 = vadd.f32 0.0, %v5764
        %v5766 = vpop.f32.mrb[0].mxu0
        %5767 = vmatprep.mubr.f32.mxu0 0.0
        %5768 = vmatmul.mubr.f32.gmra.mrb[0].mxu0 %v5570
        %v5769 = vpop.f32.mrb[0].mxu0
        %v5770 = vadd.f32 0.0, %v5769
        %v5771 = vpop.f32.mrb[0].mxu0
        %5772 = vmatprep.mubr.f32.mxu0 0.0
        %5773 = vmatmul.mubr.f32.gmra.mrb[0].mxu0 %v5573
        %v5774 = vpop.f32.mrb[0].mxu0
        %v5775 = vadd.f32 0.0, %v5774
        %v5776 = vpop.f32.mrb[0].mxu0
        %5777 = vmatprep.mubr.f32.mxu0 0.0
        %5778 = vmatmul.mubr.f32.gmra.mrb[0].mxu0 %v5576
        %v5779 = vpop.f32.mrb[0].mxu0
        %v5780 = vadd.f32 0.0, %v5779
        %v5781 = vpop.f32.mrb[0].mxu0
        %5782 = vmatprep.mubr.f32.mxu0 0.0
        %5783 = vmatmul.mubr.f32.gmra.mrb[0].mxu0 %v5579
        %v5784 = vpop.f32.mrb[0].mxu0
        %v5785 = vadd.f32 0.0, %v5784
        %v5786 = vpop.f32.mrb[0].mxu0
        %5787 = vmatprep.mubr.f32.mxu0 0.0
        %5788 = vmatmul.mubr.f32.gmra.mrb[0].mxu0 %v5582
        %v5789 = vpop.f32.mrb[0].mxu0
        %v5790 = vadd.f32 0.0, %v5789
        %v5791 = vpop.f32.mrb[0].mxu0
        %5792 = vmatprep.mubr.f32.mxu0 0.0
        %5793 = vmatmul.mubr.f32.gmra.mrb[0].mxu0 %v5585
        %v5794 = vpop.f32.mrb[0].mxu0
        %v5795 = vadd.f32 0.0, %v5794
        %v5796 = vpop.f32.mrb[0].mxu0
        %5797 = vmatprep.mubr.f32.mxu0 0.0
        %5798 = vmatmul.mubr.f32.gmra.mrb[0].mxu0 %v5588
        %v5799 = vpop.f32.mrb[0].mxu0
        %v5800 = vadd.f32 0.0, %v5799
        %v5801 = vpop.f32.mrb[0].mxu0
        %5802 = vmatprep.mubr.f32.mxu0 0.0
        %5803 = vmatmul.mubr.f32.gmra.mrb[0].mxu0 %v5591
        %v5804 = vpop.f32.mrb[0].mxu0
        %v5805 = vadd.f32 0.0, %v5804
        %v5806 = vpop.f32.mrb[0].mxu0
        %5807 = vmatprep.mubr.f32.mxu0 0.0
        %5808 = vmatmul.mubr.f32.gmra.mrb[0].mxu0 %v5594
        %v5809 = vpop.f32.mrb[0].mxu0
        %v5810 = vadd.f32 0.0, %v5809
        %v5811 = vpop.f32.mrb[0].mxu0
        %5812 = vmatprep.mubr.f32.mxu0 0.0
        %5813 = vmatmul.mubr.f32.gmra.mrb[0].mxu0 %v5597
        %v5814 = vpop.f32.mrb[0].mxu0
        %v5815 = vadd.f32 0.0, %v5814
        %v5816 = vpop.f32.mrb[0].mxu0
        %5817 = vmatprep.mubr.f32.mxu0 0.0
        %5818 = vmatmul.mubr.f32.gmra.mrb[0].mxu0 %v5600
        %v5819 = vpop.f32.mrb[0].mxu0
        %v5820 = vadd.f32 0.0, %v5819
        %v5821 = vpop.f32.mrb[0].mxu0
        %5822 = vmatprep.mubr.f32.mxu0 0.0
        %5823 = vmatmul.mubr.f32.gmra.mrb[0].mxu0 %v5603
        %v5824 = vpop.f32.mrb[0].mxu0
        %v5825 = vadd.f32 0.0, %v5824
        %v5826 = vpop.f32.mrb[0].mxu0
        %5827 = vmatprep.mubr.f32.mxu0 0.0
        %5828 = vmatmul.mubr.f32.gmra.mrb[0].mxu0 %v5606
        %v5829 = vpop.f32.mrb[0].mxu0
        %v5830 = vadd.f32 0.0, %v5829
        %v5831 = vpop.f32.mrb[0].mxu0
        %5832 = vdwg.mxu0
        %v5833 = vadd.f32 %v5443, %v5675
        %v5834 = vadd.f32 %v5444, %v5680
        %v5835 = vadd.f32 %v5445, %v5685
        %v5836 = vadd.f32 %v5446, %v5690
        %v5837 = vadd.f32 %v5447, %v5695
        %v5838 = vadd.f32 %v5448, %v5700
        %v5839 = vadd.f32 %v5449, %v5705
        %v5840 = vadd.f32 %v5450, %v5710
        %v5841 = vadd.f32 %v5451, %v5715
        %v5842 = vadd.f32 %v5452, %v5720
        %v5843 = vadd.f32 %v5453, %v5725
        %v5844 = vadd.f32 %v5454, %v5730
        %v5845 = vadd.f32 %v5455, %v5735
        %v5846 = vadd.f32 %v5456, %v5740
        %v5847 = vadd.f32 %v5457, %v5745
        %v5848 = vadd.f32 %v5458, %v5750
        %v5849 = vadd.f32 %v5459, %v5755
        %v5850 = vadd.f32 %v5460, %v5760
        %v5851 = vadd.f32 %v5461, %v5765
        %v5852 = vadd.f32 %v5462, %v5770
        %v5853 = vadd.f32 %v5463, %v5775
        %v5854 = vadd.f32 %v5464, %v5780
        %v5855 = vadd.f32 %v5465, %v5785
        %v5856 = vadd.f32 %v5466, %v5790
        %v5857 = vadd.f32 %v5467, %v5795
        %v5858 = vadd.f32 %v5468, %v5800
        %v5859 = vadd.f32 %v5469, %v5805
        %v5860 = vadd.f32 %v5470, %v5810
        %v5861 = vadd.f32 %v5471, %v5815
        %v5862 = vadd.f32 %v5472, %v5820
        %v5863 = vadd.f32 %v5473, %v5825
        %v5864 = vadd.f32 %v5474, %v5830
        %v5865 = vld [vmem:[%s364 + $0x9] sm:$0xff]
        %v5866 = vld [vmem:[%s364 + $0x11] sm:$0xff]
        %v5867 = vld [vmem:[%s364 + $0x29] sm:$0xff]
        %v5868 = vld [vmem:[%s364 + $0x31] sm:$0xff]
        %v5869 = vld [vmem:[%s364 + $0x49] sm:$0xff]
        %v5870 = vld [vmem:[%s364 + $0x51] sm:$0xff]
        %v5871 = vld [vmem:[%s364 + $0x69] sm:$0xff]
        %v5872 = vld [vmem:[%s364 + $0x71] sm:$0xff]
        %v5873 = vld [vmem:[%s364 + $0x89] sm:$0xff]
        %v5874 = vld [vmem:[%s364 + $0x91] sm:$0xff]
        %v5875 = vld [vmem:[%s364 + $0xa9] sm:$0xff]
        %v5876 = vld [vmem:[%s364 + $0xb1] sm:$0xff]
        %v5877 = vld [vmem:[%s364 + $0xc9] sm:$0xff]
        %v5878 = vld [vmem:[%s364 + $0xd1] sm:$0xff]
        %v5879 = vld [vmem:[%s364 + $0xe9] sm:$0xff]
        %v5880 = vld [vmem:[%s364 + $0xf1] sm:$0xff]
        %v5881 = vld [vmem:[%s364 + $0x109] sm:$0xff]
        %v5882 = vld [vmem:[%s364 + $0x111] sm:$0xff]
        %v5883 = vld [vmem:[%s364 + $0x129] sm:$0xff]
        %v5884 = vld [vmem:[%s364 + $0x131] sm:$0xff]
        %v5885 = vld [vmem:[%s364 + $0x149] sm:$0xff]
        %v5886 = vld [vmem:[%s364 + $0x151] sm:$0xff]
        %v5887 = vld [vmem:[%s364 + $0x169] sm:$0xff]
        %v5888 = vld [vmem:[%s364 + $0x171] sm:$0xff]
        %v5889 = vld [vmem:[%s364 + $0x189] sm:$0xff]
        %v5890 = vld [vmem:[%s364 + $0x191] sm:$0xff]
        %v5891 = vld [vmem:[%s364 + $0x1a9] sm:$0xff]
        %v5892 = vld [vmem:[%s364 + $0x1b1] sm:$0xff]
        %v5893 = vld [vmem:[%s364 + $0x1c9] sm:$0xff]
        %v5894 = vld [vmem:[%s364 + $0x1d1] sm:$0xff]
        %v5895 = vld [vmem:[%s364 + $0x1e9] sm:$0xff]
        %v5896 = vld [vmem:[%s364 + $0x1f1] sm:$0xff]
        %s5897 = scalar_lea.vmem [#allocation6], 448
        %v5898 = vld [vmem:[%s5897] sm:$0xff]
        %v5899 = vld [vmem:[%s5897 + $0x8] sm:$0xff]
        %v5900 = vld [vmem:[%s5897 + $0x10] sm:$0xff]
        %v5901 = vld [vmem:[%s5897 + $0x18] sm:$0xff]
        %v5903 = vsel %vm470, %v5865, 0
        %v5906 = vsel %vm470, %v5866, 0
        %v5909 = vsel %vm470, %v5867, 0
        %v5912 = vsel %vm470, %v5868, 0
        %v5915 = vsel %vm470, %v5869, 0
        %v5918 = vsel %vm470, %v5870, 0
        %v5921 = vsel %vm470, %v5871, 0
        %v5924 = vsel %vm470, %v5872, 0
        %v5927 = vsel %vm470, %v5873, 0
        %v5930 = vsel %vm470, %v5874, 0
        %v5933 = vsel %vm470, %v5875, 0
        %v5936 = vsel %vm470, %v5876, 0
        %v5939 = vsel %vm470, %v5877, 0
        %v5942 = vsel %vm470, %v5878, 0
        %v5945 = vsel %vm470, %v5879, 0
        %v5948 = vsel %vm470, %v5880, 0
        %v5951 = vsel %vm470, %v5881, 0
        %v5954 = vsel %vm470, %v5882, 0
        %v5957 = vsel %vm470, %v5883, 0
        %v5960 = vsel %vm470, %v5884, 0
        %v5963 = vsel %vm470, %v5885, 0
        %v5966 = vsel %vm470, %v5886, 0
        %v5969 = vsel %vm470, %v5887, 0
        %v5972 = vsel %vm470, %v5888, 0
        %v5975 = vsel %vm470, %v5889, 0
        %v5978 = vsel %vm470, %v5890, 0
        %v5981 = vsel %vm470, %v5891, 0
        %v5984 = vsel %vm470, %v5892, 0
        %v5987 = vsel %vm470, %v5893, 0
        %v5990 = vsel %vm470, %v5894, 0
        %v5993 = vsel %vm470, %v5895, 0
        %v5996 = vsel %vm470, %v5896, 0
        %5998 = vmatprep.subr.mxu0 0.0
        %5999 = vmatpush1.msra.mxu0 %v5898
        %6000 = vmatprep.subr.mxu0 0.0
        %6001 = vmatpush1.msra.mxu0 %v5899
        %6002 = vmatprep.subr.mxu0 0.0
        %6003 = vmatpush1.msra.mxu0 %v5900
        %6004 = vmatprep.subr.mxu0 0.0
        %6005 = vmatpush1.msra.mxu0 %v5901
        %6006 = vmatprep.subr.mxu0 0.0
        %6007 = vmatpush1.msra.mxu0 0.0
        %6008 = vmatprep.subr.mxu0 0.0
        %6009 = vmatpush1.msra.mxu0 0.0
        %6010 = vmatprep.subr.mxu0 0.0
        %6011 = vmatpush1.msra.mxu0 0.0
        %6012 = vmatprep.subr.mxu0 0.0
        %6013 = vmatpush1.msra.mxu0 0.0
        %6014 = vmatprep.subr.mxu0 0.0
        %6015 = vmatpush1.msra.mxu0 0.0
        %6016 = vmatprep.subr.mxu0 0.0
        %6017 = vmatpush1.msra.mxu0 0.0
        %6018 = vmatprep.subr.mxu0 0.0
        %6019 = vmatpush1.msra.mxu0 0.0
        %6020 = vmatprep.subr.mxu0 0.0
        %6021 = vmatpush1.msra.mxu0 0.0
        %6022 = vmatprep.subr.mxu0 0.0
        %6023 = vmatpush1.msra.mxu0 0.0
        %6024 = vmatprep.subr.mxu0 0.0
        %6025 = vmatpush1.msra.mxu0 0.0
        %6026 = vmatprep.subr.mxu0 0.0
        %6027 = vmatpush1.msra.mxu0 0.0
        %6028 = vmatprep.subr.mxu0 0.0
        %6029 = vmatpush1.msra.mxu0 0.0
        %6030 = vmatprep.subr.mxu0 0.0
        %6031 = vmatpush1.msra.mxu0 0.0
        %6032 = vmatprep.subr.mxu0 0.0
        %6033 = vmatpush1.msra.mxu0 0.0
        %6034 = vmatprep.subr.mxu0 0.0
        %6035 = vmatpush1.msra.mxu0 0.0
        %6036 = vmatprep.subr.mxu0 0.0
        %6037 = vmatpush1.msra.mxu0 0.0
        %6038 = vmatprep.subr.mxu0 0.0
        %6039 = vmatpush1.msra.mxu0 0.0
        %6040 = vmatprep.subr.mxu0 0.0
        %6041 = vmatpush1.msra.mxu0 0.0
        %6042 = vmatprep.subr.mxu0 0.0
        %6043 = vmatpush1.msra.mxu0 0.0
        %6044 = vmatprep.subr.mxu0 0.0
        %6045 = vmatpush1.msra.mxu0 0.0
        %6046 = vmatprep.subr.mxu0 0.0
        %6047 = vmatpush1.msra.mxu0 0.0
        %6048 = vmatprep.subr.mxu0 0.0
        %6049 = vmatpush1.msra.mxu0 0.0
        %6050 = vmatprep.subr.mxu0 0.0
        %6051 = vmatpush1.msra.mxu0 0.0
        %6052 = vmatprep.subr.mxu0 0.0
        %6053 = vmatpush1.msra.mxu0 0.0
        %6054 = vmatprep.subr.mxu0 0.0
        %6055 = vmatpush1.msra.mxu0 0.0
        %6056 = vmatprep.subr.mxu0 0.0
        %6057 = vmatpush1.msra.mxu0 0.0
        %6058 = vmatprep.subr.mxu0 0.0
        %6059 = vmatpush1.msra.mxu0 0.0
        %6060 = vmatprep.subr.mxu0 0.0
        %6061 = vmatpush1.msra.mxu0 0.0
        %6062 = vmatprep.mubr.f32.mxu0 0.0
        %6063 = vmatmul.mubr.f32.gmra.mrb[0].mxu0 %v5903
        %v6064 = vpop.f32.mrb[0].mxu0
        %v6065 = vadd.f32 0.0, %v6064
        %v6066 = vpop.f32.mrb[0].mxu0
        %6067 = vmatprep.mubr.f32.mxu0 0.0
        %6068 = vmatmul.mubr.f32.gmra.mrb[0].mxu0 %v5906
        %v6069 = vpop.f32.mrb[0].mxu0
        %v6070 = vadd.f32 0.0, %v6069
        %v6071 = vpop.f32.mrb[0].mxu0
        %6072 = vmatprep.mubr.f32.mxu0 0.0
        %6073 = vmatmul.mubr.f32.gmra.mrb[0].mxu0 %v5909
        %v6074 = vpop.f32.mrb[0].mxu0
        %v6075 = vadd.f32 0.0, %v6074
        %v6076 = vpop.f32.mrb[0].mxu0
        %6077 = vmatprep.mubr.f32.mxu0 0.0
        %6078 = vmatmul.mubr.f32.gmra.mrb[0].mxu0 %v5912
        %v6079 = vpop.f32.mrb[0].mxu0
        %v6080 = vadd.f32 0.0, %v6079
        %v6081 = vpop.f32.mrb[0].mxu0
        %6082 = vmatprep.mubr.f32.mxu0 0.0
        %6083 = vmatmul.mubr.f32.gmra.mrb[0].mxu0 %v5915
        %v6084 = vpop.f32.mrb[0].mxu0
        %v6085 = vadd.f32 0.0, %v6084
        %v6086 = vpop.f32.mrb[0].mxu0
        %6087 = vmatprep.mubr.f32.mxu0 0.0
        %6088 = vmatmul.mubr.f32.gmra.mrb[0].mxu0 %v5918
        %v6089 = vpop.f32.mrb[0].mxu0
        %v6090 = vadd.f32 0.0, %v6089
        %v6091 = vpop.f32.mrb[0].mxu0
        %6092 = vmatprep.mubr.f32.mxu0 0.0
        %6093 = vmatmul.mubr.f32.gmra.mrb[0].mxu0 %v5921
        %v6094 = vpop.f32.mrb[0].mxu0
        %v6095 = vadd.f32 0.0, %v6094
        %v6096 = vpop.f32.mrb[0].mxu0
        %6097 = vmatprep.mubr.f32.mxu0 0.0
        %6098 = vmatmul.mubr.f32.gmra.mrb[0].mxu0 %v5924
        %v6099 = vpop.f32.mrb[0].mxu0
        %v6100 = vadd.f32 0.0, %v6099
        %v6101 = vpop.f32.mrb[0].mxu0
        %6102 = vmatprep.mubr.f32.mxu0 0.0
        %6103 = vmatmul.mubr.f32.gmra.mrb[0].mxu0 %v5927
        %v6104 = vpop.f32.mrb[0].mxu0
        %v6105 = vadd.f32 0.0, %v6104
        %v6106 = vpop.f32.mrb[0].mxu0
        %6107 = vmatprep.mubr.f32.mxu0 0.0
        %6108 = vmatmul.mubr.f32.gmra.mrb[0].mxu0 %v5930
        %v6109 = vpop.f32.mrb[0].mxu0
        %v6110 = vadd.f32 0.0, %v6109
        %v6111 = vpop.f32.mrb[0].mxu0
        %6112 = vmatprep.mubr.f32.mxu0 0.0
        %6113 = vmatmul.mubr.f32.gmra.mrb[0].mxu0 %v5933
        %v6114 = vpop.f32.mrb[0].mxu0
        %v6115 = vadd.f32 0.0, %v6114
        %v6116 = vpop.f32.mrb[0].mxu0
        %6117 = vmatprep.mubr.f32.mxu0 0.0
        %6118 = vmatmul.mubr.f32.gmra.mrb[0].mxu0 %v5936
        %v6119 = vpop.f32.mrb[0].mxu0
        %v6120 = vadd.f32 0.0, %v6119
        %v6121 = vpop.f32.mrb[0].mxu0
        %6122 = vmatprep.mubr.f32.mxu0 0.0
        %6123 = vmatmul.mubr.f32.gmra.mrb[0].mxu0 %v5939
        %v6124 = vpop.f32.mrb[0].mxu0
        %v6125 = vadd.f32 0.0, %v6124
        %v6126 = vpop.f32.mrb[0].mxu0
        %6127 = vmatprep.mubr.f32.mxu0 0.0
        %6128 = vmatmul.mubr.f32.gmra.mrb[0].mxu0 %v5942
        %v6129 = vpop.f32.mrb[0].mxu0
        %v6130 = vadd.f32 0.0, %v6129
        %v6131 = vpop.f32.mrb[0].mxu0
        %6132 = vmatprep.mubr.f32.mxu0 0.0
        %6133 = vmatmul.mubr.f32.gmra.mrb[0].mxu0 %v5945
        %v6134 = vpop.f32.mrb[0].mxu0
        %v6135 = vadd.f32 0.0, %v6134
        %v6136 = vpop.f32.mrb[0].mxu0
        %6137 = vmatprep.mubr.f32.mxu0 0.0
        %6138 = vmatmul.mubr.f32.gmra.mrb[0].mxu0 %v5948
        %v6139 = vpop.f32.mrb[0].mxu0
        %v6140 = vadd.f32 0.0, %v6139
        %v6141 = vpop.f32.mrb[0].mxu0
        %6142 = vmatprep.mubr.f32.mxu0 0.0
        %6143 = vmatmul.mubr.f32.gmra.mrb[0].mxu0 %v5951
        %v6144 = vpop.f32.mrb[0].mxu0
        %v6145 = vadd.f32 0.0, %v6144
        %v6146 = vpop.f32.mrb[0].mxu0
        %6147 = vmatprep.mubr.f32.mxu0 0.0
        %6148 = vmatmul.mubr.f32.gmra.mrb[0].mxu0 %v5954
        %v6149 = vpop.f32.mrb[0].mxu0
        %v6150 = vadd.f32 0.0, %v6149
        %v6151 = vpop.f32.mrb[0].mxu0
        %6152 = vmatprep.mubr.f32.mxu0 0.0
        %6153 = vmatmul.mubr.f32.gmra.mrb[0].mxu0 %v5957
        %v6154 = vpop.f32.mrb[0].mxu0
        %v6155 = vadd.f32 0.0, %v6154
        %v6156 = vpop.f32.mrb[0].mxu0
        %6157 = vmatprep.mubr.f32.mxu0 0.0
        %6158 = vmatmul.mubr.f32.gmra.mrb[0].mxu0 %v5960
        %v6159 = vpop.f32.mrb[0].mxu0
        %v6160 = vadd.f32 0.0, %v6159
        %v6161 = vpop.f32.mrb[0].mxu0
        %6162 = vmatprep.mubr.f32.mxu0 0.0
        %6163 = vmatmul.mubr.f32.gmra.mrb[0].mxu0 %v5963
        %v6164 = vpop.f32.mrb[0].mxu0
        %v6165 = vadd.f32 0.0, %v6164
        %v6166 = vpop.f32.mrb[0].mxu0
        %6167 = vmatprep.mubr.f32.mxu0 0.0
        %6168 = vmatmul.mubr.f32.gmra.mrb[0].mxu0 %v5966
        %v6169 = vpop.f32.mrb[0].mxu0
        %v6170 = vadd.f32 0.0, %v6169
        %v6171 = vpop.f32.mrb[0].mxu0
        %6172 = vmatprep.mubr.f32.mxu0 0.0
        %6173 = vmatmul.mubr.f32.gmra.mrb[0].mxu0 %v5969
        %v6174 = vpop.f32.mrb[0].mxu0
        %v6175 = vadd.f32 0.0, %v6174
        %v6176 = vpop.f32.mrb[0].mxu0
        %6177 = vmatprep.mubr.f32.mxu0 0.0
        %6178 = vmatmul.mubr.f32.gmra.mrb[0].mxu0 %v5972
        %v6179 = vpop.f32.mrb[0].mxu0
        %v6180 = vadd.f32 0.0, %v6179
        %v6181 = vpop.f32.mrb[0].mxu0
        %6182 = vmatprep.mubr.f32.mxu0 0.0
        %6183 = vmatmul.mubr.f32.gmra.mrb[0].mxu0 %v5975
        %v6184 = vpop.f32.mrb[0].mxu0
        %v6185 = vadd.f32 0.0, %v6184
        %v6186 = vpop.f32.mrb[0].mxu0
        %6187 = vmatprep.mubr.f32.mxu0 0.0
        %6188 = vmatmul.mubr.f32.gmra.mrb[0].mxu0 %v5978
        %v6189 = vpop.f32.mrb[0].mxu0
        %v6190 = vadd.f32 0.0, %v6189
        %v6191 = vpop.f32.mrb[0].mxu0
        %6192 = vmatprep.mubr.f32.mxu0 0.0
        %6193 = vmatmul.mubr.f32.gmra.mrb[0].mxu0 %v5981
        %v6194 = vpop.f32.mrb[0].mxu0
        %v6195 = vadd.f32 0.0, %v6194
        %v6196 = vpop.f32.mrb[0].mxu0
        %6197 = vmatprep.mubr.f32.mxu0 0.0
        %6198 = vmatmul.mubr.f32.gmra.mrb[0].mxu0 %v5984
        %v6199 = vpop.f32.mrb[0].mxu0
        %v6200 = vadd.f32 0.0, %v6199
        %v6201 = vpop.f32.mrb[0].mxu0
        %6202 = vmatprep.mubr.f32.mxu0 0.0
        %6203 = vmatmul.mubr.f32.gmra.mrb[0].mxu0 %v5987
        %v6204 = vpop.f32.mrb[0].mxu0
        %v6205 = vadd.f32 0.0, %v6204
        %v6206 = vpop.f32.mrb[0].mxu0
        %6207 = vmatprep.mubr.f32.mxu0 0.0
        %6208 = vmatmul.mubr.f32.gmra.mrb[0].mxu0 %v5990
        %v6209 = vpop.f32.mrb[0].mxu0
        %v6210 = vadd.f32 0.0, %v6209
        %v6211 = vpop.f32.mrb[0].mxu0
        %6212 = vmatprep.mubr.f32.mxu0 0.0
        %6213 = vmatmul.mubr.f32.gmra.mrb[0].mxu0 %v5993
        %v6214 = vpop.f32.mrb[0].mxu0
        %v6215 = vadd.f32 0.0, %v6214
        %v6216 = vpop.f32.mrb[0].mxu0
        %6217 = vmatprep.mubr.f32.mxu0 0.0
        %6218 = vmatmul.mubr.f32.gmra.mrb[0].mxu0 %v5996
        %v6219 = vpop.f32.mrb[0].mxu0
        %v6220 = vadd.f32 0.0, %v6219
        %v6221 = vpop.f32.mrb[0].mxu0
        %6222 = vdwg.mxu0
        %v6223 = vadd.f32 %v5833, %v6065
        %v6224 = vadd.f32 %v5834, %v6070
        %v6225 = vadd.f32 %v5835, %v6075
        %v6226 = vadd.f32 %v5836, %v6080
        %v6227 = vadd.f32 %v5837, %v6085
        %v6228 = vadd.f32 %v5838, %v6090
        %v6229 = vadd.f32 %v5839, %v6095
        %v6230 = vadd.f32 %v5840, %v6100
        %v6231 = vadd.f32 %v5841, %v6105
        %v6232 = vadd.f32 %v5842, %v6110
        %v6233 = vadd.f32 %v5843, %v6115
        %v6234 = vadd.f32 %v5844, %v6120
        %v6235 = vadd.f32 %v5845, %v6125
        %v6236 = vadd.f32 %v5846, %v6130
        %v6237 = vadd.f32 %v5847, %v6135
        %v6238 = vadd.f32 %v5848, %v6140
        %v6239 = vadd.f32 %v5849, %v6145
        %v6240 = vadd.f32 %v5850, %v6150
        %v6241 = vadd.f32 %v5851, %v6155
        %v6242 = vadd.f32 %v5852, %v6160
        %v6243 = vadd.f32 %v5853, %v6165
        %v6244 = vadd.f32 %v5854, %v6170
        %v6245 = vadd.f32 %v5855, %v6175
        %v6246 = vadd.f32 %v5856, %v6180
        %v6247 = vadd.f32 %v5857, %v6185
        %v6248 = vadd.f32 %v5858, %v6190
        %v6249 = vadd.f32 %v5859, %v6195
        %v6250 = vadd.f32 %v5860, %v6200
        %v6251 = vadd.f32 %v5861, %v6205
        %v6252 = vadd.f32 %v5862, %v6210
        %v6253 = vadd.f32 %v5863, %v6215
        %v6254 = vadd.f32 %v5864, %v6220
        %v6255 = vld [vmem:[%s2673 + $0x7] sm:$0xff]
        %v6256 = vld [vmem:[%s2673 + $0xf] sm:$0xff]
        %v6257 = vld [vmem:[%s2673 + $0x27] sm:$0xff]
        %v6258 = vld [vmem:[%s2673 + $0x2f] sm:$0xff]
        %v6259 = vld [vmem:[%s2673 + $0x47] sm:$0xff]
        %v6260 = vld [vmem:[%s2673 + $0x4f] sm:$0xff]
        %v6261 = vld [vmem:[%s2673 + $0x67] sm:$0xff]
        %v6262 = vld [vmem:[%s2673 + $0x6f] sm:$0xff]
        %v6263 = vld [vmem:[%s2673 + $0x87] sm:$0xff]
        %v6264 = vld [vmem:[%s2673 + $0x8f] sm:$0xff]
        %v6265 = vld [vmem:[%s2673 + $0xa7] sm:$0xff]
        %v6266 = vld [vmem:[%s2673 + $0xaf] sm:$0xff]
        %v6267 = vld [vmem:[%s2673 + $0xc7] sm:$0xff]
        %v6268 = vld [vmem:[%s2673 + $0xcf] sm:$0xff]
        %v6269 = vld [vmem:[%s2673 + $0xe7] sm:$0xff]
        %v6270 = vld [vmem:[%s2673 + $0xef] sm:$0xff]
        %v6271 = vld [vmem:[%s2673 + $0x107] sm:$0xff]
        %v6272 = vld [vmem:[%s2673 + $0x10f] sm:$0xff]
        %v6273 = vld [vmem:[%s2673 + $0x127] sm:$0xff]
        %v6274 = vld [vmem:[%s2673 + $0x12f] sm:$0xff]
        %v6275 = vld [vmem:[%s2673 + $0x147] sm:$0xff]
        %v6276 = vld [vmem:[%s2673 + $0x14f] sm:$0xff]
        %v6277 = vld [vmem:[%s2673 + $0x167] sm:$0xff]
        %v6278 = vld [vmem:[%s2673 + $0x16f] sm:$0xff]
        %v6279 = vld [vmem:[%s2673 + $0x187] sm:$0xff]
        %v6280 = vld [vmem:[%s2673 + $0x18f] sm:$0xff]
        %v6281 = vld [vmem:[%s2673 + $0x1a7] sm:$0xff]
        %v6282 = vld [vmem:[%s2673 + $0x1af] sm:$0xff]
        %v6283 = vld [vmem:[%s2673 + $0x1c7] sm:$0xff]
        %v6284 = vld [vmem:[%s2673 + $0x1cf] sm:$0xff]
        %v6285 = vld [vmem:[%s2673 + $0x1e7] sm:$0xff]
        %v6286 = vld [vmem:[%s2673 + $0x1ef] sm:$0xff]
        %s6287 = scalar_lea.vmem [#allocation6], 480
        %v6288 = vld [vmem:[%s6287] sm:$0xff]
        %v6289 = vld [vmem:[%s6287 + $0x8] sm:$0xff]
        %v6290 = vld [vmem:[%s6287 + $0x10] sm:$0xff]
        %v6291 = vld [vmem:[%s6287 + $0x18] sm:$0xff]
        %v6293 = vsel %vm470, %v6255, 0
        %v6296 = vsel %vm470, %v6256, 0
        %v6299 = vsel %vm470, %v6257, 0
        %v6302 = vsel %vm470, %v6258, 0
        %v6305 = vsel %vm470, %v6259, 0
        %v6308 = vsel %vm470, %v6260, 0
        %v6311 = vsel %vm470, %v6261, 0
        %v6314 = vsel %vm470, %v6262, 0
        %v6317 = vsel %vm470, %v6263, 0
        %v6320 = vsel %vm470, %v6264, 0
        %v6323 = vsel %vm470, %v6265, 0
        %v6326 = vsel %vm470, %v6266, 0
        %v6329 = vsel %vm470, %v6267, 0
        %v6332 = vsel %vm470, %v6268, 0
        %v6335 = vsel %vm470, %v6269, 0
        %v6338 = vsel %vm470, %v6270, 0
        %v6341 = vsel %vm470, %v6271, 0
        %v6344 = vsel %vm470, %v6272, 0
        %v6347 = vsel %vm470, %v6273, 0
        %v6350 = vsel %vm470, %v6274, 0
        %v6353 = vsel %vm470, %v6275, 0
        %v6356 = vsel %vm470, %v6276, 0
        %v6359 = vsel %vm470, %v6277, 0
        %v6362 = vsel %vm470, %v6278, 0
        %v6365 = vsel %vm470, %v6279, 0
        %v6368 = vsel %vm470, %v6280, 0
        %v6371 = vsel %vm470, %v6281, 0
        %v6374 = vsel %vm470, %v6282, 0
        %v6377 = vsel %vm470, %v6283, 0
        %v6380 = vsel %vm470, %v6284, 0
        %v6383 = vsel %vm470, %v6285, 0
        %v6386 = vsel %vm470, %v6286, 0
        %6388 = vmatprep.subr.mxu0 0.0
        %6389 = vmatpush1.msra.mxu0 %v6288
        %6390 = vmatprep.subr.mxu0 0.0
        %6391 = vmatpush1.msra.mxu0 %v6289
        %6392 = vmatprep.subr.mxu0 0.0
        %6393 = vmatpush1.msra.mxu0 %v6290
        %6394 = vmatprep.subr.mxu0 0.0
        %6395 = vmatpush1.msra.mxu0 %v6291
        %6396 = vmatprep.subr.mxu0 0.0
        %6397 = vmatpush1.msra.mxu0 0.0
        %6398 = vmatprep.subr.mxu0 0.0
        %6399 = vmatpush1.msra.mxu0 0.0
        %6400 = vmatprep.subr.mxu0 0.0
        %6401 = vmatpush1.msra.mxu0 0.0
        %6402 = vmatprep.subr.mxu0 0.0
        %6403 = vmatpush1.msra.mxu0 0.0
        %6404 = vmatprep.subr.mxu0 0.0
        %6405 = vmatpush1.msra.mxu0 0.0
        %6406 = vmatprep.subr.mxu0 0.0
        %6407 = vmatpush1.msra.mxu0 0.0
        %6408 = vmatprep.subr.mxu0 0.0
        %6409 = vmatpush1.msra.mxu0 0.0
        %6410 = vmatprep.subr.mxu0 0.0
        %6411 = vmatpush1.msra.mxu0 0.0
        %6412 = vmatprep.subr.mxu0 0.0
        %6413 = vmatpush1.msra.mxu0 0.0
        %6414 = vmatprep.subr.mxu0 0.0
        %6415 = vmatpush1.msra.mxu0 0.0
        %6416 = vmatprep.subr.mxu0 0.0
        %6417 = vmatpush1.msra.mxu0 0.0
        %6418 = vmatprep.subr.mxu0 0.0
        %6419 = vmatpush1.msra.mxu0 0.0
        %6420 = vmatprep.subr.mxu0 0.0
        %6421 = vmatpush1.msra.mxu0 0.0
        %6422 = vmatprep.subr.mxu0 0.0
        %6423 = vmatpush1.msra.mxu0 0.0
        %6424 = vmatprep.subr.mxu0 0.0
        %6425 = vmatpush1.msra.mxu0 0.0
        %6426 = vmatprep.subr.mxu0 0.0
        %6427 = vmatpush1.msra.mxu0 0.0
        %6428 = vmatprep.subr.mxu0 0.0
        %6429 = vmatpush1.msra.mxu0 0.0
        %6430 = vmatprep.subr.mxu0 0.0
        %6431 = vmatpush1.msra.mxu0 0.0
        %6432 = vmatprep.subr.mxu0 0.0
        %6433 = vmatpush1.msra.mxu0 0.0
        %6434 = vmatprep.subr.mxu0 0.0
        %6435 = vmatpush1.msra.mxu0 0.0
        %6436 = vmatprep.subr.mxu0 0.0
        %6437 = vmatpush1.msra.mxu0 0.0
        %6438 = vmatprep.subr.mxu0 0.0
        %6439 = vmatpush1.msra.mxu0 0.0
        %6440 = vmatprep.subr.mxu0 0.0
        %6441 = vmatpush1.msra.mxu0 0.0
        %6442 = vmatprep.subr.mxu0 0.0
        %6443 = vmatpush1.msra.mxu0 0.0
        %6444 = vmatprep.subr.mxu0 0.0
        %6445 = vmatpush1.msra.mxu0 0.0
        %6446 = vmatprep.subr.mxu0 0.0
        %6447 = vmatpush1.msra.mxu0 0.0
        %6448 = vmatprep.subr.mxu0 0.0
        %6449 = vmatpush1.msra.mxu0 0.0
        %6450 = vmatprep.subr.mxu0 0.0
        %6451 = vmatpush1.msra.mxu0 0.0
        %6452 = vmatprep.mubr.f32.mxu0 0.0
        %6453 = vmatmul.mubr.f32.gmra.mrb[0].mxu0 %v6293
        %v6454 = vpop.f32.mrb[0].mxu0
        %v6455 = vadd.f32 0.0, %v6454
        %v6456 = vpop.f32.mrb[0].mxu0
        %6457 = vmatprep.mubr.f32.mxu0 0.0
        %6458 = vmatmul.mubr.f32.gmra.mrb[0].mxu0 %v6296
        %v6459 = vpop.f32.mrb[0].mxu0
        %v6460 = vadd.f32 0.0, %v6459
        %v6461 = vpop.f32.mrb[0].mxu0
        %6462 = vmatprep.mubr.f32.mxu0 0.0
        %6463 = vmatmul.mubr.f32.gmra.mrb[0].mxu0 %v6299
        %v6464 = vpop.f32.mrb[0].mxu0
        %v6465 = vadd.f32 0.0, %v6464
        %v6466 = vpop.f32.mrb[0].mxu0
        %6467 = vmatprep.mubr.f32.mxu0 0.0
        %6468 = vmatmul.mubr.f32.gmra.mrb[0].mxu0 %v6302
        %v6469 = vpop.f32.mrb[0].mxu0
        %v6470 = vadd.f32 0.0, %v6469
        %v6471 = vpop.f32.mrb[0].mxu0
        %6472 = vmatprep.mubr.f32.mxu0 0.0
        %6473 = vmatmul.mubr.f32.gmra.mrb[0].mxu0 %v6305
        %v6474 = vpop.f32.mrb[0].mxu0
        %v6475 = vadd.f32 0.0, %v6474
        %v6476 = vpop.f32.mrb[0].mxu0
        %6477 = vmatprep.mubr.f32.mxu0 0.0
        %6478 = vmatmul.mubr.f32.gmra.mrb[0].mxu0 %v6308
        %v6479 = vpop.f32.mrb[0].mxu0
        %v6480 = vadd.f32 0.0, %v6479
        %v6481 = vpop.f32.mrb[0].mxu0
        %6482 = vmatprep.mubr.f32.mxu0 0.0
        %6483 = vmatmul.mubr.f32.gmra.mrb[0].mxu0 %v6311
        %v6484 = vpop.f32.mrb[0].mxu0
        %v6485 = vadd.f32 0.0, %v6484
        %v6486 = vpop.f32.mrb[0].mxu0
        %6487 = vmatprep.mubr.f32.mxu0 0.0
        %6488 = vmatmul.mubr.f32.gmra.mrb[0].mxu0 %v6314
        %v6489 = vpop.f32.mrb[0].mxu0
        %v6490 = vadd.f32 0.0, %v6489
        %v6491 = vpop.f32.mrb[0].mxu0
        %6492 = vmatprep.mubr.f32.mxu0 0.0
        %6493 = vmatmul.mubr.f32.gmra.mrb[0].mxu0 %v6317
        %v6494 = vpop.f32.mrb[0].mxu0
        %v6495 = vadd.f32 0.0, %v6494
        %v6496 = vpop.f32.mrb[0].mxu0
        %6497 = vmatprep.mubr.f32.mxu0 0.0
        %6498 = vmatmul.mubr.f32.gmra.mrb[0].mxu0 %v6320
        %v6499 = vpop.f32.mrb[0].mxu0
        %v6500 = vadd.f32 0.0, %v6499
        %v6501 = vpop.f32.mrb[0].mxu0
        %6502 = vmatprep.mubr.f32.mxu0 0.0
        %6503 = vmatmul.mubr.f32.gmra.mrb[0].mxu0 %v6323
        %v6504 = vpop.f32.mrb[0].mxu0
        %v6505 = vadd.f32 0.0, %v6504
        %v6506 = vpop.f32.mrb[0].mxu0
        %6507 = vmatprep.mubr.f32.mxu0 0.0
        %6508 = vmatmul.mubr.f32.gmra.mrb[0].mxu0 %v6326
        %v6509 = vpop.f32.mrb[0].mxu0
        %v6510 = vadd.f32 0.0, %v6509
        %v6511 = vpop.f32.mrb[0].mxu0
        %6512 = vmatprep.mubr.f32.mxu0 0.0
        %6513 = vmatmul.mubr.f32.gmra.mrb[0].mxu0 %v6329
        %v6514 = vpop.f32.mrb[0].mxu0
        %v6515 = vadd.f32 0.0, %v6514
        %v6516 = vpop.f32.mrb[0].mxu0
        %6517 = vmatprep.mubr.f32.mxu0 0.0
        %6518 = vmatmul.mubr.f32.gmra.mrb[0].mxu0 %v6332
        %v6519 = vpop.f32.mrb[0].mxu0
        %v6520 = vadd.f32 0.0, %v6519
        %v6521 = vpop.f32.mrb[0].mxu0
        %6522 = vmatprep.mubr.f32.mxu0 0.0
        %6523 = vmatmul.mubr.f32.gmra.mrb[0].mxu0 %v6335
        %v6524 = vpop.f32.mrb[0].mxu0
        %v6525 = vadd.f32 0.0, %v6524
        %v6526 = vpop.f32.mrb[0].mxu0
        %6527 = vmatprep.mubr.f32.mxu0 0.0
        %6528 = vmatmul.mubr.f32.gmra.mrb[0].mxu0 %v6338
        %v6529 = vpop.f32.mrb[0].mxu0
        %v6530 = vadd.f32 0.0, %v6529
        %v6531 = vpop.f32.mrb[0].mxu0
        %6532 = vmatprep.mubr.f32.mxu0 0.0
        %6533 = vmatmul.mubr.f32.gmra.mrb[0].mxu0 %v6341
        %v6534 = vpop.f32.mrb[0].mxu0
        %v6535 = vadd.f32 0.0, %v6534
        %v6536 = vpop.f32.mrb[0].mxu0
        %6537 = vmatprep.mubr.f32.mxu0 0.0
        %6538 = vmatmul.mubr.f32.gmra.mrb[0].mxu0 %v6344
        %v6539 = vpop.f32.mrb[0].mxu0
        %v6540 = vadd.f32 0.0, %v6539
        %v6541 = vpop.f32.mrb[0].mxu0
        %6542 = vmatprep.mubr.f32.mxu0 0.0
        %6543 = vmatmul.mubr.f32.gmra.mrb[0].mxu0 %v6347
        %v6544 = vpop.f32.mrb[0].mxu0
        %v6545 = vadd.f32 0.0, %v6544
        %v6546 = vpop.f32.mrb[0].mxu0
        %6547 = vmatprep.mubr.f32.mxu0 0.0
        %6548 = vmatmul.mubr.f32.gmra.mrb[0].mxu0 %v6350
        %v6549 = vpop.f32.mrb[0].mxu0
        %v6550 = vadd.f32 0.0, %v6549
        %v6551 = vpop.f32.mrb[0].mxu0
        %6552 = vmatprep.mubr.f32.mxu0 0.0
        %6553 = vmatmul.mubr.f32.gmra.mrb[0].mxu0 %v6353
        %v6554 = vpop.f32.mrb[0].mxu0
        %v6555 = vadd.f32 0.0, %v6554
        %v6556 = vpop.f32.mrb[0].mxu0
        %6557 = vmatprep.mubr.f32.mxu0 0.0
        %6558 = vmatmul.mubr.f32.gmra.mrb[0].mxu0 %v6356
        %v6559 = vpop.f32.mrb[0].mxu0
        %v6560 = vadd.f32 0.0, %v6559
        %v6561 = vpop.f32.mrb[0].mxu0
        %6562 = vmatprep.mubr.f32.mxu0 0.0
        %6563 = vmatmul.mubr.f32.gmra.mrb[0].mxu0 %v6359
        %v6564 = vpop.f32.mrb[0].mxu0
        %v6565 = vadd.f32 0.0, %v6564
        %v6566 = vpop.f32.mrb[0].mxu0
        %6567 = vmatprep.mubr.f32.mxu0 0.0
        %6568 = vmatmul.mubr.f32.gmra.mrb[0].mxu0 %v6362
        %v6569 = vpop.f32.mrb[0].mxu0
        %v6570 = vadd.f32 0.0, %v6569
        %v6571 = vpop.f32.mrb[0].mxu0
        %6572 = vmatprep.mubr.f32.mxu0 0.0
        %6573 = vmatmul.mubr.f32.gmra.mrb[0].mxu0 %v6365
        %v6574 = vpop.f32.mrb[0].mxu0
        %v6575 = vadd.f32 0.0, %v6574
        %v6576 = vpop.f32.mrb[0].mxu0
        %6577 = vmatprep.mubr.f32.mxu0 0.0
        %6578 = vmatmul.mubr.f32.gmra.mrb[0].mxu0 %v6368
        %v6579 = vpop.f32.mrb[0].mxu0
        %v6580 = vadd.f32 0.0, %v6579
        %v6581 = vpop.f32.mrb[0].mxu0
        %6582 = vmatprep.mubr.f32.mxu0 0.0
        %6583 = vmatmul.mubr.f32.gmra.mrb[0].mxu0 %v6371
        %v6584 = vpop.f32.mrb[0].mxu0
        %v6585 = vadd.f32 0.0, %v6584
        %v6586 = vpop.f32.mrb[0].mxu0
        %6587 = vmatprep.mubr.f32.mxu0 0.0
        %6588 = vmatmul.mubr.f32.gmra.mrb[0].mxu0 %v6374
        %v6589 = vpop.f32.mrb[0].mxu0
        %v6590 = vadd.f32 0.0, %v6589
        %v6591 = vpop.f32.mrb[0].mxu0
        %6592 = vmatprep.mubr.f32.mxu0 0.0
        %6593 = vmatmul.mubr.f32.gmra.mrb[0].mxu0 %v6377
        %v6594 = vpop.f32.mrb[0].mxu0
        %v6595 = vadd.f32 0.0, %v6594
        %v6596 = vpop.f32.mrb[0].mxu0
        %6597 = vmatprep.mubr.f32.mxu0 0.0
        %6598 = vmatmul.mubr.f32.gmra.mrb[0].mxu0 %v6380
        %v6599 = vpop.f32.mrb[0].mxu0
        %v6600 = vadd.f32 0.0, %v6599
        %v6601 = vpop.f32.mrb[0].mxu0
        %6602 = vmatprep.mubr.f32.mxu0 0.0
        %6603 = vmatmul.mubr.f32.gmra.mrb[0].mxu0 %v6383
        %v6604 = vpop.f32.mrb[0].mxu0
        %v6605 = vadd.f32 0.0, %v6604
        %v6606 = vpop.f32.mrb[0].mxu0
        %6607 = vmatprep.mubr.f32.mxu0 0.0
        %6608 = vmatmul.mubr.f32.gmra.mrb[0].mxu0 %v6386
        %v6609 = vpop.f32.mrb[0].mxu0
        %v6610 = vadd.f32 0.0, %v6609
        %v6611 = vpop.f32.mrb[0].mxu0
        %6612 = vdwg.mxu0
        %v6613 = vadd.f32 %v6223, %v6455
        %v6614 = vadd.f32 %v6224, %v6460
        %v6615 = vadd.f32 %v6225, %v6465
        %v6616 = vadd.f32 %v6226, %v6470
        %v6617 = vadd.f32 %v6227, %v6475
        %v6618 = vadd.f32 %v6228, %v6480
        %v6619 = vadd.f32 %v6229, %v6485
        %v6620 = vadd.f32 %v6230, %v6490
        %v6621 = vadd.f32 %v6231, %v6495
        %v6622 = vadd.f32 %v6232, %v6500
        %v6623 = vadd.f32 %v6233, %v6505
        %v6624 = vadd.f32 %v6234, %v6510
        %v6625 = vadd.f32 %v6235, %v6515
        %v6626 = vadd.f32 %v6236, %v6520
        %v6627 = vadd.f32 %v6237, %v6525
        %v6628 = vadd.f32 %v6238, %v6530
        %v6629 = vadd.f32 %v6239, %v6535
        %v6630 = vadd.f32 %v6240, %v6540
        %v6631 = vadd.f32 %v6241, %v6545
        %v6632 = vadd.f32 %v6242, %v6550
        %v6633 = vadd.f32 %v6243, %v6555
        %v6634 = vadd.f32 %v6244, %v6560
        %v6635 = vadd.f32 %v6245, %v6565
        %v6636 = vadd.f32 %v6246, %v6570
        %v6637 = vadd.f32 %v6247, %v6575
        %v6638 = vadd.f32 %v6248, %v6580
        %v6639 = vadd.f32 %v6249, %v6585
        %v6640 = vadd.f32 %v6250, %v6590
        %v6641 = vadd.f32 %v6251, %v6595
        %v6642 = vadd.f32 %v6252, %v6600
        %v6643 = vadd.f32 %v6253, %v6605
        %v6644 = vadd.f32 %v6254, %v6610
        %v6645 = vld [vmem:[%s2673 + $0x8] sm:$0xff]
        %v6646 = vld [vmem:[%s2673 + $0x10] sm:$0xff]
        %v6647 = vld [vmem:[%s2673 + $0x28] sm:$0xff]
        %v6648 = vld [vmem:[%s2673 + $0x30] sm:$0xff]
        %v6649 = vld [vmem:[%s2673 + $0x48] sm:$0xff]
        %v6650 = vld [vmem:[%s2673 + $0x50] sm:$0xff]
        %v6651 = vld [vmem:[%s2673 + $0x68] sm:$0xff]
        %v6652 = vld [vmem:[%s2673 + $0x70] sm:$0xff]
        %v6653 = vld [vmem:[%s2673 + $0x88] sm:$0xff]
        %v6654 = vld [vmem:[%s2673 + $0x90] sm:$0xff]
        %v6655 = vld [vmem:[%s2673 + $0xa8] sm:$0xff]
        %v6656 = vld [vmem:[%s2673 + $0xb0] sm:$0xff]
        %v6657 = vld [vmem:[%s2673 + $0xc8] sm:$0xff]
        %v6658 = vld [vmem:[%s2673 + $0xd0] sm:$0xff]
        %v6659 = vld [vmem:[%s2673 + $0xe8] sm:$0xff]
        %v6660 = vld [vmem:[%s2673 + $0xf0] sm:$0xff]
        %v6661 = vld [vmem:[%s2673 + $0x108] sm:$0xff]
        %v6662 = vld [vmem:[%s2673 + $0x110] sm:$0xff]
        %v6663 = vld [vmem:[%s2673 + $0x128] sm:$0xff]
        %v6664 = vld [vmem:[%s2673 + $0x130] sm:$0xff]
        %v6665 = vld [vmem:[%s2673 + $0x148] sm:$0xff]
        %v6666 = vld [vmem:[%s2673 + $0x150] sm:$0xff]
        %v6667 = vld [vmem:[%s2673 + $0x168] sm:$0xff]
        %v6668 = vld [vmem:[%s2673 + $0x170] sm:$0xff]
        %v6669 = vld [vmem:[%s2673 + $0x188] sm:$0xff]
        %v6670 = vld [vmem:[%s2673 + $0x190] sm:$0xff]
        %v6671 = vld [vmem:[%s2673 + $0x1a8] sm:$0xff]
        %v6672 = vld [vmem:[%s2673 + $0x1b0] sm:$0xff]
        %v6673 = vld [vmem:[%s2673 + $0x1c8] sm:$0xff]
        %v6674 = vld [vmem:[%s2673 + $0x1d0] sm:$0xff]
        %v6675 = vld [vmem:[%s2673 + $0x1e8] sm:$0xff]
        %v6676 = vld [vmem:[%s2673 + $0x1f0] sm:$0xff]
        %s6677 = scalar_lea.vmem [#allocation6], 512
        %v6678 = vld [vmem:[%s6677] sm:$0xff]
        %v6679 = vld [vmem:[%s6677 + $0x8] sm:$0xff]
        %v6680 = vld [vmem:[%s6677 + $0x10] sm:$0xff]
        %v6681 = vld [vmem:[%s6677 + $0x18] sm:$0xff]
        %v6683 = vsel %vm470, %v6645, 0
        %v6686 = vsel %vm470, %v6646, 0
        %v6689 = vsel %vm470, %v6647, 0
        %v6692 = vsel %vm470, %v6648, 0
        %v6695 = vsel %vm470, %v6649, 0
        %v6698 = vsel %vm470, %v6650, 0
        %v6701 = vsel %vm470, %v6651, 0
        %v6704 = vsel %vm470, %v6652, 0
        %v6707 = vsel %vm470, %v6653, 0
        %v6710 = vsel %vm470, %v6654, 0
        %v6713 = vsel %vm470, %v6655, 0
        %v6716 = vsel %vm470, %v6656, 0
        %v6719 = vsel %vm470, %v6657, 0
        %v6722 = vsel %vm470, %v6658, 0
        %v6725 = vsel %vm470, %v6659, 0
        %v6728 = vsel %vm470, %v6660, 0
        %v6731 = vsel %vm470, %v6661, 0
        %v6734 = vsel %vm470, %v6662, 0
        %v6737 = vsel %vm470, %v6663, 0
        %v6740 = vsel %vm470, %v6664, 0
        %v6743 = vsel %vm470, %v6665, 0
        %v6746 = vsel %vm470, %v6666, 0
        %v6749 = vsel %vm470, %v6667, 0
        %v6752 = vsel %vm470, %v6668, 0
        %v6755 = vsel %vm470, %v6669, 0
        %v6758 = vsel %vm470, %v6670, 0
        %v6761 = vsel %vm470, %v6671, 0
        %v6764 = vsel %vm470, %v6672, 0
        %v6767 = vsel %vm470, %v6673, 0
        %v6770 = vsel %vm470, %v6674, 0
        %v6773 = vsel %vm470, %v6675, 0
        %v6776 = vsel %vm470, %v6676, 0
        %6778 = vmatprep.subr.mxu0 0.0
        %6779 = vmatpush1.msra.mxu0 %v6678
        %6780 = vmatprep.subr.mxu0 0.0
        %6781 = vmatpush1.msra.mxu0 %v6679
        %6782 = vmatprep.subr.mxu0 0.0
        %6783 = vmatpush1.msra.mxu0 %v6680
        %6784 = vmatprep.subr.mxu0 0.0
        %6785 = vmatpush1.msra.mxu0 %v6681
        %6786 = vmatprep.subr.mxu0 0.0
        %6787 = vmatpush1.msra.mxu0 0.0
        %6788 = vmatprep.subr.mxu0 0.0
        %6789 = vmatpush1.msra.mxu0 0.0
        %6790 = vmatprep.subr.mxu0 0.0
        %6791 = vmatpush1.msra.mxu0 0.0
        %6792 = vmatprep.subr.mxu0 0.0
        %6793 = vmatpush1.msra.mxu0 0.0
        %6794 = vmatprep.subr.mxu0 0.0
        %6795 = vmatpush1.msra.mxu0 0.0
        %6796 = vmatprep.subr.mxu0 0.0
        %6797 = vmatpush1.msra.mxu0 0.0
        %6798 = vmatprep.subr.mxu0 0.0
        %6799 = vmatpush1.msra.mxu0 0.0
        %6800 = vmatprep.subr.mxu0 0.0
        %6801 = vmatpush1.msra.mxu0 0.0
        %6802 = vmatprep.subr.mxu0 0.0
        %6803 = vmatpush1.msra.mxu0 0.0
        %6804 = vmatprep.subr.mxu0 0.0
        %6805 = vmatpush1.msra.mxu0 0.0
        %6806 = vmatprep.subr.mxu0 0.0
        %6807 = vmatpush1.msra.mxu0 0.0
        %6808 = vmatprep.subr.mxu0 0.0
        %6809 = vmatpush1.msra.mxu0 0.0
        %6810 = vmatprep.subr.mxu0 0.0
        %6811 = vmatpush1.msra.mxu0 0.0
        %6812 = vmatprep.subr.mxu0 0.0
        %6813 = vmatpush1.msra.mxu0 0.0
        %6814 = vmatprep.subr.mxu0 0.0
        %6815 = vmatpush1.msra.mxu0 0.0
        %6816 = vmatprep.subr.mxu0 0.0
        %6817 = vmatpush1.msra.mxu0 0.0
        %6818 = vmatprep.subr.mxu0 0.0
        %6819 = vmatpush1.msra.mxu0 0.0
        %6820 = vmatprep.subr.mxu0 0.0
        %6821 = vmatpush1.msra.mxu0 0.0
        %6822 = vmatprep.subr.mxu0 0.0
        %6823 = vmatpush1.msra.mxu0 0.0
        %6824 = vmatprep.subr.mxu0 0.0
        %6825 = vmatpush1.msra.mxu0 0.0
        %6826 = vmatprep.subr.mxu0 0.0
        %6827 = vmatpush1.msra.mxu0 0.0
        %6828 = vmatprep.subr.mxu0 0.0
        %6829 = vmatpush1.msra.mxu0 0.0
        %6830 = vmatprep.subr.mxu0 0.0
        %6831 = vmatpush1.msra.mxu0 0.0
        %6832 = vmatprep.subr.mxu0 0.0
        %6833 = vmatpush1.msra.mxu0 0.0
        %6834 = vmatprep.subr.mxu0 0.0
        %6835 = vmatpush1.msra.mxu0 0.0
        %6836 = vmatprep.subr.mxu0 0.0
        %6837 = vmatpush1.msra.mxu0 0.0
        %6838 = vmatprep.subr.mxu0 0.0
        %6839 = vmatpush1.msra.mxu0 0.0
        %6840 = vmatprep.subr.mxu0 0.0
        %6841 = vmatpush1.msra.mxu0 0.0
        %6842 = vmatprep.mubr.f32.mxu0 0.0
        %6843 = vmatmul.mubr.f32.gmra.mrb[0].mxu0 %v6683
        %v6844 = vpop.f32.mrb[0].mxu0
        %v6845 = vadd.f32 0.0, %v6844
        %v6846 = vpop.f32.mrb[0].mxu0
        %6847 = vmatprep.mubr.f32.mxu0 0.0
        %6848 = vmatmul.mubr.f32.gmra.mrb[0].mxu0 %v6686
        %v6849 = vpop.f32.mrb[0].mxu0
        %v6850 = vadd.f32 0.0, %v6849
        %v6851 = vpop.f32.mrb[0].mxu0
        %6852 = vmatprep.mubr.f32.mxu0 0.0
        %6853 = vmatmul.mubr.f32.gmra.mrb[0].mxu0 %v6689
        %v6854 = vpop.f32.mrb[0].mxu0
        %v6855 = vadd.f32 0.0, %v6854
        %v6856 = vpop.f32.mrb[0].mxu0
        %6857 = vmatprep.mubr.f32.mxu0 0.0
        %6858 = vmatmul.mubr.f32.gmra.mrb[0].mxu0 %v6692
        %v6859 = vpop.f32.mrb[0].mxu0
        %v6860 = vadd.f32 0.0, %v6859
        %v6861 = vpop.f32.mrb[0].mxu0
        %6862 = vmatprep.mubr.f32.mxu0 0.0
        %6863 = vmatmul.mubr.f32.gmra.mrb[0].mxu0 %v6695
        %v6864 = vpop.f32.mrb[0].mxu0
        %v6865 = vadd.f32 0.0, %v6864
        %v6866 = vpop.f32.mrb[0].mxu0
        %6867 = vmatprep.mubr.f32.mxu0 0.0
        %6868 = vmatmul.mubr.f32.gmra.mrb[0].mxu0 %v6698
        %v6869 = vpop.f32.mrb[0].mxu0
        %v6870 = vadd.f32 0.0, %v6869
        %v6871 = vpop.f32.mrb[0].mxu0
        %6872 = vmatprep.mubr.f32.mxu0 0.0
        %6873 = vmatmul.mubr.f32.gmra.mrb[0].mxu0 %v6701
        %v6874 = vpop.f32.mrb[0].mxu0
        %v6875 = vadd.f32 0.0, %v6874
        %v6876 = vpop.f32.mrb[0].mxu0
        %6877 = vmatprep.mubr.f32.mxu0 0.0
        %6878 = vmatmul.mubr.f32.gmra.mrb[0].mxu0 %v6704
        %v6879 = vpop.f32.mrb[0].mxu0
        %v6880 = vadd.f32 0.0, %v6879
        %v6881 = vpop.f32.mrb[0].mxu0
        %6882 = vmatprep.mubr.f32.mxu0 0.0
        %6883 = vmatmul.mubr.f32.gmra.mrb[0].mxu0 %v6707
        %v6884 = vpop.f32.mrb[0].mxu0
        %v6885 = vadd.f32 0.0, %v6884
        %v6886 = vpop.f32.mrb[0].mxu0
        %6887 = vmatprep.mubr.f32.mxu0 0.0
        %6888 = vmatmul.mubr.f32.gmra.mrb[0].mxu0 %v6710
        %v6889 = vpop.f32.mrb[0].mxu0
        %v6890 = vadd.f32 0.0, %v6889
        %v6891 = vpop.f32.mrb[0].mxu0
        %6892 = vmatprep.mubr.f32.mxu0 0.0
        %6893 = vmatmul.mubr.f32.gmra.mrb[0].mxu0 %v6713
        %v6894 = vpop.f32.mrb[0].mxu0
        %v6895 = vadd.f32 0.0, %v6894
        %v6896 = vpop.f32.mrb[0].mxu0
        %6897 = vmatprep.mubr.f32.mxu0 0.0
        %6898 = vmatmul.mubr.f32.gmra.mrb[0].mxu0 %v6716
        %v6899 = vpop.f32.mrb[0].mxu0
        %v6900 = vadd.f32 0.0, %v6899
        %v6901 = vpop.f32.mrb[0].mxu0
        %6902 = vmatprep.mubr.f32.mxu0 0.0
        %6903 = vmatmul.mubr.f32.gmra.mrb[0].mxu0 %v6719
        %v6904 = vpop.f32.mrb[0].mxu0
        %v6905 = vadd.f32 0.0, %v6904
        %v6906 = vpop.f32.mrb[0].mxu0
        %6907 = vmatprep.mubr.f32.mxu0 0.0
        %6908 = vmatmul.mubr.f32.gmra.mrb[0].mxu0 %v6722
        %v6909 = vpop.f32.mrb[0].mxu0
        %v6910 = vadd.f32 0.0, %v6909
        %v6911 = vpop.f32.mrb[0].mxu0
        %6912 = vmatprep.mubr.f32.mxu0 0.0
        %6913 = vmatmul.mubr.f32.gmra.mrb[0].mxu0 %v6725
        %v6914 = vpop.f32.mrb[0].mxu0
        %v6915 = vadd.f32 0.0, %v6914
        %v6916 = vpop.f32.mrb[0].mxu0
        %6917 = vmatprep.mubr.f32.mxu0 0.0
        %6918 = vmatmul.mubr.f32.gmra.mrb[0].mxu0 %v6728
        %v6919 = vpop.f32.mrb[0].mxu0
        %v6920 = vadd.f32 0.0, %v6919
        %v6921 = vpop.f32.mrb[0].mxu0
        %6922 = vmatprep.mubr.f32.mxu0 0.0
        %6923 = vmatmul.mubr.f32.gmra.mrb[0].mxu0 %v6731
        %v6924 = vpop.f32.mrb[0].mxu0
        %v6925 = vadd.f32 0.0, %v6924
        %v6926 = vpop.f32.mrb[0].mxu0
        %6927 = vmatprep.mubr.f32.mxu0 0.0
        %6928 = vmatmul.mubr.f32.gmra.mrb[0].mxu0 %v6734
        %v6929 = vpop.f32.mrb[0].mxu0
        %v6930 = vadd.f32 0.0, %v6929
        %v6931 = vpop.f32.mrb[0].mxu0
        %6932 = vmatprep.mubr.f32.mxu0 0.0
        %6933 = vmatmul.mubr.f32.gmra.mrb[0].mxu0 %v6737
        %v6934 = vpop.f32.mrb[0].mxu0
        %v6935 = vadd.f32 0.0, %v6934
        %v6936 = vpop.f32.mrb[0].mxu0
        %6937 = vmatprep.mubr.f32.mxu0 0.0
        %6938 = vmatmul.mubr.f32.gmra.mrb[0].mxu0 %v6740
        %v6939 = vpop.f32.mrb[0].mxu0
        %v6940 = vadd.f32 0.0, %v6939
        %v6941 = vpop.f32.mrb[0].mxu0
        %6942 = vmatprep.mubr.f32.mxu0 0.0
        %6943 = vmatmul.mubr.f32.gmra.mrb[0].mxu0 %v6743
        %v6944 = vpop.f32.mrb[0].mxu0
        %v6945 = vadd.f32 0.0, %v6944
        %v6946 = vpop.f32.mrb[0].mxu0
        %6947 = vmatprep.mubr.f32.mxu0 0.0
        %6948 = vmatmul.mubr.f32.gmra.mrb[0].mxu0 %v6746
        %v6949 = vpop.f32.mrb[0].mxu0
        %v6950 = vadd.f32 0.0, %v6949
        %v6951 = vpop.f32.mrb[0].mxu0
        %6952 = vmatprep.mubr.f32.mxu0 0.0
        %6953 = vmatmul.mubr.f32.gmra.mrb[0].mxu0 %v6749
        %v6954 = vpop.f32.mrb[0].mxu0
        %v6955 = vadd.f32 0.0, %v6954
        %v6956 = vpop.f32.mrb[0].mxu0
        %6957 = vmatprep.mubr.f32.mxu0 0.0
        %6958 = vmatmul.mubr.f32.gmra.mrb[0].mxu0 %v6752
        %v6959 = vpop.f32.mrb[0].mxu0
        %v6960 = vadd.f32 0.0, %v6959
        %v6961 = vpop.f32.mrb[0].mxu0
        %6962 = vmatprep.mubr.f32.mxu0 0.0
        %6963 = vmatmul.mubr.f32.gmra.mrb[0].mxu0 %v6755
        %v6964 = vpop.f32.mrb[0].mxu0
        %v6965 = vadd.f32 0.0, %v6964
        %v6966 = vpop.f32.mrb[0].mxu0
        %6967 = vmatprep.mubr.f32.mxu0 0.0
        %6968 = vmatmul.mubr.f32.gmra.mrb[0].mxu0 %v6758
        %v6969 = vpop.f32.mrb[0].mxu0
        %v6970 = vadd.f32 0.0, %v6969
        %v6971 = vpop.f32.mrb[0].mxu0
        %6972 = vmatprep.mubr.f32.mxu0 0.0
        %6973 = vmatmul.mubr.f32.gmra.mrb[0].mxu0 %v6761
        %v6974 = vpop.f32.mrb[0].mxu0
        %v6975 = vadd.f32 0.0, %v6974
        %v6976 = vpop.f32.mrb[0].mxu0
        %6977 = vmatprep.mubr.f32.mxu0 0.0
        %6978 = vmatmul.mubr.f32.gmra.mrb[0].mxu0 %v6764
        %v6979 = vpop.f32.mrb[0].mxu0
        %v6980 = vadd.f32 0.0, %v6979
        %v6981 = vpop.f32.mrb[0].mxu0
        %6982 = vmatprep.mubr.f32.mxu0 0.0
        %6983 = vmatmul.mubr.f32.gmra.mrb[0].mxu0 %v6767
        %v6984 = vpop.f32.mrb[0].mxu0
        %v6985 = vadd.f32 0.0, %v6984
        %v6986 = vpop.f32.mrb[0].mxu0
        %6987 = vmatprep.mubr.f32.mxu0 0.0
        %6988 = vmatmul.mubr.f32.gmra.mrb[0].mxu0 %v6770
        %v6989 = vpop.f32.mrb[0].mxu0
        %v6990 = vadd.f32 0.0, %v6989
        %v6991 = vpop.f32.mrb[0].mxu0
        %6992 = vmatprep.mubr.f32.mxu0 0.0
        %6993 = vmatmul.mubr.f32.gmra.mrb[0].mxu0 %v6773
        %v6994 = vpop.f32.mrb[0].mxu0
        %v6995 = vadd.f32 0.0, %v6994
        %v6996 = vpop.f32.mrb[0].mxu0
        %6997 = vmatprep.mubr.f32.mxu0 0.0
        %6998 = vmatmul.mubr.f32.gmra.mrb[0].mxu0 %v6776
        %v6999 = vpop.f32.mrb[0].mxu0
        %v7000 = vadd.f32 0.0, %v6999
        %v7001 = vpop.f32.mrb[0].mxu0
        %7002 = vdwg.mxu0
        %v7003 = vadd.f32 %v6613, %v6845
        %v7004 = vadd.f32 %v6614, %v6850
        %v7005 = vadd.f32 %v6615, %v6855
        %v7006 = vadd.f32 %v6616, %v6860
        %v7007 = vadd.f32 %v6617, %v6865
        %v7008 = vadd.f32 %v6618, %v6870
        %v7009 = vadd.f32 %v6619, %v6875
        %v7010 = vadd.f32 %v6620, %v6880
        %v7011 = vadd.f32 %v6621, %v6885
        %v7012 = vadd.f32 %v6622, %v6890
        %v7013 = vadd.f32 %v6623, %v6895
        %v7014 = vadd.f32 %v6624, %v6900
        %v7015 = vadd.f32 %v6625, %v6905
        %v7016 = vadd.f32 %v6626, %v6910
        %v7017 = vadd.f32 %v6627, %v6915
        %v7018 = vadd.f32 %v6628, %v6920
        %v7019 = vadd.f32 %v6629, %v6925
        %v7020 = vadd.f32 %v6630, %v6930
        %v7021 = vadd.f32 %v6631, %v6935
        %v7022 = vadd.f32 %v6632, %v6940
        %v7023 = vadd.f32 %v6633, %v6945
        %v7024 = vadd.f32 %v6634, %v6950
        %v7025 = vadd.f32 %v6635, %v6955
        %v7026 = vadd.f32 %v6636, %v6960
        %v7027 = vadd.f32 %v6637, %v6965
        %v7028 = vadd.f32 %v6638, %v6970
        %v7029 = vadd.f32 %v6639, %v6975
        %v7030 = vadd.f32 %v6640, %v6980
        %v7031 = vadd.f32 %v6641, %v6985
        %v7032 = vadd.f32 %v6642, %v6990
        %v7033 = vadd.f32 %v6643, %v6995
        %v7034 = vadd.f32 %v6644, %v7000
        %v7035 = vld [vmem:[%s2673 + $0x9] sm:$0xff]
        %v7036 = vld [vmem:[%s2673 + $0x11] sm:$0xff]
        %v7037 = vld [vmem:[%s2673 + $0x29] sm:$0xff]
        %v7038 = vld [vmem:[%s2673 + $0x31] sm:$0xff]
        %v7039 = vld [vmem:[%s2673 + $0x49] sm:$0xff]
        %v7040 = vld [vmem:[%s2673 + $0x51] sm:$0xff]
        %v7041 = vld [vmem:[%s2673 + $0x69] sm:$0xff]
        %v7042 = vld [vmem:[%s2673 + $0x71] sm:$0xff]
        %v7043 = vld [vmem:[%s2673 + $0x89] sm:$0xff]
        %v7044 = vld [vmem:[%s2673 + $0x91] sm:$0xff]
        %v7045 = vld [vmem:[%s2673 + $0xa9] sm:$0xff]
        %v7046 = vld [vmem:[%s2673 + $0xb1] sm:$0xff]
        %v7047 = vld [vmem:[%s2673 + $0xc9] sm:$0xff]
        %v7048 = vld [vmem:[%s2673 + $0xd1] sm:$0xff]
        %v7049 = vld [vmem:[%s2673 + $0xe9] sm:$0xff]
        %v7050 = vld [vmem:[%s2673 + $0xf1] sm:$0xff]
        %v7051 = vld [vmem:[%s2673 + $0x109] sm:$0xff]
        %v7052 = vld [vmem:[%s2673 + $0x111] sm:$0xff]
        %v7053 = vld [vmem:[%s2673 + $0x129] sm:$0xff]
        %v7054 = vld [vmem:[%s2673 + $0x131] sm:$0xff]
        %v7055 = vld [vmem:[%s2673 + $0x149] sm:$0xff]
        %v7056 = vld [vmem:[%s2673 + $0x151] sm:$0xff]
        %v7057 = vld [vmem:[%s2673 + $0x169] sm:$0xff]
        %v7058 = vld [vmem:[%s2673 + $0x171] sm:$0xff]
        %v7059 = vld [vmem:[%s2673 + $0x189] sm:$0xff]
        %v7060 = vld [vmem:[%s2673 + $0x191] sm:$0xff]
        %v7061 = vld [vmem:[%s2673 + $0x1a9] sm:$0xff]
        %v7062 = vld [vmem:[%s2673 + $0x1b1] sm:$0xff]
        %v7063 = vld [vmem:[%s2673 + $0x1c9] sm:$0xff]
        %v7064 = vld [vmem:[%s2673 + $0x1d1] sm:$0xff]
        %v7065 = vld [vmem:[%s2673 + $0x1e9] sm:$0xff]
        %v7066 = vld [vmem:[%s2673 + $0x1f1] sm:$0xff]
        %s7067 = scalar_lea.vmem [#allocation6], 544
        %v7068 = vld [vmem:[%s7067] sm:$0xff]
        %v7069 = vld [vmem:[%s7067 + $0x8] sm:$0xff]
        %v7070 = vld [vmem:[%s7067 + $0x10] sm:$0xff]
        %v7071 = vld [vmem:[%s7067 + $0x18] sm:$0xff]
        %v7073 = vsel %vm470, %v7035, 0
        %v7076 = vsel %vm470, %v7036, 0
        %v7079 = vsel %vm470, %v7037, 0
        %v7082 = vsel %vm470, %v7038, 0
        %v7085 = vsel %vm470, %v7039, 0
        %v7088 = vsel %vm470, %v7040, 0
        %v7091 = vsel %vm470, %v7041, 0
        %v7094 = vsel %vm470, %v7042, 0
        %v7097 = vsel %vm470, %v7043, 0
        %v7100 = vsel %vm470, %v7044, 0
        %v7103 = vsel %vm470, %v7045, 0
        %v7106 = vsel %vm470, %v7046, 0
        %v7109 = vsel %vm470, %v7047, 0
        %v7112 = vsel %vm470, %v7048, 0
        %v7115 = vsel %vm470, %v7049, 0
        %v7118 = vsel %vm470, %v7050, 0
        %v7121 = vsel %vm470, %v7051, 0
        %v7124 = vsel %vm470, %v7052, 0
        %v7127 = vsel %vm470, %v7053, 0
        %v7130 = vsel %vm470, %v7054, 0
        %v7133 = vsel %vm470, %v7055, 0
        %v7136 = vsel %vm470, %v7056, 0
        %v7139 = vsel %vm470, %v7057, 0
        %v7142 = vsel %vm470, %v7058, 0
        %v7145 = vsel %vm470, %v7059, 0
        %v7148 = vsel %vm470, %v7060, 0
        %v7151 = vsel %vm470, %v7061, 0
        %v7154 = vsel %vm470, %v7062, 0
        %v7157 = vsel %vm470, %v7063, 0
        %v7160 = vsel %vm470, %v7064, 0
        %v7163 = vsel %vm470, %v7065, 0
        %v7166 = vsel %vm470, %v7066, 0
        %7168 = vmatprep.subr.mxu0 0.0
        %7169 = vmatpush1.msra.mxu0 %v7068
        %7170 = vmatprep.subr.mxu0 0.0
        %7171 = vmatpush1.msra.mxu0 %v7069
        %7172 = vmatprep.subr.mxu0 0.0
        %7173 = vmatpush1.msra.mxu0 %v7070
        %7174 = vmatprep.subr.mxu0 0.0
        %7175 = vmatpush1.msra.mxu0 %v7071
        %7176 = vmatprep.subr.mxu0 0.0
        %7177 = vmatpush1.msra.mxu0 0.0
        %7178 = vmatprep.subr.mxu0 0.0
        %7179 = vmatpush1.msra.mxu0 0.0
        %7180 = vmatprep.subr.mxu0 0.0
        %7181 = vmatpush1.msra.mxu0 0.0
        %7182 = vmatprep.subr.mxu0 0.0
        %7183 = vmatpush1.msra.mxu0 0.0
        %7184 = vmatprep.subr.mxu0 0.0
        %7185 = vmatpush1.msra.mxu0 0.0
        %7186 = vmatprep.subr.mxu0 0.0
        %7187 = vmatpush1.msra.mxu0 0.0
        %7188 = vmatprep.subr.mxu0 0.0
        %7189 = vmatpush1.msra.mxu0 0.0
        %7190 = vmatprep.subr.mxu0 0.0
        %7191 = vmatpush1.msra.mxu0 0.0
        %7192 = vmatprep.subr.mxu0 0.0
        %7193 = vmatpush1.msra.mxu0 0.0
        %7194 = vmatprep.subr.mxu0 0.0
        %7195 = vmatpush1.msra.mxu0 0.0
        %7196 = vmatprep.subr.mxu0 0.0
        %7197 = vmatpush1.msra.mxu0 0.0
        %7198 = vmatprep.subr.mxu0 0.0
        %7199 = vmatpush1.msra.mxu0 0.0
        %7200 = vmatprep.subr.mxu0 0.0
        %7201 = vmatpush1.msra.mxu0 0.0
        %7202 = vmatprep.subr.mxu0 0.0
        %7203 = vmatpush1.msra.mxu0 0.0
        %7204 = vmatprep.subr.mxu0 0.0
        %7205 = vmatpush1.msra.mxu0 0.0
        %7206 = vmatprep.subr.mxu0 0.0
        %7207 = vmatpush1.msra.mxu0 0.0
        %7208 = vmatprep.subr.mxu0 0.0
        %7209 = vmatpush1.msra.mxu0 0.0
        %7210 = vmatprep.subr.mxu0 0.0
        %7211 = vmatpush1.msra.mxu0 0.0
        %7212 = vmatprep.subr.mxu0 0.0
        %7213 = vmatpush1.msra.mxu0 0.0
        %7214 = vmatprep.subr.mxu0 0.0
        %7215 = vmatpush1.msra.mxu0 0.0
        %7216 = vmatprep.subr.mxu0 0.0
        %7217 = vmatpush1.msra.mxu0 0.0
        %7218 = vmatprep.subr.mxu0 0.0
        %7219 = vmatpush1.msra.mxu0 0.0
        %7220 = vmatprep.subr.mxu0 0.0
        %7221 = vmatpush1.msra.mxu0 0.0
        %7222 = vmatprep.subr.mxu0 0.0
        %7223 = vmatpush1.msra.mxu0 0.0
        %7224 = vmatprep.subr.mxu0 0.0
        %7225 = vmatpush1.msra.mxu0 0.0
        %7226 = vmatprep.subr.mxu0 0.0
        %7227 = vmatpush1.msra.mxu0 0.0
        %7228 = vmatprep.subr.mxu0 0.0
        %7229 = vmatpush1.msra.mxu0 0.0
        %7230 = vmatprep.subr.mxu0 0.0
        %7231 = vmatpush1.msra.mxu0 0.0
        %7232 = vmatprep.mubr.f32.mxu0 0.0
        %7233 = vmatmul.mubr.f32.gmra.mrb[0].mxu0 %v7073
        %v7234 = vpop.f32.mrb[0].mxu0
        %v7235 = vadd.f32 0.0, %v7234
        %v7236 = vpop.f32.mrb[0].mxu0
        %7237 = vmatprep.mubr.f32.mxu0 0.0
        %7238 = vmatmul.mubr.f32.gmra.mrb[0].mxu0 %v7076
        %v7239 = vpop.f32.mrb[0].mxu0
        %v7240 = vadd.f32 0.0, %v7239
        %v7241 = vpop.f32.mrb[0].mxu0
        %7242 = vmatprep.mubr.f32.mxu0 0.0
        %7243 = vmatmul.mubr.f32.gmra.mrb[0].mxu0 %v7079
        %v7244 = vpop.f32.mrb[0].mxu0
        %v7245 = vadd.f32 0.0, %v7244
        %v7246 = vpop.f32.mrb[0].mxu0
        %7247 = vmatprep.mubr.f32.mxu0 0.0
        %7248 = vmatmul.mubr.f32.gmra.mrb[0].mxu0 %v7082
        %v7249 = vpop.f32.mrb[0].mxu0
        %v7250 = vadd.f32 0.0, %v7249
        %v7251 = vpop.f32.mrb[0].mxu0
        %7252 = vmatprep.mubr.f32.mxu0 0.0
        %7253 = vmatmul.mubr.f32.gmra.mrb[0].mxu0 %v7085
        %v7254 = vpop.f32.mrb[0].mxu0
        %v7255 = vadd.f32 0.0, %v7254
        %v7256 = vpop.f32.mrb[0].mxu0
        %7257 = vmatprep.mubr.f32.mxu0 0.0
        %7258 = vmatmul.mubr.f32.gmra.mrb[0].mxu0 %v7088
        %v7259 = vpop.f32.mrb[0].mxu0
        %v7260 = vadd.f32 0.0, %v7259
        %v7261 = vpop.f32.mrb[0].mxu0
        %7262 = vmatprep.mubr.f32.mxu0 0.0
        %7263 = vmatmul.mubr.f32.gmra.mrb[0].mxu0 %v7091
        %v7264 = vpop.f32.mrb[0].mxu0
        %v7265 = vadd.f32 0.0, %v7264
        %v7266 = vpop.f32.mrb[0].mxu0
        %7267 = vmatprep.mubr.f32.mxu0 0.0
        %7268 = vmatmul.mubr.f32.gmra.mrb[0].mxu0 %v7094
        %v7269 = vpop.f32.mrb[0].mxu0
        %v7270 = vadd.f32 0.0, %v7269
        %v7271 = vpop.f32.mrb[0].mxu0
        %7272 = vmatprep.mubr.f32.mxu0 0.0
        %7273 = vmatmul.mubr.f32.gmra.mrb[0].mxu0 %v7097
        %v7274 = vpop.f32.mrb[0].mxu0
        %v7275 = vadd.f32 0.0, %v7274
        %v7276 = vpop.f32.mrb[0].mxu0
        %7277 = vmatprep.mubr.f32.mxu0 0.0
        %7278 = vmatmul.mubr.f32.gmra.mrb[0].mxu0 %v7100
        %v7279 = vpop.f32.mrb[0].mxu0
        %v7280 = vadd.f32 0.0, %v7279
        %v7281 = vpop.f32.mrb[0].mxu0
        %7282 = vmatprep.mubr.f32.mxu0 0.0
        %7283 = vmatmul.mubr.f32.gmra.mrb[0].mxu0 %v7103
        %v7284 = vpop.f32.mrb[0].mxu0
        %v7285 = vadd.f32 0.0, %v7284
        %v7286 = vpop.f32.mrb[0].mxu0
        %7287 = vmatprep.mubr.f32.mxu0 0.0
        %7288 = vmatmul.mubr.f32.gmra.mrb[0].mxu0 %v7106
        %v7289 = vpop.f32.mrb[0].mxu0
        %v7290 = vadd.f32 0.0, %v7289
        %v7291 = vpop.f32.mrb[0].mxu0
        %7292 = vmatprep.mubr.f32.mxu0 0.0
        %7293 = vmatmul.mubr.f32.gmra.mrb[0].mxu0 %v7109
        %v7294 = vpop.f32.mrb[0].mxu0
        %v7295 = vadd.f32 0.0, %v7294
        %v7296 = vpop.f32.mrb[0].mxu0
        %7297 = vmatprep.mubr.f32.mxu0 0.0
        %7298 = vmatmul.mubr.f32.gmra.mrb[0].mxu0 %v7112
        %v7299 = vpop.f32.mrb[0].mxu0
        %v7300 = vadd.f32 0.0, %v7299
        %v7301 = vpop.f32.mrb[0].mxu0
        %7302 = vmatprep.mubr.f32.mxu0 0.0
        %7303 = vmatmul.mubr.f32.gmra.mrb[0].mxu0 %v7115
        %v7304 = vpop.f32.mrb[0].mxu0
        %v7305 = vadd.f32 0.0, %v7304
        %v7306 = vpop.f32.mrb[0].mxu0
        %7307 = vmatprep.mubr.f32.mxu0 0.0
        %7308 = vmatmul.mubr.f32.gmra.mrb[0].mxu0 %v7118
        %v7309 = vpop.f32.mrb[0].mxu0
        %v7310 = vadd.f32 0.0, %v7309
        %v7311 = vpop.f32.mrb[0].mxu0
        %7312 = vmatprep.mubr.f32.mxu0 0.0
        %7313 = vmatmul.mubr.f32.gmra.mrb[0].mxu0 %v7121
        %v7314 = vpop.f32.mrb[0].mxu0
        %v7315 = vadd.f32 0.0, %v7314
        %v7316 = vpop.f32.mrb[0].mxu0
        %7317 = vmatprep.mubr.f32.mxu0 0.0
        %7318 = vmatmul.mubr.f32.gmra.mrb[0].mxu0 %v7124
        %v7319 = vpop.f32.mrb[0].mxu0
        %v7320 = vadd.f32 0.0, %v7319
        %v7321 = vpop.f32.mrb[0].mxu0
        %7322 = vmatprep.mubr.f32.mxu0 0.0
        %7323 = vmatmul.mubr.f32.gmra.mrb[0].mxu0 %v7127
        %v7324 = vpop.f32.mrb[0].mxu0
        %v7325 = vadd.f32 0.0, %v7324
        %v7326 = vpop.f32.mrb[0].mxu0
        %7327 = vmatprep.mubr.f32.mxu0 0.0
        %7328 = vmatmul.mubr.f32.gmra.mrb[0].mxu0 %v7130
        %v7329 = vpop.f32.mrb[0].mxu0
        %v7330 = vadd.f32 0.0, %v7329
        %v7331 = vpop.f32.mrb[0].mxu0
        %7332 = vmatprep.mubr.f32.mxu0 0.0
        %7333 = vmatmul.mubr.f32.gmra.mrb[0].mxu0 %v7133
        %v7334 = vpop.f32.mrb[0].mxu0
        %v7335 = vadd.f32 0.0, %v7334
        %v7336 = vpop.f32.mrb[0].mxu0
        %7337 = vmatprep.mubr.f32.mxu0 0.0
        %7338 = vmatmul.mubr.f32.gmra.mrb[0].mxu0 %v7136
        %v7339 = vpop.f32.mrb[0].mxu0
        %v7340 = vadd.f32 0.0, %v7339
        %v7341 = vpop.f32.mrb[0].mxu0
        %7342 = vmatprep.mubr.f32.mxu0 0.0
        %7343 = vmatmul.mubr.f32.gmra.mrb[0].mxu0 %v7139
        %v7344 = vpop.f32.mrb[0].mxu0
        %v7345 = vadd.f32 0.0, %v7344
        %v7346 = vpop.f32.mrb[0].mxu0
        %7347 = vmatprep.mubr.f32.mxu0 0.0
        %7348 = vmatmul.mubr.f32.gmra.mrb[0].mxu0 %v7142
        %v7349 = vpop.f32.mrb[0].mxu0
        %v7350 = vadd.f32 0.0, %v7349
        %v7351 = vpop.f32.mrb[0].mxu0
        %7352 = vmatprep.mubr.f32.mxu0 0.0
        %7353 = vmatmul.mubr.f32.gmra.mrb[0].mxu0 %v7145
        %v7354 = vpop.f32.mrb[0].mxu0
        %v7355 = vadd.f32 0.0, %v7354
        %v7356 = vpop.f32.mrb[0].mxu0
        %7357 = vmatprep.mubr.f32.mxu0 0.0
        %7358 = vmatmul.mubr.f32.gmra.mrb[0].mxu0 %v7148
        %v7359 = vpop.f32.mrb[0].mxu0
        %v7360 = vadd.f32 0.0, %v7359
        %v7361 = vpop.f32.mrb[0].mxu0
        %7362 = vmatprep.mubr.f32.mxu0 0.0
        %7363 = vmatmul.mubr.f32.gmra.mrb[0].mxu0 %v7151
        %v7364 = vpop.f32.mrb[0].mxu0
        %v7365 = vadd.f32 0.0, %v7364
        %v7366 = vpop.f32.mrb[0].mxu0
        %7367 = vmatprep.mubr.f32.mxu0 0.0
        %7368 = vmatmul.mubr.f32.gmra.mrb[0].mxu0 %v7154
        %v7369 = vpop.f32.mrb[0].mxu0
        %v7370 = vadd.f32 0.0, %v7369
        %v7371 = vpop.f32.mrb[0].mxu0
        %7372 = vmatprep.mubr.f32.mxu0 0.0
        %7373 = vmatmul.mubr.f32.gmra.mrb[0].mxu0 %v7157
        %v7374 = vpop.f32.mrb[0].mxu0
        %v7375 = vadd.f32 0.0, %v7374
        %v7376 = vpop.f32.mrb[0].mxu0
        %7377 = vmatprep.mubr.f32.mxu0 0.0
        %7378 = vmatmul.mubr.f32.gmra.mrb[0].mxu0 %v7160
        %v7379 = vpop.f32.mrb[0].mxu0
        %v7380 = vadd.f32 0.0, %v7379
        %v7381 = vpop.f32.mrb[0].mxu0
        %7382 = vmatprep.mubr.f32.mxu0 0.0
        %7383 = vmatmul.mubr.f32.gmra.mrb[0].mxu0 %v7163
        %v7384 = vpop.f32.mrb[0].mxu0
        %v7385 = vadd.f32 0.0, %v7384
        %v7386 = vpop.f32.mrb[0].mxu0
        %7387 = vmatprep.mubr.f32.mxu0 0.0
        %7388 = vmatmul.mubr.f32.gmra.mrb[0].mxu0 %v7166
        %v7389 = vpop.f32.mrb[0].mxu0
        %v7390 = vadd.f32 0.0, %v7389
        %v7391 = vpop.f32.mrb[0].mxu0
        %7392 = vdwg.mxu0
        %v7393 = vadd.f32 %v7003, %v7235
        %v7394 = vadd.f32 %v7004, %v7240
        %v7395 = vadd.f32 %v7005, %v7245
        %v7396 = vadd.f32 %v7006, %v7250
        %v7397 = vadd.f32 %v7007, %v7255
        %v7398 = vadd.f32 %v7008, %v7260
        %v7399 = vadd.f32 %v7009, %v7265
        %v7400 = vadd.f32 %v7010, %v7270
        %v7401 = vadd.f32 %v7011, %v7275
        %v7402 = vadd.f32 %v7012, %v7280
        %v7403 = vadd.f32 %v7013, %v7285
        %v7404 = vadd.f32 %v7014, %v7290
        %v7405 = vadd.f32 %v7015, %v7295
        %v7406 = vadd.f32 %v7016, %v7300
        %v7407 = vadd.f32 %v7017, %v7305
        %v7408 = vadd.f32 %v7018, %v7310
        %v7409 = vadd.f32 %v7019, %v7315
        %v7410 = vadd.f32 %v7020, %v7320
        %v7411 = vadd.f32 %v7021, %v7325
        %v7412 = vadd.f32 %v7022, %v7330
        %v7413 = vadd.f32 %v7023, %v7335
        %v7414 = vadd.f32 %v7024, %v7340
        %v7415 = vadd.f32 %v7025, %v7345
        %v7416 = vadd.f32 %v7026, %v7350
        %v7417 = vadd.f32 %v7027, %v7355
        %v7418 = vadd.f32 %v7028, %v7360
        %v7419 = vadd.f32 %v7029, %v7365
        %v7420 = vadd.f32 %v7030, %v7370
        %v7421 = vadd.f32 %v7031, %v7375
        %v7422 = vadd.f32 %v7032, %v7380
        %v7423 = vadd.f32 %v7033, %v7385
        %v7424 = vadd.f32 %v7034, %v7390
        %s7425 = scalar_lea.vmem %s2, 1
        %v7426 = vld [vmem:[%s7425] sm:$0x1]
        %v7428 = vlaneseq
        %v7429 = vshrl.u32 %v7428, 7
        %v7430 = vsub.s32 0, %v7429
        %v7431 = vrot.slane %v7426, %v7430
        %v7433 = vadd.f32 %v7393, %v7431
        %v7434 = vadd.f32 %v7394, %v7431
        %v7435 = vadd.f32 %v7395, %v7431
        %v7436 = vadd.f32 %v7396, %v7431
        %v7437 = vadd.f32 %v7397, %v7431
        %v7438 = vadd.f32 %v7398, %v7431
        %v7439 = vadd.f32 %v7399, %v7431
        %v7440 = vadd.f32 %v7400, %v7431
        %v7441 = vadd.f32 %v7401, %v7431
        %v7442 = vadd.f32 %v7402, %v7431
        %v7443 = vadd.f32 %v7403, %v7431
        %v7444 = vadd.f32 %v7404, %v7431
        %v7445 = vadd.f32 %v7405, %v7431
        %v7446 = vadd.f32 %v7406, %v7431
        %v7447 = vadd.f32 %v7407, %v7431
        %v7448 = vadd.f32 %v7408, %v7431
        %v7449 = vadd.f32 %v7409, %v7431
        %v7450 = vadd.f32 %v7410, %v7431
        %v7451 = vadd.f32 %v7411, %v7431
        %v7452 = vadd.f32 %v7412, %v7431
        %v7453 = vadd.f32 %v7413, %v7431
        %v7454 = vadd.f32 %v7414, %v7431
        %v7455 = vadd.f32 %v7415, %v7431
        %v7456 = vadd.f32 %v7416, %v7431
        %v7457 = vadd.f32 %v7417, %v7431
        %v7458 = vadd.f32 %v7418, %v7431
        %v7459 = vadd.f32 %v7419, %v7431
        %v7460 = vadd.f32 %v7420, %v7431
        %v7461 = vadd.f32 %v7421, %v7431
        %v7462 = vadd.f32 %v7422, %v7431
        %v7463 = vadd.f32 %v7423, %v7431
        %v7464 = vadd.f32 %v7424, %v7431
        %v7465 = vmax.f32 %v7433, 0.0
        %v7466 = vmax.f32 %v7434, 0.0
        %v7467 = vmax.f32 %v7435, 0.0
        %v7468 = vmax.f32 %v7436, 0.0
        %v7469 = vmax.f32 %v7437, 0.0
        %v7470 = vmax.f32 %v7438, 0.0
        %v7471 = vmax.f32 %v7439, 0.0
        %v7472 = vmax.f32 %v7440, 0.0
        %v7473 = vmax.f32 %v7441, 0.0
        %v7474 = vmax.f32 %v7442, 0.0
        %v7475 = vmax.f32 %v7443, 0.0
        %v7476 = vmax.f32 %v7444, 0.0
        %v7477 = vmax.f32 %v7445, 0.0
        %v7478 = vmax.f32 %v7446, 0.0
        %v7479 = vmax.f32 %v7447, 0.0
        %v7480 = vmax.f32 %v7448, 0.0
        %v7481 = vmax.f32 %v7449, 0.0
        %v7482 = vmax.f32 %v7450, 0.0
        %v7483 = vmax.f32 %v7451, 0.0
        %v7484 = vmax.f32 %v7452, 0.0
        %v7485 = vmax.f32 %v7453, 0.0
        %v7486 = vmax.f32 %v7454, 0.0
        %v7487 = vmax.f32 %v7455, 0.0
        %v7488 = vmax.f32 %v7456, 0.0
        %v7489 = vmax.f32 %v7457, 0.0
        %v7490 = vmax.f32 %v7458, 0.0
        %v7491 = vmax.f32 %v7459, 0.0
        %v7492 = vmax.f32 %v7460, 0.0
        %v7493 = vmax.f32 %v7461, 0.0
        %v7494 = vmax.f32 %v7462, 0.0
        %v7495 = vmax.f32 %v7463, 0.0
        %v7496 = vmax.f32 %v7464, 0.0
        %v7497 = vadd.f32 %v5475, %v7465
        %v7498 = vadd.f32 %v5476, %v7466
        %v7499 = vadd.f32 %v5477, %v7467
        %v7500 = vadd.f32 %v5478, %v7468
        %v7501 = vadd.f32 %v5479, %v7469
        %v7502 = vadd.f32 %v5480, %v7470
        %v7503 = vadd.f32 %v5481, %v7471
        %v7504 = vadd.f32 %v5482, %v7472
        %v7505 = vadd.f32 %v5483, %v7473
        %v7506 = vadd.f32 %v5484, %v7474
        %v7507 = vadd.f32 %v5485, %v7475
        %v7508 = vadd.f32 %v5486, %v7476
        %v7509 = vadd.f32 %v5487, %v7477
        %v7510 = vadd.f32 %v5488, %v7478
        %v7511 = vadd.f32 %v5489, %v7479
        %v7512 = vadd.f32 %v5490, %v7480
        %v7513 = vadd.f32 %v5491, %v7481
        %v7514 = vadd.f32 %v5492, %v7482
        %v7515 = vadd.f32 %v5493, %v7483
        %v7516 = vadd.f32 %v5494, %v7484
        %v7517 = vadd.f32 %v5495, %v7485
        %v7518 = vadd.f32 %v5496, %v7486
        %v7519 = vadd.f32 %v5497, %v7487
        %v7520 = vadd.f32 %v5498, %v7488
        %v7521 = vadd.f32 %v5499, %v7489
        %v7522 = vadd.f32 %v5500, %v7490
        %v7523 = vadd.f32 %v5501, %v7491
        %v7524 = vadd.f32 %v5502, %v7492
        %v7525 = vadd.f32 %v5503, %v7493
        %v7526 = vadd.f32 %v5504, %v7494
        %v7527 = vadd.f32 %v5505, %v7495
        %v7528 = vadd.f32 %v5506, %v7496
        %7529 = vst [vmem:[%s364 + $0x8] sm:$0xff] %v7497
        %7530 = vst [vmem:[%s364 + $0x10] sm:$0xff] %v7498
        %7531 = vst [vmem:[%s364 + $0x28] sm:$0xff] %v7499
        %7532 = vst [vmem:[%s364 + $0x30] sm:$0xff] %v7500
        %7533 = vst [vmem:[%s364 + $0x48] sm:$0xff] %v7501
        %7534 = vst [vmem:[%s364 + $0x50] sm:$0xff] %v7502
        %7535 = vst [vmem:[%s364 + $0x68] sm:$0xff] %v7503
        %7536 = vst [vmem:[%s364 + $0x70] sm:$0xff] %v7504
        %7537 = vst [vmem:[%s364 + $0x88] sm:$0xff] %v7505
        %7538 = vst [vmem:[%s364 + $0x90] sm:$0xff] %v7506
        %7539 = vst [vmem:[%s364 + $0xa8] sm:$0xff] %v7507
        %7540 = vst [vmem:[%s364 + $0xb0] sm:$0xff] %v7508
        %7541 = vst [vmem:[%s364 + $0xc8] sm:$0xff] %v7509
        %7542 = vst [vmem:[%s364 + $0xd0] sm:$0xff] %v7510
        %7543 = vst [vmem:[%s364 + $0xe8] sm:$0xff] %v7511
        %7544 = vst [vmem:[%s364 + $0xf0] sm:$0xff] %v7512
        %7545 = vst [vmem:[%s364 + $0x108] sm:$0xff] %v7513
        %7546 = vst [vmem:[%s364 + $0x110] sm:$0xff] %v7514
        %7547 = vst [vmem:[%s364 + $0x128] sm:$0xff] %v7515
        %7548 = vst [vmem:[%s364 + $0x130] sm:$0xff] %v7516
        %7549 = vst [vmem:[%s364 + $0x148] sm:$0xff] %v7517
        %7550 = vst [vmem:[%s364 + $0x150] sm:$0xff] %v7518
        %7551 = vst [vmem:[%s364 + $0x168] sm:$0xff] %v7519
        %7552 = vst [vmem:[%s364 + $0x170] sm:$0xff] %v7520
        %7553 = vst [vmem:[%s364 + $0x188] sm:$0xff] %v7521
        %7554 = vst [vmem:[%s364 + $0x190] sm:$0xff] %v7522
        %7555 = vst [vmem:[%s364 + $0x1a8] sm:$0xff] %v7523
        %7556 = vst [vmem:[%s364 + $0x1b0] sm:$0xff] %v7524
        %7557 = vst [vmem:[%s364 + $0x1c8] sm:$0xff] %v7525
        %7558 = vst [vmem:[%s364 + $0x1d0] sm:$0xff] %v7526
        %7559 = vst [vmem:[%s364 + $0x1e8] sm:$0xff] %v7527
        %7560 = vst [vmem:[%s364 + $0x1f0] sm:$0xff] %v7528
        %v7561 = vld [vmem:[#allocation2 + $0x7] sm:$0xff]
        %v7562 = vld [vmem:[#allocation2 + $0xf] sm:$0xff]
        %v7563 = vld [vmem:[#allocation2 + $0x27] sm:$0xff]
        %v7564 = vld [vmem:[#allocation2 + $0x2f] sm:$0xff]
        %v7565 = vld [vmem:[#allocation2 + $0x47] sm:$0xff]
        %v7566 = vld [vmem:[#allocation2 + $0x4f] sm:$0xff]
        %v7567 = vld [vmem:[#allocation2 + $0x67] sm:$0xff]
        %v7568 = vld [vmem:[#allocation2 + $0x6f] sm:$0xff]
        %v7569 = vld [vmem:[#allocation2 + $0x87] sm:$0xff]
        %v7570 = vld [vmem:[#allocation2 + $0x8f] sm:$0xff]
        %v7571 = vld [vmem:[#allocation2 + $0xa7] sm:$0xff]
        %v7572 = vld [vmem:[#allocation2 + $0xaf] sm:$0xff]
        %v7573 = vld [vmem:[#allocation2 + $0xc7] sm:$0xff]
        %v7574 = vld [vmem:[#allocation2 + $0xcf] sm:$0xff]
        %v7575 = vld [vmem:[#allocation2 + $0xe7] sm:$0xff]
        %v7576 = vld [vmem:[#allocation2 + $0xef] sm:$0xff]
        %v7577 = vld [vmem:[#allocation2 + $0x107] sm:$0xff]
        %v7578 = vld [vmem:[#allocation2 + $0x10f] sm:$0xff]
        %v7579 = vld [vmem:[#allocation2 + $0x127] sm:$0xff]
        %v7580 = vld [vmem:[#allocation2 + $0x12f] sm:$0xff]
        %v7581 = vld [vmem:[#allocation2 + $0x147] sm:$0xff]
        %v7582 = vld [vmem:[#allocation2 + $0x14f] sm:$0xff]
        %v7583 = vld [vmem:[#allocation2 + $0x167] sm:$0xff]
        %v7584 = vld [vmem:[#allocation2 + $0x16f] sm:$0xff]
        %v7585 = vld [vmem:[#allocation2 + $0x187] sm:$0xff]
        %v7586 = vld [vmem:[#allocation2 + $0x18f] sm:$0xff]
        %v7587 = vld [vmem:[#allocation2 + $0x1a7] sm:$0xff]
        %v7588 = vld [vmem:[#allocation2 + $0x1af] sm:$0xff]
        %v7589 = vld [vmem:[#allocation2 + $0x1c7] sm:$0xff]
        %v7590 = vld [vmem:[#allocation2 + $0x1cf] sm:$0xff]
        %v7591 = vld [vmem:[#allocation2 + $0x1e7] sm:$0xff]
        %v7592 = vld [vmem:[#allocation2 + $0x1ef] sm:$0xff]
        %s7593 = scalar_lea.vmem [#allocation6], 576
        %v7594 = vld [vmem:[%s7593] sm:$0xff]
        %v7595 = vld [vmem:[%s7593 + $0x8] sm:$0xff]
        %v7596 = vld [vmem:[%s7593 + $0x10] sm:$0xff]
        %v7597 = vld [vmem:[%s7593 + $0x18] sm:$0xff]
        %v7598 = vld [vmem:[#allocation2 + $0x8] sm:$0xff]
        %v7599 = vld [vmem:[#allocation2 + $0x10] sm:$0xff]
        %v7600 = vld [vmem:[#allocation2 + $0x28] sm:$0xff]
        %v7601 = vld [vmem:[#allocation2 + $0x30] sm:$0xff]
        %v7602 = vld [vmem:[#allocation2 + $0x48] sm:$0xff]
        %v7603 = vld [vmem:[#allocation2 + $0x50] sm:$0xff]
        %v7604 = vld [vmem:[#allocation2 + $0x68] sm:$0xff]
        %v7605 = vld [vmem:[#allocation2 + $0x70] sm:$0xff]
        %v7606 = vld [vmem:[#allocation2 + $0x88] sm:$0xff]
        %v7607 = vld [vmem:[#allocation2 + $0x90] sm:$0xff]
        %v7608 = vld [vmem:[#allocation2 + $0xa8] sm:$0xff]
        %v7609 = vld [vmem:[#allocation2 + $0xb0] sm:$0xff]
        %v7610 = vld [vmem:[#allocation2 + $0xc8] sm:$0xff]
        %v7611 = vld [vmem:[#allocation2 + $0xd0] sm:$0xff]
        %v7612 = vld [vmem:[#allocation2 + $0xe8] sm:$0xff]
        %v7613 = vld [vmem:[#allocation2 + $0xf0] sm:$0xff]
        %v7614 = vld [vmem:[#allocation2 + $0x108] sm:$0xff]
        %v7615 = vld [vmem:[#allocation2 + $0x110] sm:$0xff]
        %v7616 = vld [vmem:[#allocation2 + $0x128] sm:$0xff]
        %v7617 = vld [vmem:[#allocation2 + $0x130] sm:$0xff]
        %v7618 = vld [vmem:[#allocation2 + $0x148] sm:$0xff]
        %v7619 = vld [vmem:[#allocation2 + $0x150] sm:$0xff]
        %v7620 = vld [vmem:[#allocation2 + $0x168] sm:$0xff]
        %v7621 = vld [vmem:[#allocation2 + $0x170] sm:$0xff]
        %v7622 = vld [vmem:[#allocation2 + $0x188] sm:$0xff]
        %v7623 = vld [vmem:[#allocation2 + $0x190] sm:$0xff]
        %v7624 = vld [vmem:[#allocation2 + $0x1a8] sm:$0xff]
        %v7625 = vld [vmem:[#allocation2 + $0x1b0] sm:$0xff]
        %v7626 = vld [vmem:[#allocation2 + $0x1c8] sm:$0xff]
        %v7627 = vld [vmem:[#allocation2 + $0x1d0] sm:$0xff]
        %v7628 = vld [vmem:[#allocation2 + $0x1e8] sm:$0xff]
        %v7629 = vld [vmem:[#allocation2 + $0x1f0] sm:$0xff]
        %s7630 = scalar_lea.vmem [#allocation6], 608
        %v7631 = vld [vmem:[%s7630] sm:$0xff]
        %v7632 = vld [vmem:[%s7630 + $0x8] sm:$0xff]
        %v7633 = vld [vmem:[%s7630 + $0x10] sm:$0xff]
        %v7634 = vld [vmem:[%s7630 + $0x18] sm:$0xff]
        %v7636 = vsel %vm470, %v7598, 0
        %v7639 = vsel %vm470, %v7599, 0
        %v7642 = vsel %vm470, %v7600, 0
        %v7645 = vsel %vm470, %v7601, 0
        %v7648 = vsel %vm470, %v7602, 0
        %v7651 = vsel %vm470, %v7603, 0
        %v7654 = vsel %vm470, %v7604, 0
        %v7657 = vsel %vm470, %v7605, 0
        %v7660 = vsel %vm470, %v7606, 0
        %v7663 = vsel %vm470, %v7607, 0
        %v7666 = vsel %vm470, %v7608, 0
        %v7669 = vsel %vm470, %v7609, 0
        %v7672 = vsel %vm470, %v7610, 0
        %v7675 = vsel %vm470, %v7611, 0
        %v7678 = vsel %vm470, %v7612, 0
        %v7681 = vsel %vm470, %v7613, 0
        %v7684 = vsel %vm470, %v7614, 0
        %v7687 = vsel %vm470, %v7615, 0
        %v7690 = vsel %vm470, %v7616, 0
        %v7693 = vsel %vm470, %v7617, 0
        %v7696 = vsel %vm470, %v7618, 0
        %v7699 = vsel %vm470, %v7619, 0
        %v7702 = vsel %vm470, %v7620, 0
        %v7705 = vsel %vm470, %v7621, 0
        %v7708 = vsel %vm470, %v7622, 0
        %v7711 = vsel %vm470, %v7623, 0
        %v7714 = vsel %vm470, %v7624, 0
        %v7717 = vsel %vm470, %v7625, 0
        %v7720 = vsel %vm470, %v7626, 0
        %v7723 = vsel %vm470, %v7627, 0
        %v7726 = vsel %vm470, %v7628, 0
        %v7729 = vsel %vm470, %v7629, 0
        %7731 = vmatprep.subr.mxu0 0.0
        %7732 = vmatpush1.msra.mxu0 %v7631
        %7733 = vmatprep.subr.mxu0 0.0
        %7734 = vmatpush1.msra.mxu0 %v7632
        %7735 = vmatprep.subr.mxu0 0.0
        %7736 = vmatpush1.msra.mxu0 %v7633
        %7737 = vmatprep.subr.mxu0 0.0
        %7738 = vmatpush1.msra.mxu0 %v7634
        %7739 = vmatprep.subr.mxu0 0.0
        %7740 = vmatpush1.msra.mxu0 0.0
        %7741 = vmatprep.subr.mxu0 0.0
        %7742 = vmatpush1.msra.mxu0 0.0
        %7743 = vmatprep.subr.mxu0 0.0
        %7744 = vmatpush1.msra.mxu0 0.0
        %7745 = vmatprep.subr.mxu0 0.0
        %7746 = vmatpush1.msra.mxu0 0.0
        %7747 = vmatprep.subr.mxu0 0.0
        %7748 = vmatpush1.msra.mxu0 0.0
        %7749 = vmatprep.subr.mxu0 0.0
        %7750 = vmatpush1.msra.mxu0 0.0
        %7751 = vmatprep.subr.mxu0 0.0
        %7752 = vmatpush1.msra.mxu0 0.0
        %7753 = vmatprep.subr.mxu0 0.0
        %7754 = vmatpush1.msra.mxu0 0.0
        %7755 = vmatprep.subr.mxu0 0.0
        %7756 = vmatpush1.msra.mxu0 0.0
        %7757 = vmatprep.subr.mxu0 0.0
        %7758 = vmatpush1.msra.mxu0 0.0
        %7759 = vmatprep.subr.mxu0 0.0
        %7760 = vmatpush1.msra.mxu0 0.0
        %7761 = vmatprep.subr.mxu0 0.0
        %7762 = vmatpush1.msra.mxu0 0.0
        %7763 = vmatprep.subr.mxu0 0.0
        %7764 = vmatpush1.msra.mxu0 0.0
        %7765 = vmatprep.subr.mxu0 0.0
        %7766 = vmatpush1.msra.mxu0 0.0
        %7767 = vmatprep.subr.mxu0 0.0
        %7768 = vmatpush1.msra.mxu0 0.0
        %7769 = vmatprep.subr.mxu0 0.0
        %7770 = vmatpush1.msra.mxu0 0.0
        %7771 = vmatprep.subr.mxu0 0.0
        %7772 = vmatpush1.msra.mxu0 0.0
        %7773 = vmatprep.subr.mxu0 0.0
        %7774 = vmatpush1.msra.mxu0 0.0
        %7775 = vmatprep.subr.mxu0 0.0
        %7776 = vmatpush1.msra.mxu0 0.0
        %7777 = vmatprep.subr.mxu0 0.0
        %7778 = vmatpush1.msra.mxu0 0.0
        %7779 = vmatprep.subr.mxu0 0.0
        %7780 = vmatpush1.msra.mxu0 0.0
        %7781 = vmatprep.subr.mxu0 0.0
        %7782 = vmatpush1.msra.mxu0 0.0
        %7783 = vmatprep.subr.mxu0 0.0
        %7784 = vmatpush1.msra.mxu0 0.0
        %7785 = vmatprep.subr.mxu0 0.0
        %7786 = vmatpush1.msra.mxu0 0.0
        %7787 = vmatprep.subr.mxu0 0.0
        %7788 = vmatpush1.msra.mxu0 0.0
        %7789 = vmatprep.subr.mxu0 0.0
        %7790 = vmatpush1.msra.mxu0 0.0
        %7791 = vmatprep.subr.mxu0 0.0
        %7792 = vmatpush1.msra.mxu0 0.0
        %7793 = vmatprep.subr.mxu0 0.0
        %7794 = vmatpush1.msra.mxu0 0.0
        %7795 = vmatprep.mubr.f32.mxu0 0.0
        %7796 = vmatmul.mubr.f32.gmra.mrb[0].mxu0 %v7636
        %v7797 = vpop.f32.mrb[0].mxu0
        %v7798 = vadd.f32 0.0, %v7797
        %v7799 = vpop.f32.mrb[0].mxu0
        %7800 = vmatprep.mubr.f32.mxu0 0.0
        %7801 = vmatmul.mubr.f32.gmra.mrb[0].mxu0 %v7639
        %v7802 = vpop.f32.mrb[0].mxu0
        %v7803 = vadd.f32 0.0, %v7802
        %v7804 = vpop.f32.mrb[0].mxu0
        %7805 = vmatprep.mubr.f32.mxu0 0.0
        %7806 = vmatmul.mubr.f32.gmra.mrb[0].mxu0 %v7642
        %v7807 = vpop.f32.mrb[0].mxu0
        %v7808 = vadd.f32 0.0, %v7807
        %v7809 = vpop.f32.mrb[0].mxu0
        %7810 = vmatprep.mubr.f32.mxu0 0.0
        %7811 = vmatmul.mubr.f32.gmra.mrb[0].mxu0 %v7645
        %v7812 = vpop.f32.mrb[0].mxu0
        %v7813 = vadd.f32 0.0, %v7812
        %v7814 = vpop.f32.mrb[0].mxu0
        %7815 = vmatprep.mubr.f32.mxu0 0.0
        %7816 = vmatmul.mubr.f32.gmra.mrb[0].mxu0 %v7648
        %v7817 = vpop.f32.mrb[0].mxu0
        %v7818 = vadd.f32 0.0, %v7817
        %v7819 = vpop.f32.mrb[0].mxu0
        %7820 = vmatprep.mubr.f32.mxu0 0.0
        %7821 = vmatmul.mubr.f32.gmra.mrb[0].mxu0 %v7651
        %v7822 = vpop.f32.mrb[0].mxu0
        %v7823 = vadd.f32 0.0, %v7822
        %v7824 = vpop.f32.mrb[0].mxu0
        %7825 = vmatprep.mubr.f32.mxu0 0.0
        %7826 = vmatmul.mubr.f32.gmra.mrb[0].mxu0 %v7654
        %v7827 = vpop.f32.mrb[0].mxu0
        %v7828 = vadd.f32 0.0, %v7827
        %v7829 = vpop.f32.mrb[0].mxu0
        %7830 = vmatprep.mubr.f32.mxu0 0.0
        %7831 = vmatmul.mubr.f32.gmra.mrb[0].mxu0 %v7657
        %v7832 = vpop.f32.mrb[0].mxu0
        %v7833 = vadd.f32 0.0, %v7832
        %v7834 = vpop.f32.mrb[0].mxu0
        %7835 = vmatprep.mubr.f32.mxu0 0.0
        %7836 = vmatmul.mubr.f32.gmra.mrb[0].mxu0 %v7660
        %v7837 = vpop.f32.mrb[0].mxu0
        %v7838 = vadd.f32 0.0, %v7837
        %v7839 = vpop.f32.mrb[0].mxu0
        %7840 = vmatprep.mubr.f32.mxu0 0.0
        %7841 = vmatmul.mubr.f32.gmra.mrb[0].mxu0 %v7663
        %v7842 = vpop.f32.mrb[0].mxu0
        %v7843 = vadd.f32 0.0, %v7842
        %v7844 = vpop.f32.mrb[0].mxu0
        %7845 = vmatprep.mubr.f32.mxu0 0.0
        %7846 = vmatmul.mubr.f32.gmra.mrb[0].mxu0 %v7666
        %v7847 = vpop.f32.mrb[0].mxu0
        %v7848 = vadd.f32 0.0, %v7847
        %v7849 = vpop.f32.mrb[0].mxu0
        %7850 = vmatprep.mubr.f32.mxu0 0.0
        %7851 = vmatmul.mubr.f32.gmra.mrb[0].mxu0 %v7669
        %v7852 = vpop.f32.mrb[0].mxu0
        %v7853 = vadd.f32 0.0, %v7852
        %v7854 = vpop.f32.mrb[0].mxu0
        %7855 = vmatprep.mubr.f32.mxu0 0.0
        %7856 = vmatmul.mubr.f32.gmra.mrb[0].mxu0 %v7672
        %v7857 = vpop.f32.mrb[0].mxu0
        %v7858 = vadd.f32 0.0, %v7857
        %v7859 = vpop.f32.mrb[0].mxu0
        %7860 = vmatprep.mubr.f32.mxu0 0.0
        %7861 = vmatmul.mubr.f32.gmra.mrb[0].mxu0 %v7675
        %v7862 = vpop.f32.mrb[0].mxu0
        %v7863 = vadd.f32 0.0, %v7862
        %v7864 = vpop.f32.mrb[0].mxu0
        %7865 = vmatprep.mubr.f32.mxu0 0.0
        %7866 = vmatmul.mubr.f32.gmra.mrb[0].mxu0 %v7678
        %v7867 = vpop.f32.mrb[0].mxu0
        %v7868 = vadd.f32 0.0, %v7867
        %v7869 = vpop.f32.mrb[0].mxu0
        %7870 = vmatprep.mubr.f32.mxu0 0.0
        %7871 = vmatmul.mubr.f32.gmra.mrb[0].mxu0 %v7681
        %v7872 = vpop.f32.mrb[0].mxu0
        %v7873 = vadd.f32 0.0, %v7872
        %v7874 = vpop.f32.mrb[0].mxu0
        %7875 = vmatprep.mubr.f32.mxu0 0.0
        %7876 = vmatmul.mubr.f32.gmra.mrb[0].mxu0 %v7684
        %v7877 = vpop.f32.mrb[0].mxu0
        %v7878 = vadd.f32 0.0, %v7877
        %v7879 = vpop.f32.mrb[0].mxu0
        %7880 = vmatprep.mubr.f32.mxu0 0.0
        %7881 = vmatmul.mubr.f32.gmra.mrb[0].mxu0 %v7687
        %v7882 = vpop.f32.mrb[0].mxu0
        %v7883 = vadd.f32 0.0, %v7882
        %v7884 = vpop.f32.mrb[0].mxu0
        %7885 = vmatprep.mubr.f32.mxu0 0.0
        %7886 = vmatmul.mubr.f32.gmra.mrb[0].mxu0 %v7690
        %v7887 = vpop.f32.mrb[0].mxu0
        %v7888 = vadd.f32 0.0, %v7887
        %v7889 = vpop.f32.mrb[0].mxu0
        %7890 = vmatprep.mubr.f32.mxu0 0.0
        %7891 = vmatmul.mubr.f32.gmra.mrb[0].mxu0 %v7693
        %v7892 = vpop.f32.mrb[0].mxu0
        %v7893 = vadd.f32 0.0, %v7892
        %v7894 = vpop.f32.mrb[0].mxu0
        %7895 = vmatprep.mubr.f32.mxu0 0.0
        %7896 = vmatmul.mubr.f32.gmra.mrb[0].mxu0 %v7696
        %v7897 = vpop.f32.mrb[0].mxu0
        %v7898 = vadd.f32 0.0, %v7897
        %v7899 = vpop.f32.mrb[0].mxu0
        %7900 = vmatprep.mubr.f32.mxu0 0.0
        %7901 = vmatmul.mubr.f32.gmra.mrb[0].mxu0 %v7699
        %v7902 = vpop.f32.mrb[0].mxu0
        %v7903 = vadd.f32 0.0, %v7902
        %v7904 = vpop.f32.mrb[0].mxu0
        %7905 = vmatprep.mubr.f32.mxu0 0.0
        %7906 = vmatmul.mubr.f32.gmra.mrb[0].mxu0 %v7702
        %v7907 = vpop.f32.mrb[0].mxu0
        %v7908 = vadd.f32 0.0, %v7907
        %v7909 = vpop.f32.mrb[0].mxu0
        %7910 = vmatprep.mubr.f32.mxu0 0.0
        %7911 = vmatmul.mubr.f32.gmra.mrb[0].mxu0 %v7705
        %v7912 = vpop.f32.mrb[0].mxu0
        %v7913 = vadd.f32 0.0, %v7912
        %v7914 = vpop.f32.mrb[0].mxu0
        %7915 = vmatprep.mubr.f32.mxu0 0.0
        %7916 = vmatmul.mubr.f32.gmra.mrb[0].mxu0 %v7708
        %v7917 = vpop.f32.mrb[0].mxu0
        %v7918 = vadd.f32 0.0, %v7917
        %v7919 = vpop.f32.mrb[0].mxu0
        %7920 = vmatprep.mubr.f32.mxu0 0.0
        %7921 = vmatmul.mubr.f32.gmra.mrb[0].mxu0 %v7711
        %v7922 = vpop.f32.mrb[0].mxu0
        %v7923 = vadd.f32 0.0, %v7922
        %v7924 = vpop.f32.mrb[0].mxu0
        %7925 = vmatprep.mubr.f32.mxu0 0.0
        %7926 = vmatmul.mubr.f32.gmra.mrb[0].mxu0 %v7714
        %v7927 = vpop.f32.mrb[0].mxu0
        %v7928 = vadd.f32 0.0, %v7927
        %v7929 = vpop.f32.mrb[0].mxu0
        %7930 = vmatprep.mubr.f32.mxu0 0.0
        %7931 = vmatmul.mubr.f32.gmra.mrb[0].mxu0 %v7717
        %v7932 = vpop.f32.mrb[0].mxu0
        %v7933 = vadd.f32 0.0, %v7932
        %v7934 = vpop.f32.mrb[0].mxu0
        %7935 = vmatprep.mubr.f32.mxu0 0.0
        %7936 = vmatmul.mubr.f32.gmra.mrb[0].mxu0 %v7720
        %v7937 = vpop.f32.mrb[0].mxu0
        %v7938 = vadd.f32 0.0, %v7937
        %v7939 = vpop.f32.mrb[0].mxu0
        %7940 = vmatprep.mubr.f32.mxu0 0.0
        %7941 = vmatmul.mubr.f32.gmra.mrb[0].mxu0 %v7723
        %v7942 = vpop.f32.mrb[0].mxu0
        %v7943 = vadd.f32 0.0, %v7942
        %v7944 = vpop.f32.mrb[0].mxu0
        %7945 = vmatprep.mubr.f32.mxu0 0.0
        %7946 = vmatmul.mubr.f32.gmra.mrb[0].mxu0 %v7726
        %v7947 = vpop.f32.mrb[0].mxu0
        %v7948 = vadd.f32 0.0, %v7947
        %v7949 = vpop.f32.mrb[0].mxu0
        %7950 = vmatprep.mubr.f32.mxu0 0.0
        %7951 = vmatmul.mubr.f32.gmra.mrb[0].mxu0 %v7729
        %v7952 = vpop.f32.mrb[0].mxu0
        %v7953 = vadd.f32 0.0, %v7952
        %v7954 = vpop.f32.mrb[0].mxu0
        %7955 = vdwg.mxu0
        %v7957 = vsel %vm470, %v7561, 0
        %v7960 = vsel %vm470, %v7562, 0
        %v7963 = vsel %vm470, %v7563, 0
        %v7966 = vsel %vm470, %v7564, 0
        %v7969 = vsel %vm470, %v7565, 0
        %v7972 = vsel %vm470, %v7566, 0
        %v7975 = vsel %vm470, %v7567, 0
        %v7978 = vsel %vm470, %v7568, 0
        %v7981 = vsel %vm470, %v7569, 0
        %v7984 = vsel %vm470, %v7570, 0
        %v7987 = vsel %vm470, %v7571, 0
        %v7990 = vsel %vm470, %v7572, 0
        %v7993 = vsel %vm470, %v7573, 0
        %v7996 = vsel %vm470, %v7574, 0
        %v7999 = vsel %vm470, %v7575, 0
        %v8002 = vsel %vm470, %v7576, 0
        %v8005 = vsel %vm470, %v7577, 0
        %v8008 = vsel %vm470, %v7578, 0
        %v8011 = vsel %vm470, %v7579, 0
        %v8014 = vsel %vm470, %v7580, 0
        %v8017 = vsel %vm470, %v7581, 0
        %v8020 = vsel %vm470, %v7582, 0
        %v8023 = vsel %vm470, %v7583, 0
        %v8026 = vsel %vm470, %v7584, 0
        %v8029 = vsel %vm470, %v7585, 0
        %v8032 = vsel %vm470, %v7586, 0
        %v8035 = vsel %vm470, %v7587, 0
        %v8038 = vsel %vm470, %v7588, 0
        %v8041 = vsel %vm470, %v7589, 0
        %v8044 = vsel %vm470, %v7590, 0
        %v8047 = vsel %vm470, %v7591, 0
        %v8050 = vsel %vm470, %v7592, 0
        %8052 = vmatprep.subr.mxu0 0.0
        %8053 = vmatpush1.msra.mxu0 %v7594
        %8054 = vmatprep.subr.mxu0 0.0
        %8055 = vmatpush1.msra.mxu0 %v7595
        %8056 = vmatprep.subr.mxu0 0.0
        %8057 = vmatpush1.msra.mxu0 %v7596
        %8058 = vmatprep.subr.mxu0 0.0
        %8059 = vmatpush1.msra.mxu0 %v7597
        %8060 = vmatprep.subr.mxu0 0.0
        %8061 = vmatpush1.msra.mxu0 0.0
        %8062 = vmatprep.subr.mxu0 0.0
        %8063 = vmatpush1.msra.mxu0 0.0
        %8064 = vmatprep.subr.mxu0 0.0
        %8065 = vmatpush1.msra.mxu0 0.0
        %8066 = vmatprep.subr.mxu0 0.0
        %8067 = vmatpush1.msra.mxu0 0.0
        %8068 = vmatprep.subr.mxu0 0.0
        %8069 = vmatpush1.msra.mxu0 0.0
        %8070 = vmatprep.subr.mxu0 0.0
        %8071 = vmatpush1.msra.mxu0 0.0
        %8072 = vmatprep.subr.mxu0 0.0
        %8073 = vmatpush1.msra.mxu0 0.0
        %8074 = vmatprep.subr.mxu0 0.0
        %8075 = vmatpush1.msra.mxu0 0.0
        %8076 = vmatprep.subr.mxu0 0.0
        %8077 = vmatpush1.msra.mxu0 0.0
        %8078 = vmatprep.subr.mxu0 0.0
        %8079 = vmatpush1.msra.mxu0 0.0
        %8080 = vmatprep.subr.mxu0 0.0
        %8081 = vmatpush1.msra.mxu0 0.0
        %8082 = vmatprep.subr.mxu0 0.0
        %8083 = vmatpush1.msra.mxu0 0.0
        %8084 = vmatprep.subr.mxu0 0.0
        %8085 = vmatpush1.msra.mxu0 0.0
        %8086 = vmatprep.subr.mxu0 0.0
        %8087 = vmatpush1.msra.mxu0 0.0
        %8088 = vmatprep.subr.mxu0 0.0
        %8089 = vmatpush1.msra.mxu0 0.0
        %8090 = vmatprep.subr.mxu0 0.0
        %8091 = vmatpush1.msra.mxu0 0.0
        %8092 = vmatprep.subr.mxu0 0.0
        %8093 = vmatpush1.msra.mxu0 0.0
        %8094 = vmatprep.subr.mxu0 0.0
        %8095 = vmatpush1.msra.mxu0 0.0
        %8096 = vmatprep.subr.mxu0 0.0
        %8097 = vmatpush1.msra.mxu0 0.0
        %8098 = vmatprep.subr.mxu0 0.0
        %8099 = vmatpush1.msra.mxu0 0.0
        %8100 = vmatprep.subr.mxu0 0.0
        %8101 = vmatpush1.msra.mxu0 0.0
        %8102 = vmatprep.subr.mxu0 0.0
        %8103 = vmatpush1.msra.mxu0 0.0
        %8104 = vmatprep.subr.mxu0 0.0
        %8105 = vmatpush1.msra.mxu0 0.0
        %8106 = vmatprep.subr.mxu0 0.0
        %8107 = vmatpush1.msra.mxu0 0.0
        %8108 = vmatprep.subr.mxu0 0.0
        %8109 = vmatpush1.msra.mxu0 0.0
        %8110 = vmatprep.subr.mxu0 0.0
        %8111 = vmatpush1.msra.mxu0 0.0
        %8112 = vmatprep.subr.mxu0 0.0
        %8113 = vmatpush1.msra.mxu0 0.0
        %8114 = vmatprep.subr.mxu0 0.0
        %8115 = vmatpush1.msra.mxu0 0.0
        %8116 = vmatprep.mubr.f32.mxu0 0.0
        %8117 = vmatmul.mubr.f32.gmra.mrb[0].mxu0 %v7957
        %v8118 = vpop.f32.mrb[0].mxu0
        %v8119 = vadd.f32 %v7798, %v8118
        %v8120 = vpop.f32.mrb[0].mxu0
        %8121 = vmatprep.mubr.f32.mxu0 0.0
        %8122 = vmatmul.mubr.f32.gmra.mrb[0].mxu0 %v7960
        %v8123 = vpop.f32.mrb[0].mxu0
        %v8124 = vadd.f32 %v7803, %v8123
        %v8125 = vpop.f32.mrb[0].mxu0
        %8126 = vmatprep.mubr.f32.mxu0 0.0
        %8127 = vmatmul.mubr.f32.gmra.mrb[0].mxu0 %v7963
        %v8128 = vpop.f32.mrb[0].mxu0
        %v8129 = vadd.f32 %v7808, %v8128
        %v8130 = vpop.f32.mrb[0].mxu0
        %8131 = vmatprep.mubr.f32.mxu0 0.0
        %8132 = vmatmul.mubr.f32.gmra.mrb[0].mxu0 %v7966
        %v8133 = vpop.f32.mrb[0].mxu0
        %v8134 = vadd.f32 %v7813, %v8133
        %v8135 = vpop.f32.mrb[0].mxu0
        %8136 = vmatprep.mubr.f32.mxu0 0.0
        %8137 = vmatmul.mubr.f32.gmra.mrb[0].mxu0 %v7969
        %v8138 = vpop.f32.mrb[0].mxu0
        %v8139 = vadd.f32 %v7818, %v8138
        %v8140 = vpop.f32.mrb[0].mxu0
        %8141 = vmatprep.mubr.f32.mxu0 0.0
        %8142 = vmatmul.mubr.f32.gmra.mrb[0].mxu0 %v7972
        %v8143 = vpop.f32.mrb[0].mxu0
        %v8144 = vadd.f32 %v7823, %v8143
        %v8145 = vpop.f32.mrb[0].mxu0
        %8146 = vmatprep.mubr.f32.mxu0 0.0
        %8147 = vmatmul.mubr.f32.gmra.mrb[0].mxu0 %v7975
        %v8148 = vpop.f32.mrb[0].mxu0
        %v8149 = vadd.f32 %v7828, %v8148
        %v8150 = vpop.f32.mrb[0].mxu0
        %8151 = vmatprep.mubr.f32.mxu0 0.0
        %8152 = vmatmul.mubr.f32.gmra.mrb[0].mxu0 %v7978
        %v8153 = vpop.f32.mrb[0].mxu0
        %v8154 = vadd.f32 %v7833, %v8153
        %v8155 = vpop.f32.mrb[0].mxu0
        %8156 = vmatprep.mubr.f32.mxu0 0.0
        %8157 = vmatmul.mubr.f32.gmra.mrb[0].mxu0 %v7981
        %v8158 = vpop.f32.mrb[0].mxu0
        %v8159 = vadd.f32 %v7838, %v8158
        %v8160 = vpop.f32.mrb[0].mxu0
        %8161 = vmatprep.mubr.f32.mxu0 0.0
        %8162 = vmatmul.mubr.f32.gmra.mrb[0].mxu0 %v7984
        %v8163 = vpop.f32.mrb[0].mxu0
        %v8164 = vadd.f32 %v7843, %v8163
        %v8165 = vpop.f32.mrb[0].mxu0
        %8166 = vmatprep.mubr.f32.mxu0 0.0
        %8167 = vmatmul.mubr.f32.gmra.mrb[0].mxu0 %v7987
        %v8168 = vpop.f32.mrb[0].mxu0
        %v8169 = vadd.f32 %v7848, %v8168
        %v8170 = vpop.f32.mrb[0].mxu0
        %8171 = vmatprep.mubr.f32.mxu0 0.0
        %8172 = vmatmul.mubr.f32.gmra.mrb[0].mxu0 %v7990
        %v8173 = vpop.f32.mrb[0].mxu0
        %v8174 = vadd.f32 %v7853, %v8173
        %v8175 = vpop.f32.mrb[0].mxu0
        %8176 = vmatprep.mubr.f32.mxu0 0.0
        %8177 = vmatmul.mubr.f32.gmra.mrb[0].mxu0 %v7993
        %v8178 = vpop.f32.mrb[0].mxu0
        %v8179 = vadd.f32 %v7858, %v8178
        %v8180 = vpop.f32.mrb[0].mxu0
        %8181 = vmatprep.mubr.f32.mxu0 0.0
        %8182 = vmatmul.mubr.f32.gmra.mrb[0].mxu0 %v7996
        %v8183 = vpop.f32.mrb[0].mxu0
        %v8184 = vadd.f32 %v7863, %v8183
        %v8185 = vpop.f32.mrb[0].mxu0
        %8186 = vmatprep.mubr.f32.mxu0 0.0
        %8187 = vmatmul.mubr.f32.gmra.mrb[0].mxu0 %v7999
        %v8188 = vpop.f32.mrb[0].mxu0
        %v8189 = vadd.f32 %v7868, %v8188
        %v8190 = vpop.f32.mrb[0].mxu0
        %8191 = vmatprep.mubr.f32.mxu0 0.0
        %8192 = vmatmul.mubr.f32.gmra.mrb[0].mxu0 %v8002
        %v8193 = vpop.f32.mrb[0].mxu0
        %v8194 = vadd.f32 %v7873, %v8193
        %v8195 = vpop.f32.mrb[0].mxu0
        %8196 = vmatprep.mubr.f32.mxu0 0.0
        %8197 = vmatmul.mubr.f32.gmra.mrb[0].mxu0 %v8005
        %v8198 = vpop.f32.mrb[0].mxu0
        %v8199 = vadd.f32 %v7878, %v8198
        %v8200 = vpop.f32.mrb[0].mxu0
        %8201 = vmatprep.mubr.f32.mxu0 0.0
        %8202 = vmatmul.mubr.f32.gmra.mrb[0].mxu0 %v8008
        %v8203 = vpop.f32.mrb[0].mxu0
        %v8204 = vadd.f32 %v7883, %v8203
        %v8205 = vpop.f32.mrb[0].mxu0
        %8206 = vmatprep.mubr.f32.mxu0 0.0
        %8207 = vmatmul.mubr.f32.gmra.mrb[0].mxu0 %v8011
        %v8208 = vpop.f32.mrb[0].mxu0
        %v8209 = vadd.f32 %v7888, %v8208
        %v8210 = vpop.f32.mrb[0].mxu0
        %8211 = vmatprep.mubr.f32.mxu0 0.0
        %8212 = vmatmul.mubr.f32.gmra.mrb[0].mxu0 %v8014
        %v8213 = vpop.f32.mrb[0].mxu0
        %v8214 = vadd.f32 %v7893, %v8213
        %v8215 = vpop.f32.mrb[0].mxu0
        %8216 = vmatprep.mubr.f32.mxu0 0.0
        %8217 = vmatmul.mubr.f32.gmra.mrb[0].mxu0 %v8017
        %v8218 = vpop.f32.mrb[0].mxu0
        %v8219 = vadd.f32 %v7898, %v8218
        %v8220 = vpop.f32.mrb[0].mxu0
        %8221 = vmatprep.mubr.f32.mxu0 0.0
        %8222 = vmatmul.mubr.f32.gmra.mrb[0].mxu0 %v8020
        %v8223 = vpop.f32.mrb[0].mxu0
        %v8224 = vadd.f32 %v7903, %v8223
        %v8225 = vpop.f32.mrb[0].mxu0
        %8226 = vmatprep.mubr.f32.mxu0 0.0
        %8227 = vmatmul.mubr.f32.gmra.mrb[0].mxu0 %v8023
        %v8228 = vpop.f32.mrb[0].mxu0
        %v8229 = vadd.f32 %v7908, %v8228
        %v8230 = vpop.f32.mrb[0].mxu0
        %8231 = vmatprep.mubr.f32.mxu0 0.0
        %8232 = vmatmul.mubr.f32.gmra.mrb[0].mxu0 %v8026
        %v8233 = vpop.f32.mrb[0].mxu0
        %v8234 = vadd.f32 %v7913, %v8233
        %v8235 = vpop.f32.mrb[0].mxu0
        %8236 = vmatprep.mubr.f32.mxu0 0.0
        %8237 = vmatmul.mubr.f32.gmra.mrb[0].mxu0 %v8029
        %v8238 = vpop.f32.mrb[0].mxu0
        %v8239 = vadd.f32 %v7918, %v8238
        %v8240 = vpop.f32.mrb[0].mxu0
        %8241 = vmatprep.mubr.f32.mxu0 0.0
        %8242 = vmatmul.mubr.f32.gmra.mrb[0].mxu0 %v8032
        %v8243 = vpop.f32.mrb[0].mxu0
        %v8244 = vadd.f32 %v7923, %v8243
        %v8245 = vpop.f32.mrb[0].mxu0
        %8246 = vmatprep.mubr.f32.mxu0 0.0
        %8247 = vmatmul.mubr.f32.gmra.mrb[0].mxu0 %v8035
        %v8248 = vpop.f32.mrb[0].mxu0
        %v8249 = vadd.f32 %v7928, %v8248
        %v8250 = vpop.f32.mrb[0].mxu0
        %8251 = vmatprep.mubr.f32.mxu0 0.0
        %8252 = vmatmul.mubr.f32.gmra.mrb[0].mxu0 %v8038
        %v8253 = vpop.f32.mrb[0].mxu0
        %v8254 = vadd.f32 %v7933, %v8253
        %v8255 = vpop.f32.mrb[0].mxu0
        %8256 = vmatprep.mubr.f32.mxu0 0.0
        %8257 = vmatmul.mubr.f32.gmra.mrb[0].mxu0 %v8041
        %v8258 = vpop.f32.mrb[0].mxu0
        %v8259 = vadd.f32 %v7938, %v8258
        %v8260 = vpop.f32.mrb[0].mxu0
        %8261 = vmatprep.mubr.f32.mxu0 0.0
        %8262 = vmatmul.mubr.f32.gmra.mrb[0].mxu0 %v8044
        %v8263 = vpop.f32.mrb[0].mxu0
        %v8264 = vadd.f32 %v7943, %v8263
        %v8265 = vpop.f32.mrb[0].mxu0
        %8266 = vmatprep.mubr.f32.mxu0 0.0
        %8267 = vmatmul.mubr.f32.gmra.mrb[0].mxu0 %v8047
        %v8268 = vpop.f32.mrb[0].mxu0
        %v8269 = vadd.f32 %v7948, %v8268
        %v8270 = vpop.f32.mrb[0].mxu0
        %8271 = vmatprep.mubr.f32.mxu0 0.0
        %8272 = vmatmul.mubr.f32.gmra.mrb[0].mxu0 %v8050
        %v8273 = vpop.f32.mrb[0].mxu0
        %v8274 = vadd.f32 %v7953, %v8273
        %v8275 = vpop.f32.mrb[0].mxu0
        %8276 = vdwg.mxu0
        %v8277 = vld [vmem:[#allocation2 + $0x9] sm:$0xff]
        %v8278 = vld [vmem:[#allocation2 + $0x11] sm:$0xff]
        %v8279 = vld [vmem:[#allocation2 + $0x29] sm:$0xff]
        %v8280 = vld [vmem:[#allocation2 + $0x31] sm:$0xff]
        %v8281 = vld [vmem:[#allocation2 + $0x49] sm:$0xff]
        %v8282 = vld [vmem:[#allocation2 + $0x51] sm:$0xff]
        %v8283 = vld [vmem:[#allocation2 + $0x69] sm:$0xff]
        %v8284 = vld [vmem:[#allocation2 + $0x71] sm:$0xff]
        %v8285 = vld [vmem:[#allocation2 + $0x89] sm:$0xff]
        %v8286 = vld [vmem:[#allocation2 + $0x91] sm:$0xff]
        %v8287 = vld [vmem:[#allocation2 + $0xa9] sm:$0xff]
        %v8288 = vld [vmem:[#allocation2 + $0xb1] sm:$0xff]
        %v8289 = vld [vmem:[#allocation2 + $0xc9] sm:$0xff]
        %v8290 = vld [vmem:[#allocation2 + $0xd1] sm:$0xff]
        %v8291 = vld [vmem:[#allocation2 + $0xe9] sm:$0xff]
        %v8292 = vld [vmem:[#allocation2 + $0xf1] sm:$0xff]
        %v8293 = vld [vmem:[#allocation2 + $0x109] sm:$0xff]
        %v8294 = vld [vmem:[#allocation2 + $0x111] sm:$0xff]
        %v8295 = vld [vmem:[#allocation2 + $0x129] sm:$0xff]
        %v8296 = vld [vmem:[#allocation2 + $0x131] sm:$0xff]
        %v8297 = vld [vmem:[#allocation2 + $0x149] sm:$0xff]
        %v8298 = vld [vmem:[#allocation2 + $0x151] sm:$0xff]
        %v8299 = vld [vmem:[#allocation2 + $0x169] sm:$0xff]
        %v8300 = vld [vmem:[#allocation2 + $0x171] sm:$0xff]
        %v8301 = vld [vmem:[#allocation2 + $0x189] sm:$0xff]
        %v8302 = vld [vmem:[#allocation2 + $0x191] sm:$0xff]
        %v8303 = vld [vmem:[#allocation2 + $0x1a9] sm:$0xff]
        %v8304 = vld [vmem:[#allocation2 + $0x1b1] sm:$0xff]
        %v8305 = vld [vmem:[#allocation2 + $0x1c9] sm:$0xff]
        %v8306 = vld [vmem:[#allocation2 + $0x1d1] sm:$0xff]
        %v8307 = vld [vmem:[#allocation2 + $0x1e9] sm:$0xff]
        %v8308 = vld [vmem:[#allocation2 + $0x1f1] sm:$0xff]
        %s8309 = scalar_lea.vmem [#allocation6], 640
        %v8310 = vld [vmem:[%s8309] sm:$0xff]
        %v8311 = vld [vmem:[%s8309 + $0x8] sm:$0xff]
        %v8312 = vld [vmem:[%s8309 + $0x10] sm:$0xff]
        %v8313 = vld [vmem:[%s8309 + $0x18] sm:$0xff]
        %v8315 = vsel %vm470, %v8277, 0
        %v8318 = vsel %vm470, %v8278, 0
        %v8321 = vsel %vm470, %v8279, 0
        %v8324 = vsel %vm470, %v8280, 0
        %v8327 = vsel %vm470, %v8281, 0
        %v8330 = vsel %vm470, %v8282, 0
        %v8333 = vsel %vm470, %v8283, 0
        %v8336 = vsel %vm470, %v8284, 0
        %v8339 = vsel %vm470, %v8285, 0
        %v8342 = vsel %vm470, %v8286, 0
        %v8345 = vsel %vm470, %v8287, 0
        %v8348 = vsel %vm470, %v8288, 0
        %v8351 = vsel %vm470, %v8289, 0
        %v8354 = vsel %vm470, %v8290, 0
        %v8357 = vsel %vm470, %v8291, 0
        %v8360 = vsel %vm470, %v8292, 0
        %v8363 = vsel %vm470, %v8293, 0
        %v8366 = vsel %vm470, %v8294, 0
        %v8369 = vsel %vm470, %v8295, 0
        %v8372 = vsel %vm470, %v8296, 0
        %v8375 = vsel %vm470, %v8297, 0
        %v8378 = vsel %vm470, %v8298, 0
        %v8381 = vsel %vm470, %v8299, 0
        %v8384 = vsel %vm470, %v8300, 0
        %v8387 = vsel %vm470, %v8301, 0
        %v8390 = vsel %vm470, %v8302, 0
        %v8393 = vsel %vm470, %v8303, 0
        %v8396 = vsel %vm470, %v8304, 0
        %v8399 = vsel %vm470, %v8305, 0
        %v8402 = vsel %vm470, %v8306, 0
        %v8405 = vsel %vm470, %v8307, 0
        %v8408 = vsel %vm470, %v8308, 0
        %8410 = vmatprep.subr.mxu0 0.0
        %8411 = vmatpush1.msra.mxu0 %v8310
        %8412 = vmatprep.subr.mxu0 0.0
        %8413 = vmatpush1.msra.mxu0 %v8311
        %8414 = vmatprep.subr.mxu0 0.0
        %8415 = vmatpush1.msra.mxu0 %v8312
        %8416 = vmatprep.subr.mxu0 0.0
        %8417 = vmatpush1.msra.mxu0 %v8313
        %8418 = vmatprep.subr.mxu0 0.0
        %8419 = vmatpush1.msra.mxu0 0.0
        %8420 = vmatprep.subr.mxu0 0.0
        %8421 = vmatpush1.msra.mxu0 0.0
        %8422 = vmatprep.subr.mxu0 0.0
        %8423 = vmatpush1.msra.mxu0 0.0
        %8424 = vmatprep.subr.mxu0 0.0
        %8425 = vmatpush1.msra.mxu0 0.0
        %8426 = vmatprep.subr.mxu0 0.0
        %8427 = vmatpush1.msra.mxu0 0.0
        %8428 = vmatprep.subr.mxu0 0.0
        %8429 = vmatpush1.msra.mxu0 0.0
        %8430 = vmatprep.subr.mxu0 0.0
        %8431 = vmatpush1.msra.mxu0 0.0
        %8432 = vmatprep.subr.mxu0 0.0
        %8433 = vmatpush1.msra.mxu0 0.0
        %8434 = vmatprep.subr.mxu0 0.0
        %8435 = vmatpush1.msra.mxu0 0.0
        %8436 = vmatprep.subr.mxu0 0.0
        %8437 = vmatpush1.msra.mxu0 0.0
        %8438 = vmatprep.subr.mxu0 0.0
        %8439 = vmatpush1.msra.mxu0 0.0
        %8440 = vmatprep.subr.mxu0 0.0
        %8441 = vmatpush1.msra.mxu0 0.0
        %8442 = vmatprep.subr.mxu0 0.0
        %8443 = vmatpush1.msra.mxu0 0.0
        %8444 = vmatprep.subr.mxu0 0.0
        %8445 = vmatpush1.msra.mxu0 0.0
        %8446 = vmatprep.subr.mxu0 0.0
        %8447 = vmatpush1.msra.mxu0 0.0
        %8448 = vmatprep.subr.mxu0 0.0
        %8449 = vmatpush1.msra.mxu0 0.0
        %8450 = vmatprep.subr.mxu0 0.0
        %8451 = vmatpush1.msra.mxu0 0.0
        %8452 = vmatprep.subr.mxu0 0.0
        %8453 = vmatpush1.msra.mxu0 0.0
        %8454 = vmatprep.subr.mxu0 0.0
        %8455 = vmatpush1.msra.mxu0 0.0
        %8456 = vmatprep.subr.mxu0 0.0
        %8457 = vmatpush1.msra.mxu0 0.0
        %8458 = vmatprep.subr.mxu0 0.0
        %8459 = vmatpush1.msra.mxu0 0.0
        %8460 = vmatprep.subr.mxu0 0.0
        %8461 = vmatpush1.msra.mxu0 0.0
        %8462 = vmatprep.subr.mxu0 0.0
        %8463 = vmatpush1.msra.mxu0 0.0
        %8464 = vmatprep.subr.mxu0 0.0
        %8465 = vmatpush1.msra.mxu0 0.0
        %8466 = vmatprep.subr.mxu0 0.0
        %8467 = vmatpush1.msra.mxu0 0.0
        %8468 = vmatprep.subr.mxu0 0.0
        %8469 = vmatpush1.msra.mxu0 0.0
        %8470 = vmatprep.subr.mxu0 0.0
        %8471 = vmatpush1.msra.mxu0 0.0
        %8472 = vmatprep.subr.mxu0 0.0
        %8473 = vmatpush1.msra.mxu0 0.0
        %8474 = vmatprep.mubr.f32.mxu0 0.0
        %8475 = vmatmul.mubr.f32.gmra.mrb[0].mxu0 %v8315
        %v8476 = vpop.f32.mrb[0].mxu0
        %v8477 = vadd.f32 0.0, %v8476
        %v8478 = vpop.f32.mrb[0].mxu0
        %8479 = vmatprep.mubr.f32.mxu0 0.0
        %8480 = vmatmul.mubr.f32.gmra.mrb[0].mxu0 %v8318
        %v8481 = vpop.f32.mrb[0].mxu0
        %v8482 = vadd.f32 0.0, %v8481
        %v8483 = vpop.f32.mrb[0].mxu0
        %8484 = vmatprep.mubr.f32.mxu0 0.0
        %8485 = vmatmul.mubr.f32.gmra.mrb[0].mxu0 %v8321
        %v8486 = vpop.f32.mrb[0].mxu0
        %v8487 = vadd.f32 0.0, %v8486
        %v8488 = vpop.f32.mrb[0].mxu0
        %8489 = vmatprep.mubr.f32.mxu0 0.0
        %8490 = vmatmul.mubr.f32.gmra.mrb[0].mxu0 %v8324
        %v8491 = vpop.f32.mrb[0].mxu0
        %v8492 = vadd.f32 0.0, %v8491
        %v8493 = vpop.f32.mrb[0].mxu0
        %8494 = vmatprep.mubr.f32.mxu0 0.0
        %8495 = vmatmul.mubr.f32.gmra.mrb[0].mxu0 %v8327
        %v8496 = vpop.f32.mrb[0].mxu0
        %v8497 = vadd.f32 0.0, %v8496
        %v8498 = vpop.f32.mrb[0].mxu0
        %8499 = vmatprep.mubr.f32.mxu0 0.0
        %8500 = vmatmul.mubr.f32.gmra.mrb[0].mxu0 %v8330
        %v8501 = vpop.f32.mrb[0].mxu0
        %v8502 = vadd.f32 0.0, %v8501
        %v8503 = vpop.f32.mrb[0].mxu0
        %8504 = vmatprep.mubr.f32.mxu0 0.0
        %8505 = vmatmul.mubr.f32.gmra.mrb[0].mxu0 %v8333
        %v8506 = vpop.f32.mrb[0].mxu0
        %v8507 = vadd.f32 0.0, %v8506
        %v8508 = vpop.f32.mrb[0].mxu0
        %8509 = vmatprep.mubr.f32.mxu0 0.0
        %8510 = vmatmul.mubr.f32.gmra.mrb[0].mxu0 %v8336
        %v8511 = vpop.f32.mrb[0].mxu0
        %v8512 = vadd.f32 0.0, %v8511
        %v8513 = vpop.f32.mrb[0].mxu0
        %8514 = vmatprep.mubr.f32.mxu0 0.0
        %8515 = vmatmul.mubr.f32.gmra.mrb[0].mxu0 %v8339
        %v8516 = vpop.f32.mrb[0].mxu0
        %v8517 = vadd.f32 0.0, %v8516
        %v8518 = vpop.f32.mrb[0].mxu0
        %8519 = vmatprep.mubr.f32.mxu0 0.0
        %8520 = vmatmul.mubr.f32.gmra.mrb[0].mxu0 %v8342
        %v8521 = vpop.f32.mrb[0].mxu0
        %v8522 = vadd.f32 0.0, %v8521
        %v8523 = vpop.f32.mrb[0].mxu0
        %8524 = vmatprep.mubr.f32.mxu0 0.0
        %8525 = vmatmul.mubr.f32.gmra.mrb[0].mxu0 %v8345
        %v8526 = vpop.f32.mrb[0].mxu0
        %v8527 = vadd.f32 0.0, %v8526
        %v8528 = vpop.f32.mrb[0].mxu0
        %8529 = vmatprep.mubr.f32.mxu0 0.0
        %8530 = vmatmul.mubr.f32.gmra.mrb[0].mxu0 %v8348
        %v8531 = vpop.f32.mrb[0].mxu0
        %v8532 = vadd.f32 0.0, %v8531
        %v8533 = vpop.f32.mrb[0].mxu0
        %8534 = vmatprep.mubr.f32.mxu0 0.0
        %8535 = vmatmul.mubr.f32.gmra.mrb[0].mxu0 %v8351
        %v8536 = vpop.f32.mrb[0].mxu0
        %v8537 = vadd.f32 0.0, %v8536
        %v8538 = vpop.f32.mrb[0].mxu0
        %8539 = vmatprep.mubr.f32.mxu0 0.0
        %8540 = vmatmul.mubr.f32.gmra.mrb[0].mxu0 %v8354
        %v8541 = vpop.f32.mrb[0].mxu0
        %v8542 = vadd.f32 0.0, %v8541
        %v8543 = vpop.f32.mrb[0].mxu0
        %8544 = vmatprep.mubr.f32.mxu0 0.0
        %8545 = vmatmul.mubr.f32.gmra.mrb[0].mxu0 %v8357
        %v8546 = vpop.f32.mrb[0].mxu0
        %v8547 = vadd.f32 0.0, %v8546
        %v8548 = vpop.f32.mrb[0].mxu0
        %8549 = vmatprep.mubr.f32.mxu0 0.0
        %8550 = vmatmul.mubr.f32.gmra.mrb[0].mxu0 %v8360
        %v8551 = vpop.f32.mrb[0].mxu0
        %v8552 = vadd.f32 0.0, %v8551
        %v8553 = vpop.f32.mrb[0].mxu0
        %8554 = vmatprep.mubr.f32.mxu0 0.0
        %8555 = vmatmul.mubr.f32.gmra.mrb[0].mxu0 %v8363
        %v8556 = vpop.f32.mrb[0].mxu0
        %v8557 = vadd.f32 0.0, %v8556
        %v8558 = vpop.f32.mrb[0].mxu0
        %8559 = vmatprep.mubr.f32.mxu0 0.0
        %8560 = vmatmul.mubr.f32.gmra.mrb[0].mxu0 %v8366
        %v8561 = vpop.f32.mrb[0].mxu0
        %v8562 = vadd.f32 0.0, %v8561
        %v8563 = vpop.f32.mrb[0].mxu0
        %8564 = vmatprep.mubr.f32.mxu0 0.0
        %8565 = vmatmul.mubr.f32.gmra.mrb[0].mxu0 %v8369
        %v8566 = vpop.f32.mrb[0].mxu0
        %v8567 = vadd.f32 0.0, %v8566
        %v8568 = vpop.f32.mrb[0].mxu0
        %8569 = vmatprep.mubr.f32.mxu0 0.0
        %8570 = vmatmul.mubr.f32.gmra.mrb[0].mxu0 %v8372
        %v8571 = vpop.f32.mrb[0].mxu0
        %v8572 = vadd.f32 0.0, %v8571
        %v8573 = vpop.f32.mrb[0].mxu0
        %8574 = vmatprep.mubr.f32.mxu0 0.0
        %8575 = vmatmul.mubr.f32.gmra.mrb[0].mxu0 %v8375
        %v8576 = vpop.f32.mrb[0].mxu0
        %v8577 = vadd.f32 0.0, %v8576
        %v8578 = vpop.f32.mrb[0].mxu0
        %8579 = vmatprep.mubr.f32.mxu0 0.0
        %8580 = vmatmul.mubr.f32.gmra.mrb[0].mxu0 %v8378
        %v8581 = vpop.f32.mrb[0].mxu0
        %v8582 = vadd.f32 0.0, %v8581
        %v8583 = vpop.f32.mrb[0].mxu0
        %8584 = vmatprep.mubr.f32.mxu0 0.0
        %8585 = vmatmul.mubr.f32.gmra.mrb[0].mxu0 %v8381
        %v8586 = vpop.f32.mrb[0].mxu0
        %v8587 = vadd.f32 0.0, %v8586
        %v8588 = vpop.f32.mrb[0].mxu0
        %8589 = vmatprep.mubr.f32.mxu0 0.0
        %8590 = vmatmul.mubr.f32.gmra.mrb[0].mxu0 %v8384
        %v8591 = vpop.f32.mrb[0].mxu0
        %v8592 = vadd.f32 0.0, %v8591
        %v8593 = vpop.f32.mrb[0].mxu0
        %8594 = vmatprep.mubr.f32.mxu0 0.0
        %8595 = vmatmul.mubr.f32.gmra.mrb[0].mxu0 %v8387
        %v8596 = vpop.f32.mrb[0].mxu0
        %v8597 = vadd.f32 0.0, %v8596
        %v8598 = vpop.f32.mrb[0].mxu0
        %8599 = vmatprep.mubr.f32.mxu0 0.0
        %8600 = vmatmul.mubr.f32.gmra.mrb[0].mxu0 %v8390
        %v8601 = vpop.f32.mrb[0].mxu0
        %v8602 = vadd.f32 0.0, %v8601
        %v8603 = vpop.f32.mrb[0].mxu0
        %8604 = vmatprep.mubr.f32.mxu0 0.0
        %8605 = vmatmul.mubr.f32.gmra.mrb[0].mxu0 %v8393
        %v8606 = vpop.f32.mrb[0].mxu0
        %v8607 = vadd.f32 0.0, %v8606
        %v8608 = vpop.f32.mrb[0].mxu0
        %8609 = vmatprep.mubr.f32.mxu0 0.0
        %8610 = vmatmul.mubr.f32.gmra.mrb[0].mxu0 %v8396
        %v8611 = vpop.f32.mrb[0].mxu0
        %v8612 = vadd.f32 0.0, %v8611
        %v8613 = vpop.f32.mrb[0].mxu0
        %8614 = vmatprep.mubr.f32.mxu0 0.0
        %8615 = vmatmul.mubr.f32.gmra.mrb[0].mxu0 %v8399
        %v8616 = vpop.f32.mrb[0].mxu0
        %v8617 = vadd.f32 0.0, %v8616
        %v8618 = vpop.f32.mrb[0].mxu0
        %8619 = vmatprep.mubr.f32.mxu0 0.0
        %8620 = vmatmul.mubr.f32.gmra.mrb[0].mxu0 %v8402
        %v8621 = vpop.f32.mrb[0].mxu0
        %v8622 = vadd.f32 0.0, %v8621
        %v8623 = vpop.f32.mrb[0].mxu0
        %8624 = vmatprep.mubr.f32.mxu0 0.0
        %8625 = vmatmul.mubr.f32.gmra.mrb[0].mxu0 %v8405
        %v8626 = vpop.f32.mrb[0].mxu0
        %v8627 = vadd.f32 0.0, %v8626
        %v8628 = vpop.f32.mrb[0].mxu0
        %8629 = vmatprep.mubr.f32.mxu0 0.0
        %8630 = vmatmul.mubr.f32.gmra.mrb[0].mxu0 %v8408
        %v8631 = vpop.f32.mrb[0].mxu0
        %v8632 = vadd.f32 0.0, %v8631
        %v8633 = vpop.f32.mrb[0].mxu0
        %8634 = vdwg.mxu0
        %v8635 = vadd.f32 %v8119, %v8477
        %v8636 = vadd.f32 %v8124, %v8482
        %v8637 = vadd.f32 %v8129, %v8487
        %v8638 = vadd.f32 %v8134, %v8492
        %v8639 = vadd.f32 %v8139, %v8497
        %v8640 = vadd.f32 %v8144, %v8502
        %v8641 = vadd.f32 %v8149, %v8507
        %v8642 = vadd.f32 %v8154, %v8512
        %v8643 = vadd.f32 %v8159, %v8517
        %v8644 = vadd.f32 %v8164, %v8522
        %v8645 = vadd.f32 %v8169, %v8527
        %v8646 = vadd.f32 %v8174, %v8532
        %v8647 = vadd.f32 %v8179, %v8537
        %v8648 = vadd.f32 %v8184, %v8542
        %v8649 = vadd.f32 %v8189, %v8547
        %v8650 = vadd.f32 %v8194, %v8552
        %v8651 = vadd.f32 %v8199, %v8557
        %v8652 = vadd.f32 %v8204, %v8562
        %v8653 = vadd.f32 %v8209, %v8567
        %v8654 = vadd.f32 %v8214, %v8572
        %v8655 = vadd.f32 %v8219, %v8577
        %v8656 = vadd.f32 %v8224, %v8582
        %v8657 = vadd.f32 %v8229, %v8587
        %v8658 = vadd.f32 %v8234, %v8592
        %v8659 = vadd.f32 %v8239, %v8597
        %v8660 = vadd.f32 %v8244, %v8602
        %v8661 = vadd.f32 %v8249, %v8607
        %v8662 = vadd.f32 %v8254, %v8612
        %v8663 = vadd.f32 %v8259, %v8617
        %v8664 = vadd.f32 %v8264, %v8622
        %v8665 = vadd.f32 %v8269, %v8627
        %v8666 = vadd.f32 %v8274, %v8632
        %v8667 = vld [vmem:[%s364 + $0x7] sm:$0xff]
        %v8668 = vld [vmem:[%s364 + $0xf] sm:$0xff]
        %v8669 = vld [vmem:[%s364 + $0x27] sm:$0xff]
        %v8670 = vld [vmem:[%s364 + $0x2f] sm:$0xff]
        %v8671 = vld [vmem:[%s364 + $0x47] sm:$0xff]
        %v8672 = vld [vmem:[%s364 + $0x4f] sm:$0xff]
        %v8673 = vld [vmem:[%s364 + $0x67] sm:$0xff]
        %v8674 = vld [vmem:[%s364 + $0x6f] sm:$0xff]
        %v8675 = vld [vmem:[%s364 + $0x87] sm:$0xff]
        %v8676 = vld [vmem:[%s364 + $0x8f] sm:$0xff]
        %v8677 = vld [vmem:[%s364 + $0xa7] sm:$0xff]
        %v8678 = vld [vmem:[%s364 + $0xaf] sm:$0xff]
        %v8679 = vld [vmem:[%s364 + $0xc7] sm:$0xff]
        %v8680 = vld [vmem:[%s364 + $0xcf] sm:$0xff]
        %v8681 = vld [vmem:[%s364 + $0xe7] sm:$0xff]
        %v8682 = vld [vmem:[%s364 + $0xef] sm:$0xff]
        %v8683 = vld [vmem:[%s364 + $0x107] sm:$0xff]
        %v8684 = vld [vmem:[%s364 + $0x10f] sm:$0xff]
        %v8685 = vld [vmem:[%s364 + $0x127] sm:$0xff]
        %v8686 = vld [vmem:[%s364 + $0x12f] sm:$0xff]
        %v8687 = vld [vmem:[%s364 + $0x147] sm:$0xff]
        %v8688 = vld [vmem:[%s364 + $0x14f] sm:$0xff]
        %v8689 = vld [vmem:[%s364 + $0x167] sm:$0xff]
        %v8690 = vld [vmem:[%s364 + $0x16f] sm:$0xff]
        %v8691 = vld [vmem:[%s364 + $0x187] sm:$0xff]
        %v8692 = vld [vmem:[%s364 + $0x18f] sm:$0xff]
        %v8693 = vld [vmem:[%s364 + $0x1a7] sm:$0xff]
        %v8694 = vld [vmem:[%s364 + $0x1af] sm:$0xff]
        %v8695 = vld [vmem:[%s364 + $0x1c7] sm:$0xff]
        %v8696 = vld [vmem:[%s364 + $0x1cf] sm:$0xff]
        %v8697 = vld [vmem:[%s364 + $0x1e7] sm:$0xff]
        %v8698 = vld [vmem:[%s364 + $0x1ef] sm:$0xff]
        %s8699 = scalar_lea.vmem [#allocation6], 672
        %v8700 = vld [vmem:[%s8699] sm:$0xff]
        %v8701 = vld [vmem:[%s8699 + $0x8] sm:$0xff]
        %v8702 = vld [vmem:[%s8699 + $0x10] sm:$0xff]
        %v8703 = vld [vmem:[%s8699 + $0x18] sm:$0xff]
        %v8705 = vsel %vm470, %v8667, 0
        %v8708 = vsel %vm470, %v8668, 0
        %v8711 = vsel %vm470, %v8669, 0
        %v8714 = vsel %vm470, %v8670, 0
        %v8717 = vsel %vm470, %v8671, 0
        %v8720 = vsel %vm470, %v8672, 0
        %v8723 = vsel %vm470, %v8673, 0
        %v8726 = vsel %vm470, %v8674, 0
        %v8729 = vsel %vm470, %v8675, 0
        %v8732 = vsel %vm470, %v8676, 0
        %v8735 = vsel %vm470, %v8677, 0
        %v8738 = vsel %vm470, %v8678, 0
        %v8741 = vsel %vm470, %v8679, 0
        %v8744 = vsel %vm470, %v8680, 0
        %v8747 = vsel %vm470, %v8681, 0
        %v8750 = vsel %vm470, %v8682, 0
        %v8753 = vsel %vm470, %v8683, 0
        %v8756 = vsel %vm470, %v8684, 0
        %v8759 = vsel %vm470, %v8685, 0
        %v8762 = vsel %vm470, %v8686, 0
        %v8765 = vsel %vm470, %v8687, 0
        %v8768 = vsel %vm470, %v8688, 0
        %v8771 = vsel %vm470, %v8689, 0
        %v8774 = vsel %vm470, %v8690, 0
        %v8777 = vsel %vm470, %v8691, 0
        %v8780 = vsel %vm470, %v8692, 0
        %v8783 = vsel %vm470, %v8693, 0
        %v8786 = vsel %vm470, %v8694, 0
        %v8789 = vsel %vm470, %v8695, 0
        %v8792 = vsel %vm470, %v8696, 0
        %v8795 = vsel %vm470, %v8697, 0
        %v8798 = vsel %vm470, %v8698, 0
        %8800 = vmatprep.subr.mxu0 0.0
        %8801 = vmatpush1.msra.mxu0 %v8700
        %8802 = vmatprep.subr.mxu0 0.0
        %8803 = vmatpush1.msra.mxu0 %v8701
        %8804 = vmatprep.subr.mxu0 0.0
        %8805 = vmatpush1.msra.mxu0 %v8702
        %8806 = vmatprep.subr.mxu0 0.0
        %8807 = vmatpush1.msra.mxu0 %v8703
        %8808 = vmatprep.subr.mxu0 0.0
        %8809 = vmatpush1.msra.mxu0 0.0
        %8810 = vmatprep.subr.mxu0 0.0
        %8811 = vmatpush1.msra.mxu0 0.0
        %8812 = vmatprep.subr.mxu0 0.0
        %8813 = vmatpush1.msra.mxu0 0.0
        %8814 = vmatprep.subr.mxu0 0.0
        %8815 = vmatpush1.msra.mxu0 0.0
        %8816 = vmatprep.subr.mxu0 0.0
        %8817 = vmatpush1.msra.mxu0 0.0
        %8818 = vmatprep.subr.mxu0 0.0
        %8819 = vmatpush1.msra.mxu0 0.0
        %8820 = vmatprep.subr.mxu0 0.0
        %8821 = vmatpush1.msra.mxu0 0.0
        %8822 = vmatprep.subr.mxu0 0.0
        %8823 = vmatpush1.msra.mxu0 0.0
        %8824 = vmatprep.subr.mxu0 0.0
        %8825 = vmatpush1.msra.mxu0 0.0
        %8826 = vmatprep.subr.mxu0 0.0
        %8827 = vmatpush1.msra.mxu0 0.0
        %8828 = vmatprep.subr.mxu0 0.0
        %8829 = vmatpush1.msra.mxu0 0.0
        %8830 = vmatprep.subr.mxu0 0.0
        %8831 = vmatpush1.msra.mxu0 0.0
        %8832 = vmatprep.subr.mxu0 0.0
        %8833 = vmatpush1.msra.mxu0 0.0
        %8834 = vmatprep.subr.mxu0 0.0
        %8835 = vmatpush1.msra.mxu0 0.0
        %8836 = vmatprep.subr.mxu0 0.0
        %8837 = vmatpush1.msra.mxu0 0.0
        %8838 = vmatprep.subr.mxu0 0.0
        %8839 = vmatpush1.msra.mxu0 0.0
        %8840 = vmatprep.subr.mxu0 0.0
        %8841 = vmatpush1.msra.mxu0 0.0
        %8842 = vmatprep.subr.mxu0 0.0
        %8843 = vmatpush1.msra.mxu0 0.0
        %8844 = vmatprep.subr.mxu0 0.0
        %8845 = vmatpush1.msra.mxu0 0.0
        %8846 = vmatprep.subr.mxu0 0.0
        %8847 = vmatpush1.msra.mxu0 0.0
        %8848 = vmatprep.subr.mxu0 0.0
        %8849 = vmatpush1.msra.mxu0 0.0
        %8850 = vmatprep.subr.mxu0 0.0
        %8851 = vmatpush1.msra.mxu0 0.0
        %8852 = vmatprep.subr.mxu0 0.0
        %8853 = vmatpush1.msra.mxu0 0.0
        %8854 = vmatprep.subr.mxu0 0.0
        %8855 = vmatpush1.msra.mxu0 0.0
        %8856 = vmatprep.subr.mxu0 0.0
        %8857 = vmatpush1.msra.mxu0 0.0
        %8858 = vmatprep.subr.mxu0 0.0
        %8859 = vmatpush1.msra.mxu0 0.0
        %8860 = vmatprep.subr.mxu0 0.0
        %8861 = vmatpush1.msra.mxu0 0.0
        %8862 = vmatprep.subr.mxu0 0.0
        %8863 = vmatpush1.msra.mxu0 0.0
        %8864 = vmatprep.mubr.f32.mxu0 0.0
        %8865 = vmatmul.mubr.f32.gmra.mrb[0].mxu0 %v8705
        %v8866 = vpop.f32.mrb[0].mxu0
        %v8867 = vadd.f32 0.0, %v8866
        %v8868 = vpop.f32.mrb[0].mxu0
        %8869 = vmatprep.mubr.f32.mxu0 0.0
        %8870 = vmatmul.mubr.f32.gmra.mrb[0].mxu0 %v8708
        %v8871 = vpop.f32.mrb[0].mxu0
        %v8872 = vadd.f32 0.0, %v8871
        %v8873 = vpop.f32.mrb[0].mxu0
        %8874 = vmatprep.mubr.f32.mxu0 0.0
        %8875 = vmatmul.mubr.f32.gmra.mrb[0].mxu0 %v8711
        %v8876 = vpop.f32.mrb[0].mxu0
        %v8877 = vadd.f32 0.0, %v8876
        %v8878 = vpop.f32.mrb[0].mxu0
        %8879 = vmatprep.mubr.f32.mxu0 0.0
        %8880 = vmatmul.mubr.f32.gmra.mrb[0].mxu0 %v8714
        %v8881 = vpop.f32.mrb[0].mxu0
        %v8882 = vadd.f32 0.0, %v8881
        %v8883 = vpop.f32.mrb[0].mxu0
        %8884 = vmatprep.mubr.f32.mxu0 0.0
        %8885 = vmatmul.mubr.f32.gmra.mrb[0].mxu0 %v8717
        %v8886 = vpop.f32.mrb[0].mxu0
        %v8887 = vadd.f32 0.0, %v8886
        %v8888 = vpop.f32.mrb[0].mxu0
        %8889 = vmatprep.mubr.f32.mxu0 0.0
        %8890 = vmatmul.mubr.f32.gmra.mrb[0].mxu0 %v8720
        %v8891 = vpop.f32.mrb[0].mxu0
        %v8892 = vadd.f32 0.0, %v8891
        %v8893 = vpop.f32.mrb[0].mxu0
        %8894 = vmatprep.mubr.f32.mxu0 0.0
        %8895 = vmatmul.mubr.f32.gmra.mrb[0].mxu0 %v8723
        %v8896 = vpop.f32.mrb[0].mxu0
        %v8897 = vadd.f32 0.0, %v8896
        %v8898 = vpop.f32.mrb[0].mxu0
        %8899 = vmatprep.mubr.f32.mxu0 0.0
        %8900 = vmatmul.mubr.f32.gmra.mrb[0].mxu0 %v8726
        %v8901 = vpop.f32.mrb[0].mxu0
        %v8902 = vadd.f32 0.0, %v8901
        %v8903 = vpop.f32.mrb[0].mxu0
        %8904 = vmatprep.mubr.f32.mxu0 0.0
        %8905 = vmatmul.mubr.f32.gmra.mrb[0].mxu0 %v8729
        %v8906 = vpop.f32.mrb[0].mxu0
        %v8907 = vadd.f32 0.0, %v8906
        %v8908 = vpop.f32.mrb[0].mxu0
        %8909 = vmatprep.mubr.f32.mxu0 0.0
        %8910 = vmatmul.mubr.f32.gmra.mrb[0].mxu0 %v8732
        %v8911 = vpop.f32.mrb[0].mxu0
        %v8912 = vadd.f32 0.0, %v8911
        %v8913 = vpop.f32.mrb[0].mxu0
        %8914 = vmatprep.mubr.f32.mxu0 0.0
        %8915 = vmatmul.mubr.f32.gmra.mrb[0].mxu0 %v8735
        %v8916 = vpop.f32.mrb[0].mxu0
        %v8917 = vadd.f32 0.0, %v8916
        %v8918 = vpop.f32.mrb[0].mxu0
        %8919 = vmatprep.mubr.f32.mxu0 0.0
        %8920 = vmatmul.mubr.f32.gmra.mrb[0].mxu0 %v8738
        %v8921 = vpop.f32.mrb[0].mxu0
        %v8922 = vadd.f32 0.0, %v8921
        %v8923 = vpop.f32.mrb[0].mxu0
        %8924 = vmatprep.mubr.f32.mxu0 0.0
        %8925 = vmatmul.mubr.f32.gmra.mrb[0].mxu0 %v8741
        %v8926 = vpop.f32.mrb[0].mxu0
        %v8927 = vadd.f32 0.0, %v8926
        %v8928 = vpop.f32.mrb[0].mxu0
        %8929 = vmatprep.mubr.f32.mxu0 0.0
        %8930 = vmatmul.mubr.f32.gmra.mrb[0].mxu0 %v8744
        %v8931 = vpop.f32.mrb[0].mxu0
        %v8932 = vadd.f32 0.0, %v8931
        %v8933 = vpop.f32.mrb[0].mxu0
        %8934 = vmatprep.mubr.f32.mxu0 0.0
        %8935 = vmatmul.mubr.f32.gmra.mrb[0].mxu0 %v8747
        %v8936 = vpop.f32.mrb[0].mxu0
        %v8937 = vadd.f32 0.0, %v8936
        %v8938 = vpop.f32.mrb[0].mxu0
        %8939 = vmatprep.mubr.f32.mxu0 0.0
        %8940 = vmatmul.mubr.f32.gmra.mrb[0].mxu0 %v8750
        %v8941 = vpop.f32.mrb[0].mxu0
        %v8942 = vadd.f32 0.0, %v8941
        %v8943 = vpop.f32.mrb[0].mxu0
        %8944 = vmatprep.mubr.f32.mxu0 0.0
        %8945 = vmatmul.mubr.f32.gmra.mrb[0].mxu0 %v8753
        %v8946 = vpop.f32.mrb[0].mxu0
        %v8947 = vadd.f32 0.0, %v8946
        %v8948 = vpop.f32.mrb[0].mxu0
        %8949 = vmatprep.mubr.f32.mxu0 0.0
        %8950 = vmatmul.mubr.f32.gmra.mrb[0].mxu0 %v8756
        %v8951 = vpop.f32.mrb[0].mxu0
        %v8952 = vadd.f32 0.0, %v8951
        %v8953 = vpop.f32.mrb[0].mxu0
        %8954 = vmatprep.mubr.f32.mxu0 0.0
        %8955 = vmatmul.mubr.f32.gmra.mrb[0].mxu0 %v8759
        %v8956 = vpop.f32.mrb[0].mxu0
        %v8957 = vadd.f32 0.0, %v8956
        %v8958 = vpop.f32.mrb[0].mxu0
        %8959 = vmatprep.mubr.f32.mxu0 0.0
        %8960 = vmatmul.mubr.f32.gmra.mrb[0].mxu0 %v8762
        %v8961 = vpop.f32.mrb[0].mxu0
        %v8962 = vadd.f32 0.0, %v8961
        %v8963 = vpop.f32.mrb[0].mxu0
        %8964 = vmatprep.mubr.f32.mxu0 0.0
        %8965 = vmatmul.mubr.f32.gmra.mrb[0].mxu0 %v8765
        %v8966 = vpop.f32.mrb[0].mxu0
        %v8967 = vadd.f32 0.0, %v8966
        %v8968 = vpop.f32.mrb[0].mxu0
        %8969 = vmatprep.mubr.f32.mxu0 0.0
        %8970 = vmatmul.mubr.f32.gmra.mrb[0].mxu0 %v8768
        %v8971 = vpop.f32.mrb[0].mxu0
        %v8972 = vadd.f32 0.0, %v8971
        %v8973 = vpop.f32.mrb[0].mxu0
        %8974 = vmatprep.mubr.f32.mxu0 0.0
        %8975 = vmatmul.mubr.f32.gmra.mrb[0].mxu0 %v8771
        %v8976 = vpop.f32.mrb[0].mxu0
        %v8977 = vadd.f32 0.0, %v8976
        %v8978 = vpop.f32.mrb[0].mxu0
        %8979 = vmatprep.mubr.f32.mxu0 0.0
        %8980 = vmatmul.mubr.f32.gmra.mrb[0].mxu0 %v8774
        %v8981 = vpop.f32.mrb[0].mxu0
        %v8982 = vadd.f32 0.0, %v8981
        %v8983 = vpop.f32.mrb[0].mxu0
        %8984 = vmatprep.mubr.f32.mxu0 0.0
        %8985 = vmatmul.mubr.f32.gmra.mrb[0].mxu0 %v8777
        %v8986 = vpop.f32.mrb[0].mxu0
        %v8987 = vadd.f32 0.0, %v8986
        %v8988 = vpop.f32.mrb[0].mxu0
        %8989 = vmatprep.mubr.f32.mxu0 0.0
        %8990 = vmatmul.mubr.f32.gmra.mrb[0].mxu0 %v8780
        %v8991 = vpop.f32.mrb[0].mxu0
        %v8992 = vadd.f32 0.0, %v8991
        %v8993 = vpop.f32.mrb[0].mxu0
        %8994 = vmatprep.mubr.f32.mxu0 0.0
        %8995 = vmatmul.mubr.f32.gmra.mrb[0].mxu0 %v8783
        %v8996 = vpop.f32.mrb[0].mxu0
        %v8997 = vadd.f32 0.0, %v8996
        %v8998 = vpop.f32.mrb[0].mxu0
        %8999 = vmatprep.mubr.f32.mxu0 0.0
        %9000 = vmatmul.mubr.f32.gmra.mrb[0].mxu0 %v8786
        %v9001 = vpop.f32.mrb[0].mxu0
        %v9002 = vadd.f32 0.0, %v9001
        %v9003 = vpop.f32.mrb[0].mxu0
        %9004 = vmatprep.mubr.f32.mxu0 0.0
        %9005 = vmatmul.mubr.f32.gmra.mrb[0].mxu0 %v8789
        %v9006 = vpop.f32.mrb[0].mxu0
        %v9007 = vadd.f32 0.0, %v9006
        %v9008 = vpop.f32.mrb[0].mxu0
        %9009 = vmatprep.mubr.f32.mxu0 0.0
        %9010 = vmatmul.mubr.f32.gmra.mrb[0].mxu0 %v8792
        %v9011 = vpop.f32.mrb[0].mxu0
        %v9012 = vadd.f32 0.0, %v9011
        %v9013 = vpop.f32.mrb[0].mxu0
        %9014 = vmatprep.mubr.f32.mxu0 0.0
        %9015 = vmatmul.mubr.f32.gmra.mrb[0].mxu0 %v8795
        %v9016 = vpop.f32.mrb[0].mxu0
        %v9017 = vadd.f32 0.0, %v9016
        %v9018 = vpop.f32.mrb[0].mxu0
        %9019 = vmatprep.mubr.f32.mxu0 0.0
        %9020 = vmatmul.mubr.f32.gmra.mrb[0].mxu0 %v8798
        %v9021 = vpop.f32.mrb[0].mxu0
        %v9022 = vadd.f32 0.0, %v9021
        %v9023 = vpop.f32.mrb[0].mxu0
        %9024 = vdwg.mxu0
        %v9025 = vadd.f32 %v8635, %v8867
        %v9026 = vadd.f32 %v8636, %v8872
        %v9027 = vadd.f32 %v8637, %v8877
        %v9028 = vadd.f32 %v8638, %v8882
        %v9029 = vadd.f32 %v8639, %v8887
        %v9030 = vadd.f32 %v8640, %v8892
        %v9031 = vadd.f32 %v8641, %v8897
        %v9032 = vadd.f32 %v8642, %v8902
        %v9033 = vadd.f32 %v8643, %v8907
        %v9034 = vadd.f32 %v8644, %v8912
        %v9035 = vadd.f32 %v8645, %v8917
        %v9036 = vadd.f32 %v8646, %v8922
        %v9037 = vadd.f32 %v8647, %v8927
        %v9038 = vadd.f32 %v8648, %v8932
        %v9039 = vadd.f32 %v8649, %v8937
        %v9040 = vadd.f32 %v8650, %v8942
        %v9041 = vadd.f32 %v8651, %v8947
        %v9042 = vadd.f32 %v8652, %v8952
        %v9043 = vadd.f32 %v8653, %v8957
        %v9044 = vadd.f32 %v8654, %v8962
        %v9045 = vadd.f32 %v8655, %v8967
        %v9046 = vadd.f32 %v8656, %v8972
        %v9047 = vadd.f32 %v8657, %v8977
        %v9048 = vadd.f32 %v8658, %v8982
        %v9049 = vadd.f32 %v8659, %v8987
        %v9050 = vadd.f32 %v8660, %v8992
        %v9051 = vadd.f32 %v8661, %v8997
        %v9052 = vadd.f32 %v8662, %v9002
        %v9053 = vadd.f32 %v8663, %v9007
        %v9054 = vadd.f32 %v8664, %v9012
        %v9055 = vadd.f32 %v8665, %v9017
        %v9056 = vadd.f32 %v8666, %v9022
        %v9057 = vld [vmem:[%s364 + $0x8] sm:$0xff]
        %v9058 = vld [vmem:[%s364 + $0x10] sm:$0xff]
        %v9059 = vld [vmem:[%s364 + $0x28] sm:$0xff]
        %v9060 = vld [vmem:[%s364 + $0x30] sm:$0xff]
        %v9061 = vld [vmem:[%s364 + $0x48] sm:$0xff]
        %v9062 = vld [vmem:[%s364 + $0x50] sm:$0xff]
        %v9063 = vld [vmem:[%s364 + $0x68] sm:$0xff]
        %v9064 = vld [vmem:[%s364 + $0x70] sm:$0xff]
        %v9065 = vld [vmem:[%s364 + $0x88] sm:$0xff]
        %v9066 = vld [vmem:[%s364 + $0x90] sm:$0xff]
        %v9067 = vld [vmem:[%s364 + $0xa8] sm:$0xff]
        %v9068 = vld [vmem:[%s364 + $0xb0] sm:$0xff]
        %v9069 = vld [vmem:[%s364 + $0xc8] sm:$0xff]
        %v9070 = vld [vmem:[%s364 + $0xd0] sm:$0xff]
        %v9071 = vld [vmem:[%s364 + $0xe8] sm:$0xff]
        %v9072 = vld [vmem:[%s364 + $0xf0] sm:$0xff]
        %v9073 = vld [vmem:[%s364 + $0x108] sm:$0xff]
        %v9074 = vld [vmem:[%s364 + $0x110] sm:$0xff]
        %v9075 = vld [vmem:[%s364 + $0x128] sm:$0xff]
        %v9076 = vld [vmem:[%s364 + $0x130] sm:$0xff]
        %v9077 = vld [vmem:[%s364 + $0x148] sm:$0xff]
        %v9078 = vld [vmem:[%s364 + $0x150] sm:$0xff]
        %v9079 = vld [vmem:[%s364 + $0x168] sm:$0xff]
        %v9080 = vld [vmem:[%s364 + $0x170] sm:$0xff]
        %v9081 = vld [vmem:[%s364 + $0x188] sm:$0xff]
        %v9082 = vld [vmem:[%s364 + $0x190] sm:$0xff]
        %v9083 = vld [vmem:[%s364 + $0x1a8] sm:$0xff]
        %v9084 = vld [vmem:[%s364 + $0x1b0] sm:$0xff]
        %v9085 = vld [vmem:[%s364 + $0x1c8] sm:$0xff]
        %v9086 = vld [vmem:[%s364 + $0x1d0] sm:$0xff]
        %v9087 = vld [vmem:[%s364 + $0x1e8] sm:$0xff]
        %v9088 = vld [vmem:[%s364 + $0x1f0] sm:$0xff]
        %s9089 = scalar_lea.vmem [#allocation6], 704
        %v9090 = vld [vmem:[%s9089] sm:$0xff]
        %v9091 = vld [vmem:[%s9089 + $0x8] sm:$0xff]
        %v9092 = vld [vmem:[%s9089 + $0x10] sm:$0xff]
        %v9093 = vld [vmem:[%s9089 + $0x18] sm:$0xff]
        %v9095 = vsel %vm470, %v9057, 0
        %v9098 = vsel %vm470, %v9058, 0
        %v9101 = vsel %vm470, %v9059, 0
        %v9104 = vsel %vm470, %v9060, 0
        %v9107 = vsel %vm470, %v9061, 0
        %v9110 = vsel %vm470, %v9062, 0
        %v9113 = vsel %vm470, %v9063, 0
        %v9116 = vsel %vm470, %v9064, 0
        %v9119 = vsel %vm470, %v9065, 0
        %v9122 = vsel %vm470, %v9066, 0
        %v9125 = vsel %vm470, %v9067, 0
        %v9128 = vsel %vm470, %v9068, 0
        %v9131 = vsel %vm470, %v9069, 0
        %v9134 = vsel %vm470, %v9070, 0
        %v9137 = vsel %vm470, %v9071, 0
        %v9140 = vsel %vm470, %v9072, 0
        %v9143 = vsel %vm470, %v9073, 0
        %v9146 = vsel %vm470, %v9074, 0
        %v9149 = vsel %vm470, %v9075, 0
        %v9152 = vsel %vm470, %v9076, 0
        %v9155 = vsel %vm470, %v9077, 0
        %v9158 = vsel %vm470, %v9078, 0
        %v9161 = vsel %vm470, %v9079, 0
        %v9164 = vsel %vm470, %v9080, 0
        %v9167 = vsel %vm470, %v9081, 0
        %v9170 = vsel %vm470, %v9082, 0
        %v9173 = vsel %vm470, %v9083, 0
        %v9176 = vsel %vm470, %v9084, 0
        %v9179 = vsel %vm470, %v9085, 0
        %v9182 = vsel %vm470, %v9086, 0
        %v9185 = vsel %vm470, %v9087, 0
        %v9188 = vsel %vm470, %v9088, 0
        %9190 = vmatprep.subr.mxu0 0.0
        %9191 = vmatpush1.msra.mxu0 %v9090
        %9192 = vmatprep.subr.mxu0 0.0
        %9193 = vmatpush1.msra.mxu0 %v9091
        %9194 = vmatprep.subr.mxu0 0.0
        %9195 = vmatpush1.msra.mxu0 %v9092
        %9196 = vmatprep.subr.mxu0 0.0
        %9197 = vmatpush1.msra.mxu0 %v9093
        %9198 = vmatprep.subr.mxu0 0.0
        %9199 = vmatpush1.msra.mxu0 0.0
        %9200 = vmatprep.subr.mxu0 0.0
        %9201 = vmatpush1.msra.mxu0 0.0
        %9202 = vmatprep.subr.mxu0 0.0
        %9203 = vmatpush1.msra.mxu0 0.0
        %9204 = vmatprep.subr.mxu0 0.0
        %9205 = vmatpush1.msra.mxu0 0.0
        %9206 = vmatprep.subr.mxu0 0.0
        %9207 = vmatpush1.msra.mxu0 0.0
        %9208 = vmatprep.subr.mxu0 0.0
        %9209 = vmatpush1.msra.mxu0 0.0
        %9210 = vmatprep.subr.mxu0 0.0
        %9211 = vmatpush1.msra.mxu0 0.0
        %9212 = vmatprep.subr.mxu0 0.0
        %9213 = vmatpush1.msra.mxu0 0.0
        %9214 = vmatprep.subr.mxu0 0.0
        %9215 = vmatpush1.msra.mxu0 0.0
        %9216 = vmatprep.subr.mxu0 0.0
        %9217 = vmatpush1.msra.mxu0 0.0
        %9218 = vmatprep.subr.mxu0 0.0
        %9219 = vmatpush1.msra.mxu0 0.0
        %9220 = vmatprep.subr.mxu0 0.0
        %9221 = vmatpush1.msra.mxu0 0.0
        %9222 = vmatprep.subr.mxu0 0.0
        %9223 = vmatpush1.msra.mxu0 0.0
        %9224 = vmatprep.subr.mxu0 0.0
        %9225 = vmatpush1.msra.mxu0 0.0
        %9226 = vmatprep.subr.mxu0 0.0
        %9227 = vmatpush1.msra.mxu0 0.0
        %9228 = vmatprep.subr.mxu0 0.0
        %9229 = vmatpush1.msra.mxu0 0.0
        %9230 = vmatprep.subr.mxu0 0.0
        %9231 = vmatpush1.msra.mxu0 0.0
        %9232 = vmatprep.subr.mxu0 0.0
        %9233 = vmatpush1.msra.mxu0 0.0
        %9234 = vmatprep.subr.mxu0 0.0
        %9235 = vmatpush1.msra.mxu0 0.0
        %9236 = vmatprep.subr.mxu0 0.0
        %9237 = vmatpush1.msra.mxu0 0.0
        %9238 = vmatprep.subr.mxu0 0.0
        %9239 = vmatpush1.msra.mxu0 0.0
        %9240 = vmatprep.subr.mxu0 0.0
        %9241 = vmatpush1.msra.mxu0 0.0
        %9242 = vmatprep.subr.mxu0 0.0
        %9243 = vmatpush1.msra.mxu0 0.0
        %9244 = vmatprep.subr.mxu0 0.0
        %9245 = vmatpush1.msra.mxu0 0.0
        %9246 = vmatprep.subr.mxu0 0.0
        %9247 = vmatpush1.msra.mxu0 0.0
        %9248 = vmatprep.subr.mxu0 0.0
        %9249 = vmatpush1.msra.mxu0 0.0
        %9250 = vmatprep.subr.mxu0 0.0
        %9251 = vmatpush1.msra.mxu0 0.0
        %9252 = vmatprep.subr.mxu0 0.0
        %9253 = vmatpush1.msra.mxu0 0.0
        %9254 = vmatprep.mubr.f32.mxu0 0.0
        %9255 = vmatmul.mubr.f32.gmra.mrb[0].mxu0 %v9095
        %v9256 = vpop.f32.mrb[0].mxu0
        %v9257 = vadd.f32 0.0, %v9256
        %v9258 = vpop.f32.mrb[0].mxu0
        %9259 = vmatprep.mubr.f32.mxu0 0.0
        %9260 = vmatmul.mubr.f32.gmra.mrb[0].mxu0 %v9098
        %v9261 = vpop.f32.mrb[0].mxu0
        %v9262 = vadd.f32 0.0, %v9261
        %v9263 = vpop.f32.mrb[0].mxu0
        %9264 = vmatprep.mubr.f32.mxu0 0.0
        %9265 = vmatmul.mubr.f32.gmra.mrb[0].mxu0 %v9101
        %v9266 = vpop.f32.mrb[0].mxu0
        %v9267 = vadd.f32 0.0, %v9266
        %v9268 = vpop.f32.mrb[0].mxu0
        %9269 = vmatprep.mubr.f32.mxu0 0.0
        %9270 = vmatmul.mubr.f32.gmra.mrb[0].mxu0 %v9104
        %v9271 = vpop.f32.mrb[0].mxu0
        %v9272 = vadd.f32 0.0, %v9271
        %v9273 = vpop.f32.mrb[0].mxu0
        %9274 = vmatprep.mubr.f32.mxu0 0.0
        %9275 = vmatmul.mubr.f32.gmra.mrb[0].mxu0 %v9107
        %v9276 = vpop.f32.mrb[0].mxu0
        %v9277 = vadd.f32 0.0, %v9276
        %v9278 = vpop.f32.mrb[0].mxu0
        %9279 = vmatprep.mubr.f32.mxu0 0.0
        %9280 = vmatmul.mubr.f32.gmra.mrb[0].mxu0 %v9110
        %v9281 = vpop.f32.mrb[0].mxu0
        %v9282 = vadd.f32 0.0, %v9281
        %v9283 = vpop.f32.mrb[0].mxu0
        %9284 = vmatprep.mubr.f32.mxu0 0.0
        %9285 = vmatmul.mubr.f32.gmra.mrb[0].mxu0 %v9113
        %v9286 = vpop.f32.mrb[0].mxu0
        %v9287 = vadd.f32 0.0, %v9286
        %v9288 = vpop.f32.mrb[0].mxu0
        %9289 = vmatprep.mubr.f32.mxu0 0.0
        %9290 = vmatmul.mubr.f32.gmra.mrb[0].mxu0 %v9116
        %v9291 = vpop.f32.mrb[0].mxu0
        %v9292 = vadd.f32 0.0, %v9291
        %v9293 = vpop.f32.mrb[0].mxu0
        %9294 = vmatprep.mubr.f32.mxu0 0.0
        %9295 = vmatmul.mubr.f32.gmra.mrb[0].mxu0 %v9119
        %v9296 = vpop.f32.mrb[0].mxu0
        %v9297 = vadd.f32 0.0, %v9296
        %v9298 = vpop.f32.mrb[0].mxu0
        %9299 = vmatprep.mubr.f32.mxu0 0.0
        %9300 = vmatmul.mubr.f32.gmra.mrb[0].mxu0 %v9122
        %v9301 = vpop.f32.mrb[0].mxu0
        %v9302 = vadd.f32 0.0, %v9301
        %v9303 = vpop.f32.mrb[0].mxu0
        %9304 = vmatprep.mubr.f32.mxu0 0.0
        %9305 = vmatmul.mubr.f32.gmra.mrb[0].mxu0 %v9125
        %v9306 = vpop.f32.mrb[0].mxu0
        %v9307 = vadd.f32 0.0, %v9306
        %v9308 = vpop.f32.mrb[0].mxu0
        %9309 = vmatprep.mubr.f32.mxu0 0.0
        %9310 = vmatmul.mubr.f32.gmra.mrb[0].mxu0 %v9128
        %v9311 = vpop.f32.mrb[0].mxu0
        %v9312 = vadd.f32 0.0, %v9311
        %v9313 = vpop.f32.mrb[0].mxu0
        %9314 = vmatprep.mubr.f32.mxu0 0.0
        %9315 = vmatmul.mubr.f32.gmra.mrb[0].mxu0 %v9131
        %v9316 = vpop.f32.mrb[0].mxu0
        %v9317 = vadd.f32 0.0, %v9316
        %v9318 = vpop.f32.mrb[0].mxu0
        %9319 = vmatprep.mubr.f32.mxu0 0.0
        %9320 = vmatmul.mubr.f32.gmra.mrb[0].mxu0 %v9134
        %v9321 = vpop.f32.mrb[0].mxu0
        %v9322 = vadd.f32 0.0, %v9321
        %v9323 = vpop.f32.mrb[0].mxu0
        %9324 = vmatprep.mubr.f32.mxu0 0.0
        %9325 = vmatmul.mubr.f32.gmra.mrb[0].mxu0 %v9137
        %v9326 = vpop.f32.mrb[0].mxu0
        %v9327 = vadd.f32 0.0, %v9326
        %v9328 = vpop.f32.mrb[0].mxu0
        %9329 = vmatprep.mubr.f32.mxu0 0.0
        %9330 = vmatmul.mubr.f32.gmra.mrb[0].mxu0 %v9140
        %v9331 = vpop.f32.mrb[0].mxu0
        %v9332 = vadd.f32 0.0, %v9331
        %v9333 = vpop.f32.mrb[0].mxu0
        %9334 = vmatprep.mubr.f32.mxu0 0.0
        %9335 = vmatmul.mubr.f32.gmra.mrb[0].mxu0 %v9143
        %v9336 = vpop.f32.mrb[0].mxu0
        %v9337 = vadd.f32 0.0, %v9336
        %v9338 = vpop.f32.mrb[0].mxu0
        %9339 = vmatprep.mubr.f32.mxu0 0.0
        %9340 = vmatmul.mubr.f32.gmra.mrb[0].mxu0 %v9146
        %v9341 = vpop.f32.mrb[0].mxu0
        %v9342 = vadd.f32 0.0, %v9341
        %v9343 = vpop.f32.mrb[0].mxu0
        %9344 = vmatprep.mubr.f32.mxu0 0.0
        %9345 = vmatmul.mubr.f32.gmra.mrb[0].mxu0 %v9149
        %v9346 = vpop.f32.mrb[0].mxu0
        %v9347 = vadd.f32 0.0, %v9346
        %v9348 = vpop.f32.mrb[0].mxu0
        %9349 = vmatprep.mubr.f32.mxu0 0.0
        %9350 = vmatmul.mubr.f32.gmra.mrb[0].mxu0 %v9152
        %v9351 = vpop.f32.mrb[0].mxu0
        %v9352 = vadd.f32 0.0, %v9351
        %v9353 = vpop.f32.mrb[0].mxu0
        %9354 = vmatprep.mubr.f32.mxu0 0.0
        %9355 = vmatmul.mubr.f32.gmra.mrb[0].mxu0 %v9155
        %v9356 = vpop.f32.mrb[0].mxu0
        %v9357 = vadd.f32 0.0, %v9356
        %v9358 = vpop.f32.mrb[0].mxu0
        %9359 = vmatprep.mubr.f32.mxu0 0.0
        %9360 = vmatmul.mubr.f32.gmra.mrb[0].mxu0 %v9158
        %v9361 = vpop.f32.mrb[0].mxu0
        %v9362 = vadd.f32 0.0, %v9361
        %v9363 = vpop.f32.mrb[0].mxu0
        %9364 = vmatprep.mubr.f32.mxu0 0.0
        %9365 = vmatmul.mubr.f32.gmra.mrb[0].mxu0 %v9161
        %v9366 = vpop.f32.mrb[0].mxu0
        %v9367 = vadd.f32 0.0, %v9366
        %v9368 = vpop.f32.mrb[0].mxu0
        %9369 = vmatprep.mubr.f32.mxu0 0.0
        %9370 = vmatmul.mubr.f32.gmra.mrb[0].mxu0 %v9164
        %v9371 = vpop.f32.mrb[0].mxu0
        %v9372 = vadd.f32 0.0, %v9371
        %v9373 = vpop.f32.mrb[0].mxu0
        %9374 = vmatprep.mubr.f32.mxu0 0.0
        %9375 = vmatmul.mubr.f32.gmra.mrb[0].mxu0 %v9167
        %v9376 = vpop.f32.mrb[0].mxu0
        %v9377 = vadd.f32 0.0, %v9376
        %v9378 = vpop.f32.mrb[0].mxu0
        %9379 = vmatprep.mubr.f32.mxu0 0.0
        %9380 = vmatmul.mubr.f32.gmra.mrb[0].mxu0 %v9170
        %v9381 = vpop.f32.mrb[0].mxu0
        %v9382 = vadd.f32 0.0, %v9381
        %v9383 = vpop.f32.mrb[0].mxu0
        %9384 = vmatprep.mubr.f32.mxu0 0.0
        %9385 = vmatmul.mubr.f32.gmra.mrb[0].mxu0 %v9173
        %v9386 = vpop.f32.mrb[0].mxu0
        %v9387 = vadd.f32 0.0, %v9386
        %v9388 = vpop.f32.mrb[0].mxu0
        %9389 = vmatprep.mubr.f32.mxu0 0.0
        %9390 = vmatmul.mubr.f32.gmra.mrb[0].mxu0 %v9176
        %v9391 = vpop.f32.mrb[0].mxu0
        %v9392 = vadd.f32 0.0, %v9391
        %v9393 = vpop.f32.mrb[0].mxu0
        %9394 = vmatprep.mubr.f32.mxu0 0.0
        %9395 = vmatmul.mubr.f32.gmra.mrb[0].mxu0 %v9179
        %v9396 = vpop.f32.mrb[0].mxu0
        %v9397 = vadd.f32 0.0, %v9396
        %v9398 = vpop.f32.mrb[0].mxu0
        %9399 = vmatprep.mubr.f32.mxu0 0.0
        %9400 = vmatmul.mubr.f32.gmra.mrb[0].mxu0 %v9182
        %v9401 = vpop.f32.mrb[0].mxu0
        %v9402 = vadd.f32 0.0, %v9401
        %v9403 = vpop.f32.mrb[0].mxu0
        %9404 = vmatprep.mubr.f32.mxu0 0.0
        %9405 = vmatmul.mubr.f32.gmra.mrb[0].mxu0 %v9185
        %v9406 = vpop.f32.mrb[0].mxu0
        %v9407 = vadd.f32 0.0, %v9406
        %v9408 = vpop.f32.mrb[0].mxu0
        %9409 = vmatprep.mubr.f32.mxu0 0.0
        %9410 = vmatmul.mubr.f32.gmra.mrb[0].mxu0 %v9188
        %v9411 = vpop.f32.mrb[0].mxu0
        %v9412 = vadd.f32 0.0, %v9411
        %v9413 = vpop.f32.mrb[0].mxu0
        %9414 = vdwg.mxu0
        %v9415 = vadd.f32 %v9025, %v9257
        %v9416 = vadd.f32 %v9026, %v9262
        %v9417 = vadd.f32 %v9027, %v9267
        %v9418 = vadd.f32 %v9028, %v9272
        %v9419 = vadd.f32 %v9029, %v9277
        %v9420 = vadd.f32 %v9030, %v9282
        %v9421 = vadd.f32 %v9031, %v9287
        %v9422 = vadd.f32 %v9032, %v9292
        %v9423 = vadd.f32 %v9033, %v9297
        %v9424 = vadd.f32 %v9034, %v9302
        %v9425 = vadd.f32 %v9035, %v9307
        %v9426 = vadd.f32 %v9036, %v9312
        %v9427 = vadd.f32 %v9037, %v9317
        %v9428 = vadd.f32 %v9038, %v9322
        %v9429 = vadd.f32 %v9039, %v9327
        %v9430 = vadd.f32 %v9040, %v9332
        %v9431 = vadd.f32 %v9041, %v9337
        %v9432 = vadd.f32 %v9042, %v9342
        %v9433 = vadd.f32 %v9043, %v9347
        %v9434 = vadd.f32 %v9044, %v9352
        %v9435 = vadd.f32 %v9045, %v9357
        %v9436 = vadd.f32 %v9046, %v9362
        %v9437 = vadd.f32 %v9047, %v9367
        %v9438 = vadd.f32 %v9048, %v9372
        %v9439 = vadd.f32 %v9049, %v9377
        %v9440 = vadd.f32 %v9050, %v9382
        %v9441 = vadd.f32 %v9051, %v9387
        %v9442 = vadd.f32 %v9052, %v9392
        %v9443 = vadd.f32 %v9053, %v9397
        %v9444 = vadd.f32 %v9054, %v9402
        %v9445 = vadd.f32 %v9055, %v9407
        %v9446 = vadd.f32 %v9056, %v9412
        %v9447 = vld [vmem:[%s364 + $0x9] sm:$0xff]
        %v9448 = vld [vmem:[%s364 + $0x11] sm:$0xff]
        %v9449 = vld [vmem:[%s364 + $0x29] sm:$0xff]
        %v9450 = vld [vmem:[%s364 + $0x31] sm:$0xff]
        %v9451 = vld [vmem:[%s364 + $0x49] sm:$0xff]
        %v9452 = vld [vmem:[%s364 + $0x51] sm:$0xff]
        %v9453 = vld [vmem:[%s364 + $0x69] sm:$0xff]
        %v9454 = vld [vmem:[%s364 + $0x71] sm:$0xff]
        %v9455 = vld [vmem:[%s364 + $0x89] sm:$0xff]
        %v9456 = vld [vmem:[%s364 + $0x91] sm:$0xff]
        %v9457 = vld [vmem:[%s364 + $0xa9] sm:$0xff]
        %v9458 = vld [vmem:[%s364 + $0xb1] sm:$0xff]
        %v9459 = vld [vmem:[%s364 + $0xc9] sm:$0xff]
        %v9460 = vld [vmem:[%s364 + $0xd1] sm:$0xff]
        %v9461 = vld [vmem:[%s364 + $0xe9] sm:$0xff]
        %v9462 = vld [vmem:[%s364 + $0xf1] sm:$0xff]
        %v9463 = vld [vmem:[%s364 + $0x109] sm:$0xff]
        %v9464 = vld [vmem:[%s364 + $0x111] sm:$0xff]
        %v9465 = vld [vmem:[%s364 + $0x129] sm:$0xff]
        %v9466 = vld [vmem:[%s364 + $0x131] sm:$0xff]
        %v9467 = vld [vmem:[%s364 + $0x149] sm:$0xff]
        %v9468 = vld [vmem:[%s364 + $0x151] sm:$0xff]
        %v9469 = vld [vmem:[%s364 + $0x169] sm:$0xff]
        %v9470 = vld [vmem:[%s364 + $0x171] sm:$0xff]
        %v9471 = vld [vmem:[%s364 + $0x189] sm:$0xff]
        %v9472 = vld [vmem:[%s364 + $0x191] sm:$0xff]
        %v9473 = vld [vmem:[%s364 + $0x1a9] sm:$0xff]
        %v9474 = vld [vmem:[%s364 + $0x1b1] sm:$0xff]
        %v9475 = vld [vmem:[%s364 + $0x1c9] sm:$0xff]
        %v9476 = vld [vmem:[%s364 + $0x1d1] sm:$0xff]
        %v9477 = vld [vmem:[%s364 + $0x1e9] sm:$0xff]
        %v9478 = vld [vmem:[%s364 + $0x1f1] sm:$0xff]
        %s9479 = scalar_lea.vmem [#allocation6], 736
        %v9480 = vld [vmem:[%s9479] sm:$0xff]
        %v9481 = vld [vmem:[%s9479 + $0x8] sm:$0xff]
        %v9482 = vld [vmem:[%s9479 + $0x10] sm:$0xff]
        %v9483 = vld [vmem:[%s9479 + $0x18] sm:$0xff]
        %v9485 = vsel %vm470, %v9447, 0
        %v9488 = vsel %vm470, %v9448, 0
        %v9491 = vsel %vm470, %v9449, 0
        %v9494 = vsel %vm470, %v9450, 0
        %v9497 = vsel %vm470, %v9451, 0
        %v9500 = vsel %vm470, %v9452, 0
        %v9503 = vsel %vm470, %v9453, 0
        %v9506 = vsel %vm470, %v9454, 0
        %v9509 = vsel %vm470, %v9455, 0
        %v9512 = vsel %vm470, %v9456, 0
        %v9515 = vsel %vm470, %v9457, 0
        %v9518 = vsel %vm470, %v9458, 0
        %v9521 = vsel %vm470, %v9459, 0
        %v9524 = vsel %vm470, %v9460, 0
        %v9527 = vsel %vm470, %v9461, 0
        %v9530 = vsel %vm470, %v9462, 0
        %v9533 = vsel %vm470, %v9463, 0
        %v9536 = vsel %vm470, %v9464, 0
        %v9539 = vsel %vm470, %v9465, 0
        %v9542 = vsel %vm470, %v9466, 0
        %v9545 = vsel %vm470, %v9467, 0
        %v9548 = vsel %vm470, %v9468, 0
        %v9551 = vsel %vm470, %v9469, 0
        %v9554 = vsel %vm470, %v9470, 0
        %v9557 = vsel %vm470, %v9471, 0
        %v9560 = vsel %vm470, %v9472, 0
        %v9563 = vsel %vm470, %v9473, 0
        %v9566 = vsel %vm470, %v9474, 0
        %v9569 = vsel %vm470, %v9475, 0
        %v9572 = vsel %vm470, %v9476, 0
        %v9575 = vsel %vm470, %v9477, 0
        %v9578 = vsel %vm470, %v9478, 0
        %9580 = vmatprep.subr.mxu0 0.0
        %9581 = vmatpush1.msra.mxu0 %v9480
        %9582 = vmatprep.subr.mxu0 0.0
        %9583 = vmatpush1.msra.mxu0 %v9481
        %9584 = vmatprep.subr.mxu0 0.0
        %9585 = vmatpush1.msra.mxu0 %v9482
        %9586 = vmatprep.subr.mxu0 0.0
        %9587 = vmatpush1.msra.mxu0 %v9483
        %9588 = vmatprep.subr.mxu0 0.0
        %9589 = vmatpush1.msra.mxu0 0.0
        %9590 = vmatprep.subr.mxu0 0.0
        %9591 = vmatpush1.msra.mxu0 0.0
        %9592 = vmatprep.subr.mxu0 0.0
        %9593 = vmatpush1.msra.mxu0 0.0
        %9594 = vmatprep.subr.mxu0 0.0
        %9595 = vmatpush1.msra.mxu0 0.0
        %9596 = vmatprep.subr.mxu0 0.0
        %9597 = vmatpush1.msra.mxu0 0.0
        %9598 = vmatprep.subr.mxu0 0.0
        %9599 = vmatpush1.msra.mxu0 0.0
        %9600 = vmatprep.subr.mxu0 0.0
        %9601 = vmatpush1.msra.mxu0 0.0
        %9602 = vmatprep.subr.mxu0 0.0
        %9603 = vmatpush1.msra.mxu0 0.0
        %9604 = vmatprep.subr.mxu0 0.0
        %9605 = vmatpush1.msra.mxu0 0.0
        %9606 = vmatprep.subr.mxu0 0.0
        %9607 = vmatpush1.msra.mxu0 0.0
        %9608 = vmatprep.subr.mxu0 0.0
        %9609 = vmatpush1.msra.mxu0 0.0
        %9610 = vmatprep.subr.mxu0 0.0
        %9611 = vmatpush1.msra.mxu0 0.0
        %9612 = vmatprep.subr.mxu0 0.0
        %9613 = vmatpush1.msra.mxu0 0.0
        %9614 = vmatprep.subr.mxu0 0.0
        %9615 = vmatpush1.msra.mxu0 0.0
        %9616 = vmatprep.subr.mxu0 0.0
        %9617 = vmatpush1.msra.mxu0 0.0
        %9618 = vmatprep.subr.mxu0 0.0
        %9619 = vmatpush1.msra.mxu0 0.0
        %9620 = vmatprep.subr.mxu0 0.0
        %9621 = vmatpush1.msra.mxu0 0.0
        %9622 = vmatprep.subr.mxu0 0.0
        %9623 = vmatpush1.msra.mxu0 0.0
        %9624 = vmatprep.subr.mxu0 0.0
        %9625 = vmatpush1.msra.mxu0 0.0
        %9626 = vmatprep.subr.mxu0 0.0
        %9627 = vmatpush1.msra.mxu0 0.0
        %9628 = vmatprep.subr.mxu0 0.0
        %9629 = vmatpush1.msra.mxu0 0.0
        %9630 = vmatprep.subr.mxu0 0.0
        %9631 = vmatpush1.msra.mxu0 0.0
        %9632 = vmatprep.subr.mxu0 0.0
        %9633 = vmatpush1.msra.mxu0 0.0
        %9634 = vmatprep.subr.mxu0 0.0
        %9635 = vmatpush1.msra.mxu0 0.0
        %9636 = vmatprep.subr.mxu0 0.0
        %9637 = vmatpush1.msra.mxu0 0.0
        %9638 = vmatprep.subr.mxu0 0.0
        %9639 = vmatpush1.msra.mxu0 0.0
        %9640 = vmatprep.subr.mxu0 0.0
        %9641 = vmatpush1.msra.mxu0 0.0
        %9642 = vmatprep.subr.mxu0 0.0
        %9643 = vmatpush1.msra.mxu0 0.0
        %9644 = vmatprep.mubr.f32.mxu0 0.0
        %9645 = vmatmul.mubr.f32.gmra.mrb[0].mxu0 %v9485
        %v9646 = vpop.f32.mrb[0].mxu0
        %v9647 = vadd.f32 0.0, %v9646
        %v9648 = vpop.f32.mrb[0].mxu0
        %9649 = vmatprep.mubr.f32.mxu0 0.0
        %9650 = vmatmul.mubr.f32.gmra.mrb[0].mxu0 %v9488
        %v9651 = vpop.f32.mrb[0].mxu0
        %v9652 = vadd.f32 0.0, %v9651
        %v9653 = vpop.f32.mrb[0].mxu0
        %9654 = vmatprep.mubr.f32.mxu0 0.0
        %9655 = vmatmul.mubr.f32.gmra.mrb[0].mxu0 %v9491
        %v9656 = vpop.f32.mrb[0].mxu0
        %v9657 = vadd.f32 0.0, %v9656
        %v9658 = vpop.f32.mrb[0].mxu0
        %9659 = vmatprep.mubr.f32.mxu0 0.0
        %9660 = vmatmul.mubr.f32.gmra.mrb[0].mxu0 %v9494
        %v9661 = vpop.f32.mrb[0].mxu0
        %v9662 = vadd.f32 0.0, %v9661
        %v9663 = vpop.f32.mrb[0].mxu0
        %9664 = vmatprep.mubr.f32.mxu0 0.0
        %9665 = vmatmul.mubr.f32.gmra.mrb[0].mxu0 %v9497
        %v9666 = vpop.f32.mrb[0].mxu0
        %v9667 = vadd.f32 0.0, %v9666
        %v9668 = vpop.f32.mrb[0].mxu0
        %9669 = vmatprep.mubr.f32.mxu0 0.0
        %9670 = vmatmul.mubr.f32.gmra.mrb[0].mxu0 %v9500
        %v9671 = vpop.f32.mrb[0].mxu0
        %v9672 = vadd.f32 0.0, %v9671
        %v9673 = vpop.f32.mrb[0].mxu0
        %9674 = vmatprep.mubr.f32.mxu0 0.0
        %9675 = vmatmul.mubr.f32.gmra.mrb[0].mxu0 %v9503
        %v9676 = vpop.f32.mrb[0].mxu0
        %v9677 = vadd.f32 0.0, %v9676
        %v9678 = vpop.f32.mrb[0].mxu0
        %9679 = vmatprep.mubr.f32.mxu0 0.0
        %9680 = vmatmul.mubr.f32.gmra.mrb[0].mxu0 %v9506
        %v9681 = vpop.f32.mrb[0].mxu0
        %v9682 = vadd.f32 0.0, %v9681
        %v9683 = vpop.f32.mrb[0].mxu0
        %9684 = vmatprep.mubr.f32.mxu0 0.0
        %9685 = vmatmul.mubr.f32.gmra.mrb[0].mxu0 %v9509
        %v9686 = vpop.f32.mrb[0].mxu0
        %v9687 = vadd.f32 0.0, %v9686
        %v9688 = vpop.f32.mrb[0].mxu0
        %9689 = vmatprep.mubr.f32.mxu0 0.0
        %9690 = vmatmul.mubr.f32.gmra.mrb[0].mxu0 %v9512
        %v9691 = vpop.f32.mrb[0].mxu0
        %v9692 = vadd.f32 0.0, %v9691
        %v9693 = vpop.f32.mrb[0].mxu0
        %9694 = vmatprep.mubr.f32.mxu0 0.0
        %9695 = vmatmul.mubr.f32.gmra.mrb[0].mxu0 %v9515
        %v9696 = vpop.f32.mrb[0].mxu0
        %v9697 = vadd.f32 0.0, %v9696
        %v9698 = vpop.f32.mrb[0].mxu0
        %9699 = vmatprep.mubr.f32.mxu0 0.0
        %9700 = vmatmul.mubr.f32.gmra.mrb[0].mxu0 %v9518
        %v9701 = vpop.f32.mrb[0].mxu0
        %v9702 = vadd.f32 0.0, %v9701
        %v9703 = vpop.f32.mrb[0].mxu0
        %9704 = vmatprep.mubr.f32.mxu0 0.0
        %9705 = vmatmul.mubr.f32.gmra.mrb[0].mxu0 %v9521
        %v9706 = vpop.f32.mrb[0].mxu0
        %v9707 = vadd.f32 0.0, %v9706
        %v9708 = vpop.f32.mrb[0].mxu0
        %9709 = vmatprep.mubr.f32.mxu0 0.0
        %9710 = vmatmul.mubr.f32.gmra.mrb[0].mxu0 %v9524
        %v9711 = vpop.f32.mrb[0].mxu0
        %v9712 = vadd.f32 0.0, %v9711
        %v9713 = vpop.f32.mrb[0].mxu0
        %9714 = vmatprep.mubr.f32.mxu0 0.0
        %9715 = vmatmul.mubr.f32.gmra.mrb[0].mxu0 %v9527
        %v9716 = vpop.f32.mrb[0].mxu0
        %v9717 = vadd.f32 0.0, %v9716
        %v9718 = vpop.f32.mrb[0].mxu0
        %9719 = vmatprep.mubr.f32.mxu0 0.0
        %9720 = vmatmul.mubr.f32.gmra.mrb[0].mxu0 %v9530
        %v9721 = vpop.f32.mrb[0].mxu0
        %v9722 = vadd.f32 0.0, %v9721
        %v9723 = vpop.f32.mrb[0].mxu0
        %9724 = vmatprep.mubr.f32.mxu0 0.0
        %9725 = vmatmul.mubr.f32.gmra.mrb[0].mxu0 %v9533
        %v9726 = vpop.f32.mrb[0].mxu0
        %v9727 = vadd.f32 0.0, %v9726
        %v9728 = vpop.f32.mrb[0].mxu0
        %9729 = vmatprep.mubr.f32.mxu0 0.0
        %9730 = vmatmul.mubr.f32.gmra.mrb[0].mxu0 %v9536
        %v9731 = vpop.f32.mrb[0].mxu0
        %v9732 = vadd.f32 0.0, %v9731
        %v9733 = vpop.f32.mrb[0].mxu0
        %9734 = vmatprep.mubr.f32.mxu0 0.0
        %9735 = vmatmul.mubr.f32.gmra.mrb[0].mxu0 %v9539
        %v9736 = vpop.f32.mrb[0].mxu0
        %v9737 = vadd.f32 0.0, %v9736
        %v9738 = vpop.f32.mrb[0].mxu0
        %9739 = vmatprep.mubr.f32.mxu0 0.0
        %9740 = vmatmul.mubr.f32.gmra.mrb[0].mxu0 %v9542
        %v9741 = vpop.f32.mrb[0].mxu0
        %v9742 = vadd.f32 0.0, %v9741
        %v9743 = vpop.f32.mrb[0].mxu0
        %9744 = vmatprep.mubr.f32.mxu0 0.0
        %9745 = vmatmul.mubr.f32.gmra.mrb[0].mxu0 %v9545
        %v9746 = vpop.f32.mrb[0].mxu0
        %v9747 = vadd.f32 0.0, %v9746
        %v9748 = vpop.f32.mrb[0].mxu0
        %9749 = vmatprep.mubr.f32.mxu0 0.0
        %9750 = vmatmul.mubr.f32.gmra.mrb[0].mxu0 %v9548
        %v9751 = vpop.f32.mrb[0].mxu0
        %v9752 = vadd.f32 0.0, %v9751
        %v9753 = vpop.f32.mrb[0].mxu0
        %9754 = vmatprep.mubr.f32.mxu0 0.0
        %9755 = vmatmul.mubr.f32.gmra.mrb[0].mxu0 %v9551
        %v9756 = vpop.f32.mrb[0].mxu0
        %v9757 = vadd.f32 0.0, %v9756
        %v9758 = vpop.f32.mrb[0].mxu0
        %9759 = vmatprep.mubr.f32.mxu0 0.0
        %9760 = vmatmul.mubr.f32.gmra.mrb[0].mxu0 %v9554
        %v9761 = vpop.f32.mrb[0].mxu0
        %v9762 = vadd.f32 0.0, %v9761
        %v9763 = vpop.f32.mrb[0].mxu0
        %9764 = vmatprep.mubr.f32.mxu0 0.0
        %9765 = vmatmul.mubr.f32.gmra.mrb[0].mxu0 %v9557
        %v9766 = vpop.f32.mrb[0].mxu0
        %v9767 = vadd.f32 0.0, %v9766
        %v9768 = vpop.f32.mrb[0].mxu0
        %9769 = vmatprep.mubr.f32.mxu0 0.0
        %9770 = vmatmul.mubr.f32.gmra.mrb[0].mxu0 %v9560
        %v9771 = vpop.f32.mrb[0].mxu0
        %v9772 = vadd.f32 0.0, %v9771
        %v9773 = vpop.f32.mrb[0].mxu0
        %9774 = vmatprep.mubr.f32.mxu0 0.0
        %9775 = vmatmul.mubr.f32.gmra.mrb[0].mxu0 %v9563
        %v9776 = vpop.f32.mrb[0].mxu0
        %v9777 = vadd.f32 0.0, %v9776
        %v9778 = vpop.f32.mrb[0].mxu0
        %9779 = vmatprep.mubr.f32.mxu0 0.0
        %9780 = vmatmul.mubr.f32.gmra.mrb[0].mxu0 %v9566
        %v9781 = vpop.f32.mrb[0].mxu0
        %v9782 = vadd.f32 0.0, %v9781
        %v9783 = vpop.f32.mrb[0].mxu0
        %9784 = vmatprep.mubr.f32.mxu0 0.0
        %9785 = vmatmul.mubr.f32.gmra.mrb[0].mxu0 %v9569
        %v9786 = vpop.f32.mrb[0].mxu0
        %v9787 = vadd.f32 0.0, %v9786
        %v9788 = vpop.f32.mrb[0].mxu0
        %9789 = vmatprep.mubr.f32.mxu0 0.0
        %9790 = vmatmul.mubr.f32.gmra.mrb[0].mxu0 %v9572
        %v9791 = vpop.f32.mrb[0].mxu0
        %v9792 = vadd.f32 0.0, %v9791
        %v9793 = vpop.f32.mrb[0].mxu0
        %9794 = vmatprep.mubr.f32.mxu0 0.0
        %9795 = vmatmul.mubr.f32.gmra.mrb[0].mxu0 %v9575
        %v9796 = vpop.f32.mrb[0].mxu0
        %v9797 = vadd.f32 0.0, %v9796
        %v9798 = vpop.f32.mrb[0].mxu0
        %9799 = vmatprep.mubr.f32.mxu0 0.0
        %9800 = vmatmul.mubr.f32.gmra.mrb[0].mxu0 %v9578
        %v9801 = vpop.f32.mrb[0].mxu0
        %v9802 = vadd.f32 0.0, %v9801
        %v9803 = vpop.f32.mrb[0].mxu0
        %9804 = vdwg.mxu0
        %v9805 = vadd.f32 %v9415, %v9647
        %v9806 = vadd.f32 %v9416, %v9652
        %v9807 = vadd.f32 %v9417, %v9657
        %v9808 = vadd.f32 %v9418, %v9662
        %v9809 = vadd.f32 %v9419, %v9667
        %v9810 = vadd.f32 %v9420, %v9672
        %v9811 = vadd.f32 %v9421, %v9677
        %v9812 = vadd.f32 %v9422, %v9682
        %v9813 = vadd.f32 %v9423, %v9687
        %v9814 = vadd.f32 %v9424, %v9692
        %v9815 = vadd.f32 %v9425, %v9697
        %v9816 = vadd.f32 %v9426, %v9702
        %v9817 = vadd.f32 %v9427, %v9707
        %v9818 = vadd.f32 %v9428, %v9712
        %v9819 = vadd.f32 %v9429, %v9717
        %v9820 = vadd.f32 %v9430, %v9722
        %v9821 = vadd.f32 %v9431, %v9727
        %v9822 = vadd.f32 %v9432, %v9732
        %v9823 = vadd.f32 %v9433, %v9737
        %v9824 = vadd.f32 %v9434, %v9742
        %v9825 = vadd.f32 %v9435, %v9747
        %v9826 = vadd.f32 %v9436, %v9752
        %v9827 = vadd.f32 %v9437, %v9757
        %v9828 = vadd.f32 %v9438, %v9762
        %v9829 = vadd.f32 %v9439, %v9767
        %v9830 = vadd.f32 %v9440, %v9772
        %v9831 = vadd.f32 %v9441, %v9777
        %v9832 = vadd.f32 %v9442, %v9782
        %v9833 = vadd.f32 %v9443, %v9787
        %v9834 = vadd.f32 %v9444, %v9792
        %v9835 = vadd.f32 %v9445, %v9797
        %v9836 = vadd.f32 %v9446, %v9802
        %v9837 = vld [vmem:[%s2673 + $0x7] sm:$0xff]
        %v9838 = vld [vmem:[%s2673 + $0xf] sm:$0xff]
        %v9839 = vld [vmem:[%s2673 + $0x27] sm:$0xff]
        %v9840 = vld [vmem:[%s2673 + $0x2f] sm:$0xff]
        %v9841 = vld [vmem:[%s2673 + $0x47] sm:$0xff]
        %v9842 = vld [vmem:[%s2673 + $0x4f] sm:$0xff]
        %v9843 = vld [vmem:[%s2673 + $0x67] sm:$0xff]
        %v9844 = vld [vmem:[%s2673 + $0x6f] sm:$0xff]
        %v9845 = vld [vmem:[%s2673 + $0x87] sm:$0xff]
        %v9846 = vld [vmem:[%s2673 + $0x8f] sm:$0xff]
        %v9847 = vld [vmem:[%s2673 + $0xa7] sm:$0xff]
        %v9848 = vld [vmem:[%s2673 + $0xaf] sm:$0xff]
        %v9849 = vld [vmem:[%s2673 + $0xc7] sm:$0xff]
        %v9850 = vld [vmem:[%s2673 + $0xcf] sm:$0xff]
        %v9851 = vld [vmem:[%s2673 + $0xe7] sm:$0xff]
        %v9852 = vld [vmem:[%s2673 + $0xef] sm:$0xff]
        %v9853 = vld [vmem:[%s2673 + $0x107] sm:$0xff]
        %v9854 = vld [vmem:[%s2673 + $0x10f] sm:$0xff]
        %v9855 = vld [vmem:[%s2673 + $0x127] sm:$0xff]
        %v9856 = vld [vmem:[%s2673 + $0x12f] sm:$0xff]
        %v9857 = vld [vmem:[%s2673 + $0x147] sm:$0xff]
        %v9858 = vld [vmem:[%s2673 + $0x14f] sm:$0xff]
        %v9859 = vld [vmem:[%s2673 + $0x167] sm:$0xff]
        %v9860 = vld [vmem:[%s2673 + $0x16f] sm:$0xff]
        %v9861 = vld [vmem:[%s2673 + $0x187] sm:$0xff]
        %v9862 = vld [vmem:[%s2673 + $0x18f] sm:$0xff]
        %v9863 = vld [vmem:[%s2673 + $0x1a7] sm:$0xff]
        %v9864 = vld [vmem:[%s2673 + $0x1af] sm:$0xff]
        %v9865 = vld [vmem:[%s2673 + $0x1c7] sm:$0xff]
        %v9866 = vld [vmem:[%s2673 + $0x1cf] sm:$0xff]
        %v9867 = vld [vmem:[%s2673 + $0x1e7] sm:$0xff]
        %v9868 = vld [vmem:[%s2673 + $0x1ef] sm:$0xff]
        %s9869 = scalar_lea.vmem [#allocation6], 768
        %v9870 = vld [vmem:[%s9869] sm:$0xff]
        %v9871 = vld [vmem:[%s9869 + $0x8] sm:$0xff]
        %v9872 = vld [vmem:[%s9869 + $0x10] sm:$0xff]
        %v9873 = vld [vmem:[%s9869 + $0x18] sm:$0xff]
        %v9875 = vsel %vm470, %v9837, 0
        %v9878 = vsel %vm470, %v9838, 0
        %v9881 = vsel %vm470, %v9839, 0
        %v9884 = vsel %vm470, %v9840, 0
        %v9887 = vsel %vm470, %v9841, 0
        %v9890 = vsel %vm470, %v9842, 0
        %v9893 = vsel %vm470, %v9843, 0
        %v9896 = vsel %vm470, %v9844, 0
        %v9899 = vsel %vm470, %v9845, 0
        %v9902 = vsel %vm470, %v9846, 0
        %v9905 = vsel %vm470, %v9847, 0
        %v9908 = vsel %vm470, %v9848, 0
        %v9911 = vsel %vm470, %v9849, 0
        %v9914 = vsel %vm470, %v9850, 0
        %v9917 = vsel %vm470, %v9851, 0
        %v9920 = vsel %vm470, %v9852, 0
        %v9923 = vsel %vm470, %v9853, 0
        %v9926 = vsel %vm470, %v9854, 0
        %v9929 = vsel %vm470, %v9855, 0
        %v9932 = vsel %vm470, %v9856, 0
        %v9935 = vsel %vm470, %v9857, 0
        %v9938 = vsel %vm470, %v9858, 0
        %v9941 = vsel %vm470, %v9859, 0
        %v9944 = vsel %vm470, %v9860, 0
        %v9947 = vsel %vm470, %v9861, 0
        %v9950 = vsel %vm470, %v9862, 0
        %v9953 = vsel %vm470, %v9863, 0
        %v9956 = vsel %vm470, %v9864, 0
        %v9959 = vsel %vm470, %v9865, 0
        %v9962 = vsel %vm470, %v9866, 0
        %v9965 = vsel %vm470, %v9867, 0
        %v9968 = vsel %vm470, %v9868, 0
        %9970 = vmatprep.subr.mxu0 0.0
        %9971 = vmatpush1.msra.mxu0 %v9870
        %9972 = vmatprep.subr.mxu0 0.0
        %9973 = vmatpush1.msra.mxu0 %v9871
        %9974 = vmatprep.subr.mxu0 0.0
        %9975 = vmatpush1.msra.mxu0 %v9872
        %9976 = vmatprep.subr.mxu0 0.0
        %9977 = vmatpush1.msra.mxu0 %v9873
        %9978 = vmatprep.subr.mxu0 0.0
        %9979 = vmatpush1.msra.mxu0 0.0
        %9980 = vmatprep.subr.mxu0 0.0
        %9981 = vmatpush1.msra.mxu0 0.0
        %9982 = vmatprep.subr.mxu0 0.0
        %9983 = vmatpush1.msra.mxu0 0.0
        %9984 = vmatprep.subr.mxu0 0.0
        %9985 = vmatpush1.msra.mxu0 0.0
        %9986 = vmatprep.subr.mxu0 0.0
        %9987 = vmatpush1.msra.mxu0 0.0
        %9988 = vmatprep.subr.mxu0 0.0
        %9989 = vmatpush1.msra.mxu0 0.0
        %9990 = vmatprep.subr.mxu0 0.0
        %9991 = vmatpush1.msra.mxu0 0.0
        %9992 = vmatprep.subr.mxu0 0.0
        %9993 = vmatpush1.msra.mxu0 0.0
        %9994 = vmatprep.subr.mxu0 0.0
        %9995 = vmatpush1.msra.mxu0 0.0
        %9996 = vmatprep.subr.mxu0 0.0
        %9997 = vmatpush1.msra.mxu0 0.0
        %9998 = vmatprep.subr.mxu0 0.0
        %9999 = vmatpush1.msra.mxu0 0.0
        %10000 = vmatprep.subr.mxu0 0.0
        %10001 = vmatpush1.msra.mxu0 0.0
        %10002 = vmatprep.subr.mxu0 0.0
        %10003 = vmatpush1.msra.mxu0 0.0
        %10004 = vmatprep.subr.mxu0 0.0
        %10005 = vmatpush1.msra.mxu0 0.0
        %10006 = vmatprep.subr.mxu0 0.0
        %10007 = vmatpush1.msra.mxu0 0.0
        %10008 = vmatprep.subr.mxu0 0.0
        %10009 = vmatpush1.msra.mxu0 0.0
        %10010 = vmatprep.subr.mxu0 0.0
        %10011 = vmatpush1.msra.mxu0 0.0
        %10012 = vmatprep.subr.mxu0 0.0
        %10013 = vmatpush1.msra.mxu0 0.0
        %10014 = vmatprep.subr.mxu0 0.0
        %10015 = vmatpush1.msra.mxu0 0.0
        %10016 = vmatprep.subr.mxu0 0.0
        %10017 = vmatpush1.msra.mxu0 0.0
        %10018 = vmatprep.subr.mxu0 0.0
        %10019 = vmatpush1.msra.mxu0 0.0
        %10020 = vmatprep.subr.mxu0 0.0
        %10021 = vmatpush1.msra.mxu0 0.0
        %10022 = vmatprep.subr.mxu0 0.0
        %10023 = vmatpush1.msra.mxu0 0.0
        %10024 = vmatprep.subr.mxu0 0.0
        %10025 = vmatpush1.msra.mxu0 0.0
        %10026 = vmatprep.subr.mxu0 0.0
        %10027 = vmatpush1.msra.mxu0 0.0
        %10028 = vmatprep.subr.mxu0 0.0
        %10029 = vmatpush1.msra.mxu0 0.0
        %10030 = vmatprep.subr.mxu0 0.0
        %10031 = vmatpush1.msra.mxu0 0.0
        %10032 = vmatprep.subr.mxu0 0.0
        %10033 = vmatpush1.msra.mxu0 0.0
        %10034 = vmatprep.mubr.f32.mxu0 0.0
        %10035 = vmatmul.mubr.f32.gmra.mrb[0].mxu0 %v9875
        %v10036 = vpop.f32.mrb[0].mxu0
        %v10037 = vadd.f32 0.0, %v10036
        %v10038 = vpop.f32.mrb[0].mxu0
        %10039 = vmatprep.mubr.f32.mxu0 0.0
        %10040 = vmatmul.mubr.f32.gmra.mrb[0].mxu0 %v9878
        %v10041 = vpop.f32.mrb[0].mxu0
        %v10042 = vadd.f32 0.0, %v10041
        %v10043 = vpop.f32.mrb[0].mxu0
        %10044 = vmatprep.mubr.f32.mxu0 0.0
        %10045 = vmatmul.mubr.f32.gmra.mrb[0].mxu0 %v9881
        %v10046 = vpop.f32.mrb[0].mxu0
        %v10047 = vadd.f32 0.0, %v10046
        %v10048 = vpop.f32.mrb[0].mxu0
        %10049 = vmatprep.mubr.f32.mxu0 0.0
        %10050 = vmatmul.mubr.f32.gmra.mrb[0].mxu0 %v9884
        %v10051 = vpop.f32.mrb[0].mxu0
        %v10052 = vadd.f32 0.0, %v10051
        %v10053 = vpop.f32.mrb[0].mxu0
        %10054 = vmatprep.mubr.f32.mxu0 0.0
        %10055 = vmatmul.mubr.f32.gmra.mrb[0].mxu0 %v9887
        %v10056 = vpop.f32.mrb[0].mxu0
        %v10057 = vadd.f32 0.0, %v10056
        %v10058 = vpop.f32.mrb[0].mxu0
        %10059 = vmatprep.mubr.f32.mxu0 0.0
        %10060 = vmatmul.mubr.f32.gmra.mrb[0].mxu0 %v9890
        %v10061 = vpop.f32.mrb[0].mxu0
        %v10062 = vadd.f32 0.0, %v10061
        %v10063 = vpop.f32.mrb[0].mxu0
        %10064 = vmatprep.mubr.f32.mxu0 0.0
        %10065 = vmatmul.mubr.f32.gmra.mrb[0].mxu0 %v9893
        %v10066 = vpop.f32.mrb[0].mxu0
        %v10067 = vadd.f32 0.0, %v10066
        %v10068 = vpop.f32.mrb[0].mxu0
        %10069 = vmatprep.mubr.f32.mxu0 0.0
        %10070 = vmatmul.mubr.f32.gmra.mrb[0].mxu0 %v9896
        %v10071 = vpop.f32.mrb[0].mxu0
        %v10072 = vadd.f32 0.0, %v10071
        %v10073 = vpop.f32.mrb[0].mxu0
        %10074 = vmatprep.mubr.f32.mxu0 0.0
        %10075 = vmatmul.mubr.f32.gmra.mrb[0].mxu0 %v9899
        %v10076 = vpop.f32.mrb[0].mxu0
        %v10077 = vadd.f32 0.0, %v10076
        %v10078 = vpop.f32.mrb[0].mxu0
        %10079 = vmatprep.mubr.f32.mxu0 0.0
        %10080 = vmatmul.mubr.f32.gmra.mrb[0].mxu0 %v9902
        %v10081 = vpop.f32.mrb[0].mxu0
        %v10082 = vadd.f32 0.0, %v10081
        %v10083 = vpop.f32.mrb[0].mxu0
        %10084 = vmatprep.mubr.f32.mxu0 0.0
        %10085 = vmatmul.mubr.f32.gmra.mrb[0].mxu0 %v9905
        %v10086 = vpop.f32.mrb[0].mxu0
        %v10087 = vadd.f32 0.0, %v10086
        %v10088 = vpop.f32.mrb[0].mxu0
        %10089 = vmatprep.mubr.f32.mxu0 0.0
        %10090 = vmatmul.mubr.f32.gmra.mrb[0].mxu0 %v9908
        %v10091 = vpop.f32.mrb[0].mxu0
        %v10092 = vadd.f32 0.0, %v10091
        %v10093 = vpop.f32.mrb[0].mxu0
        %10094 = vmatprep.mubr.f32.mxu0 0.0
        %10095 = vmatmul.mubr.f32.gmra.mrb[0].mxu0 %v9911
        %v10096 = vpop.f32.mrb[0].mxu0
        %v10097 = vadd.f32 0.0, %v10096
        %v10098 = vpop.f32.mrb[0].mxu0
        %10099 = vmatprep.mubr.f32.mxu0 0.0
        %10100 = vmatmul.mubr.f32.gmra.mrb[0].mxu0 %v9914
        %v10101 = vpop.f32.mrb[0].mxu0
        %v10102 = vadd.f32 0.0, %v10101
        %v10103 = vpop.f32.mrb[0].mxu0
        %10104 = vmatprep.mubr.f32.mxu0 0.0
        %10105 = vmatmul.mubr.f32.gmra.mrb[0].mxu0 %v9917
        %v10106 = vpop.f32.mrb[0].mxu0
        %v10107 = vadd.f32 0.0, %v10106
        %v10108 = vpop.f32.mrb[0].mxu0
        %10109 = vmatprep.mubr.f32.mxu0 0.0
        %10110 = vmatmul.mubr.f32.gmra.mrb[0].mxu0 %v9920
        %v10111 = vpop.f32.mrb[0].mxu0
        %v10112 = vadd.f32 0.0, %v10111
        %v10113 = vpop.f32.mrb[0].mxu0
        %10114 = vmatprep.mubr.f32.mxu0 0.0
        %10115 = vmatmul.mubr.f32.gmra.mrb[0].mxu0 %v9923
        %v10116 = vpop.f32.mrb[0].mxu0
        %v10117 = vadd.f32 0.0, %v10116
        %v10118 = vpop.f32.mrb[0].mxu0
        %10119 = vmatprep.mubr.f32.mxu0 0.0
        %10120 = vmatmul.mubr.f32.gmra.mrb[0].mxu0 %v9926
        %v10121 = vpop.f32.mrb[0].mxu0
        %v10122 = vadd.f32 0.0, %v10121
        %v10123 = vpop.f32.mrb[0].mxu0
        %10124 = vmatprep.mubr.f32.mxu0 0.0
        %10125 = vmatmul.mubr.f32.gmra.mrb[0].mxu0 %v9929
        %v10126 = vpop.f32.mrb[0].mxu0
        %v10127 = vadd.f32 0.0, %v10126
        %v10128 = vpop.f32.mrb[0].mxu0
        %10129 = vmatprep.mubr.f32.mxu0 0.0
        %10130 = vmatmul.mubr.f32.gmra.mrb[0].mxu0 %v9932
        %v10131 = vpop.f32.mrb[0].mxu0
        %v10132 = vadd.f32 0.0, %v10131
        %v10133 = vpop.f32.mrb[0].mxu0
        %10134 = vmatprep.mubr.f32.mxu0 0.0
        %10135 = vmatmul.mubr.f32.gmra.mrb[0].mxu0 %v9935
        %v10136 = vpop.f32.mrb[0].mxu0
        %v10137 = vadd.f32 0.0, %v10136
        %v10138 = vpop.f32.mrb[0].mxu0
        %10139 = vmatprep.mubr.f32.mxu0 0.0
        %10140 = vmatmul.mubr.f32.gmra.mrb[0].mxu0 %v9938
        %v10141 = vpop.f32.mrb[0].mxu0
        %v10142 = vadd.f32 0.0, %v10141
        %v10143 = vpop.f32.mrb[0].mxu0
        %10144 = vmatprep.mubr.f32.mxu0 0.0
        %10145 = vmatmul.mubr.f32.gmra.mrb[0].mxu0 %v9941
        %v10146 = vpop.f32.mrb[0].mxu0
        %v10147 = vadd.f32 0.0, %v10146
        %v10148 = vpop.f32.mrb[0].mxu0
        %10149 = vmatprep.mubr.f32.mxu0 0.0
        %10150 = vmatmul.mubr.f32.gmra.mrb[0].mxu0 %v9944
        %v10151 = vpop.f32.mrb[0].mxu0
        %v10152 = vadd.f32 0.0, %v10151
        %v10153 = vpop.f32.mrb[0].mxu0
        %10154 = vmatprep.mubr.f32.mxu0 0.0
        %10155 = vmatmul.mubr.f32.gmra.mrb[0].mxu0 %v9947
        %v10156 = vpop.f32.mrb[0].mxu0
        %v10157 = vadd.f32 0.0, %v10156
        %v10158 = vpop.f32.mrb[0].mxu0
        %10159 = vmatprep.mubr.f32.mxu0 0.0
        %10160 = vmatmul.mubr.f32.gmra.mrb[0].mxu0 %v9950
        %v10161 = vpop.f32.mrb[0].mxu0
        %v10162 = vadd.f32 0.0, %v10161
        %v10163 = vpop.f32.mrb[0].mxu0
        %10164 = vmatprep.mubr.f32.mxu0 0.0
        %10165 = vmatmul.mubr.f32.gmra.mrb[0].mxu0 %v9953
        %v10166 = vpop.f32.mrb[0].mxu0
        %v10167 = vadd.f32 0.0, %v10166
        %v10168 = vpop.f32.mrb[0].mxu0
        %10169 = vmatprep.mubr.f32.mxu0 0.0
        %10170 = vmatmul.mubr.f32.gmra.mrb[0].mxu0 %v9956
        %v10171 = vpop.f32.mrb[0].mxu0
        %v10172 = vadd.f32 0.0, %v10171
        %v10173 = vpop.f32.mrb[0].mxu0
        %10174 = vmatprep.mubr.f32.mxu0 0.0
        %10175 = vmatmul.mubr.f32.gmra.mrb[0].mxu0 %v9959
        %v10176 = vpop.f32.mrb[0].mxu0
        %v10177 = vadd.f32 0.0, %v10176
        %v10178 = vpop.f32.mrb[0].mxu0
        %10179 = vmatprep.mubr.f32.mxu0 0.0
        %10180 = vmatmul.mubr.f32.gmra.mrb[0].mxu0 %v9962
        %v10181 = vpop.f32.mrb[0].mxu0
        %v10182 = vadd.f32 0.0, %v10181
        %v10183 = vpop.f32.mrb[0].mxu0
        %10184 = vmatprep.mubr.f32.mxu0 0.0
        %10185 = vmatmul.mubr.f32.gmra.mrb[0].mxu0 %v9965
        %v10186 = vpop.f32.mrb[0].mxu0
        %v10187 = vadd.f32 0.0, %v10186
        %v10188 = vpop.f32.mrb[0].mxu0
        %10189 = vmatprep.mubr.f32.mxu0 0.0
        %10190 = vmatmul.mubr.f32.gmra.mrb[0].mxu0 %v9968
        %v10191 = vpop.f32.mrb[0].mxu0
        %v10192 = vadd.f32 0.0, %v10191
        %v10193 = vpop.f32.mrb[0].mxu0
        %10194 = vdwg.mxu0
        %v10195 = vadd.f32 %v9805, %v10037
        %v10196 = vadd.f32 %v9806, %v10042
        %v10197 = vadd.f32 %v9807, %v10047
        %v10198 = vadd.f32 %v9808, %v10052
        %v10199 = vadd.f32 %v9809, %v10057
        %v10200 = vadd.f32 %v9810, %v10062
        %v10201 = vadd.f32 %v9811, %v10067
        %v10202 = vadd.f32 %v9812, %v10072
        %v10203 = vadd.f32 %v9813, %v10077
        %v10204 = vadd.f32 %v9814, %v10082
        %v10205 = vadd.f32 %v9815, %v10087
        %v10206 = vadd.f32 %v9816, %v10092
        %v10207 = vadd.f32 %v9817, %v10097
        %v10208 = vadd.f32 %v9818, %v10102
        %v10209 = vadd.f32 %v9819, %v10107
        %v10210 = vadd.f32 %v9820, %v10112
        %v10211 = vadd.f32 %v9821, %v10117
        %v10212 = vadd.f32 %v9822, %v10122
        %v10213 = vadd.f32 %v9823, %v10127
        %v10214 = vadd.f32 %v9824, %v10132
        %v10215 = vadd.f32 %v9825, %v10137
        %v10216 = vadd.f32 %v9826, %v10142
        %v10217 = vadd.f32 %v9827, %v10147
        %v10218 = vadd.f32 %v9828, %v10152
        %v10219 = vadd.f32 %v9829, %v10157
        %v10220 = vadd.f32 %v9830, %v10162
        %v10221 = vadd.f32 %v9831, %v10167
        %v10222 = vadd.f32 %v9832, %v10172
        %v10223 = vadd.f32 %v9833, %v10177
        %v10224 = vadd.f32 %v9834, %v10182
        %v10225 = vadd.f32 %v9835, %v10187
        %v10226 = vadd.f32 %v9836, %v10192
        %v10227 = vld [vmem:[%s2673 + $0x8] sm:$0xff]
        %v10228 = vld [vmem:[%s2673 + $0x10] sm:$0xff]
        %v10229 = vld [vmem:[%s2673 + $0x28] sm:$0xff]
        %v10230 = vld [vmem:[%s2673 + $0x30] sm:$0xff]
        %v10231 = vld [vmem:[%s2673 + $0x48] sm:$0xff]
        %v10232 = vld [vmem:[%s2673 + $0x50] sm:$0xff]
        %v10233 = vld [vmem:[%s2673 + $0x68] sm:$0xff]
        %v10234 = vld [vmem:[%s2673 + $0x70] sm:$0xff]
        %v10235 = vld [vmem:[%s2673 + $0x88] sm:$0xff]
        %v10236 = vld [vmem:[%s2673 + $0x90] sm:$0xff]
        %v10237 = vld [vmem:[%s2673 + $0xa8] sm:$0xff]
        %v10238 = vld [vmem:[%s2673 + $0xb0] sm:$0xff]
        %v10239 = vld [vmem:[%s2673 + $0xc8] sm:$0xff]
        %v10240 = vld [vmem:[%s2673 + $0xd0] sm:$0xff]
        %v10241 = vld [vmem:[%s2673 + $0xe8] sm:$0xff]
        %v10242 = vld [vmem:[%s2673 + $0xf0] sm:$0xff]
        %v10243 = vld [vmem:[%s2673 + $0x108] sm:$0xff]
        %v10244 = vld [vmem:[%s2673 + $0x110] sm:$0xff]
        %v10245 = vld [vmem:[%s2673 + $0x128] sm:$0xff]
        %v10246 = vld [vmem:[%s2673 + $0x130] sm:$0xff]
        %v10247 = vld [vmem:[%s2673 + $0x148] sm:$0xff]
        %v10248 = vld [vmem:[%s2673 + $0x150] sm:$0xff]
        %v10249 = vld [vmem:[%s2673 + $0x168] sm:$0xff]
        %v10250 = vld [vmem:[%s2673 + $0x170] sm:$0xff]
        %v10251 = vld [vmem:[%s2673 + $0x188] sm:$0xff]
        %v10252 = vld [vmem:[%s2673 + $0x190] sm:$0xff]
        %v10253 = vld [vmem:[%s2673 + $0x1a8] sm:$0xff]
        %v10254 = vld [vmem:[%s2673 + $0x1b0] sm:$0xff]
        %v10255 = vld [vmem:[%s2673 + $0x1c8] sm:$0xff]
        %v10256 = vld [vmem:[%s2673 + $0x1d0] sm:$0xff]
        %v10257 = vld [vmem:[%s2673 + $0x1e8] sm:$0xff]
        %v10258 = vld [vmem:[%s2673 + $0x1f0] sm:$0xff]
        %s10259 = scalar_lea.vmem [#allocation6], 800
        %v10260 = vld [vmem:[%s10259] sm:$0xff]
        %v10261 = vld [vmem:[%s10259 + $0x8] sm:$0xff]
        %v10262 = vld [vmem:[%s10259 + $0x10] sm:$0xff]
        %v10263 = vld [vmem:[%s10259 + $0x18] sm:$0xff]
        %v10265 = vsel %vm470, %v10227, 0
        %v10268 = vsel %vm470, %v10228, 0
        %v10271 = vsel %vm470, %v10229, 0
        %v10274 = vsel %vm470, %v10230, 0
        %v10277 = vsel %vm470, %v10231, 0
        %v10280 = vsel %vm470, %v10232, 0
        %v10283 = vsel %vm470, %v10233, 0
        %v10286 = vsel %vm470, %v10234, 0
        %v10289 = vsel %vm470, %v10235, 0
        %v10292 = vsel %vm470, %v10236, 0
        %v10295 = vsel %vm470, %v10237, 0
        %v10298 = vsel %vm470, %v10238, 0
        %v10301 = vsel %vm470, %v10239, 0
        %v10304 = vsel %vm470, %v10240, 0
        %v10307 = vsel %vm470, %v10241, 0
        %v10310 = vsel %vm470, %v10242, 0
        %v10313 = vsel %vm470, %v10243, 0
        %v10316 = vsel %vm470, %v10244, 0
        %v10319 = vsel %vm470, %v10245, 0
        %v10322 = vsel %vm470, %v10246, 0
        %v10325 = vsel %vm470, %v10247, 0
        %v10328 = vsel %vm470, %v10248, 0
        %v10331 = vsel %vm470, %v10249, 0
        %v10334 = vsel %vm470, %v10250, 0
        %v10337 = vsel %vm470, %v10251, 0
        %v10340 = vsel %vm470, %v10252, 0
        %v10343 = vsel %vm470, %v10253, 0
        %v10346 = vsel %vm470, %v10254, 0
        %v10349 = vsel %vm470, %v10255, 0
        %v10352 = vsel %vm470, %v10256, 0
        %v10355 = vsel %vm470, %v10257, 0
        %v10358 = vsel %vm470, %v10258, 0
        %10360 = vmatprep.subr.mxu0 0.0
        %10361 = vmatpush1.msra.mxu0 %v10260
        %10362 = vmatprep.subr.mxu0 0.0
        %10363 = vmatpush1.msra.mxu0 %v10261
        %10364 = vmatprep.subr.mxu0 0.0
        %10365 = vmatpush1.msra.mxu0 %v10262
        %10366 = vmatprep.subr.mxu0 0.0
        %10367 = vmatpush1.msra.mxu0 %v10263
        %10368 = vmatprep.subr.mxu0 0.0
        %10369 = vmatpush1.msra.mxu0 0.0
        %10370 = vmatprep.subr.mxu0 0.0
        %10371 = vmatpush1.msra.mxu0 0.0
        %10372 = vmatprep.subr.mxu0 0.0
        %10373 = vmatpush1.msra.mxu0 0.0
        %10374 = vmatprep.subr.mxu0 0.0
        %10375 = vmatpush1.msra.mxu0 0.0
        %10376 = vmatprep.subr.mxu0 0.0
        %10377 = vmatpush1.msra.mxu0 0.0
        %10378 = vmatprep.subr.mxu0 0.0
        %10379 = vmatpush1.msra.mxu0 0.0
        %10380 = vmatprep.subr.mxu0 0.0
        %10381 = vmatpush1.msra.mxu0 0.0
        %10382 = vmatprep.subr.mxu0 0.0
        %10383 = vmatpush1.msra.mxu0 0.0
        %10384 = vmatprep.subr.mxu0 0.0
        %10385 = vmatpush1.msra.mxu0 0.0
        %10386 = vmatprep.subr.mxu0 0.0
        %10387 = vmatpush1.msra.mxu0 0.0
        %10388 = vmatprep.subr.mxu0 0.0
        %10389 = vmatpush1.msra.mxu0 0.0
        %10390 = vmatprep.subr.mxu0 0.0
        %10391 = vmatpush1.msra.mxu0 0.0
        %10392 = vmatprep.subr.mxu0 0.0
        %10393 = vmatpush1.msra.mxu0 0.0
        %10394 = vmatprep.subr.mxu0 0.0
        %10395 = vmatpush1.msra.mxu0 0.0
        %10396 = vmatprep.subr.mxu0 0.0
        %10397 = vmatpush1.msra.mxu0 0.0
        %10398 = vmatprep.subr.mxu0 0.0
        %10399 = vmatpush1.msra.mxu0 0.0
        %10400 = vmatprep.subr.mxu0 0.0
        %10401 = vmatpush1.msra.mxu0 0.0
        %10402 = vmatprep.subr.mxu0 0.0
        %10403 = vmatpush1.msra.mxu0 0.0
        %10404 = vmatprep.subr.mxu0 0.0
        %10405 = vmatpush1.msra.mxu0 0.0
        %10406 = vmatprep.subr.mxu0 0.0
        %10407 = vmatpush1.msra.mxu0 0.0
        %10408 = vmatprep.subr.mxu0 0.0
        %10409 = vmatpush1.msra.mxu0 0.0
        %10410 = vmatprep.subr.mxu0 0.0
        %10411 = vmatpush1.msra.mxu0 0.0
        %10412 = vmatprep.subr.mxu0 0.0
        %10413 = vmatpush1.msra.mxu0 0.0
        %10414 = vmatprep.subr.mxu0 0.0
        %10415 = vmatpush1.msra.mxu0 0.0
        %10416 = vmatprep.subr.mxu0 0.0
        %10417 = vmatpush1.msra.mxu0 0.0
        %10418 = vmatprep.subr.mxu0 0.0
        %10419 = vmatpush1.msra.mxu0 0.0
        %10420 = vmatprep.subr.mxu0 0.0
        %10421 = vmatpush1.msra.mxu0 0.0
        %10422 = vmatprep.subr.mxu0 0.0
        %10423 = vmatpush1.msra.mxu0 0.0
        %10424 = vmatprep.mubr.f32.mxu0 0.0
        %10425 = vmatmul.mubr.f32.gmra.mrb[0].mxu0 %v10265
        %v10426 = vpop.f32.mrb[0].mxu0
        %v10427 = vadd.f32 0.0, %v10426
        %v10428 = vpop.f32.mrb[0].mxu0
        %10429 = vmatprep.mubr.f32.mxu0 0.0
        %10430 = vmatmul.mubr.f32.gmra.mrb[0].mxu0 %v10268
        %v10431 = vpop.f32.mrb[0].mxu0
        %v10432 = vadd.f32 0.0, %v10431
        %v10433 = vpop.f32.mrb[0].mxu0
        %10434 = vmatprep.mubr.f32.mxu0 0.0
        %10435 = vmatmul.mubr.f32.gmra.mrb[0].mxu0 %v10271
        %v10436 = vpop.f32.mrb[0].mxu0
        %v10437 = vadd.f32 0.0, %v10436
        %v10438 = vpop.f32.mrb[0].mxu0
        %10439 = vmatprep.mubr.f32.mxu0 0.0
        %10440 = vmatmul.mubr.f32.gmra.mrb[0].mxu0 %v10274
        %v10441 = vpop.f32.mrb[0].mxu0
        %v10442 = vadd.f32 0.0, %v10441
        %v10443 = vpop.f32.mrb[0].mxu0
        %10444 = vmatprep.mubr.f32.mxu0 0.0
        %10445 = vmatmul.mubr.f32.gmra.mrb[0].mxu0 %v10277
        %v10446 = vpop.f32.mrb[0].mxu0
        %v10447 = vadd.f32 0.0, %v10446
        %v10448 = vpop.f32.mrb[0].mxu0
        %10449 = vmatprep.mubr.f32.mxu0 0.0
        %10450 = vmatmul.mubr.f32.gmra.mrb[0].mxu0 %v10280
        %v10451 = vpop.f32.mrb[0].mxu0
        %v10452 = vadd.f32 0.0, %v10451
        %v10453 = vpop.f32.mrb[0].mxu0
        %10454 = vmatprep.mubr.f32.mxu0 0.0
        %10455 = vmatmul.mubr.f32.gmra.mrb[0].mxu0 %v10283
        %v10456 = vpop.f32.mrb[0].mxu0
        %v10457 = vadd.f32 0.0, %v10456
        %v10458 = vpop.f32.mrb[0].mxu0
        %10459 = vmatprep.mubr.f32.mxu0 0.0
        %10460 = vmatmul.mubr.f32.gmra.mrb[0].mxu0 %v10286
        %v10461 = vpop.f32.mrb[0].mxu0
        %v10462 = vadd.f32 0.0, %v10461
        %v10463 = vpop.f32.mrb[0].mxu0
        %10464 = vmatprep.mubr.f32.mxu0 0.0
        %10465 = vmatmul.mubr.f32.gmra.mrb[0].mxu0 %v10289
        %v10466 = vpop.f32.mrb[0].mxu0
        %v10467 = vadd.f32 0.0, %v10466
        %v10468 = vpop.f32.mrb[0].mxu0
        %10469 = vmatprep.mubr.f32.mxu0 0.0
        %10470 = vmatmul.mubr.f32.gmra.mrb[0].mxu0 %v10292
        %v10471 = vpop.f32.mrb[0].mxu0
        %v10472 = vadd.f32 0.0, %v10471
        %v10473 = vpop.f32.mrb[0].mxu0
        %10474 = vmatprep.mubr.f32.mxu0 0.0
        %10475 = vmatmul.mubr.f32.gmra.mrb[0].mxu0 %v10295
        %v10476 = vpop.f32.mrb[0].mxu0
        %v10477 = vadd.f32 0.0, %v10476
        %v10478 = vpop.f32.mrb[0].mxu0
        %10479 = vmatprep.mubr.f32.mxu0 0.0
        %10480 = vmatmul.mubr.f32.gmra.mrb[0].mxu0 %v10298
        %v10481 = vpop.f32.mrb[0].mxu0
        %v10482 = vadd.f32 0.0, %v10481
        %v10483 = vpop.f32.mrb[0].mxu0
        %10484 = vmatprep.mubr.f32.mxu0 0.0
        %10485 = vmatmul.mubr.f32.gmra.mrb[0].mxu0 %v10301
        %v10486 = vpop.f32.mrb[0].mxu0
        %v10487 = vadd.f32 0.0, %v10486
        %v10488 = vpop.f32.mrb[0].mxu0
        %10489 = vmatprep.mubr.f32.mxu0 0.0
        %10490 = vmatmul.mubr.f32.gmra.mrb[0].mxu0 %v10304
        %v10491 = vpop.f32.mrb[0].mxu0
        %v10492 = vadd.f32 0.0, %v10491
        %v10493 = vpop.f32.mrb[0].mxu0
        %10494 = vmatprep.mubr.f32.mxu0 0.0
        %10495 = vmatmul.mubr.f32.gmra.mrb[0].mxu0 %v10307
        %v10496 = vpop.f32.mrb[0].mxu0
        %v10497 = vadd.f32 0.0, %v10496
        %v10498 = vpop.f32.mrb[0].mxu0
        %10499 = vmatprep.mubr.f32.mxu0 0.0
        %10500 = vmatmul.mubr.f32.gmra.mrb[0].mxu0 %v10310
        %v10501 = vpop.f32.mrb[0].mxu0
        %v10502 = vadd.f32 0.0, %v10501
        %v10503 = vpop.f32.mrb[0].mxu0
        %10504 = vmatprep.mubr.f32.mxu0 0.0
        %10505 = vmatmul.mubr.f32.gmra.mrb[0].mxu0 %v10313
        %v10506 = vpop.f32.mrb[0].mxu0
        %v10507 = vadd.f32 0.0, %v10506
        %v10508 = vpop.f32.mrb[0].mxu0
        %10509 = vmatprep.mubr.f32.mxu0 0.0
        %10510 = vmatmul.mubr.f32.gmra.mrb[0].mxu0 %v10316
        %v10511 = vpop.f32.mrb[0].mxu0
        %v10512 = vadd.f32 0.0, %v10511
        %v10513 = vpop.f32.mrb[0].mxu0
        %10514 = vmatprep.mubr.f32.mxu0 0.0
        %10515 = vmatmul.mubr.f32.gmra.mrb[0].mxu0 %v10319
        %v10516 = vpop.f32.mrb[0].mxu0
        %v10517 = vadd.f32 0.0, %v10516
        %v10518 = vpop.f32.mrb[0].mxu0
        %10519 = vmatprep.mubr.f32.mxu0 0.0
        %10520 = vmatmul.mubr.f32.gmra.mrb[0].mxu0 %v10322
        %v10521 = vpop.f32.mrb[0].mxu0
        %v10522 = vadd.f32 0.0, %v10521
        %v10523 = vpop.f32.mrb[0].mxu0
        %10524 = vmatprep.mubr.f32.mxu0 0.0
        %10525 = vmatmul.mubr.f32.gmra.mrb[0].mxu0 %v10325
        %v10526 = vpop.f32.mrb[0].mxu0
        %v10527 = vadd.f32 0.0, %v10526
        %v10528 = vpop.f32.mrb[0].mxu0
        %10529 = vmatprep.mubr.f32.mxu0 0.0
        %10530 = vmatmul.mubr.f32.gmra.mrb[0].mxu0 %v10328
        %v10531 = vpop.f32.mrb[0].mxu0
        %v10532 = vadd.f32 0.0, %v10531
        %v10533 = vpop.f32.mrb[0].mxu0
        %10534 = vmatprep.mubr.f32.mxu0 0.0
        %10535 = vmatmul.mubr.f32.gmra.mrb[0].mxu0 %v10331
        %v10536 = vpop.f32.mrb[0].mxu0
        %v10537 = vadd.f32 0.0, %v10536
        %v10538 = vpop.f32.mrb[0].mxu0
        %10539 = vmatprep.mubr.f32.mxu0 0.0
        %10540 = vmatmul.mubr.f32.gmra.mrb[0].mxu0 %v10334
        %v10541 = vpop.f32.mrb[0].mxu0
        %v10542 = vadd.f32 0.0, %v10541
        %v10543 = vpop.f32.mrb[0].mxu0
        %10544 = vmatprep.mubr.f32.mxu0 0.0
        %10545 = vmatmul.mubr.f32.gmra.mrb[0].mxu0 %v10337
        %v10546 = vpop.f32.mrb[0].mxu0
        %v10547 = vadd.f32 0.0, %v10546
        %v10548 = vpop.f32.mrb[0].mxu0
        %10549 = vmatprep.mubr.f32.mxu0 0.0
        %10550 = vmatmul.mubr.f32.gmra.mrb[0].mxu0 %v10340
        %v10551 = vpop.f32.mrb[0].mxu0
        %v10552 = vadd.f32 0.0, %v10551
        %v10553 = vpop.f32.mrb[0].mxu0
        %10554 = vmatprep.mubr.f32.mxu0 0.0
        %10555 = vmatmul.mubr.f32.gmra.mrb[0].mxu0 %v10343
        %v10556 = vpop.f32.mrb[0].mxu0
        %v10557 = vadd.f32 0.0, %v10556
        %v10558 = vpop.f32.mrb[0].mxu0
        %10559 = vmatprep.mubr.f32.mxu0 0.0
        %10560 = vmatmul.mubr.f32.gmra.mrb[0].mxu0 %v10346
        %v10561 = vpop.f32.mrb[0].mxu0
        %v10562 = vadd.f32 0.0, %v10561
        %v10563 = vpop.f32.mrb[0].mxu0
        %10564 = vmatprep.mubr.f32.mxu0 0.0
        %10565 = vmatmul.mubr.f32.gmra.mrb[0].mxu0 %v10349
        %v10566 = vpop.f32.mrb[0].mxu0
        %v10567 = vadd.f32 0.0, %v10566
        %v10568 = vpop.f32.mrb[0].mxu0
        %10569 = vmatprep.mubr.f32.mxu0 0.0
        %10570 = vmatmul.mubr.f32.gmra.mrb[0].mxu0 %v10352
        %v10571 = vpop.f32.mrb[0].mxu0
        %v10572 = vadd.f32 0.0, %v10571
        %v10573 = vpop.f32.mrb[0].mxu0
        %10574 = vmatprep.mubr.f32.mxu0 0.0
        %10575 = vmatmul.mubr.f32.gmra.mrb[0].mxu0 %v10355
        %v10576 = vpop.f32.mrb[0].mxu0
        %v10577 = vadd.f32 0.0, %v10576
        %v10578 = vpop.f32.mrb[0].mxu0
        %10579 = vmatprep.mubr.f32.mxu0 0.0
        %10580 = vmatmul.mubr.f32.gmra.mrb[0].mxu0 %v10358
        %v10581 = vpop.f32.mrb[0].mxu0
        %v10582 = vadd.f32 0.0, %v10581
        %v10583 = vpop.f32.mrb[0].mxu0
        %10584 = vdwg.mxu0
        %v10585 = vadd.f32 %v10195, %v10427
        %v10586 = vadd.f32 %v10196, %v10432
        %v10587 = vadd.f32 %v10197, %v10437
        %v10588 = vadd.f32 %v10198, %v10442
        %v10589 = vadd.f32 %v10199, %v10447
        %v10590 = vadd.f32 %v10200, %v10452
        %v10591 = vadd.f32 %v10201, %v10457
        %v10592 = vadd.f32 %v10202, %v10462
        %v10593 = vadd.f32 %v10203, %v10467
        %v10594 = vadd.f32 %v10204, %v10472
        %v10595 = vadd.f32 %v10205, %v10477
        %v10596 = vadd.f32 %v10206, %v10482
        %v10597 = vadd.f32 %v10207, %v10487
        %v10598 = vadd.f32 %v10208, %v10492
        %v10599 = vadd.f32 %v10209, %v10497
        %v10600 = vadd.f32 %v10210, %v10502
        %v10601 = vadd.f32 %v10211, %v10507
        %v10602 = vadd.f32 %v10212, %v10512
        %v10603 = vadd.f32 %v10213, %v10517
        %v10604 = vadd.f32 %v10214, %v10522
        %v10605 = vadd.f32 %v10215, %v10527
        %v10606 = vadd.f32 %v10216, %v10532
        %v10607 = vadd.f32 %v10217, %v10537
        %v10608 = vadd.f32 %v10218, %v10542
        %v10609 = vadd.f32 %v10219, %v10547
        %v10610 = vadd.f32 %v10220, %v10552
        %v10611 = vadd.f32 %v10221, %v10557
        %v10612 = vadd.f32 %v10222, %v10562
        %v10613 = vadd.f32 %v10223, %v10567
        %v10614 = vadd.f32 %v10224, %v10572
        %v10615 = vadd.f32 %v10225, %v10577
        %v10616 = vadd.f32 %v10226, %v10582
        %v10617 = vld [vmem:[%s2673 + $0x9] sm:$0xff]
        %v10618 = vld [vmem:[%s2673 + $0x11] sm:$0xff]
        %v10619 = vld [vmem:[%s2673 + $0x29] sm:$0xff]
        %v10620 = vld [vmem:[%s2673 + $0x31] sm:$0xff]
        %v10621 = vld [vmem:[%s2673 + $0x49] sm:$0xff]
        %v10622 = vld [vmem:[%s2673 + $0x51] sm:$0xff]
        %v10623 = vld [vmem:[%s2673 + $0x69] sm:$0xff]
        %v10624 = vld [vmem:[%s2673 + $0x71] sm:$0xff]
        %v10625 = vld [vmem:[%s2673 + $0x89] sm:$0xff]
        %v10626 = vld [vmem:[%s2673 + $0x91] sm:$0xff]
        %v10627 = vld [vmem:[%s2673 + $0xa9] sm:$0xff]
        %v10628 = vld [vmem:[%s2673 + $0xb1] sm:$0xff]
        %v10629 = vld [vmem:[%s2673 + $0xc9] sm:$0xff]
        %v10630 = vld [vmem:[%s2673 + $0xd1] sm:$0xff]
        %v10631 = vld [vmem:[%s2673 + $0xe9] sm:$0xff]
        %v10632 = vld [vmem:[%s2673 + $0xf1] sm:$0xff]
        %v10633 = vld [vmem:[%s2673 + $0x109] sm:$0xff]
        %v10634 = vld [vmem:[%s2673 + $0x111] sm:$0xff]
        %v10635 = vld [vmem:[%s2673 + $0x129] sm:$0xff]
        %v10636 = vld [vmem:[%s2673 + $0x131] sm:$0xff]
        %v10637 = vld [vmem:[%s2673 + $0x149] sm:$0xff]
        %v10638 = vld [vmem:[%s2673 + $0x151] sm:$0xff]
        %v10639 = vld [vmem:[%s2673 + $0x169] sm:$0xff]
        %v10640 = vld [vmem:[%s2673 + $0x171] sm:$0xff]
        %v10641 = vld [vmem:[%s2673 + $0x189] sm:$0xff]
        %v10642 = vld [vmem:[%s2673 + $0x191] sm:$0xff]
        %v10643 = vld [vmem:[%s2673 + $0x1a9] sm:$0xff]
        %v10644 = vld [vmem:[%s2673 + $0x1b1] sm:$0xff]
        %v10645 = vld [vmem:[%s2673 + $0x1c9] sm:$0xff]
        %v10646 = vld [vmem:[%s2673 + $0x1d1] sm:$0xff]
        %v10647 = vld [vmem:[%s2673 + $0x1e9] sm:$0xff]
        %v10648 = vld [vmem:[%s2673 + $0x1f1] sm:$0xff]
        %s10649 = scalar_lea.vmem [#allocation6], 832
        %v10650 = vld [vmem:[%s10649] sm:$0xff]
        %v10651 = vld [vmem:[%s10649 + $0x8] sm:$0xff]
        %v10652 = vld [vmem:[%s10649 + $0x10] sm:$0xff]
        %v10653 = vld [vmem:[%s10649 + $0x18] sm:$0xff]
        %v10655 = vsel %vm470, %v10617, 0
        %v10658 = vsel %vm470, %v10618, 0
        %v10661 = vsel %vm470, %v10619, 0
        %v10664 = vsel %vm470, %v10620, 0
        %v10667 = vsel %vm470, %v10621, 0
        %v10670 = vsel %vm470, %v10622, 0
        %v10673 = vsel %vm470, %v10623, 0
        %v10676 = vsel %vm470, %v10624, 0
        %v10679 = vsel %vm470, %v10625, 0
        %v10682 = vsel %vm470, %v10626, 0
        %v10685 = vsel %vm470, %v10627, 0
        %v10688 = vsel %vm470, %v10628, 0
        %v10691 = vsel %vm470, %v10629, 0
        %v10694 = vsel %vm470, %v10630, 0
        %v10697 = vsel %vm470, %v10631, 0
        %v10700 = vsel %vm470, %v10632, 0
        %v10703 = vsel %vm470, %v10633, 0
        %v10706 = vsel %vm470, %v10634, 0
        %v10709 = vsel %vm470, %v10635, 0
        %v10712 = vsel %vm470, %v10636, 0
        %v10715 = vsel %vm470, %v10637, 0
        %v10718 = vsel %vm470, %v10638, 0
        %v10721 = vsel %vm470, %v10639, 0
        %v10724 = vsel %vm470, %v10640, 0
        %v10727 = vsel %vm470, %v10641, 0
        %v10730 = vsel %vm470, %v10642, 0
        %v10733 = vsel %vm470, %v10643, 0
        %v10736 = vsel %vm470, %v10644, 0
        %v10739 = vsel %vm470, %v10645, 0
        %v10742 = vsel %vm470, %v10646, 0
        %v10745 = vsel %vm470, %v10647, 0
        %v10748 = vsel %vm470, %v10648, 0
        %10750 = vmatprep.subr.mxu0 0.0
        %10751 = vmatpush1.msra.mxu0 %v10650
        %10752 = vmatprep.subr.mxu0 0.0
        %10753 = vmatpush1.msra.mxu0 %v10651
        %10754 = vmatprep.subr.mxu0 0.0
        %10755 = vmatpush1.msra.mxu0 %v10652
        %10756 = vmatprep.subr.mxu0 0.0
        %10757 = vmatpush1.msra.mxu0 %v10653
        %10758 = vmatprep.subr.mxu0 0.0
        %10759 = vmatpush1.msra.mxu0 0.0
        %10760 = vmatprep.subr.mxu0 0.0
        %10761 = vmatpush1.msra.mxu0 0.0
        %10762 = vmatprep.subr.mxu0 0.0
        %10763 = vmatpush1.msra.mxu0 0.0
        %10764 = vmatprep.subr.mxu0 0.0
        %10765 = vmatpush1.msra.mxu0 0.0
        %10766 = vmatprep.subr.mxu0 0.0
        %10767 = vmatpush1.msra.mxu0 0.0
        %10768 = vmatprep.subr.mxu0 0.0
        %10769 = vmatpush1.msra.mxu0 0.0
        %10770 = vmatprep.subr.mxu0 0.0
        %10771 = vmatpush1.msra.mxu0 0.0
        %10772 = vmatprep.subr.mxu0 0.0
        %10773 = vmatpush1.msra.mxu0 0.0
        %10774 = vmatprep.subr.mxu0 0.0
        %10775 = vmatpush1.msra.mxu0 0.0
        %10776 = vmatprep.subr.mxu0 0.0
        %10777 = vmatpush1.msra.mxu0 0.0
        %10778 = vmatprep.subr.mxu0 0.0
        %10779 = vmatpush1.msra.mxu0 0.0
        %10780 = vmatprep.subr.mxu0 0.0
        %10781 = vmatpush1.msra.mxu0 0.0
        %10782 = vmatprep.subr.mxu0 0.0
        %10783 = vmatpush1.msra.mxu0 0.0
        %10784 = vmatprep.subr.mxu0 0.0
        %10785 = vmatpush1.msra.mxu0 0.0
        %10786 = vmatprep.subr.mxu0 0.0
        %10787 = vmatpush1.msra.mxu0 0.0
        %10788 = vmatprep.subr.mxu0 0.0
        %10789 = vmatpush1.msra.mxu0 0.0
        %10790 = vmatprep.subr.mxu0 0.0
        %10791 = vmatpush1.msra.mxu0 0.0
        %10792 = vmatprep.subr.mxu0 0.0
        %10793 = vmatpush1.msra.mxu0 0.0
        %10794 = vmatprep.subr.mxu0 0.0
        %10795 = vmatpush1.msra.mxu0 0.0
        %10796 = vmatprep.subr.mxu0 0.0
        %10797 = vmatpush1.msra.mxu0 0.0
        %10798 = vmatprep.subr.mxu0 0.0
        %10799 = vmatpush1.msra.mxu0 0.0
        %10800 = vmatprep.subr.mxu0 0.0
        %10801 = vmatpush1.msra.mxu0 0.0
        %10802 = vmatprep.subr.mxu0 0.0
        %10803 = vmatpush1.msra.mxu0 0.0
        %10804 = vmatprep.subr.mxu0 0.0
        %10805 = vmatpush1.msra.mxu0 0.0
        %10806 = vmatprep.subr.mxu0 0.0
        %10807 = vmatpush1.msra.mxu0 0.0
        %10808 = vmatprep.subr.mxu0 0.0
        %10809 = vmatpush1.msra.mxu0 0.0
        %10810 = vmatprep.subr.mxu0 0.0
        %10811 = vmatpush1.msra.mxu0 0.0
        %10812 = vmatprep.subr.mxu0 0.0
        %10813 = vmatpush1.msra.mxu0 0.0
        %10814 = vmatprep.mubr.f32.mxu0 0.0
        %10815 = vmatmul.mubr.f32.gmra.mrb[0].mxu0 %v10655
        %v10816 = vpop.f32.mrb[0].mxu0
        %v10817 = vadd.f32 0.0, %v10816
        %v10818 = vpop.f32.mrb[0].mxu0
        %10819 = vmatprep.mubr.f32.mxu0 0.0
        %10820 = vmatmul.mubr.f32.gmra.mrb[0].mxu0 %v10658
        %v10821 = vpop.f32.mrb[0].mxu0
        %v10822 = vadd.f32 0.0, %v10821
        %v10823 = vpop.f32.mrb[0].mxu0
        %10824 = vmatprep.mubr.f32.mxu0 0.0
        %10825 = vmatmul.mubr.f32.gmra.mrb[0].mxu0 %v10661
        %v10826 = vpop.f32.mrb[0].mxu0
        %v10827 = vadd.f32 0.0, %v10826
        %v10828 = vpop.f32.mrb[0].mxu0
        %10829 = vmatprep.mubr.f32.mxu0 0.0
        %10830 = vmatmul.mubr.f32.gmra.mrb[0].mxu0 %v10664
        %v10831 = vpop.f32.mrb[0].mxu0
        %v10832 = vadd.f32 0.0, %v10831
        %v10833 = vpop.f32.mrb[0].mxu0
        %10834 = vmatprep.mubr.f32.mxu0 0.0
        %10835 = vmatmul.mubr.f32.gmra.mrb[0].mxu0 %v10667
        %v10836 = vpop.f32.mrb[0].mxu0
        %v10837 = vadd.f32 0.0, %v10836
        %v10838 = vpop.f32.mrb[0].mxu0
        %10839 = vmatprep.mubr.f32.mxu0 0.0
        %10840 = vmatmul.mubr.f32.gmra.mrb[0].mxu0 %v10670
        %v10841 = vpop.f32.mrb[0].mxu0
        %v10842 = vadd.f32 0.0, %v10841
        %v10843 = vpop.f32.mrb[0].mxu0
        %10844 = vmatprep.mubr.f32.mxu0 0.0
        %10845 = vmatmul.mubr.f32.gmra.mrb[0].mxu0 %v10673
        %v10846 = vpop.f32.mrb[0].mxu0
        %v10847 = vadd.f32 0.0, %v10846
        %v10848 = vpop.f32.mrb[0].mxu0
        %10849 = vmatprep.mubr.f32.mxu0 0.0
        %10850 = vmatmul.mubr.f32.gmra.mrb[0].mxu0 %v10676
        %v10851 = vpop.f32.mrb[0].mxu0
        %v10852 = vadd.f32 0.0, %v10851
        %v10853 = vpop.f32.mrb[0].mxu0
        %10854 = vmatprep.mubr.f32.mxu0 0.0
        %10855 = vmatmul.mubr.f32.gmra.mrb[0].mxu0 %v10679
        %v10856 = vpop.f32.mrb[0].mxu0
        %v10857 = vadd.f32 0.0, %v10856
        %v10858 = vpop.f32.mrb[0].mxu0
        %10859 = vmatprep.mubr.f32.mxu0 0.0
        %10860 = vmatmul.mubr.f32.gmra.mrb[0].mxu0 %v10682
        %v10861 = vpop.f32.mrb[0].mxu0
        %v10862 = vadd.f32 0.0, %v10861
        %v10863 = vpop.f32.mrb[0].mxu0
        %10864 = vmatprep.mubr.f32.mxu0 0.0
        %10865 = vmatmul.mubr.f32.gmra.mrb[0].mxu0 %v10685
        %v10866 = vpop.f32.mrb[0].mxu0
        %v10867 = vadd.f32 0.0, %v10866
        %v10868 = vpop.f32.mrb[0].mxu0
        %10869 = vmatprep.mubr.f32.mxu0 0.0
        %10870 = vmatmul.mubr.f32.gmra.mrb[0].mxu0 %v10688
        %v10871 = vpop.f32.mrb[0].mxu0
        %v10872 = vadd.f32 0.0, %v10871
        %v10873 = vpop.f32.mrb[0].mxu0
        %10874 = vmatprep.mubr.f32.mxu0 0.0
        %10875 = vmatmul.mubr.f32.gmra.mrb[0].mxu0 %v10691
        %v10876 = vpop.f32.mrb[0].mxu0
        %v10877 = vadd.f32 0.0, %v10876
        %v10878 = vpop.f32.mrb[0].mxu0
        %10879 = vmatprep.mubr.f32.mxu0 0.0
        %10880 = vmatmul.mubr.f32.gmra.mrb[0].mxu0 %v10694
        %v10881 = vpop.f32.mrb[0].mxu0
        %v10882 = vadd.f32 0.0, %v10881
        %v10883 = vpop.f32.mrb[0].mxu0
        %10884 = vmatprep.mubr.f32.mxu0 0.0
        %10885 = vmatmul.mubr.f32.gmra.mrb[0].mxu0 %v10697
        %v10886 = vpop.f32.mrb[0].mxu0
        %v10887 = vadd.f32 0.0, %v10886
        %v10888 = vpop.f32.mrb[0].mxu0
        %10889 = vmatprep.mubr.f32.mxu0 0.0
        %10890 = vmatmul.mubr.f32.gmra.mrb[0].mxu0 %v10700
        %v10891 = vpop.f32.mrb[0].mxu0
        %v10892 = vadd.f32 0.0, %v10891
        %v10893 = vpop.f32.mrb[0].mxu0
        %10894 = vmatprep.mubr.f32.mxu0 0.0
        %10895 = vmatmul.mubr.f32.gmra.mrb[0].mxu0 %v10703
        %v10896 = vpop.f32.mrb[0].mxu0
        %v10897 = vadd.f32 0.0, %v10896
        %v10898 = vpop.f32.mrb[0].mxu0
        %10899 = vmatprep.mubr.f32.mxu0 0.0
        %10900 = vmatmul.mubr.f32.gmra.mrb[0].mxu0 %v10706
        %v10901 = vpop.f32.mrb[0].mxu0
        %v10902 = vadd.f32 0.0, %v10901
        %v10903 = vpop.f32.mrb[0].mxu0
        %10904 = vmatprep.mubr.f32.mxu0 0.0
        %10905 = vmatmul.mubr.f32.gmra.mrb[0].mxu0 %v10709
        %v10906 = vpop.f32.mrb[0].mxu0
        %v10907 = vadd.f32 0.0, %v10906
        %v10908 = vpop.f32.mrb[0].mxu0
        %10909 = vmatprep.mubr.f32.mxu0 0.0
        %10910 = vmatmul.mubr.f32.gmra.mrb[0].mxu0 %v10712
        %v10911 = vpop.f32.mrb[0].mxu0
        %v10912 = vadd.f32 0.0, %v10911
        %v10913 = vpop.f32.mrb[0].mxu0
        %10914 = vmatprep.mubr.f32.mxu0 0.0
        %10915 = vmatmul.mubr.f32.gmra.mrb[0].mxu0 %v10715
        %v10916 = vpop.f32.mrb[0].mxu0
        %v10917 = vadd.f32 0.0, %v10916
        %v10918 = vpop.f32.mrb[0].mxu0
        %10919 = vmatprep.mubr.f32.mxu0 0.0
        %10920 = vmatmul.mubr.f32.gmra.mrb[0].mxu0 %v10718
        %v10921 = vpop.f32.mrb[0].mxu0
        %v10922 = vadd.f32 0.0, %v10921
        %v10923 = vpop.f32.mrb[0].mxu0
        %10924 = vmatprep.mubr.f32.mxu0 0.0
        %10925 = vmatmul.mubr.f32.gmra.mrb[0].mxu0 %v10721
        %v10926 = vpop.f32.mrb[0].mxu0
        %v10927 = vadd.f32 0.0, %v10926
        %v10928 = vpop.f32.mrb[0].mxu0
        %10929 = vmatprep.mubr.f32.mxu0 0.0
        %10930 = vmatmul.mubr.f32.gmra.mrb[0].mxu0 %v10724
        %v10931 = vpop.f32.mrb[0].mxu0
        %v10932 = vadd.f32 0.0, %v10931
        %v10933 = vpop.f32.mrb[0].mxu0
        %10934 = vmatprep.mubr.f32.mxu0 0.0
        %10935 = vmatmul.mubr.f32.gmra.mrb[0].mxu0 %v10727
        %v10936 = vpop.f32.mrb[0].mxu0
        %v10937 = vadd.f32 0.0, %v10936
        %v10938 = vpop.f32.mrb[0].mxu0
        %10939 = vmatprep.mubr.f32.mxu0 0.0
        %10940 = vmatmul.mubr.f32.gmra.mrb[0].mxu0 %v10730
        %v10941 = vpop.f32.mrb[0].mxu0
        %v10942 = vadd.f32 0.0, %v10941
        %v10943 = vpop.f32.mrb[0].mxu0
        %10944 = vmatprep.mubr.f32.mxu0 0.0
        %10945 = vmatmul.mubr.f32.gmra.mrb[0].mxu0 %v10733
        %v10946 = vpop.f32.mrb[0].mxu0
        %v10947 = vadd.f32 0.0, %v10946
        %v10948 = vpop.f32.mrb[0].mxu0
        %10949 = vmatprep.mubr.f32.mxu0 0.0
        %10950 = vmatmul.mubr.f32.gmra.mrb[0].mxu0 %v10736
        %v10951 = vpop.f32.mrb[0].mxu0
        %v10952 = vadd.f32 0.0, %v10951
        %v10953 = vpop.f32.mrb[0].mxu0
        %10954 = vmatprep.mubr.f32.mxu0 0.0
        %10955 = vmatmul.mubr.f32.gmra.mrb[0].mxu0 %v10739
        %v10956 = vpop.f32.mrb[0].mxu0
        %v10957 = vadd.f32 0.0, %v10956
        %v10958 = vpop.f32.mrb[0].mxu0
        %10959 = vmatprep.mubr.f32.mxu0 0.0
        %10960 = vmatmul.mubr.f32.gmra.mrb[0].mxu0 %v10742
        %v10961 = vpop.f32.mrb[0].mxu0
        %v10962 = vadd.f32 0.0, %v10961
        %v10963 = vpop.f32.mrb[0].mxu0
        %10964 = vmatprep.mubr.f32.mxu0 0.0
        %10965 = vmatmul.mubr.f32.gmra.mrb[0].mxu0 %v10745
        %v10966 = vpop.f32.mrb[0].mxu0
        %v10967 = vadd.f32 0.0, %v10966
        %v10968 = vpop.f32.mrb[0].mxu0
        %10969 = vmatprep.mubr.f32.mxu0 0.0
        %10970 = vmatmul.mubr.f32.gmra.mrb[0].mxu0 %v10748
        %v10971 = vpop.f32.mrb[0].mxu0
        %v10972 = vadd.f32 0.0, %v10971
        %v10973 = vpop.f32.mrb[0].mxu0
        %10974 = vdwg.mxu0
        %v10975 = vadd.f32 %v10585, %v10817
        %v10976 = vadd.f32 %v10586, %v10822
        %v10977 = vadd.f32 %v10587, %v10827
        %v10978 = vadd.f32 %v10588, %v10832
        %v10979 = vadd.f32 %v10589, %v10837
        %v10980 = vadd.f32 %v10590, %v10842
        %v10981 = vadd.f32 %v10591, %v10847
        %v10982 = vadd.f32 %v10592, %v10852
        %v10983 = vadd.f32 %v10593, %v10857
        %v10984 = vadd.f32 %v10594, %v10862
        %v10985 = vadd.f32 %v10595, %v10867
        %v10986 = vadd.f32 %v10596, %v10872
        %v10987 = vadd.f32 %v10597, %v10877
        %v10988 = vadd.f32 %v10598, %v10882
        %v10989 = vadd.f32 %v10599, %v10887
        %v10990 = vadd.f32 %v10600, %v10892
        %v10991 = vadd.f32 %v10601, %v10897
        %v10992 = vadd.f32 %v10602, %v10902
        %v10993 = vadd.f32 %v10603, %v10907
        %v10994 = vadd.f32 %v10604, %v10912
        %v10995 = vadd.f32 %v10605, %v10917
        %v10996 = vadd.f32 %v10606, %v10922
        %v10997 = vadd.f32 %v10607, %v10927
        %v10998 = vadd.f32 %v10608, %v10932
        %v10999 = vadd.f32 %v10609, %v10937
        %v11000 = vadd.f32 %v10610, %v10942
        %v11001 = vadd.f32 %v10611, %v10947
        %v11002 = vadd.f32 %v10612, %v10952
        %v11003 = vadd.f32 %v10613, %v10957
        %v11004 = vadd.f32 %v10614, %v10962
        %v11005 = vadd.f32 %v10615, %v10967
        %v11006 = vadd.f32 %v10616, %v10972
        %s11007 = scalar_lea.vmem %s2, 2
        %v11008 = vld [vmem:[%s11007] sm:$0x1]
        %v11010 = vlaneseq
        %v11011 = vshrl.u32 %v11010, 7
        %v11012 = vsub.s32 0, %v11011
        %v11013 = vrot.slane %v11008, %v11012
        %v11015 = vadd.f32 %v10975, %v11013
        %v11016 = vadd.f32 %v10976, %v11013
        %v11017 = vadd.f32 %v10977, %v11013
        %v11018 = vadd.f32 %v10978, %v11013
        %v11019 = vadd.f32 %v10979, %v11013
        %v11020 = vadd.f32 %v10980, %v11013
        %v11021 = vadd.f32 %v10981, %v11013
        %v11022 = vadd.f32 %v10982, %v11013
        %v11023 = vadd.f32 %v10983, %v11013
        %v11024 = vadd.f32 %v10984, %v11013
        %v11025 = vadd.f32 %v10985, %v11013
        %v11026 = vadd.f32 %v10986, %v11013
        %v11027 = vadd.f32 %v10987, %v11013
        %v11028 = vadd.f32 %v10988, %v11013
        %v11029 = vadd.f32 %v10989, %v11013
        %v11030 = vadd.f32 %v10990, %v11013
        %v11031 = vadd.f32 %v10991, %v11013
        %v11032 = vadd.f32 %v10992, %v11013
        %v11033 = vadd.f32 %v10993, %v11013
        %v11034 = vadd.f32 %v10994, %v11013
        %v11035 = vadd.f32 %v10995, %v11013
        %v11036 = vadd.f32 %v10996, %v11013
        %v11037 = vadd.f32 %v10997, %v11013
        %v11038 = vadd.f32 %v10998, %v11013
        %v11039 = vadd.f32 %v10999, %v11013
        %v11040 = vadd.f32 %v11000, %v11013
        %v11041 = vadd.f32 %v11001, %v11013
        %v11042 = vadd.f32 %v11002, %v11013
        %v11043 = vadd.f32 %v11003, %v11013
        %v11044 = vadd.f32 %v11004, %v11013
        %v11045 = vadd.f32 %v11005, %v11013
        %v11046 = vadd.f32 %v11006, %v11013
        %v11047 = vmax.f32 %v11015, 0.0
        %v11048 = vmax.f32 %v11016, 0.0
        %v11049 = vmax.f32 %v11017, 0.0
        %v11050 = vmax.f32 %v11018, 0.0
        %v11051 = vmax.f32 %v11019, 0.0
        %v11052 = vmax.f32 %v11020, 0.0
        %v11053 = vmax.f32 %v11021, 0.0
        %v11054 = vmax.f32 %v11022, 0.0
        %v11055 = vmax.f32 %v11023, 0.0
        %v11056 = vmax.f32 %v11024, 0.0
        %v11057 = vmax.f32 %v11025, 0.0
        %v11058 = vmax.f32 %v11026, 0.0
        %v11059 = vmax.f32 %v11027, 0.0
        %v11060 = vmax.f32 %v11028, 0.0
        %v11061 = vmax.f32 %v11029, 0.0
        %v11062 = vmax.f32 %v11030, 0.0
        %v11063 = vmax.f32 %v11031, 0.0
        %v11064 = vmax.f32 %v11032, 0.0
        %v11065 = vmax.f32 %v11033, 0.0
        %v11066 = vmax.f32 %v11034, 0.0
        %v11067 = vmax.f32 %v11035, 0.0
        %v11068 = vmax.f32 %v11036, 0.0
        %v11069 = vmax.f32 %v11037, 0.0
        %v11070 = vmax.f32 %v11038, 0.0
        %v11071 = vmax.f32 %v11039, 0.0
        %v11072 = vmax.f32 %v11040, 0.0
        %v11073 = vmax.f32 %v11041, 0.0
        %v11074 = vmax.f32 %v11042, 0.0
        %v11075 = vmax.f32 %v11043, 0.0
        %v11076 = vmax.f32 %v11044, 0.0
        %v11077 = vmax.f32 %v11045, 0.0
        %v11078 = vmax.f32 %v11046, 0.0
        %v11079 = vadd.f32 %v9057, %v11047
        %v11080 = vadd.f32 %v9058, %v11048
        %v11081 = vadd.f32 %v9059, %v11049
        %v11082 = vadd.f32 %v9060, %v11050
        %v11083 = vadd.f32 %v9061, %v11051
        %v11084 = vadd.f32 %v9062, %v11052
        %v11085 = vadd.f32 %v9063, %v11053
        %v11086 = vadd.f32 %v9064, %v11054
        %v11087 = vadd.f32 %v9065, %v11055
        %v11088 = vadd.f32 %v9066, %v11056
        %v11089 = vadd.f32 %v9067, %v11057
        %v11090 = vadd.f32 %v9068, %v11058
        %v11091 = vadd.f32 %v9069, %v11059
        %v11092 = vadd.f32 %v9070, %v11060
        %v11093 = vadd.f32 %v9071, %v11061
        %v11094 = vadd.f32 %v9072, %v11062
        %v11095 = vadd.f32 %v9073, %v11063
        %v11096 = vadd.f32 %v9074, %v11064
        %v11097 = vadd.f32 %v9075, %v11065
        %v11098 = vadd.f32 %v9076, %v11066
        %v11099 = vadd.f32 %v9077, %v11067
        %v11100 = vadd.f32 %v9078, %v11068
        %v11101 = vadd.f32 %v9079, %v11069
        %v11102 = vadd.f32 %v9080, %v11070
        %v11103 = vadd.f32 %v9081, %v11071
        %v11104 = vadd.f32 %v9082, %v11072
        %v11105 = vadd.f32 %v9083, %v11073
        %v11106 = vadd.f32 %v9084, %v11074
        %v11107 = vadd.f32 %v9085, %v11075
        %v11108 = vadd.f32 %v9086, %v11076
        %v11109 = vadd.f32 %v9087, %v11077
        %v11110 = vadd.f32 %v9088, %v11078
        %11111 = vst [vmem:[%s364 + $0x8] sm:$0xff] %v11079
        %11112 = vst [vmem:[%s364 + $0x10] sm:$0xff] %v11080
        %11113 = vst [vmem:[%s364 + $0x28] sm:$0xff] %v11081
        %11114 = vst [vmem:[%s364 + $0x30] sm:$0xff] %v11082
        %11115 = vst [vmem:[%s364 + $0x48] sm:$0xff] %v11083
        %11116 = vst [vmem:[%s364 + $0x50] sm:$0xff] %v11084
        %11117 = vst [vmem:[%s364 + $0x68] sm:$0xff] %v11085
        %11118 = vst [vmem:[%s364 + $0x70] sm:$0xff] %v11086
        %11119 = vst [vmem:[%s364 + $0x88] sm:$0xff] %v11087
        %11120 = vst [vmem:[%s364 + $0x90] sm:$0xff] %v11088
        %11121 = vst [vmem:[%s364 + $0xa8] sm:$0xff] %v11089
        %11122 = vst [vmem:[%s364 + $0xb0] sm:$0xff] %v11090
        %11123 = vst [vmem:[%s364 + $0xc8] sm:$0xff] %v11091
        %11124 = vst [vmem:[%s364 + $0xd0] sm:$0xff] %v11092
        %11125 = vst [vmem:[%s364 + $0xe8] sm:$0xff] %v11093
        %11126 = vst [vmem:[%s364 + $0xf0] sm:$0xff] %v11094
        %11127 = vst [vmem:[%s364 + $0x108] sm:$0xff] %v11095
        %11128 = vst [vmem:[%s364 + $0x110] sm:$0xff] %v11096
        %11129 = vst [vmem:[%s364 + $0x128] sm:$0xff] %v11097
        %11130 = vst [vmem:[%s364 + $0x130] sm:$0xff] %v11098
        %11131 = vst [vmem:[%s364 + $0x148] sm:$0xff] %v11099
        %11132 = vst [vmem:[%s364 + $0x150] sm:$0xff] %v11100
        %11133 = vst [vmem:[%s364 + $0x168] sm:$0xff] %v11101
        %11134 = vst [vmem:[%s364 + $0x170] sm:$0xff] %v11102
        %11135 = vst [vmem:[%s364 + $0x188] sm:$0xff] %v11103
        %11136 = vst [vmem:[%s364 + $0x190] sm:$0xff] %v11104
        %11137 = vst [vmem:[%s364 + $0x1a8] sm:$0xff] %v11105
        %11138 = vst [vmem:[%s364 + $0x1b0] sm:$0xff] %v11106
        %11139 = vst [vmem:[%s364 + $0x1c8] sm:$0xff] %v11107
        %11140 = vst [vmem:[%s364 + $0x1d0] sm:$0xff] %v11108
        %11141 = vst [vmem:[%s364 + $0x1e8] sm:$0xff] %v11109
        %11142 = vst [vmem:[%s364 + $0x1f0] sm:$0xff] %v11110
        %v11143 = vld [vmem:[%s364 + $0x8] sm:$0xff]
        %v11144 = vld [vmem:[%s364 + $0x10] sm:$0xff]
        %v11145 = vld [vmem:[%s364 + $0x28] sm:$0xff]
        %v11146 = vld [vmem:[%s364 + $0x30] sm:$0xff]
        %v11147 = vld [vmem:[%s364 + $0x48] sm:$0xff]
        %v11148 = vld [vmem:[%s364 + $0x50] sm:$0xff]
        %v11149 = vld [vmem:[%s364 + $0x68] sm:$0xff]
        %v11150 = vld [vmem:[%s364 + $0x70] sm:$0xff]
        %v11151 = vld [vmem:[%s364 + $0x88] sm:$0xff]
        %v11152 = vld [vmem:[%s364 + $0x90] sm:$0xff]
        %v11153 = vld [vmem:[%s364 + $0xa8] sm:$0xff]
        %v11154 = vld [vmem:[%s364 + $0xb0] sm:$0xff]
        %v11155 = vld [vmem:[%s364 + $0xc8] sm:$0xff]
        %v11156 = vld [vmem:[%s364 + $0xd0] sm:$0xff]
        %v11157 = vld [vmem:[%s364 + $0xe8] sm:$0xff]
        %v11158 = vld [vmem:[%s364 + $0xf0] sm:$0xff]
        %v11159 = vld [vmem:[%s364 + $0x108] sm:$0xff]
        %v11160 = vld [vmem:[%s364 + $0x110] sm:$0xff]
        %v11161 = vld [vmem:[%s364 + $0x128] sm:$0xff]
        %v11162 = vld [vmem:[%s364 + $0x130] sm:$0xff]
        %v11163 = vld [vmem:[%s364 + $0x148] sm:$0xff]
        %v11164 = vld [vmem:[%s364 + $0x150] sm:$0xff]
        %v11165 = vld [vmem:[%s364 + $0x168] sm:$0xff]
        %v11166 = vld [vmem:[%s364 + $0x170] sm:$0xff]
        %v11167 = vld [vmem:[%s364 + $0x188] sm:$0xff]
        %v11168 = vld [vmem:[%s364 + $0x190] sm:$0xff]
        %v11169 = vld [vmem:[%s364 + $0x1a8] sm:$0xff]
        %v11170 = vld [vmem:[%s364 + $0x1b0] sm:$0xff]
        %v11171 = vld [vmem:[%s364 + $0x1c8] sm:$0xff]
        %v11172 = vld [vmem:[%s364 + $0x1d0] sm:$0xff]
        %v11173 = vld [vmem:[%s364 + $0x1e8] sm:$0xff]
        %v11174 = vld [vmem:[%s364 + $0x1f0] sm:$0xff]
        %v11175 = vld [vmem:[%s3] sm:$0xff]
        %v11176 = vld [vmem:[%s3 + $0x8] sm:$0xff]
        %v11177 = vld [vmem:[%s3 + $0x10] sm:$0xff]
        %v11178 = vld [vmem:[%s3 + $0x18] sm:$0xff]
        %v11179 = vld [vmem:[%s3 + $0x20] sm:$0xff]
        %v11180 = vld [vmem:[%s3 + $0x28] sm:$0xff]
        %v11181 = vld [vmem:[%s3 + $0x30] sm:$0xff]
        %v11182 = vld [vmem:[%s3 + $0x38] sm:$0xff]
        %v11183 = vld [vmem:[%s3 + $0x40] sm:$0xff]
        %v11184 = vld [vmem:[%s3 + $0x48] sm:$0xff]
        %v11185 = vld [vmem:[%s3 + $0x50] sm:$0xff]
        %v11186 = vld [vmem:[%s3 + $0x58] sm:$0xff]
        %v11187 = vld [vmem:[%s3 + $0x60] sm:$0xff]
        %v11188 = vld [vmem:[%s3 + $0x68] sm:$0xff]
        %v11189 = vld [vmem:[%s3 + $0x70] sm:$0xff]
        %v11190 = vld [vmem:[%s3 + $0x78] sm:$0xff]
        %v11191 = vld [vmem:[%s4] sm:$0x1]
        %v11193 = vlaneseq
        %v11194 = vshrl.u32 %v11193, 7
        %v11195 = vsub.s32 0, %v11194
        %v11196 = vrot.slane %v11191, %v11195
        %11198 = vmatprep.subr.mxu0 0.0
        %11199 = vmatpush1.msra.mxu0 %v11175
        %11200 = vmatprep.subr.mxu0 0.0
        %11201 = vmatpush1.msra.mxu0 %v11176
        %11202 = vmatprep.subr.mxu0 0.0
        %11203 = vmatpush1.msra.mxu0 %v11177
        %11204 = vmatprep.subr.mxu0 0.0
        %11205 = vmatpush1.msra.mxu0 %v11178
        %11206 = vmatprep.subr.mxu0 0.0
        %11207 = vmatpush1.msra.mxu0 %v11179
        %11208 = vmatprep.subr.mxu0 0.0
        %11209 = vmatpush1.msra.mxu0 %v11180
        %11210 = vmatprep.subr.mxu0 0.0
        %11211 = vmatpush1.msra.mxu0 %v11181
        %11212 = vmatprep.subr.mxu0 0.0
        %11213 = vmatpush1.msra.mxu0 %v11182
        %11214 = vmatprep.subr.mxu0 0.0
        %11215 = vmatpush1.msra.mxu0 %v11183
        %11216 = vmatprep.subr.mxu0 0.0
        %11217 = vmatpush1.msra.mxu0 %v11184
        %11218 = vmatprep.subr.mxu0 0.0
        %11219 = vmatpush1.msra.mxu0 %v11185
        %11220 = vmatprep.subr.mxu0 0.0
        %11221 = vmatpush1.msra.mxu0 %v11186
        %11222 = vmatprep.subr.mxu0 0.0
        %11223 = vmatpush1.msra.mxu0 %v11187
        %11224 = vmatprep.subr.mxu0 0.0
        %11225 = vmatpush1.msra.mxu0 %v11188
        %11226 = vmatprep.subr.mxu0 0.0
        %11227 = vmatpush1.msra.mxu0 %v11189
        %11228 = vmatprep.subr.mxu0 0.0
        %11229 = vmatpush1.msra.mxu0 %v11190
        %11230 = vmatprep.subr.mxu0 0.0
        %11231 = vmatpush1.msra.mxu0 0.0
        %11232 = vmatprep.subr.mxu0 0.0
        %11233 = vmatpush1.msra.mxu0 0.0
        %11234 = vmatprep.subr.mxu0 0.0
        %11235 = vmatpush1.msra.mxu0 0.0
        %11236 = vmatprep.subr.mxu0 0.0
        %11237 = vmatpush1.msra.mxu0 0.0
        %11238 = vmatprep.subr.mxu0 0.0
        %11239 = vmatpush1.msra.mxu0 0.0
        %11240 = vmatprep.subr.mxu0 0.0
        %11241 = vmatpush1.msra.mxu0 0.0
        %11242 = vmatprep.subr.mxu0 0.0
        %11243 = vmatpush1.msra.mxu0 0.0
        %11244 = vmatprep.subr.mxu0 0.0
        %11245 = vmatpush1.msra.mxu0 0.0
        %11246 = vmatprep.subr.mxu0 0.0
        %11247 = vmatpush1.msra.mxu0 0.0
        %11248 = vmatprep.subr.mxu0 0.0
        %11249 = vmatpush1.msra.mxu0 0.0
        %11250 = vmatprep.subr.mxu0 0.0
        %11251 = vmatpush1.msra.mxu0 0.0
        %11252 = vmatprep.subr.mxu0 0.0
        %11253 = vmatpush1.msra.mxu0 0.0
        %11254 = vmatprep.subr.mxu0 0.0
        %11255 = vmatpush1.msra.mxu0 0.0
        %11256 = vmatprep.subr.mxu0 0.0
        %11257 = vmatpush1.msra.mxu0 0.0
        %11258 = vmatprep.subr.mxu0 0.0
        %11259 = vmatpush1.msra.mxu0 0.0
        %11260 = vmatprep.subr.mxu0 0.0
        %11261 = vmatpush1.msra.mxu0 0.0
        %11262 = vmatprep.mubr.f32.mxu0 0.0
        %11263 = vmatmul.mubr.f32.gmra.mrb[0].mxu0 %v11143
        %v11264 = vpop.f32.mrb[0].mxu0
        %v11265 = vadd.f32 %v11196, %v11264
        %v11266 = vpop.f32.mrb[0].mxu0
        %11267 = vmatprep.mubr.f32.mxu0 0.0
        %11268 = vmatmul.mubr.f32.gmra.mrb[0].mxu0 %v11144
        %v11269 = vpop.f32.mrb[0].mxu0
        %v11270 = vadd.f32 %v11196, %v11269
        %v11271 = vpop.f32.mrb[0].mxu0
        %11272 = vmatprep.mubr.f32.mxu0 0.0
        %11273 = vmatmul.mubr.f32.gmra.mrb[0].mxu0 %v11145
        %v11274 = vpop.f32.mrb[0].mxu0
        %v11275 = vadd.f32 %v11196, %v11274
        %v11276 = vpop.f32.mrb[0].mxu0
        %11277 = vmatprep.mubr.f32.mxu0 0.0
        %11278 = vmatmul.mubr.f32.gmra.mrb[0].mxu0 %v11146
        %v11279 = vpop.f32.mrb[0].mxu0
        %v11280 = vadd.f32 %v11196, %v11279
        %v11281 = vpop.f32.mrb[0].mxu0
        %11282 = vmatprep.mubr.f32.mxu0 0.0
        %11283 = vmatmul.mubr.f32.gmra.mrb[0].mxu0 %v11147
        %v11284 = vpop.f32.mrb[0].mxu0
        %v11285 = vadd.f32 %v11196, %v11284
        %v11286 = vpop.f32.mrb[0].mxu0
        %11287 = vmatprep.mubr.f32.mxu0 0.0
        %11288 = vmatmul.mubr.f32.gmra.mrb[0].mxu0 %v11148
        %v11289 = vpop.f32.mrb[0].mxu0
        %v11290 = vadd.f32 %v11196, %v11289
        %v11291 = vpop.f32.mrb[0].mxu0
        %11292 = vmatprep.mubr.f32.mxu0 0.0
        %11293 = vmatmul.mubr.f32.gmra.mrb[0].mxu0 %v11149
        %v11294 = vpop.f32.mrb[0].mxu0
        %v11295 = vadd.f32 %v11196, %v11294
        %v11296 = vpop.f32.mrb[0].mxu0
        %11297 = vmatprep.mubr.f32.mxu0 0.0
        %11298 = vmatmul.mubr.f32.gmra.mrb[0].mxu0 %v11150
        %v11299 = vpop.f32.mrb[0].mxu0
        %v11300 = vadd.f32 %v11196, %v11299
        %v11301 = vpop.f32.mrb[0].mxu0
        %11302 = vmatprep.mubr.f32.mxu0 0.0
        %11303 = vmatmul.mubr.f32.gmra.mrb[0].mxu0 %v11151
        %v11304 = vpop.f32.mrb[0].mxu0
        %v11305 = vadd.f32 %v11196, %v11304
        %v11306 = vpop.f32.mrb[0].mxu0
        %11307 = vmatprep.mubr.f32.mxu0 0.0
        %11308 = vmatmul.mubr.f32.gmra.mrb[0].mxu0 %v11152
        %v11309 = vpop.f32.mrb[0].mxu0
        %v11310 = vadd.f32 %v11196, %v11309
        %v11311 = vpop.f32.mrb[0].mxu0
        %11312 = vmatprep.mubr.f32.mxu0 0.0
        %11313 = vmatmul.mubr.f32.gmra.mrb[0].mxu0 %v11153
        %v11314 = vpop.f32.mrb[0].mxu0
        %v11315 = vadd.f32 %v11196, %v11314
        %v11316 = vpop.f32.mrb[0].mxu0
        %11317 = vmatprep.mubr.f32.mxu0 0.0
        %11318 = vmatmul.mubr.f32.gmra.mrb[0].mxu0 %v11154
        %v11319 = vpop.f32.mrb[0].mxu0
        %v11320 = vadd.f32 %v11196, %v11319
        %v11321 = vpop.f32.mrb[0].mxu0
        %11322 = vmatprep.mubr.f32.mxu0 0.0
        %11323 = vmatmul.mubr.f32.gmra.mrb[0].mxu0 %v11155
        %v11324 = vpop.f32.mrb[0].mxu0
        %v11325 = vadd.f32 %v11196, %v11324
        %v11326 = vpop.f32.mrb[0].mxu0
        %11327 = vmatprep.mubr.f32.mxu0 0.0
        %11328 = vmatmul.mubr.f32.gmra.mrb[0].mxu0 %v11156
        %v11329 = vpop.f32.mrb[0].mxu0
        %v11330 = vadd.f32 %v11196, %v11329
        %v11331 = vpop.f32.mrb[0].mxu0
        %11332 = vmatprep.mubr.f32.mxu0 0.0
        %11333 = vmatmul.mubr.f32.gmra.mrb[0].mxu0 %v11157
        %v11334 = vpop.f32.mrb[0].mxu0
        %v11335 = vadd.f32 %v11196, %v11334
        %v11336 = vpop.f32.mrb[0].mxu0
        %11337 = vmatprep.mubr.f32.mxu0 0.0
        %11338 = vmatmul.mubr.f32.gmra.mrb[0].mxu0 %v11158
        %v11339 = vpop.f32.mrb[0].mxu0
        %v11340 = vadd.f32 %v11196, %v11339
        %v11341 = vpop.f32.mrb[0].mxu0
        %11342 = vmatprep.mubr.f32.mxu0 0.0
        %11343 = vmatmul.mubr.f32.gmra.mrb[0].mxu0 %v11159
        %v11344 = vpop.f32.mrb[0].mxu0
        %v11345 = vadd.f32 %v11196, %v11344
        %v11346 = vpop.f32.mrb[0].mxu0
        %11347 = vmatprep.mubr.f32.mxu0 0.0
        %11348 = vmatmul.mubr.f32.gmra.mrb[0].mxu0 %v11160
        %v11349 = vpop.f32.mrb[0].mxu0
        %v11350 = vadd.f32 %v11196, %v11349
        %v11351 = vpop.f32.mrb[0].mxu0
        %11352 = vmatprep.mubr.f32.mxu0 0.0
        %11353 = vmatmul.mubr.f32.gmra.mrb[0].mxu0 %v11161
        %v11354 = vpop.f32.mrb[0].mxu0
        %v11355 = vadd.f32 %v11196, %v11354
        %v11356 = vpop.f32.mrb[0].mxu0
        %11357 = vmatprep.mubr.f32.mxu0 0.0
        %11358 = vmatmul.mubr.f32.gmra.mrb[0].mxu0 %v11162
        %v11359 = vpop.f32.mrb[0].mxu0
        %v11360 = vadd.f32 %v11196, %v11359
        %v11361 = vpop.f32.mrb[0].mxu0
        %11362 = vmatprep.mubr.f32.mxu0 0.0
        %11363 = vmatmul.mubr.f32.gmra.mrb[0].mxu0 %v11163
        %v11364 = vpop.f32.mrb[0].mxu0
        %v11365 = vadd.f32 %v11196, %v11364
        %v11366 = vpop.f32.mrb[0].mxu0
        %11367 = vmatprep.mubr.f32.mxu0 0.0
        %11368 = vmatmul.mubr.f32.gmra.mrb[0].mxu0 %v11164
        %v11369 = vpop.f32.mrb[0].mxu0
        %v11370 = vadd.f32 %v11196, %v11369
        %v11371 = vpop.f32.mrb[0].mxu0
        %11372 = vmatprep.mubr.f32.mxu0 0.0
        %11373 = vmatmul.mubr.f32.gmra.mrb[0].mxu0 %v11165
        %v11374 = vpop.f32.mrb[0].mxu0
        %v11375 = vadd.f32 %v11196, %v11374
        %v11376 = vpop.f32.mrb[0].mxu0
        %11377 = vmatprep.mubr.f32.mxu0 0.0
        %11378 = vmatmul.mubr.f32.gmra.mrb[0].mxu0 %v11166
        %v11379 = vpop.f32.mrb[0].mxu0
        %v11380 = vadd.f32 %v11196, %v11379
        %v11381 = vpop.f32.mrb[0].mxu0
        %11382 = vmatprep.mubr.f32.mxu0 0.0
        %11383 = vmatmul.mubr.f32.gmra.mrb[0].mxu0 %v11167
        %v11384 = vpop.f32.mrb[0].mxu0
        %v11385 = vadd.f32 %v11196, %v11384
        %v11386 = vpop.f32.mrb[0].mxu0
        %11387 = vmatprep.mubr.f32.mxu0 0.0
        %11388 = vmatmul.mubr.f32.gmra.mrb[0].mxu0 %v11168
        %v11389 = vpop.f32.mrb[0].mxu0
        %v11390 = vadd.f32 %v11196, %v11389
        %v11391 = vpop.f32.mrb[0].mxu0
        %11392 = vmatprep.mubr.f32.mxu0 0.0
        %11393 = vmatmul.mubr.f32.gmra.mrb[0].mxu0 %v11169
        %v11394 = vpop.f32.mrb[0].mxu0
        %v11395 = vadd.f32 %v11196, %v11394
        %v11396 = vpop.f32.mrb[0].mxu0
        %11397 = vmatprep.mubr.f32.mxu0 0.0
        %11398 = vmatmul.mubr.f32.gmra.mrb[0].mxu0 %v11170
        %v11399 = vpop.f32.mrb[0].mxu0
        %v11400 = vadd.f32 %v11196, %v11399
        %v11401 = vpop.f32.mrb[0].mxu0
        %11402 = vmatprep.mubr.f32.mxu0 0.0
        %11403 = vmatmul.mubr.f32.gmra.mrb[0].mxu0 %v11171
        %v11404 = vpop.f32.mrb[0].mxu0
        %v11405 = vadd.f32 %v11196, %v11404
        %v11406 = vpop.f32.mrb[0].mxu0
        %11407 = vmatprep.mubr.f32.mxu0 0.0
        %11408 = vmatmul.mubr.f32.gmra.mrb[0].mxu0 %v11172
        %v11409 = vpop.f32.mrb[0].mxu0
        %v11410 = vadd.f32 %v11196, %v11409
        %v11411 = vpop.f32.mrb[0].mxu0
        %11412 = vmatprep.mubr.f32.mxu0 0.0
        %11413 = vmatmul.mubr.f32.gmra.mrb[0].mxu0 %v11173
        %v11414 = vpop.f32.mrb[0].mxu0
        %v11415 = vadd.f32 %v11196, %v11414
        %v11416 = vpop.f32.mrb[0].mxu0
        %11417 = vmatprep.mubr.f32.mxu0 0.0
        %11418 = vmatmul.mubr.f32.gmra.mrb[0].mxu0 %v11174
        %v11419 = vpop.f32.mrb[0].mxu0
        %v11420 = vadd.f32 %v11196, %v11419
        %v11421 = vpop.f32.mrb[0].mxu0
        %11422 = vdwg.mxu0
        %v11423 = vld [vmem:[%s227] sm:$0xff]
        %v11424 = vld [vmem:[%s227 + $0x8] sm:$0xff]
        %v11425 = vld [vmem:[%s227 + $0x10] sm:$0xff]
        %v11426 = vld [vmem:[%s227 + $0x18] sm:$0xff]
        %v11427 = vld [vmem:[%s227 + $0x20] sm:$0xff]
        %v11428 = vld [vmem:[%s227 + $0x28] sm:$0xff]
        %v11429 = vld [vmem:[%s227 + $0x30] sm:$0xff]
        %v11430 = vld [vmem:[%s227 + $0x38] sm:$0xff]
        %v11431 = vld [vmem:[%s227 + $0x40] sm:$0xff]
        %v11432 = vld [vmem:[%s227 + $0x48] sm:$0xff]
        %v11433 = vld [vmem:[%s227 + $0x50] sm:$0xff]
        %v11434 = vld [vmem:[%s227 + $0x58] sm:$0xff]
        %v11435 = vld [vmem:[%s227 + $0x60] sm:$0xff]
        %v11436 = vld [vmem:[%s227 + $0x68] sm:$0xff]
        %v11437 = vld [vmem:[%s227 + $0x70] sm:$0xff]
        %v11438 = vld [vmem:[%s227 + $0x78] sm:$0xff]
        %v11439 = vld [vmem:[%s227 + $0x80] sm:$0xff]
        %v11440 = vld [vmem:[%s227 + $0x88] sm:$0xff]
        %v11441 = vld [vmem:[%s227 + $0x90] sm:$0xff]
        %v11442 = vld [vmem:[%s227 + $0x98] sm:$0xff]
        %v11443 = vld [vmem:[%s227 + $0xa0] sm:$0xff]
        %v11444 = vld [vmem:[%s227 + $0xa8] sm:$0xff]
        %v11445 = vld [vmem:[%s227 + $0xb0] sm:$0xff]
        %v11446 = vld [vmem:[%s227 + $0xb8] sm:$0xff]
        %v11447 = vld [vmem:[%s227 + $0xc0] sm:$0xff]
        %v11448 = vld [vmem:[%s227 + $0xc8] sm:$0xff]
        %v11449 = vld [vmem:[%s227 + $0xd0] sm:$0xff]
        %v11450 = vld [vmem:[%s227 + $0xd8] sm:$0xff]
        %v11451 = vld [vmem:[%s227 + $0xe0] sm:$0xff]
        %v11452 = vld [vmem:[%s227 + $0xe8] sm:$0xff]
        %v11453 = vld [vmem:[%s227 + $0xf0] sm:$0xff]
        %v11454 = vld [vmem:[%s227 + $0xf8] sm:$0xff]
        %v11455 = vadd.f32 %v11265, %v11423
        %v11456 = vadd.f32 %v11270, %v11424
        %v11457 = vadd.f32 %v11275, %v11425
        %v11458 = vadd.f32 %v11280, %v11426
        %v11459 = vadd.f32 %v11285, %v11427
        %v11460 = vadd.f32 %v11290, %v11428
        %v11461 = vadd.f32 %v11295, %v11429
        %v11462 = vadd.f32 %v11300, %v11430
        %v11463 = vadd.f32 %v11305, %v11431
        %v11464 = vadd.f32 %v11310, %v11432
        %v11465 = vadd.f32 %v11315, %v11433
        %v11466 = vadd.f32 %v11320, %v11434
        %v11467 = vadd.f32 %v11325, %v11435
        %v11468 = vadd.f32 %v11330, %v11436
        %v11469 = vadd.f32 %v11335, %v11437
        %v11470 = vadd.f32 %v11340, %v11438
        %v11471 = vadd.f32 %v11345, %v11439
        %v11472 = vadd.f32 %v11350, %v11440
        %v11473 = vadd.f32 %v11355, %v11441
        %v11474 = vadd.f32 %v11360, %v11442
        %v11475 = vadd.f32 %v11365, %v11443
        %v11476 = vadd.f32 %v11370, %v11444
        %v11477 = vadd.f32 %v11375, %v11445
        %v11478 = vadd.f32 %v11380, %v11446
        %v11479 = vadd.f32 %v11385, %v11447
        %v11480 = vadd.f32 %v11390, %v11448
        %v11481 = vadd.f32 %v11395, %v11449
        %v11482 = vadd.f32 %v11400, %v11450
        %v11483 = vadd.f32 %v11405, %v11451
        %v11484 = vadd.f32 %v11410, %v11452
        %v11485 = vadd.f32 %v11415, %v11453
        %v11486 = vadd.f32 %v11420, %v11454
        %11487 = vst.msk [vmem:[%s257] sm:$0xff] %vm331, %v11455
        %11488 = vst.msk [vmem:[%s257 + $0x8] sm:$0xff] %vm331, %v11456
        %11489 = vst.msk [vmem:[%s257 + $0x10] sm:$0xff] %vm331, %v11457
        %11490 = vst.msk [vmem:[%s257 + $0x18] sm:$0xff] %vm331, %v11458
        %11491 = vst.msk [vmem:[%s257 + $0x20] sm:$0xff] %vm331, %v11459
        %11492 = vst.msk [vmem:[%s257 + $0x28] sm:$0xff] %vm331, %v11460
        %11493 = vst.msk [vmem:[%s257 + $0x30] sm:$0xff] %vm331, %v11461
        %11494 = vst.msk [vmem:[%s257 + $0x38] sm:$0xff] %vm331, %v11462
        %11495 = vst.msk [vmem:[%s257 + $0x40] sm:$0xff] %vm331, %v11463
        %11496 = vst.msk [vmem:[%s257 + $0x48] sm:$0xff] %vm331, %v11464
        %11497 = vst.msk [vmem:[%s257 + $0x50] sm:$0xff] %vm331, %v11465
        %11498 = vst.msk [vmem:[%s257 + $0x58] sm:$0xff] %vm331, %v11466
        %11499 = vst.msk [vmem:[%s257 + $0x60] sm:$0xff] %vm331, %v11467
        %11500 = vst.msk [vmem:[%s257 + $0x68] sm:$0xff] %vm331, %v11468
        %11501 = vst.msk [vmem:[%s257 + $0x70] sm:$0xff] %vm331, %v11469
        %11502 = vst.msk [vmem:[%s257 + $0x78] sm:$0xff] %vm331, %v11470
        %11503 = vst.msk [vmem:[%s257 + $0x80] sm:$0xff] %vm331, %v11471
        %11504 = vst.msk [vmem:[%s257 + $0x88] sm:$0xff] %vm331, %v11472
        %11505 = vst.msk [vmem:[%s257 + $0x90] sm:$0xff] %vm331, %v11473
        %11506 = vst.msk [vmem:[%s257 + $0x98] sm:$0xff] %vm331, %v11474
        %11507 = vst.msk [vmem:[%s257 + $0xa0] sm:$0xff] %vm331, %v11475
        %11508 = vst.msk [vmem:[%s257 + $0xa8] sm:$0xff] %vm331, %v11476
        %11509 = vst.msk [vmem:[%s257 + $0xb0] sm:$0xff] %vm331, %v11477
        %11510 = vst.msk [vmem:[%s257 + $0xb8] sm:$0xff] %vm331, %v11478
        %11511 = vst.msk [vmem:[%s257 + $0xc0] sm:$0xff] %vm331, %v11479
        %11512 = vst.msk [vmem:[%s257 + $0xc8] sm:$0xff] %vm331, %v11480
        %11513 = vst.msk [vmem:[%s257 + $0xd0] sm:$0xff] %vm331, %v11481
        %11514 = vst.msk [vmem:[%s257 + $0xd8] sm:$0xff] %vm331, %v11482
        %11515 = vst.msk [vmem:[%s257 + $0xe0] sm:$0xff] %vm331, %v11483
        %11516 = vst.msk [vmem:[%s257 + $0xe8] sm:$0xff] %vm331, %v11484
        %11517 = vst.msk [vmem:[%s257 + $0xf0] sm:$0xff] %vm331, %v11485
        %11518 = vst.msk [vmem:[%s257 + $0xf8] sm:$0xff] %vm331, %v11486
        %s11519 = sand.u32 %s141, 1
        %s11520 = scalar_lea.sflag [#allocation5], %s11519
        %s11521 = sand.u32 %s141, 1
        %s11522 = smul.addr %s11521, 256
        %s11523 = scalar_lea.vmem [#allocation8], %s11522
        // Predicated region
        $region49: #{tpu_custom_call.1} parent=39 // pred_check
          %p11524 = pneg %p151
        $region50: #{tpu_custom_call.1} parent=39 // pred_check_branch
          %11526 = sbr.rel (%p11524) target = $region52
        $region51: #{tpu_custom_call.1} parent=39 // pred_region
          %s11528 = ssub.s32 4096, 4096
          %11529 = vsyncadd %s11520, %s11528
          %s11530 = smul.addr %s23, 32
          %s11531 = smul.addr %s11530, 128
          %s11532 = scalar_lea.hbm %s5, %s11531
          %s11533 = sshll.u32 %s11523, 4
          %s11534 = int_to_ptr.vmem [resolvable:$true] %s11533
          %11539 = dma.vmem_to_hbm [thread:$0]  %s11534, 4096, %s11532, %s11520, 128, 128, 8
        $region52: #{tpu_custom_call.1} parent=39 // pred_fallthru
          _
      $region40: #{tpu_custom_call.1} parent=5 // pred_fallthru
        _
      %p11540 = scmp.le.s32.totalorder 2, %s18
      // Predicated region
      $region53: #{tpu_custom_call.1} parent=5 // pred_check
        %p11541 = pneg %p11540
      $region54: #{tpu_custom_call.1} parent=5 // pred_check_branch
        %11543 = sbr.rel (%p11541) target = $region56
      $region55: #{tpu_custom_call.1} parent=5 // pred_region
        %s11544 = ssub.s32 %s18, 2
        // Predicated region
        $region57: #{tpu_custom_call.1} parent=55 // pred_check
          %p11545 = pneg %p157
        $region58: #{tpu_custom_call.1} parent=55 // pred_check_branch
          %11547 = sbr.rel (%p11545) target = $region60
        $region59: #{tpu_custom_call.1} parent=55 // pred_region
          %s11548 = sand.u32 %s142, 1
          %s11549 = scalar_lea.sflag [#allocation5], %s11548
          %s11550 = sand.u32 %s142, 1
          %s11551 = smul.addr %s11550, 256
          %s11552 = scalar_lea.vmem [#allocation8], %s11551
          %11553 = dma.done %s11549, 4096
        $region60: #{tpu_custom_call.1} parent=55 // pred_fallthru
          _
      $region56: #{tpu_custom_call.1} parent=5 // pred_fallthru
        _
    $region6: #{tpu_custom_call.1} parent=1 // loop_footer
      %s22 = sadd.s32 1, %s18
    $region7: #{tpu_custom_call.1} parent=1 // loop_footer_branch
      %17 = sbr.rel target = $region3
    $region8: #{tpu_custom_call.1} parent=1 // loop_exit
      _
    %11554 = vsyncpa [#allocation4], 1
    %s11555 = scalar_lea.sflag [#allocation4], 1
    %11556 = vsyncpa %s11555, 1
    %11557 = vsyncpa [#allocation7], 1
    %11558 = vsyncpa [#allocation5], 1
    %s11559 = scalar_lea.sflag [#allocation5], 1
    %11560 = vsyncpa %s11559, 1

</llo_original>
